<compile_context>
chip_gen: v7x
topology: tpu7x:2x2x1
jax: 0.10.0
libtpu: 0.0.40
codegen_flags: <defaults>
</compile_context>

<pallas_src>
import functools

import jax
import jax.numpy as jnp
from jax import lax
from jax.experimental import pallas as pl
from jax.experimental.pallas import tpu as pltpu


# ----------------------------------------------------------------------------
# In-kernel 3x3 conv: 2 rolls + tap-packed K + aligned row shifts
# ----------------------------------------------------------------------------

def _conv3x3_packed(x, w_top, w_mid, w_bot, *, Wp):
    """3x3 conv of a zero-ring padded, row-flattened image.

    x:     (M, Cin) mxu-dtype value, M = Hp * Wp; ring rows/cols are zero and
           Wp is a multiple of the sublane packing, so the +-Wp row shifts are
           aligned slices (no XLU) and roll wrap lands only on zero ring rows.
    w_*:   (3*Cin, Cout) packed weights for kernel rows ky = 0 / 1 / 2
           (kx-major along the contraction dim).
    Returns the (M, Cout) float32 accumulator; ring rows hold garbage and must
    be re-masked by the caller.
    """
    M = x.shape[0]
    # kx = -1 / +1 neighbours: the only two rolls per conv.
    xl = pltpu.roll(x, shift=1, axis=0)          # x[r - 1]
    xr = pltpu.roll(x, shift=M - 1, axis=0)      # x[r + 1]
    xkx = jnp.concatenate([xl, x, xr], axis=1)   # (M, 3*Cin), tap-packed K
    zero = jnp.zeros((Wp, xkx.shape[1]), xkx.dtype)
    top = jnp.concatenate([zero, xkx[:M - Wp, :]], axis=0)   # xkx[r - Wp]
    bot = jnp.concatenate([xkx[Wp:, :], zero], axis=0)       # xkx[r + Wp]
    acc = jnp.dot(top, w_top, preferred_element_type=jnp.float32)
    acc = acc + jnp.dot(xkx, w_mid, preferred_element_type=jnp.float32)
    acc = acc + jnp.dot(bot, w_bot, preferred_element_type=jnp.float32)
    return acc


# ----------------------------------------------------------------------------
# Fused kernel: input conv + all residual blocks, activation stays in VMEM
# ----------------------------------------------------------------------------

def _make_fused_kernel(Wp, mxu_dtype):

    def kernel(x_ref, w_in_ref, b_in_ref, w1_ref, b1_ref, w2_ref, b2_ref,
               mask_ref, o_ref, act_ref):
        j = pl.program_id(1)
        last = pl.num_programs(1) - 1
        mask = mask_ref[...]                     # (M, 1) f32 interior mask

        # Stage 0: input conv + LeakyReLU(0.1) -> f32 residual stream in VMEM.
        @pl.when(j == 0)
        def _():
            x = x_ref[0].astype(mxu_dtype)       # (M, Cin), cast once
            y = _conv3x3_packed(x, w_in_ref[0], w_in_ref[1], w_in_ref[2], Wp=Wp)
            y = y + b_in_ref[...]
            y = jnp.where(y >= 0.0, y, 0.1 * y)  # LeakyReLU(0.1)
            act_ref[...] = y * mask              # re-zero the ring

        # Stage j >= 1: ResidualBlockNoBN (conv1 + ReLU + conv2 + residual).
        @pl.when(j > 0)
        def _():
            b = jnp.maximum(j - 1, 0)            # block id
            xf = act_ref[...]                    # f32 residual stream
            xm = xf.astype(mxu_dtype)            # cast once per conv input
            h = _conv3x3_packed(xm, w1_ref[3 * b], w1_ref[3 * b + 1],
                                w1_ref[3 * b + 2], Wp=Wp)
            h = jnp.maximum(h + b1_ref[b], 0.0) * mask   # ring = conv2 zero pad
            y = _conv3x3_packed(h.astype(mxu_dtype), w2_ref[3 * b],
                                w2_ref[3 * b + 1], w2_ref[3 * b + 2], Wp=Wp)
            act_ref[...] = (y + b2_ref[b] + xf) * mask

        # Final stage: single write of the result to HBM.
        @pl.when(j == last)
        def _():
            o_ref[0] = act_ref[...].astype(o_ref.dtype)

    return kernel


def _compiler_params():
    vmem_limit = None
    try:
        cap = pltpu.get_tpu_info().vmem_capacity_bytes
        if isinstance(cap, int) and cap >= 32 * 1024 * 1024:
            vmem_limit = min(96 * 1024 * 1024, (3 * cap) // 4)
    except Exception:                            # best effort; defaults are fine
        vmem_limit = None
    return pltpu.CompilerParams(
        dimension_semantics=("parallel", "arbitrary"),
        vmem_limit_bytes=vmem_limit)


# ----------------------------------------------------------------------------
# Module forward
# ----------------------------------------------------------------------------

def _interior_mask(H, W, Wp):
    Hp = H + 2
    r = (jnp.arange(Hp) >= 1) & (jnp.arange(Hp) <= H)
    c = (jnp.arange(Wp) >= 1) & (jnp.arange(Wp) <= W)
    m = (r[:, None] & c[None, :]).astype(jnp.float32)
    return m.reshape(Hp * Wp, 1)


@functools.partial(jax.jit, static_argnames=("mxu_dtype",))
def residual_blocks_with_input_conv(feat_nchw, params, *, mxu_dtype=jnp.float32):
    """Forward pass of ResidualBlocksWithInputConv (res_scale = 1.0).

    feat_nchw: (N, Cin, H, W) f32  ->  (N, Cout, H, W) f32.
    mxu_dtype: dtype fed to the MXU (f32 or bf16); accumulation / residual
               stream stay float32 either way.
    """
    N, Cin, H, W = feat_nchw.shape
    Cout = params["w_in"].shape[-1]
    num_blocks = len(params["blocks"])

    # Pad Wp so row shifts of +-Wp are sublane-aligned for the storage dtype.
    row_align = 8 if jnp.dtype(mxu_dtype).itemsize >= 4 else 16
    Hp = H + 2
    Wp = ((W + 2 + row_align - 1) // row_align) * row_align
    M = Hp * Wp

    # NCHW -> NHWC, zero ring (1 top/bottom row, 1..Wp-W-1 right cols), flatten.
    x = jnp.transpose(feat_nchw, (0, 2, 3, 1))
    x = jnp.pad(x, ((0, 0), (1, 1), (1, Wp - W - 1), (0, 0)))
    x = x.reshape(N, M, Cin).astype(mxu_dtype)

    mask = _interior_mask(H, W, Wp)

    def pack_w(w):   # (3, 3, ci, co) -> (3, 3*ci, co), kx-major contraction
        return w.reshape(3, 3 * w.shape[2], w.shape[3]).astype(mxu_dtype)

    def pack_b(b):
        return b.reshape(1, -1).astype(jnp.float32)

    w_in = pack_w(params["w_in"])
    b_in = pack_b(params["b_in"])

    if num_blocks > 0:
        w1s = jnp.stack([pack_w(w1) for (w1, _, _, _) in params["blocks"]])
        w2s = jnp.stack([pack_w(w2) for (_, _, w2, _) in params["blocks"]])
        w1s = w1s.reshape(3 * num_blocks, 3 * Cout, Cout)
        w2s = w2s.reshape(3 * num_blocks, 3 * Cout, Cout)
        b1s = jnp.stack([pack_b(b1) for (_, b1, _, _) in params["blocks"]])
        b2s = jnp.stack([pack_b(b2) for (_, _, _, b2) in params["blocks"]])
    else:  # degenerate case: dummy (never-used) weight blocks
        w1s = jnp.zeros((3, 3 * Cout, Cout), mxu_dtype)
        w2s = w1s
        b1s = jnp.zeros((1, 1, Cout), jnp.float32)
        b2s = b1s

    nw = w1s.shape[0]
    nb = b1s.shape[0]

    kernel = _make_fused_kernel(Wp, mxu_dtype)

    out = pl.pallas_call(
        kernel,
        out_shape=jax.ShapeDtypeStruct((N, M, Cout), jnp.float32),
        grid_spec=pltpu.PrefetchScalarGridSpec(
            num_scalar_prefetch=0,
            grid=(N, num_blocks + 1),
            in_specs=[
                pl.BlockSpec((1, M, Cin), lambda n, j: (n, 0, 0)),
                pl.BlockSpec((3, 3 * Cin, Cout), lambda n, j: (0, 0, 0)),
                pl.BlockSpec((1, Cout), lambda n, j: (0, 0)),
                # Constant index maps -> weights DMA'd into VMEM exactly once.
                pl.BlockSpec((nw, 3 * Cout, Cout), lambda n, j: (0, 0, 0)),
                pl.BlockSpec((nb, 1, Cout), lambda n, j: (0, 0, 0)),
                pl.BlockSpec((nw, 3 * Cout, Cout), lambda n, j: (0, 0, 0)),
                pl.BlockSpec((nb, 1, Cout), lambda n, j: (0, 0, 0)),
                pl.BlockSpec((M, 1), lambda n, j: (0, 0)),
            ],
            out_specs=pl.BlockSpec((1, M, Cout), lambda n, j: (n, 0, 0)),
            scratch_shapes=[pltpu.VMEM((M, Cout), jnp.float32)],
        ),
        compiler_params=_compiler_params(),
    )(x, w_in, b_in, w1s, b1s, w2s, b2s, mask)

    y = out.reshape(N, Hp, Wp, Cout)[:, 1:H + 1, 1:W + 1, :]
    return jnp.transpose(y, (0, 3, 1, 2))


# ----------------------------------------------------------------------------
# Parameters + pure-JAX reference (correctness check)
# ----------------------------------------------------------------------------

def init_params(key, in_channels, out_channels, num_blocks):
    """Deterministic synthetic parameters (kaiming-style normal, fan_in).

    Residual-block conv weights are scaled by 0.1 and their biases are 0,
    mirroring `default_init_weights(m, 0.1)` with bias=0 in the PyTorch module.
    """
    def conv_w(k, cin, cout, scale=1.0):
        fan_in = cin * 9
        std = (2.0 / fan_in) ** 0.5
        return (scale * std) * jax.random.normal(k, (3, 3, cin, cout), jnp.float32)

    keys = jax.random.split(key, 2 + 2 * num_blocks)
    params = {
        "w_in": conv_w(keys[0], in_channels, out_channels),
        "b_in": 0.01 * jax.random.normal(keys[1], (out_channels,), jnp.float32),
        "blocks": [],
    }
    for i in range(num_blocks):
        k1, k2 = jax.random.split(keys[2 + 2 * i])
        params["blocks"].append((
            conv_w(k1, out_channels, out_channels, scale=0.1),
            jnp.zeros((out_channels,), jnp.float32),
            conv_w(k2, out_channels, out_channels, scale=0.1),
            jnp.zeros((out_channels,), jnp.float32),
        ))
    return params


def _conv_ref(x, w, b):
    y = lax.conv_general_dilated(x, w, (1, 1), "SAME",
                                 dimension_numbers=("NHWC", "HWIO", "NHWC"))
    return y + b.reshape(1, 1, 1, -1)


def reference(feat_nchw, params):
    x = jnp.transpose(feat_nchw, (0, 2, 3, 1))
    x = _conv_ref(x, params["w_in"], params["b_in"])
    x = jnp.where(x >= 0, x, 0.1 * x)
    for (w1, b1, w2, b2) in params["blocks"]:
        h = jnp.maximum(_conv_ref(x, w1, b1), 0.0)
        x = x + _conv_ref(h, w2, b2)
    return jnp.transpose(x, (0, 3, 1, 2))


if __name__ == "__main__":
    key = jax.random.PRNGKey(0)
    k_feat, k_params = jax.random.split(key)

    N, Cin, H, W = 2, 4, 16, 16          # small shapes, module takes NCHW
    Cout, num_blocks = 32, 2

    feat = jax.random.normal(k_feat, (N, Cin, H, W), jnp.float32)
    params = init_params(k_params, Cin, Cout, num_blocks)

    ref = jax.block_until_ready(reference(feat, params))

    # f32 MXU path: strict check against the pure-JAX reference.
    out = jax.block_until_ready(
        residual_blocks_with_input_conv(feat, params, mxu_dtype=jnp.float32))
    assert out.shape == (N, Cout, H, W), out.shape
    assert jnp.allclose(out, ref, atol=1e-3, rtol=1e-3), \
        float(jnp.max(jnp.abs(out - ref)))

    # bf16 MXU inputs / f32 accumulation + f32 residual stream: looser check.
    out_bf16 = jax.block_until_ready(
        residual_blocks_with_input_conv(feat, params, mxu_dtype=jnp.bfloat16))
    assert jnp.allclose(out_bf16, ref, atol=1e-1, rtol=5e-2), \
        float(jnp.max(jnp.abs(out_bf16 - ref)))

    print("KERNEL_OK")
</pallas_src>

<mosaic_0001>
module attributes {stable_mosaic.version = 11 : i64} {
  func.func @kernel(%arg0: i32, %arg1: i32, %arg2: memref<1x432x4xf32, #tpu.memory_space<vmem>>, %arg3: memref<3x12x32xf32, #tpu.memory_space<vmem>>, %arg4: memref<1x32xf32, #tpu.memory_space<vmem>>, %arg5: memref<6x96x32xf32, #tpu.memory_space<vmem>>, %arg6: memref<2x1x32xf32, #tpu.memory_space<vmem>>, %arg7: memref<6x96x32xf32, #tpu.memory_space<vmem>>, %arg8: memref<2x1x32xf32, #tpu.memory_space<vmem>>, %arg9: memref<432x1xf32, #tpu.memory_space<vmem>>, %arg10: memref<1x432x32xf32, #tpu.memory_space<vmem>>, %arg11: memref<432x32xf32, #tpu.memory_space<vmem>>) attributes {dimension_semantics = [#tpu.dimension_semantics<parallel>, #tpu.dimension_semantics<arbitrary>], iteration_bounds = array<i64: 2, 3>, scalar_prefetch = 0 : i64, scratch_operands = 1 : i64, tpu.core_type = #tpu.core_type<tc>, window_params = [{transform_indices = @transform_0, window_bounds = array<i64: 1, 432, 4>}, {pipeline_mode = #tpu.pipeline_mode<synchronous>, transform_indices = @transform_1, window_bounds = array<i64: 3, 12, 32>}, {pipeline_mode = #tpu.pipeline_mode<synchronous>, transform_indices = @transform_2, window_bounds = array<i64: 1, 32>}, {pipeline_mode = #tpu.pipeline_mode<synchronous>, transform_indices = @transform_3, window_bounds = array<i64: 6, 96, 32>}, {pipeline_mode = #tpu.pipeline_mode<synchronous>, transform_indices = @transform_4, window_bounds = array<i64: 2, 1, 32>}, {pipeline_mode = #tpu.pipeline_mode<synchronous>, transform_indices = @transform_5, window_bounds = array<i64: 6, 96, 32>}, {pipeline_mode = #tpu.pipeline_mode<synchronous>, transform_indices = @transform_6, window_bounds = array<i64: 2, 1, 32>}, {pipeline_mode = #tpu.pipeline_mode<synchronous>, transform_indices = @transform_7, window_bounds = array<i64: 432, 1>}, {transform_indices = @transform_8, window_bounds = array<i64: 1, 432, 32>}]} {
    %c0 = arith.constant 0 : index
    %c0_0 = arith.constant 0 : index
    %0 = vector.load %arg9[%c0, %c0_0] : memref<432x1xf32, #tpu.memory_space<vmem>>, vector<432x1xf32>
    %c0_i32 = arith.constant 0 : i32
    %1 = arith.cmpi eq, %arg1, %c0_i32 : i32
    %2 = arith.extui %1 : i1 to i32
    %c0_i32_1 = arith.constant 0 : i32
    %3 = arith.cmpi ne, %2, %c0_i32_1 : i32
    scf.if %3 {
      %c0_5 = arith.constant 0 : index
      %c0_6 = arith.constant 0 : index
      %c0_7 = arith.constant 0 : index
      %10 = vector.load %arg2[%c0_5, %c0_6, %c0_7] : memref<1x432x4xf32, #tpu.memory_space<vmem>>, vector<1x432x4xf32>
      %11 = vector.shape_cast %10 : vector<1x432x4xf32> to vector<432x4xf32>
      %c0_8 = arith.constant 0 : index
      %c0_9 = arith.constant 0 : index
      %c0_10 = arith.constant 0 : index
      %12 = vector.load %arg3[%c0_8, %c0_9, %c0_10] : memref<3x12x32xf32, #tpu.memory_space<vmem>>, vector<1x12x32xf32>
      %13 = vector.shape_cast %12 : vector<1x12x32xf32> to vector<12x32xf32>
      %c1 = arith.constant 1 : index
      %c0_11 = arith.constant 0 : index
      %c0_12 = arith.constant 0 : index
      %14 = vector.load %arg3[%c1, %c0_11, %c0_12] : memref<3x12x32xf32, #tpu.memory_space<vmem>>, vector<1x12x32xf32>
      %15 = vector.shape_cast %14 : vector<1x12x32xf32> to vector<12x32xf32>
      %c2 = arith.constant 2 : index
      %c0_13 = arith.constant 0 : index
      %c0_14 = arith.constant 0 : index
      %16 = vector.load %arg3[%c2, %c0_13, %c0_14] : memref<3x12x32xf32, #tpu.memory_space<vmem>>, vector<1x12x32xf32>
      %17 = vector.shape_cast %16 : vector<1x12x32xf32> to vector<12x32xf32>
      %c1_i32 = arith.constant 1 : i32
      %18 = tpu.dynamic_rotate %11 by %c1_i32 dim 0 : vector<432x4xf32>, i32 -> vector<432x4xf32>
      %c431_i32 = arith.constant 431 : i32
      %19 = tpu.dynamic_rotate %11 by %c431_i32 dim 0 : vector<432x4xf32>, i32 -> vector<432x4xf32>
      %20 = tpu.concatenate %18, %11, %19 in 1 : vector<432x4xf32>, vector<432x4xf32>, vector<432x4xf32> -> vector<432x12xf32>
      %cst = arith.constant 0.000000e+00 : f32
      %21 = vector.broadcast %cst : f32 to vector<24x12xf32>
      %22 = vector.extract_strided_slice %20 {offsets = [0, 0], sizes = [408, 12], strides = [1, 1]} : vector<432x12xf32> to vector<408x12xf32>
      %23 = tpu.concatenate %21, %22 in 0 : vector<24x12xf32>, vector<408x12xf32> -> vector<432x12xf32>
      %24 = vector.extract_strided_slice %20 {offsets = [24, 0], sizes = [408, 12], strides = [1, 1]} : vector<432x12xf32> to vector<408x12xf32>
      %25 = tpu.concatenate %24, %21 in 0 : vector<408x12xf32>, vector<24x12xf32> -> vector<432x12xf32>
      %cst_15 = arith.constant dense<0.000000e+00> : vector<432x32xf32>
      %26 = tpu.matmul %23, %13, %cst_15 {dimension_numbers = #tpu.dot_dimension_numbers<[1], [0], [0], [1], [0, 0, 1, 1], [], []>} : vector<432x12xf32>, vector<12x32xf32>, vector<432x32xf32> -> vector<432x32xf32>
      %cst_16 = arith.constant dense<0.000000e+00> : vector<432x32xf32>
      %27 = tpu.matmul %20, %15, %cst_16 {dimension_numbers = #tpu.dot_dimension_numbers<[1], [0], [0], [1], [0, 0, 1, 1], [], []>} : vector<432x12xf32>, vector<12x32xf32>, vector<432x32xf32> -> vector<432x32xf32>
      %28 = arith.addf %26, %27 : vector<432x32xf32>
      %cst_17 = arith.constant dense<0.000000e+00> : vector<432x32xf32>
      %29 = tpu.matmul %25, %17, %cst_17 {dimension_numbers = #tpu.dot_dimension_numbers<[1], [0], [0], [1], [0, 0, 1, 1], [], []>} : vector<432x12xf32>, vector<12x32xf32>, vector<432x32xf32> -> vector<432x32xf32>
      %30 = arith.addf %28, %29 : vector<432x32xf32>
      %c0_18 = arith.constant 0 : index
      %c0_19 = arith.constant 0 : index
      %31 = vector.load %arg4[%c0_18, %c0_19] : memref<1x32xf32, #tpu.memory_space<vmem>>, vector<1x32xf32>
      %32 = vector.broadcast %31 : vector<1x32xf32> to vector<432x32xf32>
      %33 = arith.addf %30, %32 : vector<432x32xf32>
      %cst_20 = arith.constant 0.000000e+00 : f32
      %34 = vector.broadcast %cst_20 : f32 to vector<432x32xf32>
      %35 = arith.cmpf oge, %33, %34 : vector<432x32xf32>
      %cst_21 = arith.constant 1.000000e-01 : f32
      %36 = vector.broadcast %cst_21 : f32 to vector<432x32xf32>
      %37 = arith.mulf %36, %33 : vector<432x32xf32>
      %38 = arith.select %35, %33, %37 : vector<432x32xi1>, vector<432x32xf32>
      %39 = vector.broadcast %0 : vector<432x1xf32> to vector<432x32xf32>
      %40 = arith.mulf %38, %39 : vector<432x32xf32>
      %c0_22 = arith.constant 0 : index
      %c0_23 = arith.constant 0 : index
      %41 = vector.load %arg11[%c0_22, %c0_23] : memref<432x32xf32, #tpu.memory_space<vmem>>, vector<432x32xf32>
      tpu.vector_store %arg11[%c0_22, %c0_23], %40 {strides = array<i32>} : memref<432x32xf32, #tpu.memory_space<vmem>>, vector<432x32xf32>,
    } else {
    }
    %c0_i32_2 = arith.constant 0 : i32
    %4 = arith.cmpi sgt, %arg1, %c0_i32_2 : i32
    %5 = arith.extui %4 : i1 to i32
    %c0_i32_3 = arith.constant 0 : i32
    %6 = arith.cmpi ne, %5, %c0_i32_3 : i32
    scf.if %6 {
      %c1_i32 = arith.constant 1 : i32
      %10 = arith.subi %arg1, %c1_i32 : i32
      %c0_i32_5 = arith.constant 0 : i32
      %11 = arith.maxsi %10, %c0_i32_5 : i32
      %c0_6 = arith.constant 0 : index
      %c0_7 = arith.constant 0 : index
      %12 = vector.load %arg11[%c0_6, %c0_7] : memref<432x32xf32, #tpu.memory_space<vmem>>, vector<432x32xf32>
      %c3_i32 = arith.constant 3 : i32
      %13 = arith.muli %c3_i32, %11 : i32
      %14 = arith.index_cast %13 : i32 to index
      %c0_8 = arith.constant 0 : index
      %c0_9 = arith.constant 0 : index
      %15 = vector.load %arg5[%14, %c0_8, %c0_9] : memref<6x96x32xf32, #tpu.memory_space<vmem>>, vector<1x96x32xf32>
      %16 = vector.shape_cast %15 : vector<1x96x32xf32> to vector<96x32xf32>
      %c3_i32_10 = arith.constant 3 : i32
      %17 = arith.muli %c3_i32_10, %11 : i32
      %c1_i32_11 = arith.constant 1 : i32
      %18 = arith.addi %17, %c1_i32_11 : i32
      %19 = arith.index_cast %18 : i32 to index
      %c0_12 = arith.constant 0 : index
      %c0_13 = arith.constant 0 : index
      %20 = vector.load %arg5[%19, %c0_12, %c0_13] : memref<6x96x32xf32, #tpu.memory_space<vmem>>, vector<1x96x32xf32>
      %21 = vector.shape_cast %20 : vector<1x96x32xf32> to vector<96x32xf32>
      %c3_i32_14 = arith.constant 3 : i32
      %22 = arith.muli %c3_i32_14, %11 : i32
      %c2_i32_15 = arith.constant 2 : i32
      %23 = arith.addi %22, %c2_i32_15 : i32
      %24 = arith.index_cast %23 : i32 to index
      %c0_16 = arith.constant 0 : index
      %c0_17 = arith.constant 0 : index
      %25 = vector.load %arg5[%24, %c0_16, %c0_17] : memref<6x96x32xf32, #tpu.memory_space<vmem>>, vector<1x96x32xf32>
      %26 = vector.shape_cast %25 : vector<1x96x32xf32> to vector<96x32xf32>
      %c1_i32_18 = arith.constant 1 : i32
      %27 = tpu.dynamic_rotate %12 by %c1_i32_18 dim 0 : vector<432x32xf32>, i32 -> vector<432x32xf32>
      %c431_i32 = arith.constant 431 : i32
      %28 = tpu.dynamic_rotate %12 by %c431_i32 dim 0 : vector<432x32xf32>, i32 -> vector<432x32xf32>
      %29 = tpu.concatenate %27, %12, %28 in 1 : vector<432x32xf32>, vector<432x32xf32>, vector<432x32xf32> -> vector<432x96xf32>
      %cst = arith.constant 0.000000e+00 : f32
      %30 = vector.broadcast %cst : f32 to vector<24x96xf32>
      %31 = vector.extract_strided_slice %29 {offsets = [0, 0], sizes = [408, 96], strides = [1, 1]} : vector<432x96xf32> to vector<408x96xf32>
      %32 = tpu.concatenate %30, %31 in 0 : vector<24x96xf32>, vector<408x96xf32> -> vector<432x96xf32>
      %33 = vector.extract_strided_slice %29 {offsets = [24, 0], sizes = [408, 96], strides = [1, 1]} : vector<432x96xf32> to vector<408x96xf32>
      %34 = tpu.concatenate %33, %30 in 0 : vector<408x96xf32>, vector<24x96xf32> -> vector<432x96xf32>
      %cst_19 = arith.constant dense<0.000000e+00> : vector<432x32xf32>
      %35 = tpu.matmul %32, %16, %cst_19 {dimension_numbers = #tpu.dot_dimension_numbers<[1], [0], [0], [1], [0, 0, 1, 1], [], []>} : vector<432x96xf32>, vector<96x32xf32>, vector<432x32xf32> -> vector<432x32xf32>
      %cst_20 = arith.constant dense<0.000000e+00> : vector<432x32xf32>
      %36 = tpu.matmul %29, %21, %cst_20 {dimension_numbers = #tpu.dot_dimension_numbers<[1], [0], [0], [1], [0, 0, 1, 1], [], []>} : vector<432x96xf32>, vector<96x32xf32>, vector<432x32xf32> -> vector<432x32xf32>
      %37 = arith.addf %35, %36 : vector<432x32xf32>
      %cst_21 = arith.constant dense<0.000000e+00> : vector<432x32xf32>
      %38 = tpu.matmul %34, %26, %cst_21 {dimension_numbers = #tpu.dot_dimension_numbers<[1], [0], [0], [1], [0, 0, 1, 1], [], []>} : vector<432x96xf32>, vector<96x32xf32>, vector<432x32xf32> -> vector<432x32xf32>
      %39 = arith.addf %37, %38 : vector<432x32xf32>
      %40 = arith.index_cast %11 : i32 to index
      %c0_22 = arith.constant 0 : index
      %c0_23 = arith.constant 0 : index
      %41 = vector.load %arg6[%40, %c0_22, %c0_23] : memref<2x1x32xf32, #tpu.memory_space<vmem>>, vector<1x1x32xf32>
      %42 = vector.shape_cast %41 : vector<1x1x32xf32> to vector<1x32xf32>
      %43 = vector.broadcast %42 : vector<1x32xf32> to vector<432x32xf32>
      %44 = arith.addf %39, %43 : vector<432x32xf32>
      %cst_24 = arith.constant 0.000000e+00 : f32
      %45 = vector.broadcast %cst_24 : f32 to vector<432x32xf32>
      %46 = arith.maximumf %44, %45 : vector<432x32xf32>
      %47 = vector.broadcast %0 : vector<432x1xf32> to vector<432x32xf32>
      %48 = arith.mulf %46, %47 : vector<432x32xf32>
      %c3_i32_25 = arith.constant 3 : i32
      %49 = arith.muli %c3_i32_25, %11 : i32
      %50 = arith.index_cast %49 : i32 to index
      %c0_26 = arith.constant 0 : index
      %c0_27 = arith.constant 0 : index
      %51 = vector.load %arg7[%50, %c0_26, %c0_27] : memref<6x96x32xf32, #tpu.memory_space<vmem>>, vector<1x96x32xf32>
      %52 = vector.shape_cast %51 : vector<1x96x32xf32> to vector<96x32xf32>
      %c3_i32_28 = arith.constant 3 : i32
      %53 = arith.muli %c3_i32_28, %11 : i32
      %c1_i32_29 = arith.constant 1 : i32
      %54 = arith.addi %53, %c1_i32_29 : i32
      %55 = arith.index_cast %54 : i32 to index
      %c0_30 = arith.constant 0 : index
      %c0_31 = arith.constant 0 : index
      %56 = vector.load %arg7[%55, %c0_30, %c0_31] : memref<6x96x32xf32, #tpu.memory_space<vmem>>, vector<1x96x32xf32>
      %57 = vector.shape_cast %56 : vector<1x96x32xf32> to vector<96x32xf32>
      %c3_i32_32 = arith.constant 3 : i32
      %58 = arith.muli %c3_i32_32, %11 : i32
      %c2_i32_33 = arith.constant 2 : i32
      %59 = arith.addi %58, %c2_i32_33 : i32
      %60 = arith.index_cast %59 : i32 to index
      %c0_34 = arith.constant 0 : index
      %c0_35 = arith.constant 0 : index
      %61 = vector.load %arg7[%60, %c0_34, %c0_35] : memref<6x96x32xf32, #tpu.memory_space<vmem>>, vector<1x96x32xf32>
      %62 = vector.shape_cast %61 : vector<1x96x32xf32> to vector<96x32xf32>
      %c1_i32_36 = arith.constant 1 : i32
      %63 = tpu.dynamic_rotate %48 by %c1_i32_36 dim 0 : vector<432x32xf32>, i32 -> vector<432x32xf32>
      %c431_i32_37 = arith.constant 431 : i32
      %64 = tpu.dynamic_rotate %48 by %c431_i32_37 dim 0 : vector<432x32xf32>, i32 -> vector<432x32xf32>
      %65 = tpu.concatenate %63, %48, %64 in 1 : vector<432x32xf32>, vector<432x32xf32>, vector<432x32xf32> -> vector<432x96xf32>
      %cst_38 = arith.constant 0.000000e+00 : f32
      %66 = vector.broadcast %cst_38 : f32 to vector<24x96xf32>
      %67 = vector.extract_strided_slice %65 {offsets = [0, 0], sizes = [408, 96], strides = [1, 1]} : vector<432x96xf32> to vector<408x96xf32>
      %68 = tpu.concatenate %66, %67 in 0 : vector<24x96xf32>, vector<408x96xf32> -> vector<432x96xf32>
      %69 = vector.extract_strided_slice %65 {offsets = [24, 0], sizes = [408, 96], strides = [1, 1]} : vector<432x96xf32> to vector<408x96xf32>
      %70 = tpu.concatenate %69, %66 in 0 : vector<408x96xf32>, vector<24x96xf32> -> vector<432x96xf32>
      %cst_39 = arith.constant dense<0.000000e+00> : vector<432x32xf32>
      %71 = tpu.matmul %68, %52, %cst_39 {dimension_numbers = #tpu.dot_dimension_numbers<[1], [0], [0], [1], [0, 0, 1, 1], [], []>} : vector<432x96xf32>, vector<96x32xf32>, vector<432x32xf32> -> vector<432x32xf32>
      %cst_40 = arith.constant dense<0.000000e+00> : vector<432x32xf32>
      %72 = tpu.matmul %65, %57, %cst_40 {dimension_numbers = #tpu.dot_dimension_numbers<[1], [0], [0], [1], [0, 0, 1, 1], [], []>} : vector<432x96xf32>, vector<96x32xf32>, vector<432x32xf32> -> vector<432x32xf32>
      %73 = arith.addf %71, %72 : vector<432x32xf32>
      %cst_41 = arith.constant dense<0.000000e+00> : vector<432x32xf32>
      %74 = tpu.matmul %70, %62, %cst_41 {dimension_numbers = #tpu.dot_dimension_numbers<[1], [0], [0], [1], [0, 0, 1, 1], [], []>} : vector<432x96xf32>, vector<96x32xf32>, vector<432x32xf32> -> vector<432x32xf32>
      %75 = arith.addf %73, %74 : vector<432x32xf32>
      %76 = arith.index_cast %11 : i32 to index
      %c0_42 = arith.constant 0 : index
      %c0_43 = arith.constant 0 : index
      %77 = vector.load %arg8[%76, %c0_42, %c0_43] : memref<2x1x32xf32, #tpu.memory_space<vmem>>, vector<1x1x32xf32>
      %78 = vector.shape_cast %77 : vector<1x1x32xf32> to vector<1x32xf32>
      %79 = vector.broadcast %78 : vector<1x32xf32> to vector<432x32xf32>
      %80 = arith.addf %75, %79 : vector<432x32xf32>
      %81 = arith.addf %80, %12 : vector<432x32xf32>
      %82 = vector.broadcast %0 : vector<432x1xf32> to vector<432x32xf32>
      %83 = arith.mulf %81, %82 : vector<432x32xf32>
      %c0_44 = arith.constant 0 : index
      %c0_45 = arith.constant 0 : index
      %84 = vector.load %arg11[%c0_44, %c0_45] : memref<432x32xf32, #tpu.memory_space<vmem>>, vector<432x32xf32>
      tpu.vector_store %arg11[%c0_44, %c0_45], %83 {strides = array<i32>} : memref<432x32xf32, #tpu.memory_space<vmem>>, vector<432x32xf32>,
    } else {
    }
    %c2_i32 = arith.constant 2 : i32
    %7 = arith.cmpi eq, %arg1, %c2_i32 : i32
    %8 = arith.extui %7 : i1 to i32
    %c0_i32_4 = arith.constant 0 : i32
    %9 = arith.cmpi ne, %8, %c0_i32_4 : i32
    scf.if %9 {
      %c0_5 = arith.constant 0 : index
      %c0_6 = arith.constant 0 : index
      %10 = vector.load %arg11[%c0_5, %c0_6] : memref<432x32xf32, #tpu.memory_space<vmem>>, vector<432x32xf32>
      %c0_7 = arith.constant 0 : index
      %c0_8 = arith.constant 0 : index
      %c0_9 = arith.constant 0 : index
      %11 = vector.load %arg10[%c0_7, %c0_8, %c0_9] : memref<1x432x32xf32, #tpu.memory_space<vmem>>, vector<1x432x32xf32>
      %12 = vector.shape_cast %11 : vector<1x432x32xf32> to vector<432x32xf32>
      %13 = vector.shape_cast %10 : vector<432x32xf32> to vector<1x432x32xf32>
      tpu.vector_store %arg10[%c0_7, %c0_8, %c0_9], %13 {strides = array<i32>} : memref<1x432x32xf32, #tpu.memory_space<vmem>>, vector<1x432x32xf32>,
    } else {
    }
    return
  }
  func.func @transform_0(%arg0: i32, %arg1: i32) -> (i32, i32, i32) {
    %c0_i32 = arith.constant 0 : i32
    %c0_i32_0 = arith.constant 0 : i32
    %c0_i32_1 = arith.constant 0 : i32
    return %arg0, %c0_i32, %c0_i32_0 : i32, i32, i32
  }
  func.func @transform_1(%arg0: i32, %arg1: i32) -> (i32, i32, i32) {
    %c0_i32 = arith.constant 0 : i32
    %c0_i32_0 = arith.constant 0 : i32
    %c0_i32_1 = arith.constant 0 : i32
    %c0_i32_2 = arith.constant 0 : i32
    return %c0_i32, %c0_i32_0, %c0_i32_1 : i32, i32, i32
  }
  func.func @transform_2(%arg0: i32, %arg1: i32) -> (i32, i32) {
    %c0_i32 = arith.constant 0 : i32
    %c0_i32_0 = arith.constant 0 : i32
    %c0_i32_1 = arith.constant 0 : i32
    return %c0_i32, %c0_i32_0 : i32, i32
  }
  func.func @transform_3(%arg0: i32, %arg1: i32) -> (i32, i32, i32) {
    %c0_i32 = arith.constant 0 : i32
    %c0_i32_0 = arith.constant 0 : i32
    %c0_i32_1 = arith.constant 0 : i32
    %c0_i32_2 = arith.constant 0 : i32
    return %c0_i32, %c0_i32_0, %c0_i32_1 : i32, i32, i32
  }
  func.func @transform_4(%arg0: i32, %arg1: i32) -> (i32, i32, i32) {
    %c0_i32 = arith.constant 0 : i32
    %c0_i32_0 = arith.constant 0 : i32
    %c0_i32_1 = arith.constant 0 : i32
    %c0_i32_2 = arith.constant 0 : i32
    return %c0_i32, %c0_i32_0, %c0_i32_1 : i32, i32, i32
  }
  func.func @transform_5(%arg0: i32, %arg1: i32) -> (i32, i32, i32) {
    %c0_i32 = arith.constant 0 : i32
    %c0_i32_0 = arith.constant 0 : i32
    %c0_i32_1 = arith.constant 0 : i32
    %c0_i32_2 = arith.constant 0 : i32
    return %c0_i32, %c0_i32_0, %c0_i32_1 : i32, i32, i32
  }
  func.func @transform_6(%arg0: i32, %arg1: i32) -> (i32, i32, i32) {
    %c0_i32 = arith.constant 0 : i32
    %c0_i32_0 = arith.constant 0 : i32
    %c0_i32_1 = arith.constant 0 : i32
    %c0_i32_2 = arith.constant 0 : i32
    return %c0_i32, %c0_i32_0, %c0_i32_1 : i32, i32, i32
  }
  func.func @transform_7(%arg0: i32, %arg1: i32) -> (i32, i32) {
    %c0_i32 = arith.constant 0 : i32
    %c0_i32_0 = arith.constant 0 : i32
    %c0_i32_1 = arith.constant 0 : i32
    return %c0_i32, %c0_i32_0 : i32, i32
  }
  func.func @transform_8(%arg0: i32, %arg1: i32) -> (i32, i32, i32) {
    %c0_i32 = arith.constant 0 : i32
    %c0_i32_0 = arith.constant 0 : i32
    %c0_i32_1 = arith.constant 0 : i32
    return %arg0, %c0_i32, %c0_i32_0 : i32, i32, i32
  }
}

</mosaic_0001>

<llo_original>
// kernel: residual_blocks_with_input_conv.1
$region0: #{residual_blocks_with_input_conv.1}
  #allocation0 [shape = 'u32[]', space=smem, size = 0x4, offset = 0x4, fixed_abs, tag = 'smem constant byte address 0x4 - core index']
  #allocation1 [shape = 'u32[144,128]{1,0:T(1,128)}', space=vmem, size = 0x12000, scoped, tag = 'internal scratch']
  #allocation2 [shape = 'f32[432,32]{1,0:T(8,128)}', space=vmem, size = 0x36000, scoped, tag = 'scratch operand']
  %s0 = inlined_call_operand.vmem [shape: f32[2,432,4], index: 0, kind: input, shape index: {}]
  %s1 = inlined_call_operand.vmem [shape: f32[3,12,32], index: 1, kind: input, shape index: {}]
  %s2 = inlined_call_operand.vmem [shape: f32[1,32], index: 2, kind: input, shape index: {}]
  %s3 = inlined_call_operand.vmem [shape: f32[6,96,32], index: 3, kind: input, shape index: {}]
  %s4 = inlined_call_operand.vmem [shape: f32[2,1,32], index: 4, kind: input, shape index: {}]
  %s5 = inlined_call_operand.vmem [shape: f32[6,96,32], index: 5, kind: input, shape index: {}]
  %s6 = inlined_call_operand.vmem [shape: f32[2,1,32], index: 6, kind: input, shape index: {}]
  %s7 = inlined_call_operand.vmem [shape: f32[432,1], index: 7, kind: input, shape index: {}]
  %s8 = inlined_call_operand.vmem [shape: f32[2,432,32], index: 8, kind: output, shape index: {}]
  %s9 = sld [smem:[#allocation0]]
  $region77: #{residual_blocks_with_input_conv.1} parent=0
    _
  %s11 = ssub.s32 1, %s9
  %s12 = scalar_select 0, %s11, %s9
  loop: start=0, step=1, limit=8
  $region2: #{residual_blocks_with_input_conv.1} parent=0 // loop_pre_header
    _
  $region3: #{residual_blocks_with_input_conv.1} parent=0 // loop_header
    %s14 = sphi 0, %s18
    %p15 = scmp.ge.s32.totalorder %s14, 8
    %s21 = sphi 0, %s33
    %s22 = sphi 0, %s29
    %s23 = sphi 0, %s21
    %s24 = sphi 0, %s22
    %s25 = sphi 0, %s23
    %s26 = sphi 0, %s24
    %s36 = sphi 0, %s38
    %s39 = sphi 0, %s36
    %s40 = sphi 0, %s39
    %s56 = sphi 0, %s40
    %s60 = sphi 0, %s60
    %s62 = sphi 0, %s60
    %s63 = sphi 0, %s62
    %s77 = sphi 0, %s63
    %s81 = sphi 0, %s81
    %s83 = sphi 0, %s81
    %s84 = sphi 0, %s83
    %s98 = sphi 0, %s84
    %s102 = sphi 0, %s102
    %s104 = sphi 0, %s102
    %s105 = sphi 0, %s104
    %s119 = sphi 0, %s105
    %s123 = sphi 0, %s123
    %s125 = sphi 0, %s123
    %s126 = sphi 0, %s125
    %s140 = sphi 0, %s126
    %s144 = sphi 0, %s144
    %s146 = sphi 0, %s144
    %s147 = sphi 0, %s146
    %s161 = sphi 0, %s147
    %s165 = sphi 0, %s165
    %s167 = sphi 0, %s165
    %s168 = sphi 0, %s167
    %s182 = sphi 0, %s168
    %s186 = sphi 0, %s186
    %s188 = sphi 0, %s186
    %s189 = sphi 0, %s188
    %s203 = sphi 0, %s189
    %s209 = sphi 0, %s211
    %s212 = sphi 0, %s209
    %s213 = sphi 0, %s212
    %s229 = sphi 0, %s213
  $region4: #{residual_blocks_with_input_conv.1} parent=0 // loop_header_branch
    %17 = sbr.rel (%p15) target = $region8
  $region5: #{residual_blocks_with_input_conv.1} parent=0 // loop_body
    %s19 = ssub.s32 %s14, 1
    %s20 = ssub.s32 %s14, 2
    %s27 = sadd.s32 1, %s22
    %p28 = scmp.ge.s32.totalorder %s27, 3
    %s29 = scalar_select %p28, 0, %s27
    %s30 = sadd.s32 1, %s21
    %s31 = scalar_select %p28, %s30, %s21
    %p32 = scmp.ge.s32.totalorder %s31, 2
    %s33 = scalar_select %p32, 0, %s31
    %s34 = ssub.s32 %s21, %s33
    %p35 = scmp.eq.s32.totalorder %s34, 0
    %s37 = sadd.s32 %s36, 1
    %s38 = scalar_select %p35, %s36, %s37
    %p41 = pneg %p35
    %p42 = scmp.eq.s32.totalorder %s14, 5
    %p43 = por %p41, %p42
    %p44 = scmp.ne.s32.totalorder %s36, %s39
    %p45 = scmp.eq.s32.totalorder %s14, 0
    %p46 = por %p44, %p45
    %p47 = scmp.ne.s32.totalorder %s36, %s39
    %p48 = scmp.eq.s32.totalorder %s19, 5
    %p49 = por %p47, %p48
    %p50 = scmp.ne.s32.totalorder %s39, %s40
    %p51 = scmp.eq.s32.totalorder %s19, 0
    %p52 = por %p50, %p51
    %p53 = scmp.ne.s32.totalorder %s39, %s40
    %p54 = scmp.eq.s32.totalorder %s20, 5
    %p55 = por %p53, %p54
    %p57 = scmp.ne.s32.totalorder %s40, %s56
    %p58 = scmp.eq.s32.totalorder %s20, 0
    %p59 = por %p57, %p58
    %s61 = sadd.s32 %s60, 1
    %p64 = scmp.eq.s32.totalorder %s14, 5
    %p65 = scmp.ne.s32.totalorder %s60, %s62
    %p66 = scmp.eq.s32.totalorder %s14, 0
    %p67 = por %p65, %p66
    %p68 = scmp.ne.s32.totalorder %s60, %s62
    %p69 = scmp.eq.s32.totalorder %s19, 5
    %p70 = por %p68, %p69
    %p71 = scmp.ne.s32.totalorder %s62, %s63
    %p72 = scmp.eq.s32.totalorder %s19, 0
    %p73 = por %p71, %p72
    %p74 = scmp.ne.s32.totalorder %s62, %s63
    %p75 = scmp.eq.s32.totalorder %s20, 5
    %p76 = por %p74, %p75
    %p78 = scmp.ne.s32.totalorder %s63, %s77
    %p79 = scmp.eq.s32.totalorder %s20, 0
    %p80 = por %p78, %p79
    %s82 = sadd.s32 %s81, 1
    %p85 = scmp.eq.s32.totalorder %s14, 5
    %p86 = scmp.ne.s32.totalorder %s81, %s83
    %p87 = scmp.eq.s32.totalorder %s14, 0
    %p88 = por %p86, %p87
    %p89 = scmp.ne.s32.totalorder %s81, %s83
    %p90 = scmp.eq.s32.totalorder %s19, 5
    %p91 = por %p89, %p90
    %p92 = scmp.ne.s32.totalorder %s83, %s84
    %p93 = scmp.eq.s32.totalorder %s19, 0
    %p94 = por %p92, %p93
    %p95 = scmp.ne.s32.totalorder %s83, %s84
    %p96 = scmp.eq.s32.totalorder %s20, 5
    %p97 = por %p95, %p96
    %p99 = scmp.ne.s32.totalorder %s84, %s98
    %p100 = scmp.eq.s32.totalorder %s20, 0
    %p101 = por %p99, %p100
    %s103 = sadd.s32 %s102, 1
    %p106 = scmp.eq.s32.totalorder %s14, 5
    %p107 = scmp.ne.s32.totalorder %s102, %s104
    %p108 = scmp.eq.s32.totalorder %s14, 0
    %p109 = por %p107, %p108
    %p110 = scmp.ne.s32.totalorder %s102, %s104
    %p111 = scmp.eq.s32.totalorder %s19, 5
    %p112 = por %p110, %p111
    %p113 = scmp.ne.s32.totalorder %s104, %s105
    %p114 = scmp.eq.s32.totalorder %s19, 0
    %p115 = por %p113, %p114
    %p116 = scmp.ne.s32.totalorder %s104, %s105
    %p117 = scmp.eq.s32.totalorder %s20, 5
    %p118 = por %p116, %p117
    %p120 = scmp.ne.s32.totalorder %s105, %s119
    %p121 = scmp.eq.s32.totalorder %s20, 0
    %p122 = por %p120, %p121
    %s124 = sadd.s32 %s123, 1
    %p127 = scmp.eq.s32.totalorder %s14, 5
    %p128 = scmp.ne.s32.totalorder %s123, %s125
    %p129 = scmp.eq.s32.totalorder %s14, 0
    %p130 = por %p128, %p129
    %p131 = scmp.ne.s32.totalorder %s123, %s125
    %p132 = scmp.eq.s32.totalorder %s19, 5
    %p133 = por %p131, %p132
    %p134 = scmp.ne.s32.totalorder %s125, %s126
    %p135 = scmp.eq.s32.totalorder %s19, 0
    %p136 = por %p134, %p135
    %p137 = scmp.ne.s32.totalorder %s125, %s126
    %p138 = scmp.eq.s32.totalorder %s20, 5
    %p139 = por %p137, %p138
    %p141 = scmp.ne.s32.totalorder %s126, %s140
    %p142 = scmp.eq.s32.totalorder %s20, 0
    %p143 = por %p141, %p142
    %s145 = sadd.s32 %s144, 1
    %p148 = scmp.eq.s32.totalorder %s14, 5
    %p149 = scmp.ne.s32.totalorder %s144, %s146
    %p150 = scmp.eq.s32.totalorder %s14, 0
    %p151 = por %p149, %p150
    %p152 = scmp.ne.s32.totalorder %s144, %s146
    %p153 = scmp.eq.s32.totalorder %s19, 5
    %p154 = por %p152, %p153
    %p155 = scmp.ne.s32.totalorder %s146, %s147
    %p156 = scmp.eq.s32.totalorder %s19, 0
    %p157 = por %p155, %p156
    %p158 = scmp.ne.s32.totalorder %s146, %s147
    %p159 = scmp.eq.s32.totalorder %s20, 5
    %p160 = por %p158, %p159
    %p162 = scmp.ne.s32.totalorder %s147, %s161
    %p163 = scmp.eq.s32.totalorder %s20, 0
    %p164 = por %p162, %p163
    %s166 = sadd.s32 %s165, 1
    %p169 = scmp.eq.s32.totalorder %s14, 5
    %p170 = scmp.ne.s32.totalorder %s165, %s167
    %p171 = scmp.eq.s32.totalorder %s14, 0
    %p172 = por %p170, %p171
    %p173 = scmp.ne.s32.totalorder %s165, %s167
    %p174 = scmp.eq.s32.totalorder %s19, 5
    %p175 = por %p173, %p174
    %p176 = scmp.ne.s32.totalorder %s167, %s168
    %p177 = scmp.eq.s32.totalorder %s19, 0
    %p178 = por %p176, %p177
    %p179 = scmp.ne.s32.totalorder %s167, %s168
    %p180 = scmp.eq.s32.totalorder %s20, 5
    %p181 = por %p179, %p180
    %p183 = scmp.ne.s32.totalorder %s168, %s182
    %p184 = scmp.eq.s32.totalorder %s20, 0
    %p185 = por %p183, %p184
    %s187 = sadd.s32 %s186, 1
    %p190 = scmp.eq.s32.totalorder %s14, 5
    %p191 = scmp.ne.s32.totalorder %s186, %s188
    %p192 = scmp.eq.s32.totalorder %s14, 0
    %p193 = por %p191, %p192
    %p194 = scmp.ne.s32.totalorder %s186, %s188
    %p195 = scmp.eq.s32.totalorder %s19, 5
    %p196 = por %p194, %p195
    %p197 = scmp.ne.s32.totalorder %s188, %s189
    %p198 = scmp.eq.s32.totalorder %s19, 0
    %p199 = por %p197, %p198
    %p200 = scmp.ne.s32.totalorder %s188, %s189
    %p201 = scmp.eq.s32.totalorder %s20, 5
    %p202 = por %p200, %p201
    %p204 = scmp.ne.s32.totalorder %s189, %s203
    %p205 = scmp.eq.s32.totalorder %s20, 0
    %p206 = por %p204, %p205
    %s207 = ssub.s32 %s21, %s33
    %p208 = scmp.eq.s32.totalorder %s207, 0
    %s210 = sadd.s32 %s209, 1
    %s211 = scalar_select %p208, %s209, %s210
    %p214 = pneg %p208
    %p215 = scmp.eq.s32.totalorder %s14, 5
    %p216 = por %p214, %p215
    %p217 = scmp.ne.s32.totalorder %s209, %s212
    %p218 = scmp.eq.s32.totalorder %s14, 0
    %p219 = por %p217, %p218
    %p220 = scmp.ne.s32.totalorder %s209, %s212
    %p221 = scmp.eq.s32.totalorder %s19, 5
    %p222 = por %p220, %p221
    %p223 = scmp.ne.s32.totalorder %s212, %s213
    %p224 = scmp.eq.s32.totalorder %s19, 0
    %p225 = por %p223, %p224
    %p226 = scmp.ne.s32.totalorder %s212, %s213
    %p227 = scmp.eq.s32.totalorder %s20, 5
    %p228 = por %p226, %p227
    %p230 = scmp.ne.s32.totalorder %s213, %s229
    %p231 = scmp.eq.s32.totalorder %s20, 0
    %p232 = por %p230, %p231
    %p233 = scmp.le.s32.totalorder 1, %s14
    %p234 = scmp.lt.s32.totalorder %s14, 7
    %p235 = pnand %p233, %p234
    %p236 = pneg %p235
    // Predicated region
    $region9: #{residual_blocks_with_input_conv.1} parent=5 // pred_check
      _
    $region10: #{residual_blocks_with_input_conv.1} parent=5 // pred_check_branch
      %238 = sbr.rel (%p235) target = $region12
    $region11: #{residual_blocks_with_input_conv.1} parent=5 // pred_region
      %s239 = ssub.s32 %s14, 1
      // Predicated region
      $region13: #{residual_blocks_with_input_conv.1} parent=11 // pred_check
        %p240 = pneg %p73
      $region14: #{residual_blocks_with_input_conv.1} parent=11 // pred_check_branch
        %242 = sbr.rel (%p240) target = $region16
      $region15: #{residual_blocks_with_input_conv.1} parent=11 // pred_region
        _
      $region16: #{residual_blocks_with_input_conv.1} parent=11 // pred_fallthru
        _
      // Predicated region
      $region17: #{residual_blocks_with_input_conv.1} parent=11 // pred_check
        %p243 = pneg %p94
      $region18: #{residual_blocks_with_input_conv.1} parent=11 // pred_check_branch
        %245 = sbr.rel (%p243) target = $region20
      $region19: #{residual_blocks_with_input_conv.1} parent=11 // pred_region
        _
      $region20: #{residual_blocks_with_input_conv.1} parent=11 // pred_fallthru
        _
      // Predicated region
      $region21: #{residual_blocks_with_input_conv.1} parent=11 // pred_check
        %p246 = pneg %p115
      $region22: #{residual_blocks_with_input_conv.1} parent=11 // pred_check_branch
        %248 = sbr.rel (%p246) target = $region24
      $region23: #{residual_blocks_with_input_conv.1} parent=11 // pred_region
        _
      $region24: #{residual_blocks_with_input_conv.1} parent=11 // pred_fallthru
        _
      // Predicated region
      $region25: #{residual_blocks_with_input_conv.1} parent=11 // pred_check
        %p249 = pneg %p136
      $region26: #{residual_blocks_with_input_conv.1} parent=11 // pred_check_branch
        %251 = sbr.rel (%p249) target = $region28
      $region27: #{residual_blocks_with_input_conv.1} parent=11 // pred_region
        _
      $region28: #{residual_blocks_with_input_conv.1} parent=11 // pred_fallthru
        _
      // Predicated region
      $region29: #{residual_blocks_with_input_conv.1} parent=11 // pred_check
        %p252 = pneg %p157
      $region30: #{residual_blocks_with_input_conv.1} parent=11 // pred_check_branch
        %254 = sbr.rel (%p252) target = $region32
      $region31: #{residual_blocks_with_input_conv.1} parent=11 // pred_region
        _
      $region32: #{residual_blocks_with_input_conv.1} parent=11 // pred_fallthru
        _
      // Predicated region
      $region33: #{residual_blocks_with_input_conv.1} parent=11 // pred_check
        %p255 = pneg %p178
      $region34: #{residual_blocks_with_input_conv.1} parent=11 // pred_check_branch
        %257 = sbr.rel (%p255) target = $region36
      $region35: #{residual_blocks_with_input_conv.1} parent=11 // pred_region
        _
      $region36: #{residual_blocks_with_input_conv.1} parent=11 // pred_fallthru
        _
      // Predicated region
      $region37: #{residual_blocks_with_input_conv.1} parent=11 // pred_check
        %p258 = pneg %p199
      $region38: #{residual_blocks_with_input_conv.1} parent=11 // pred_check_branch
        %260 = sbr.rel (%p258) target = $region40
      $region39: #{residual_blocks_with_input_conv.1} parent=11 // pred_region
        _
      $region40: #{residual_blocks_with_input_conv.1} parent=11 // pred_fallthru
        _
    $region12: #{residual_blocks_with_input_conv.1} parent=5 // pred_fallthru
      _
    %p261 = scmp.lt.s32.totalorder %s14, 6
    // Predicated region
    $region41: #{residual_blocks_with_input_conv.1} parent=5 // pred_check
      %p262 = pneg %p261
    $region42: #{residual_blocks_with_input_conv.1} parent=5 // pred_check_branch
      %264 = sbr.rel (%p262) target = $region44
    $region43: #{residual_blocks_with_input_conv.1} parent=5 // pred_region
      // Predicated region
      $region45: #{residual_blocks_with_input_conv.1} parent=43 // pred_check
        %p265 = pneg %p46
      $region46: #{residual_blocks_with_input_conv.1} parent=43 // pred_check_branch
        %267 = sbr.rel (%p265) target = $region48
      $region47: #{residual_blocks_with_input_conv.1} parent=43 // pred_region
        %p268 = scmp.lt.s32.totalorder %s21, 1
        %s269 = scalar_select %p268, %s21, 1
        %s270 = smul.addr %s269, 54
        %s271 = smul.addr %s270, 8
        %s272 = scalar_lea.vmem %s0, %s271
      $region48: #{residual_blocks_with_input_conv.1} parent=43 // pred_fallthru
        _
    $region44: #{residual_blocks_with_input_conv.1} parent=5 // pred_fallthru
      _
    %p273 = scmp.le.s32.totalorder 1, %s14
    %p274 = scmp.lt.s32.totalorder %s14, 7
    %p275 = pnand %p273, %p274
    %p276 = pneg %p275
    // Predicated region
    $region49: #{residual_blocks_with_input_conv.1} parent=5 // pred_check
      _
    $region50: #{residual_blocks_with_input_conv.1} parent=5 // pred_check_branch
      %278 = sbr.rel (%p275) target = $region52
    $region51: #{residual_blocks_with_input_conv.1} parent=5 // pred_region
      %s279 = ssub.s32 %s14, 1
      %p280 = scmp.lt.s32.totalorder %s23, 1
      %s281 = scalar_select %p280, %s23, 1
      %s282 = smul.addr %s281, 54
      %s283 = smul.addr %s282, 8
      %s284 = scalar_lea.vmem %s0, %s283
      %p285 = pneg %p52
      %p286 = pneg %p49
      %p287 = pneg %p73
      %p288 = pneg %p70
      %p289 = pneg %p94
      %p290 = pneg %p91
      %p291 = pneg %p115
      %p292 = pneg %p112
      %p293 = pneg %p136
      %p294 = pneg %p133
      %p295 = pneg %p157
      %p296 = pneg %p154
      %p297 = pneg %p178
      %p298 = pneg %p175
      %p299 = pneg %p199
      %p300 = pneg %p196
      %p301 = pneg %p225
      %p302 = pneg %p222
      %p303 = scmp.lt.s32.totalorder %s23, 1
      %s304 = scalar_select %p303, %s23, 1
      %s305 = smul.addr %s304, 54
      %s306 = smul.addr %s305, 8
      %s307 = scalar_lea.vmem %s8, %s306
      %p308 = scmp.lt.s32.totalorder %s23, 1
      %s309 = scalar_select %p308, %s23, 1
      %s310 = smul.addr %s309, 54
      %s311 = smul.addr %s310, 8
      %s312 = scalar_lea.vmem %s0, %s311
      %p313 = scmp.lt.s32.totalorder %s23, 1
      %s314 = scalar_select %p313, %s23, 1
      %s315 = smul.addr %s314, 54
      %s316 = smul.addr %s315, 8
      %s317 = scalar_lea.vmem %s8, %s316
      %v318 = vld [vmem:[%s7] sm:$0xff]
      %v319 = vld [vmem:[%s7 + $0x8] sm:$0xff]
      %v320 = vld [vmem:[%s7 + $0x10] sm:$0xff]
      %v321 = vld [vmem:[%s7 + $0x18] sm:$0xff]
      %v322 = vld [vmem:[%s7 + $0x20] sm:$0xff]
      %v323 = vld [vmem:[%s7 + $0x28] sm:$0xff]
      %v324 = vld [vmem:[%s7 + $0x30] sm:$0xff]
      %v325 = vld [vmem:[%s7 + $0x38] sm:$0xff]
      %v326 = vld [vmem:[%s7 + $0x40] sm:$0xff]
      %v327 = vld [vmem:[%s7 + $0x48] sm:$0xff]
      %v328 = vld [vmem:[%s7 + $0x50] sm:$0xff]
      %v329 = vld [vmem:[%s7 + $0x58] sm:$0xff]
      %v330 = vld [vmem:[%s7 + $0x60] sm:$0xff]
      %v331 = vld [vmem:[%s7 + $0x68] sm:$0xff]
      %v332 = vld [vmem:[%s7 + $0x70] sm:$0xff]
      %v333 = vld [vmem:[%s7 + $0x78] sm:$0xff]
      %v334 = vld [vmem:[%s7 + $0x80] sm:$0xff]
      %v335 = vld [vmem:[%s7 + $0x88] sm:$0xff]
      %v336 = vld [vmem:[%s7 + $0x90] sm:$0xff]
      %v337 = vld [vmem:[%s7 + $0x98] sm:$0xff]
      %v338 = vld [vmem:[%s7 + $0xa0] sm:$0xff]
      %v339 = vld [vmem:[%s7 + $0xa8] sm:$0xff]
      %v340 = vld [vmem:[%s7 + $0xb0] sm:$0xff]
      %v341 = vld [vmem:[%s7 + $0xb8] sm:$0xff]
      %v342 = vld [vmem:[%s7 + $0xc0] sm:$0xff]
      %v343 = vld [vmem:[%s7 + $0xc8] sm:$0xff]
      %v344 = vld [vmem:[%s7 + $0xd0] sm:$0xff]
      %v345 = vld [vmem:[%s7 + $0xd8] sm:$0xff]
      %v346 = vld [vmem:[%s7 + $0xe0] sm:$0xff]
      %v347 = vld [vmem:[%s7 + $0xe8] sm:$0xff]
      %v348 = vld [vmem:[%s7 + $0xf0] sm:$0xff]
      %v349 = vld [vmem:[%s7 + $0xf8] sm:$0xff]
      %v350 = vld [vmem:[%s7 + $0x100] sm:$0xff]
      %v351 = vld [vmem:[%s7 + $0x108] sm:$0xff]
      %v352 = vld [vmem:[%s7 + $0x110] sm:$0xff]
      %v353 = vld [vmem:[%s7 + $0x118] sm:$0xff]
      %v354 = vld [vmem:[%s7 + $0x120] sm:$0xff]
      %v355 = vld [vmem:[%s7 + $0x128] sm:$0xff]
      %v356 = vld [vmem:[%s7 + $0x130] sm:$0xff]
      %v357 = vld [vmem:[%s7 + $0x138] sm:$0xff]
      %v358 = vld [vmem:[%s7 + $0x140] sm:$0xff]
      %v359 = vld [vmem:[%s7 + $0x148] sm:$0xff]
      %v360 = vld [vmem:[%s7 + $0x150] sm:$0xff]
      %v361 = vld [vmem:[%s7 + $0x158] sm:$0xff]
      %v362 = vld [vmem:[%s7 + $0x160] sm:$0xff]
      %v363 = vld [vmem:[%s7 + $0x168] sm:$0xff]
      %v364 = vld [vmem:[%s7 + $0x170] sm:$0xff]
      %v365 = vld [vmem:[%s7 + $0x178] sm:$0xff]
      %v366 = vld [vmem:[%s7 + $0x180] sm:$0xff]
      %v367 = vld [vmem:[%s7 + $0x188] sm:$0xff]
      %v368 = vld [vmem:[%s7 + $0x190] sm:$0xff]
      %v369 = vld [vmem:[%s7 + $0x198] sm:$0xff]
      %v370 = vld [vmem:[%s7 + $0x1a0] sm:$0xff]
      %v371 = vld [vmem:[%s7 + $0x1a8] sm:$0xff]
      %p372 = scmp.eq.s32.totalorder %s24, 0
      // Predicated region
      $region53: #{residual_blocks_with_input_conv.1} parent=51 // pred_check
        %p373 = pneg %p372
      $region54: #{residual_blocks_with_input_conv.1} parent=51 // pred_check_branch
        %375 = sbr.rel (%p373) target = $region56
      $region55: #{residual_blocks_with_input_conv.1} parent=51 // pred_region
        %v376 = vld [vmem:[%s312] sm:$0xff]
        %v377 = vld [vmem:[%s312 + $0x8] sm:$0xff]
        %v378 = vld [vmem:[%s312 + $0x10] sm:$0xff]
        %v379 = vld [vmem:[%s312 + $0x18] sm:$0xff]
        %v380 = vld [vmem:[%s312 + $0x20] sm:$0xff]
        %v381 = vld [vmem:[%s312 + $0x28] sm:$0xff]
        %v382 = vld [vmem:[%s312 + $0x30] sm:$0xff]
        %v383 = vld [vmem:[%s312 + $0x38] sm:$0xff]
        %v384 = vld [vmem:[%s312 + $0x40] sm:$0xff]
        %v385 = vld [vmem:[%s312 + $0x48] sm:$0xff]
        %v386 = vld [vmem:[%s312 + $0x50] sm:$0xff]
        %v387 = vld [vmem:[%s312 + $0x58] sm:$0xff]
        %v388 = vld [vmem:[%s312 + $0x60] sm:$0xff]
        %v389 = vld [vmem:[%s312 + $0x68] sm:$0xff]
        %v390 = vld [vmem:[%s312 + $0x70] sm:$0xff]
        %v391 = vld [vmem:[%s312 + $0x78] sm:$0xff]
        %v392 = vld [vmem:[%s312 + $0x80] sm:$0xff]
        %v393 = vld [vmem:[%s312 + $0x88] sm:$0xff]
        %v394 = vld [vmem:[%s312 + $0x90] sm:$0xff]
        %v395 = vld [vmem:[%s312 + $0x98] sm:$0xff]
        %v396 = vld [vmem:[%s312 + $0xa0] sm:$0xff]
        %v397 = vld [vmem:[%s312 + $0xa8] sm:$0xff]
        %v398 = vld [vmem:[%s312 + $0xb0] sm:$0xff]
        %v399 = vld [vmem:[%s312 + $0xb8] sm:$0xff]
        %v400 = vld [vmem:[%s312 + $0xc0] sm:$0xff]
        %v401 = vld [vmem:[%s312 + $0xc8] sm:$0xff]
        %v402 = vld [vmem:[%s312 + $0xd0] sm:$0xff]
        %v403 = vld [vmem:[%s312 + $0xd8] sm:$0xff]
        %v404 = vld [vmem:[%s312 + $0xe0] sm:$0xff]
        %v405 = vld [vmem:[%s312 + $0xe8] sm:$0xff]
        %v406 = vld [vmem:[%s312 + $0xf0] sm:$0xff]
        %v407 = vld [vmem:[%s312 + $0xf8] sm:$0xff]
        %v408 = vld [vmem:[%s312 + $0x100] sm:$0xff]
        %v409 = vld [vmem:[%s312 + $0x108] sm:$0xff]
        %v410 = vld [vmem:[%s312 + $0x110] sm:$0xff]
        %v411 = vld [vmem:[%s312 + $0x118] sm:$0xff]
        %v412 = vld [vmem:[%s312 + $0x120] sm:$0xff]
        %v413 = vld [vmem:[%s312 + $0x128] sm:$0xff]
        %v414 = vld [vmem:[%s312 + $0x130] sm:$0xff]
        %v415 = vld [vmem:[%s312 + $0x138] sm:$0xff]
        %v416 = vld [vmem:[%s312 + $0x140] sm:$0xff]
        %v417 = vld [vmem:[%s312 + $0x148] sm:$0xff]
        %v418 = vld [vmem:[%s312 + $0x150] sm:$0xff]
        %v419 = vld [vmem:[%s312 + $0x158] sm:$0xff]
        %v420 = vld [vmem:[%s312 + $0x160] sm:$0xff]
        %v421 = vld [vmem:[%s312 + $0x168] sm:$0xff]
        %v422 = vld [vmem:[%s312 + $0x170] sm:$0xff]
        %v423 = vld [vmem:[%s312 + $0x178] sm:$0xff]
        %v424 = vld [vmem:[%s312 + $0x180] sm:$0xff]
        %v425 = vld [vmem:[%s312 + $0x188] sm:$0xff]
        %v426 = vld [vmem:[%s312 + $0x190] sm:$0xff]
        %v427 = vld [vmem:[%s312 + $0x198] sm:$0xff]
        %v428 = vld [vmem:[%s312 + $0x1a0] sm:$0xff]
        %v429 = vld [vmem:[%s312 + $0x1a8] sm:$0xff]
        %v430 = vld [vmem:[%s1] sm:$0xff]
        %v431 = vld [vmem:[%s1 + $0x8] sm:$0xf]
        %s432 = scalar_lea.vmem %s1, 16
        %v433 = vld [vmem:[%s432] sm:$0xff]
        %v434 = vld [vmem:[%s432 + $0x8] sm:$0xf]
        %s435 = scalar_lea.vmem %s1, 32
        %v436 = vld [vmem:[%s435] sm:$0xff]
        %v437 = vld [vmem:[%s435 + $0x8] sm:$0xf]
        %v438 = vrot.slane %v376, 7
        %v439 = vrot.slane %v377, 7
        %v440 = vrot.slane %v378, 7
        %v441 = vrot.slane %v379, 7
        %v442 = vrot.slane %v380, 7
        %v443 = vrot.slane %v381, 7
        %v444 = vrot.slane %v382, 7
        %v445 = vrot.slane %v383, 7
        %v446 = vrot.slane %v384, 7
        %v447 = vrot.slane %v385, 7
        %v448 = vrot.slane %v386, 7
        %v449 = vrot.slane %v387, 7
        %v450 = vrot.slane %v388, 7
        %v451 = vrot.slane %v389, 7
        %v452 = vrot.slane %v390, 7
        %v453 = vrot.slane %v391, 7
        %v454 = vrot.slane %v392, 7
        %v455 = vrot.slane %v393, 7
        %v456 = vrot.slane %v394, 7
        %v457 = vrot.slane %v395, 7
        %v458 = vrot.slane %v396, 7
        %v459 = vrot.slane %v397, 7
        %v460 = vrot.slane %v398, 7
        %v461 = vrot.slane %v399, 7
        %v462 = vrot.slane %v400, 7
        %v463 = vrot.slane %v401, 7
        %v464 = vrot.slane %v402, 7
        %v465 = vrot.slane %v403, 7
        %v466 = vrot.slane %v404, 7
        %v467 = vrot.slane %v405, 7
        %v468 = vrot.slane %v406, 7
        %v469 = vrot.slane %v407, 7
        %v470 = vrot.slane %v408, 7
        %v471 = vrot.slane %v409, 7
        %v472 = vrot.slane %v410, 7
        %v473 = vrot.slane %v411, 7
        %v474 = vrot.slane %v412, 7
        %v475 = vrot.slane %v413, 7
        %v476 = vrot.slane %v414, 7
        %v477 = vrot.slane %v415, 7
        %v478 = vrot.slane %v416, 7
        %v479 = vrot.slane %v417, 7
        %v480 = vrot.slane %v418, 7
        %v481 = vrot.slane %v419, 7
        %v482 = vrot.slane %v420, 7
        %v483 = vrot.slane %v421, 7
        %v484 = vrot.slane %v422, 7
        %v485 = vrot.slane %v423, 7
        %v486 = vrot.slane %v424, 7
        %v487 = vrot.slane %v425, 7
        %v488 = vrot.slane %v426, 7
        %v489 = vrot.slane %v427, 7
        %v490 = vrot.slane %v428, 7
        %v491 = vrot.slane %v429, 7
        %v492 = vlaneseq
        %v493 = vshrl.u32 %v492, 7
        %vm494 = vcmp.lt.s32.totalorder %v493, 1
        %v495 = vsel %vm494, %v490, %v491
        %v496 = vsel %vm494, %v489, %v490
        %v497 = vsel %vm494, %v488, %v489
        %v498 = vsel %vm494, %v487, %v488
        %v499 = vsel %vm494, %v486, %v487
        %v500 = vsel %vm494, %v485, %v486
        %v501 = vsel %vm494, %v484, %v485
        %v502 = vsel %vm494, %v483, %v484
        %v503 = vsel %vm494, %v482, %v483
        %v504 = vsel %vm494, %v481, %v482
        %v505 = vsel %vm494, %v480, %v481
        %v506 = vsel %vm494, %v479, %v480
        %v507 = vsel %vm494, %v478, %v479
        %v508 = vsel %vm494, %v477, %v478
        %v509 = vsel %vm494, %v476, %v477
        %v510 = vsel %vm494, %v475, %v476
        %v511 = vsel %vm494, %v474, %v475
        %v512 = vsel %vm494, %v473, %v474
        %v513 = vsel %vm494, %v472, %v473
        %v514 = vsel %vm494, %v471, %v472
        %v515 = vsel %vm494, %v470, %v471
        %v516 = vsel %vm494, %v469, %v470
        %v517 = vsel %vm494, %v468, %v469
        %v518 = vsel %vm494, %v467, %v468
        %v519 = vsel %vm494, %v466, %v467
        %v520 = vsel %vm494, %v465, %v466
        %v521 = vsel %vm494, %v464, %v465
        %v522 = vsel %vm494, %v463, %v464
        %v523 = vsel %vm494, %v462, %v463
        %v524 = vsel %vm494, %v461, %v462
        %v525 = vsel %vm494, %v460, %v461
        %v526 = vsel %vm494, %v459, %v460
        %v527 = vsel %vm494, %v458, %v459
        %v528 = vsel %vm494, %v457, %v458
        %v529 = vsel %vm494, %v456, %v457
        %v530 = vsel %vm494, %v455, %v456
        %v531 = vsel %vm494, %v454, %v455
        %v532 = vsel %vm494, %v453, %v454
        %v533 = vsel %vm494, %v452, %v453
        %v534 = vsel %vm494, %v451, %v452
        %v535 = vsel %vm494, %v450, %v451
        %v536 = vsel %vm494, %v449, %v450
        %v537 = vsel %vm494, %v448, %v449
        %v538 = vsel %vm494, %v447, %v448
        %v539 = vsel %vm494, %v446, %v447
        %v540 = vsel %vm494, %v445, %v446
        %v541 = vsel %vm494, %v444, %v445
        %v542 = vsel %vm494, %v443, %v444
        %v543 = vsel %vm494, %v442, %v443
        %v544 = vsel %vm494, %v441, %v442
        %v545 = vsel %vm494, %v440, %v441
        %v546 = vsel %vm494, %v439, %v440
        %v547 = vsel %vm494, %v438, %v439
        %v548 = vsel %vm494, %v491, %v438
        %v549 = vrot.slane %v376, 1
        %v550 = vrot.slane %v377, 1
        %v551 = vrot.slane %v378, 1
        %v552 = vrot.slane %v379, 1
        %v553 = vrot.slane %v380, 1
        %v554 = vrot.slane %v381, 1
        %v555 = vrot.slane %v382, 1
        %v556 = vrot.slane %v383, 1
        %v557 = vrot.slane %v384, 1
        %v558 = vrot.slane %v385, 1
        %v559 = vrot.slane %v386, 1
        %v560 = vrot.slane %v387, 1
        %v561 = vrot.slane %v388, 1
        %v562 = vrot.slane %v389, 1
        %v563 = vrot.slane %v390, 1
        %v564 = vrot.slane %v391, 1
        %v565 = vrot.slane %v392, 1
        %v566 = vrot.slane %v393, 1
        %v567 = vrot.slane %v394, 1
        %v568 = vrot.slane %v395, 1
        %v569 = vrot.slane %v396, 1
        %v570 = vrot.slane %v397, 1
        %v571 = vrot.slane %v398, 1
        %v572 = vrot.slane %v399, 1
        %v573 = vrot.slane %v400, 1
        %v574 = vrot.slane %v401, 1
        %v575 = vrot.slane %v402, 1
        %v576 = vrot.slane %v403, 1
        %v577 = vrot.slane %v404, 1
        %v578 = vrot.slane %v405, 1
        %v579 = vrot.slane %v406, 1
        %v580 = vrot.slane %v407, 1
        %v581 = vrot.slane %v408, 1
        %v582 = vrot.slane %v409, 1
        %v583 = vrot.slane %v410, 1
        %v584 = vrot.slane %v411, 1
        %v585 = vrot.slane %v412, 1
        %v586 = vrot.slane %v413, 1
        %v587 = vrot.slane %v414, 1
        %v588 = vrot.slane %v415, 1
        %v589 = vrot.slane %v416, 1
        %v590 = vrot.slane %v417, 1
        %v591 = vrot.slane %v418, 1
        %v592 = vrot.slane %v419, 1
        %v593 = vrot.slane %v420, 1
        %v594 = vrot.slane %v421, 1
        %v595 = vrot.slane %v422, 1
        %v596 = vrot.slane %v423, 1
        %v597 = vrot.slane %v424, 1
        %v598 = vrot.slane %v425, 1
        %v599 = vrot.slane %v426, 1
        %v600 = vrot.slane %v427, 1
        %v601 = vrot.slane %v428, 1
        %v602 = vrot.slane %v429, 1
        %vm603 = vcmp.lt.s32.totalorder %v493, 7
        %v604 = vsel %vm603, %v601, %v602
        %v605 = vsel %vm603, %v600, %v601
        %v606 = vsel %vm603, %v599, %v600
        %v607 = vsel %vm603, %v598, %v599
        %v608 = vsel %vm603, %v597, %v598
        %v609 = vsel %vm603, %v596, %v597
        %v610 = vsel %vm603, %v595, %v596
        %v611 = vsel %vm603, %v594, %v595
        %v612 = vsel %vm603, %v593, %v594
        %v613 = vsel %vm603, %v592, %v593
        %v614 = vsel %vm603, %v591, %v592
        %v615 = vsel %vm603, %v590, %v591
        %v616 = vsel %vm603, %v589, %v590
        %v617 = vsel %vm603, %v588, %v589
        %v618 = vsel %vm603, %v587, %v588
        %v619 = vsel %vm603, %v586, %v587
        %v620 = vsel %vm603, %v585, %v586
        %v621 = vsel %vm603, %v584, %v585
        %v622 = vsel %vm603, %v583, %v584
        %v623 = vsel %vm603, %v582, %v583
        %v624 = vsel %vm603, %v581, %v582
        %v625 = vsel %vm603, %v580, %v581
        %v626 = vsel %vm603, %v579, %v580
        %v627 = vsel %vm603, %v578, %v579
        %v628 = vsel %vm603, %v577, %v578
        %v629 = vsel %vm603, %v576, %v577
        %v630 = vsel %vm603, %v575, %v576
        %v631 = vsel %vm603, %v574, %v575
        %v632 = vsel %vm603, %v573, %v574
        %v633 = vsel %vm603, %v572, %v573
        %v634 = vsel %vm603, %v571, %v572
        %v635 = vsel %vm603, %v570, %v571
        %v636 = vsel %vm603, %v569, %v570
        %v637 = vsel %vm603, %v568, %v569
        %v638 = vsel %vm603, %v567, %v568
        %v639 = vsel %vm603, %v566, %v567
        %v640 = vsel %vm603, %v565, %v566
        %v641 = vsel %vm603, %v564, %v565
        %v642 = vsel %vm603, %v563, %v564
        %v643 = vsel %vm603, %v562, %v563
        %v644 = vsel %vm603, %v561, %v562
        %v645 = vsel %vm603, %v560, %v561
        %v646 = vsel %vm603, %v559, %v560
        %v647 = vsel %vm603, %v558, %v559
        %v648 = vsel %vm603, %v557, %v558
        %v649 = vsel %vm603, %v556, %v557
        %v650 = vsel %vm603, %v555, %v556
        %v651 = vsel %vm603, %v554, %v555
        %v652 = vsel %vm603, %v553, %v554
        %v653 = vsel %vm603, %v552, %v553
        %v654 = vsel %vm603, %v551, %v552
        %v655 = vsel %vm603, %v550, %v551
        %v656 = vsel %vm603, %v549, %v550
        %v657 = vsel %vm603, %v602, %v549
        %712 = vrot.lane.b32.xlu0 %v376, 4
        %v713 = vpop.permute.xlu0 %712
        %714 = vrot.lane.b32.xlu0 %v377, 4
        %v715 = vpop.permute.xlu0 %714
        %716 = vrot.lane.b32.xlu0 %v378, 4
        %v717 = vpop.permute.xlu0 %716
        %718 = vrot.lane.b32.xlu0 %v379, 4
        %v719 = vpop.permute.xlu0 %718
        %720 = vrot.lane.b32.xlu0 %v380, 4
        %v721 = vpop.permute.xlu0 %720
        %722 = vrot.lane.b32.xlu0 %v381, 4
        %v723 = vpop.permute.xlu0 %722
        %724 = vrot.lane.b32.xlu0 %v382, 4
        %v725 = vpop.permute.xlu0 %724
        %726 = vrot.lane.b32.xlu0 %v383, 4
        %v727 = vpop.permute.xlu0 %726
        %728 = vrot.lane.b32.xlu0 %v384, 4
        %v729 = vpop.permute.xlu0 %728
        %730 = vrot.lane.b32.xlu0 %v385, 4
        %v731 = vpop.permute.xlu0 %730
        %732 = vrot.lane.b32.xlu0 %v386, 4
        %v733 = vpop.permute.xlu0 %732
        %734 = vrot.lane.b32.xlu0 %v387, 4
        %v735 = vpop.permute.xlu0 %734
        %736 = vrot.lane.b32.xlu0 %v388, 4
        %v737 = vpop.permute.xlu0 %736
        %738 = vrot.lane.b32.xlu0 %v389, 4
        %v739 = vpop.permute.xlu0 %738
        %740 = vrot.lane.b32.xlu0 %v390, 4
        %v741 = vpop.permute.xlu0 %740
        %742 = vrot.lane.b32.xlu0 %v391, 4
        %v743 = vpop.permute.xlu0 %742
        %744 = vrot.lane.b32.xlu0 %v392, 4
        %v745 = vpop.permute.xlu0 %744
        %746 = vrot.lane.b32.xlu0 %v393, 4
        %v747 = vpop.permute.xlu0 %746
        %748 = vrot.lane.b32.xlu0 %v394, 4
        %v749 = vpop.permute.xlu0 %748
        %750 = vrot.lane.b32.xlu0 %v395, 4
        %v751 = vpop.permute.xlu0 %750
        %752 = vrot.lane.b32.xlu0 %v396, 4
        %v753 = vpop.permute.xlu0 %752
        %754 = vrot.lane.b32.xlu0 %v397, 4
        %v755 = vpop.permute.xlu0 %754
        %756 = vrot.lane.b32.xlu0 %v398, 4
        %v757 = vpop.permute.xlu0 %756
        %758 = vrot.lane.b32.xlu0 %v399, 4
        %v759 = vpop.permute.xlu0 %758
        %760 = vrot.lane.b32.xlu0 %v400, 4
        %v761 = vpop.permute.xlu0 %760
        %762 = vrot.lane.b32.xlu0 %v401, 4
        %v763 = vpop.permute.xlu0 %762
        %764 = vrot.lane.b32.xlu0 %v402, 4
        %v765 = vpop.permute.xlu0 %764
        %766 = vrot.lane.b32.xlu0 %v403, 4
        %v767 = vpop.permute.xlu0 %766
        %768 = vrot.lane.b32.xlu0 %v404, 4
        %v769 = vpop.permute.xlu0 %768
        %770 = vrot.lane.b32.xlu0 %v405, 4
        %v771 = vpop.permute.xlu0 %770
        %772 = vrot.lane.b32.xlu0 %v406, 4
        %v773 = vpop.permute.xlu0 %772
        %774 = vrot.lane.b32.xlu0 %v407, 4
        %v775 = vpop.permute.xlu0 %774
        %776 = vrot.lane.b32.xlu0 %v408, 4
        %v777 = vpop.permute.xlu0 %776
        %778 = vrot.lane.b32.xlu0 %v409, 4
        %v779 = vpop.permute.xlu0 %778
        %780 = vrot.lane.b32.xlu0 %v410, 4
        %v781 = vpop.permute.xlu0 %780
        %782 = vrot.lane.b32.xlu0 %v411, 4
        %v783 = vpop.permute.xlu0 %782
        %784 = vrot.lane.b32.xlu0 %v412, 4
        %v785 = vpop.permute.xlu0 %784
        %786 = vrot.lane.b32.xlu0 %v413, 4
        %v787 = vpop.permute.xlu0 %786
        %788 = vrot.lane.b32.xlu0 %v414, 4
        %v789 = vpop.permute.xlu0 %788
        %790 = vrot.lane.b32.xlu0 %v415, 4
        %v791 = vpop.permute.xlu0 %790
        %792 = vrot.lane.b32.xlu0 %v416, 4
        %v793 = vpop.permute.xlu0 %792
        %794 = vrot.lane.b32.xlu0 %v417, 4
        %v795 = vpop.permute.xlu0 %794
        %796 = vrot.lane.b32.xlu0 %v418, 4
        %v797 = vpop.permute.xlu0 %796
        %798 = vrot.lane.b32.xlu0 %v419, 4
        %v799 = vpop.permute.xlu0 %798
        %800 = vrot.lane.b32.xlu0 %v420, 4
        %v801 = vpop.permute.xlu0 %800
        %802 = vrot.lane.b32.xlu0 %v421, 4
        %v803 = vpop.permute.xlu0 %802
        %804 = vrot.lane.b32.xlu0 %v422, 4
        %v805 = vpop.permute.xlu0 %804
        %806 = vrot.lane.b32.xlu0 %v423, 4
        %v807 = vpop.permute.xlu0 %806
        %808 = vrot.lane.b32.xlu0 %v424, 4
        %v809 = vpop.permute.xlu0 %808
        %810 = vrot.lane.b32.xlu0 %v425, 4
        %v811 = vpop.permute.xlu0 %810
        %812 = vrot.lane.b32.xlu0 %v426, 4
        %v813 = vpop.permute.xlu0 %812
        %814 = vrot.lane.b32.xlu0 %v427, 4
        %v815 = vpop.permute.xlu0 %814
        %816 = vrot.lane.b32.xlu0 %v428, 4
        %v817 = vpop.permute.xlu0 %816
        %818 = vrot.lane.b32.xlu0 %v429, 4
        %v819 = vpop.permute.xlu0 %818
        %928 = vrot.lane.b32.xlu0 %v656, 8
        %v929 = vpop.permute.xlu0 %928
        %930 = vrot.lane.b32.xlu0 %v655, 8
        %v931 = vpop.permute.xlu0 %930
        %932 = vrot.lane.b32.xlu0 %v654, 8
        %v933 = vpop.permute.xlu0 %932
        %934 = vrot.lane.b32.xlu0 %v653, 8
        %v935 = vpop.permute.xlu0 %934
        %936 = vrot.lane.b32.xlu0 %v652, 8
        %v937 = vpop.permute.xlu0 %936
        %938 = vrot.lane.b32.xlu0 %v651, 8
        %v939 = vpop.permute.xlu0 %938
        %940 = vrot.lane.b32.xlu0 %v650, 8
        %v941 = vpop.permute.xlu0 %940
        %942 = vrot.lane.b32.xlu0 %v649, 8
        %v943 = vpop.permute.xlu0 %942
        %944 = vrot.lane.b32.xlu0 %v648, 8
        %v945 = vpop.permute.xlu0 %944
        %946 = vrot.lane.b32.xlu0 %v647, 8
        %v947 = vpop.permute.xlu0 %946
        %948 = vrot.lane.b32.xlu0 %v646, 8
        %v949 = vpop.permute.xlu0 %948
        %950 = vrot.lane.b32.xlu0 %v645, 8
        %v951 = vpop.permute.xlu0 %950
        %952 = vrot.lane.b32.xlu0 %v644, 8
        %v953 = vpop.permute.xlu0 %952
        %954 = vrot.lane.b32.xlu0 %v643, 8
        %v955 = vpop.permute.xlu0 %954
        %956 = vrot.lane.b32.xlu0 %v642, 8
        %v957 = vpop.permute.xlu0 %956
        %958 = vrot.lane.b32.xlu0 %v641, 8
        %v959 = vpop.permute.xlu0 %958
        %960 = vrot.lane.b32.xlu0 %v640, 8
        %v961 = vpop.permute.xlu0 %960
        %962 = vrot.lane.b32.xlu0 %v639, 8
        %v963 = vpop.permute.xlu0 %962
        %964 = vrot.lane.b32.xlu0 %v638, 8
        %v965 = vpop.permute.xlu0 %964
        %966 = vrot.lane.b32.xlu0 %v637, 8
        %v967 = vpop.permute.xlu0 %966
        %968 = vrot.lane.b32.xlu0 %v636, 8
        %v969 = vpop.permute.xlu0 %968
        %970 = vrot.lane.b32.xlu0 %v635, 8
        %v971 = vpop.permute.xlu0 %970
        %972 = vrot.lane.b32.xlu0 %v634, 8
        %v973 = vpop.permute.xlu0 %972
        %974 = vrot.lane.b32.xlu0 %v633, 8
        %v975 = vpop.permute.xlu0 %974
        %976 = vrot.lane.b32.xlu0 %v632, 8
        %v977 = vpop.permute.xlu0 %976
        %978 = vrot.lane.b32.xlu0 %v631, 8
        %v979 = vpop.permute.xlu0 %978
        %980 = vrot.lane.b32.xlu0 %v630, 8
        %v981 = vpop.permute.xlu0 %980
        %982 = vrot.lane.b32.xlu0 %v629, 8
        %v983 = vpop.permute.xlu0 %982
        %984 = vrot.lane.b32.xlu0 %v628, 8
        %v985 = vpop.permute.xlu0 %984
        %986 = vrot.lane.b32.xlu0 %v627, 8
        %v987 = vpop.permute.xlu0 %986
        %988 = vrot.lane.b32.xlu0 %v626, 8
        %v989 = vpop.permute.xlu0 %988
        %990 = vrot.lane.b32.xlu0 %v625, 8
        %v991 = vpop.permute.xlu0 %990
        %992 = vrot.lane.b32.xlu0 %v624, 8
        %v993 = vpop.permute.xlu0 %992
        %994 = vrot.lane.b32.xlu0 %v623, 8
        %v995 = vpop.permute.xlu0 %994
        %996 = vrot.lane.b32.xlu0 %v622, 8
        %v997 = vpop.permute.xlu0 %996
        %998 = vrot.lane.b32.xlu0 %v621, 8
        %v999 = vpop.permute.xlu0 %998
        %1000 = vrot.lane.b32.xlu0 %v620, 8
        %v1001 = vpop.permute.xlu0 %1000
        %1002 = vrot.lane.b32.xlu0 %v619, 8
        %v1003 = vpop.permute.xlu0 %1002
        %1004 = vrot.lane.b32.xlu0 %v618, 8
        %v1005 = vpop.permute.xlu0 %1004
        %1006 = vrot.lane.b32.xlu0 %v617, 8
        %v1007 = vpop.permute.xlu0 %1006
        %1008 = vrot.lane.b32.xlu0 %v616, 8
        %v1009 = vpop.permute.xlu0 %1008
        %1010 = vrot.lane.b32.xlu0 %v615, 8
        %v1011 = vpop.permute.xlu0 %1010
        %1012 = vrot.lane.b32.xlu0 %v614, 8
        %v1013 = vpop.permute.xlu0 %1012
        %1014 = vrot.lane.b32.xlu0 %v613, 8
        %v1015 = vpop.permute.xlu0 %1014
        %1016 = vrot.lane.b32.xlu0 %v612, 8
        %v1017 = vpop.permute.xlu0 %1016
        %1018 = vrot.lane.b32.xlu0 %v611, 8
        %v1019 = vpop.permute.xlu0 %1018
        %1020 = vrot.lane.b32.xlu0 %v610, 8
        %v1021 = vpop.permute.xlu0 %1020
        %1022 = vrot.lane.b32.xlu0 %v609, 8
        %v1023 = vpop.permute.xlu0 %1022
        %1024 = vrot.lane.b32.xlu0 %v608, 8
        %v1025 = vpop.permute.xlu0 %1024
        %1026 = vrot.lane.b32.xlu0 %v607, 8
        %v1027 = vpop.permute.xlu0 %1026
        %1028 = vrot.lane.b32.xlu0 %v606, 8
        %v1029 = vpop.permute.xlu0 %1028
        %1030 = vrot.lane.b32.xlu0 %v605, 8
        %v1031 = vpop.permute.xlu0 %1030
        %1032 = vrot.lane.b32.xlu0 %v604, 8
        %v1033 = vpop.permute.xlu0 %1032
        %1034 = vrot.lane.b32.xlu0 %v657, 8
        %v1035 = vpop.permute.xlu0 %1034
        %vm1090 = vcmask 31744
        %v1091 = vsel %vm1090, %v548, %v713
        %v1092 = vsel %vm1090, %v547, %v715
        %v1093 = vsel %vm1090, %v546, %v717
        %v1094 = vsel %vm1090, %v545, %v719
        %v1095 = vsel %vm1090, %v544, %v721
        %v1096 = vsel %vm1090, %v543, %v723
        %v1097 = vsel %vm1090, %v542, %v725
        %v1098 = vsel %vm1090, %v541, %v727
        %v1099 = vsel %vm1090, %v540, %v729
        %v1100 = vsel %vm1090, %v539, %v731
        %v1101 = vsel %vm1090, %v538, %v733
        %v1102 = vsel %vm1090, %v537, %v735
        %v1103 = vsel %vm1090, %v536, %v737
        %v1104 = vsel %vm1090, %v535, %v739
        %v1105 = vsel %vm1090, %v534, %v741
        %v1106 = vsel %vm1090, %v533, %v743
        %v1107 = vsel %vm1090, %v532, %v745
        %v1108 = vsel %vm1090, %v531, %v747
        %v1109 = vsel %vm1090, %v530, %v749
        %v1110 = vsel %vm1090, %v529, %v751
        %v1111 = vsel %vm1090, %v528, %v753
        %v1112 = vsel %vm1090, %v527, %v755
        %v1113 = vsel %vm1090, %v526, %v757
        %v1114 = vsel %vm1090, %v525, %v759
        %v1115 = vsel %vm1090, %v524, %v761
        %v1116 = vsel %vm1090, %v523, %v763
        %v1117 = vsel %vm1090, %v522, %v765
        %v1118 = vsel %vm1090, %v521, %v767
        %v1119 = vsel %vm1090, %v520, %v769
        %v1120 = vsel %vm1090, %v519, %v771
        %v1121 = vsel %vm1090, %v518, %v773
        %v1122 = vsel %vm1090, %v517, %v775
        %v1123 = vsel %vm1090, %v516, %v777
        %v1124 = vsel %vm1090, %v515, %v779
        %v1125 = vsel %vm1090, %v514, %v781
        %v1126 = vsel %vm1090, %v513, %v783
        %v1127 = vsel %vm1090, %v512, %v785
        %v1128 = vsel %vm1090, %v511, %v787
        %v1129 = vsel %vm1090, %v510, %v789
        %v1130 = vsel %vm1090, %v509, %v791
        %v1131 = vsel %vm1090, %v508, %v793
        %v1132 = vsel %vm1090, %v507, %v795
        %v1133 = vsel %vm1090, %v506, %v797
        %v1134 = vsel %vm1090, %v505, %v799
        %v1135 = vsel %vm1090, %v504, %v801
        %v1136 = vsel %vm1090, %v503, %v803
        %v1137 = vsel %vm1090, %v502, %v805
        %v1138 = vsel %vm1090, %v501, %v807
        %v1139 = vsel %vm1090, %v500, %v809
        %v1140 = vsel %vm1090, %v499, %v811
        %v1141 = vsel %vm1090, %v498, %v813
        %v1142 = vsel %vm1090, %v497, %v815
        %v1143 = vsel %vm1090, %v496, %v817
        %v1144 = vsel %vm1090, %v495, %v819
        %vm1145 = vcmask 64512
        %v1146 = vsel %vm1145, %v1091, %v929
        %v1147 = vsel %vm1145, %v1092, %v931
        %v1148 = vsel %vm1145, %v1093, %v933
        %v1149 = vsel %vm1145, %v1094, %v935
        %v1150 = vsel %vm1145, %v1095, %v937
        %v1151 = vsel %vm1145, %v1096, %v939
        %v1152 = vsel %vm1145, %v1097, %v941
        %v1153 = vsel %vm1145, %v1098, %v943
        %v1154 = vsel %vm1145, %v1099, %v945
        %v1155 = vsel %vm1145, %v1100, %v947
        %v1156 = vsel %vm1145, %v1101, %v949
        %v1157 = vsel %vm1145, %v1102, %v951
        %v1158 = vsel %vm1145, %v1103, %v953
        %v1159 = vsel %vm1145, %v1104, %v955
        %v1160 = vsel %vm1145, %v1105, %v957
        %v1161 = vsel %vm1145, %v1106, %v959
        %v1162 = vsel %vm1145, %v1107, %v961
        %v1163 = vsel %vm1145, %v1108, %v963
        %v1164 = vsel %vm1145, %v1109, %v965
        %v1165 = vsel %vm1145, %v1110, %v967
        %v1166 = vsel %vm1145, %v1111, %v969
        %v1167 = vsel %vm1145, %v1112, %v971
        %v1168 = vsel %vm1145, %v1113, %v973
        %v1169 = vsel %vm1145, %v1114, %v975
        %v1170 = vsel %vm1145, %v1115, %v977
        %v1171 = vsel %vm1145, %v1116, %v979
        %v1172 = vsel %vm1145, %v1117, %v981
        %v1173 = vsel %vm1145, %v1118, %v983
        %v1174 = vsel %vm1145, %v1119, %v985
        %v1175 = vsel %vm1145, %v1120, %v987
        %v1176 = vsel %vm1145, %v1121, %v989
        %v1177 = vsel %vm1145, %v1122, %v991
        %v1178 = vsel %vm1145, %v1123, %v993
        %v1179 = vsel %vm1145, %v1124, %v995
        %v1180 = vsel %vm1145, %v1125, %v997
        %v1181 = vsel %vm1145, %v1126, %v999
        %v1182 = vsel %vm1145, %v1127, %v1001
        %v1183 = vsel %vm1145, %v1128, %v1003
        %v1184 = vsel %vm1145, %v1129, %v1005
        %v1185 = vsel %vm1145, %v1130, %v1007
        %v1186 = vsel %vm1145, %v1131, %v1009
        %v1187 = vsel %vm1145, %v1132, %v1011
        %v1188 = vsel %vm1145, %v1133, %v1013
        %v1189 = vsel %vm1145, %v1134, %v1015
        %v1190 = vsel %vm1145, %v1135, %v1017
        %v1191 = vsel %vm1145, %v1136, %v1019
        %v1192 = vsel %vm1145, %v1137, %v1021
        %v1193 = vsel %vm1145, %v1138, %v1023
        %v1194 = vsel %vm1145, %v1139, %v1025
        %v1195 = vsel %vm1145, %v1140, %v1027
        %v1196 = vsel %vm1145, %v1141, %v1029
        %v1197 = vsel %vm1145, %v1142, %v1031
        %v1198 = vsel %vm1145, %v1143, %v1033
        %v1199 = vsel %vm1145, %v1144, %v1035
        %vm1200 = vcmask 97280
        %v1202 = vsel %vm1200, %v1146, 0
        %v1205 = vsel %vm1200, %v1147, 0
        %v1208 = vsel %vm1200, %v1148, 0
        %v1211 = vsel %vm1200, %v1149, 0
        %v1214 = vsel %vm1200, %v1150, 0
        %v1217 = vsel %vm1200, %v1151, 0
        %v1220 = vsel %vm1200, %v1152, 0
        %v1223 = vsel %vm1200, %v1153, 0
        %v1226 = vsel %vm1200, %v1154, 0
        %v1229 = vsel %vm1200, %v1155, 0
        %v1232 = vsel %vm1200, %v1156, 0
        %v1235 = vsel %vm1200, %v1157, 0
        %v1238 = vsel %vm1200, %v1158, 0
        %v1241 = vsel %vm1200, %v1159, 0
        %v1244 = vsel %vm1200, %v1160, 0
        %v1247 = vsel %vm1200, %v1161, 0
        %v1250 = vsel %vm1200, %v1162, 0
        %v1253 = vsel %vm1200, %v1163, 0
        %v1256 = vsel %vm1200, %v1164, 0
        %v1259 = vsel %vm1200, %v1165, 0
        %v1262 = vsel %vm1200, %v1166, 0
        %v1265 = vsel %vm1200, %v1167, 0
        %v1268 = vsel %vm1200, %v1168, 0
        %v1271 = vsel %vm1200, %v1169, 0
        %v1274 = vsel %vm1200, %v1170, 0
        %v1277 = vsel %vm1200, %v1171, 0
        %v1280 = vsel %vm1200, %v1172, 0
        %v1283 = vsel %vm1200, %v1173, 0
        %v1286 = vsel %vm1200, %v1174, 0
        %v1289 = vsel %vm1200, %v1175, 0
        %v1292 = vsel %vm1200, %v1176, 0
        %v1295 = vsel %vm1200, %v1177, 0
        %v1298 = vsel %vm1200, %v1178, 0
        %v1301 = vsel %vm1200, %v1179, 0
        %v1304 = vsel %vm1200, %v1180, 0
        %v1307 = vsel %vm1200, %v1181, 0
        %v1310 = vsel %vm1200, %v1182, 0
        %v1313 = vsel %vm1200, %v1183, 0
        %v1316 = vsel %vm1200, %v1184, 0
        %v1319 = vsel %vm1200, %v1185, 0
        %v1322 = vsel %vm1200, %v1186, 0
        %v1325 = vsel %vm1200, %v1187, 0
        %v1328 = vsel %vm1200, %v1188, 0
        %v1331 = vsel %vm1200, %v1189, 0
        %v1334 = vsel %vm1200, %v1190, 0
        %v1337 = vsel %vm1200, %v1191, 0
        %v1340 = vsel %vm1200, %v1192, 0
        %v1343 = vsel %vm1200, %v1193, 0
        %v1346 = vsel %vm1200, %v1194, 0
        %v1349 = vsel %vm1200, %v1195, 0
        %v1352 = vsel %vm1200, %v1196, 0
        %v1355 = vsel %vm1200, %v1197, 0
        %v1358 = vsel %vm1200, %v1198, 0
        %v1361 = vsel %vm1200, %v1199, 0
        %vm1363 = vcmask 1043456
        %v1365 = vsel %vm1363, %v434, 0
        %1367 = vmatprep.subr.mxu0 0.0
        %1368 = vmatpush1.msra.mxu0 %v433
        %1369 = vmatprep.subr.mxu0 0.0
        %1370 = vmatpush1.msra.mxu0 %v1365
        %1371 = vmatprep.subr.mxu0 0.0
        %1372 = vmatpush1.msra.mxu0 0.0
        %1373 = vmatprep.subr.mxu0 0.0
        %1374 = vmatpush1.msra.mxu0 0.0
        %1375 = vmatprep.subr.mxu0 0.0
        %1376 = vmatpush1.msra.mxu0 0.0
        %1377 = vmatprep.subr.mxu0 0.0
        %1378 = vmatpush1.msra.mxu0 0.0
        %1379 = vmatprep.subr.mxu0 0.0
        %1380 = vmatpush1.msra.mxu0 0.0
        %1381 = vmatprep.subr.mxu0 0.0
        %1382 = vmatpush1.msra.mxu0 0.0
        %1383 = vmatprep.subr.mxu0 0.0
        %1384 = vmatpush1.msra.mxu0 0.0
        %1385 = vmatprep.subr.mxu0 0.0
        %1386 = vmatpush1.msra.mxu0 0.0
        %1387 = vmatprep.subr.mxu0 0.0
        %1388 = vmatpush1.msra.mxu0 0.0
        %1389 = vmatprep.subr.mxu0 0.0
        %1390 = vmatpush1.msra.mxu0 0.0
        %1391 = vmatprep.subr.mxu0 0.0
        %1392 = vmatpush1.msra.mxu0 0.0
        %1393 = vmatprep.subr.mxu0 0.0
        %1394 = vmatpush1.msra.mxu0 0.0
        %1395 = vmatprep.subr.mxu0 0.0
        %1396 = vmatpush1.msra.mxu0 0.0
        %1397 = vmatprep.subr.mxu0 0.0
        %1398 = vmatpush1.msra.mxu0 0.0
        %1399 = vmatprep.subr.mxu0 0.0
        %1400 = vmatpush1.msra.mxu0 0.0
        %1401 = vmatprep.subr.mxu0 0.0
        %1402 = vmatpush1.msra.mxu0 0.0
        %1403 = vmatprep.subr.mxu0 0.0
        %1404 = vmatpush1.msra.mxu0 0.0
        %1405 = vmatprep.subr.mxu0 0.0
        %1406 = vmatpush1.msra.mxu0 0.0
        %1407 = vmatprep.subr.mxu0 0.0
        %1408 = vmatpush1.msra.mxu0 0.0
        %1409 = vmatprep.subr.mxu0 0.0
        %1410 = vmatpush1.msra.mxu0 0.0
        %1411 = vmatprep.subr.mxu0 0.0
        %1412 = vmatpush1.msra.mxu0 0.0
        %1413 = vmatprep.subr.mxu0 0.0
        %1414 = vmatpush1.msra.mxu0 0.0
        %1415 = vmatprep.subr.mxu0 0.0
        %1416 = vmatpush1.msra.mxu0 0.0
        %1417 = vmatprep.subr.mxu0 0.0
        %1418 = vmatpush1.msra.mxu0 0.0
        %1419 = vmatprep.subr.mxu0 0.0
        %1420 = vmatpush1.msra.mxu0 0.0
        %1421 = vmatprep.subr.mxu0 0.0
        %1422 = vmatpush1.msra.mxu0 0.0
        %1423 = vmatprep.subr.mxu0 0.0
        %1424 = vmatpush1.msra.mxu0 0.0
        %1425 = vmatprep.subr.mxu0 0.0
        %1426 = vmatpush1.msra.mxu0 0.0
        %1427 = vmatprep.subr.mxu0 0.0
        %1428 = vmatpush1.msra.mxu0 0.0
        %1429 = vmatprep.subr.mxu0 0.0
        %1430 = vmatpush1.msra.mxu0 0.0
        %1431 = vmatprep.mubr.f32.mxu0 0.0
        %1432 = vmatmul.mubr.f32.gmra.mrb[0].mxu0 %v1202
        %v1433 = vpop.f32.mrb[0].mxu0
        %v1434 = vadd.f32 0.0, %v1433
        %v1435 = vpop.f32.mrb[0].mxu0
        %1436 = vmatprep.mubr.f32.mxu0 0.0
        %1437 = vmatmul.mubr.f32.gmra.mrb[0].mxu0 %v1205
        %v1438 = vpop.f32.mrb[0].mxu0
        %v1439 = vadd.f32 0.0, %v1438
        %v1440 = vpop.f32.mrb[0].mxu0
        %1441 = vmatprep.mubr.f32.mxu0 0.0
        %1442 = vmatmul.mubr.f32.gmra.mrb[0].mxu0 %v1208
        %v1443 = vpop.f32.mrb[0].mxu0
        %v1444 = vadd.f32 0.0, %v1443
        %v1445 = vpop.f32.mrb[0].mxu0
        %1446 = vmatprep.mubr.f32.mxu0 0.0
        %1447 = vmatmul.mubr.f32.gmra.mrb[0].mxu0 %v1211
        %v1448 = vpop.f32.mrb[0].mxu0
        %v1449 = vadd.f32 0.0, %v1448
        %v1450 = vpop.f32.mrb[0].mxu0
        %1451 = vmatprep.mubr.f32.mxu0 0.0
        %1452 = vmatmul.mubr.f32.gmra.mrb[0].mxu0 %v1214
        %v1453 = vpop.f32.mrb[0].mxu0
        %v1454 = vadd.f32 0.0, %v1453
        %v1455 = vpop.f32.mrb[0].mxu0
        %1456 = vmatprep.mubr.f32.mxu0 0.0
        %1457 = vmatmul.mubr.f32.gmra.mrb[0].mxu0 %v1217
        %v1458 = vpop.f32.mrb[0].mxu0
        %v1459 = vadd.f32 0.0, %v1458
        %v1460 = vpop.f32.mrb[0].mxu0
        %1461 = vmatprep.mubr.f32.mxu0 0.0
        %1462 = vmatmul.mubr.f32.gmra.mrb[0].mxu0 %v1220
        %v1463 = vpop.f32.mrb[0].mxu0
        %v1464 = vadd.f32 0.0, %v1463
        %v1465 = vpop.f32.mrb[0].mxu0
        %1466 = vmatprep.mubr.f32.mxu0 0.0
        %1467 = vmatmul.mubr.f32.gmra.mrb[0].mxu0 %v1223
        %v1468 = vpop.f32.mrb[0].mxu0
        %v1469 = vadd.f32 0.0, %v1468
        %v1470 = vpop.f32.mrb[0].mxu0
        %1471 = vmatprep.mubr.f32.mxu0 0.0
        %1472 = vmatmul.mubr.f32.gmra.mrb[0].mxu0 %v1226
        %v1473 = vpop.f32.mrb[0].mxu0
        %v1474 = vadd.f32 0.0, %v1473
        %v1475 = vpop.f32.mrb[0].mxu0
        %1476 = vmatprep.mubr.f32.mxu0 0.0
        %1477 = vmatmul.mubr.f32.gmra.mrb[0].mxu0 %v1229
        %v1478 = vpop.f32.mrb[0].mxu0
        %v1479 = vadd.f32 0.0, %v1478
        %v1480 = vpop.f32.mrb[0].mxu0
        %1481 = vmatprep.mubr.f32.mxu0 0.0
        %1482 = vmatmul.mubr.f32.gmra.mrb[0].mxu0 %v1232
        %v1483 = vpop.f32.mrb[0].mxu0
        %v1484 = vadd.f32 0.0, %v1483
        %v1485 = vpop.f32.mrb[0].mxu0
        %1486 = vmatprep.mubr.f32.mxu0 0.0
        %1487 = vmatmul.mubr.f32.gmra.mrb[0].mxu0 %v1235
        %v1488 = vpop.f32.mrb[0].mxu0
        %v1489 = vadd.f32 0.0, %v1488
        %v1490 = vpop.f32.mrb[0].mxu0
        %1491 = vmatprep.mubr.f32.mxu0 0.0
        %1492 = vmatmul.mubr.f32.gmra.mrb[0].mxu0 %v1238
        %v1493 = vpop.f32.mrb[0].mxu0
        %v1494 = vadd.f32 0.0, %v1493
        %v1495 = vpop.f32.mrb[0].mxu0
        %1496 = vmatprep.mubr.f32.mxu0 0.0
        %1497 = vmatmul.mubr.f32.gmra.mrb[0].mxu0 %v1241
        %v1498 = vpop.f32.mrb[0].mxu0
        %v1499 = vadd.f32 0.0, %v1498
        %v1500 = vpop.f32.mrb[0].mxu0
        %1501 = vmatprep.mubr.f32.mxu0 0.0
        %1502 = vmatmul.mubr.f32.gmra.mrb[0].mxu0 %v1244
        %v1503 = vpop.f32.mrb[0].mxu0
        %v1504 = vadd.f32 0.0, %v1503
        %v1505 = vpop.f32.mrb[0].mxu0
        %1506 = vmatprep.mubr.f32.mxu0 0.0
        %1507 = vmatmul.mubr.f32.gmra.mrb[0].mxu0 %v1247
        %v1508 = vpop.f32.mrb[0].mxu0
        %v1509 = vadd.f32 0.0, %v1508
        %v1510 = vpop.f32.mrb[0].mxu0
        %1511 = vmatprep.mubr.f32.mxu0 0.0
        %1512 = vmatmul.mubr.f32.gmra.mrb[0].mxu0 %v1250
        %v1513 = vpop.f32.mrb[0].mxu0
        %v1514 = vadd.f32 0.0, %v1513
        %v1515 = vpop.f32.mrb[0].mxu0
        %1516 = vmatprep.mubr.f32.mxu0 0.0
        %1517 = vmatmul.mubr.f32.gmra.mrb[0].mxu0 %v1253
        %v1518 = vpop.f32.mrb[0].mxu0
        %v1519 = vadd.f32 0.0, %v1518
        %v1520 = vpop.f32.mrb[0].mxu0
        %1521 = vmatprep.mubr.f32.mxu0 0.0
        %1522 = vmatmul.mubr.f32.gmra.mrb[0].mxu0 %v1256
        %v1523 = vpop.f32.mrb[0].mxu0
        %v1524 = vadd.f32 0.0, %v1523
        %v1525 = vpop.f32.mrb[0].mxu0
        %1526 = vmatprep.mubr.f32.mxu0 0.0
        %1527 = vmatmul.mubr.f32.gmra.mrb[0].mxu0 %v1259
        %v1528 = vpop.f32.mrb[0].mxu0
        %v1529 = vadd.f32 0.0, %v1528
        %v1530 = vpop.f32.mrb[0].mxu0
        %1531 = vmatprep.mubr.f32.mxu0 0.0
        %1532 = vmatmul.mubr.f32.gmra.mrb[0].mxu0 %v1262
        %v1533 = vpop.f32.mrb[0].mxu0
        %v1534 = vadd.f32 0.0, %v1533
        %v1535 = vpop.f32.mrb[0].mxu0
        %1536 = vmatprep.mubr.f32.mxu0 0.0
        %1537 = vmatmul.mubr.f32.gmra.mrb[0].mxu0 %v1265
        %v1538 = vpop.f32.mrb[0].mxu0
        %v1539 = vadd.f32 0.0, %v1538
        %v1540 = vpop.f32.mrb[0].mxu0
        %1541 = vmatprep.mubr.f32.mxu0 0.0
        %1542 = vmatmul.mubr.f32.gmra.mrb[0].mxu0 %v1268
        %v1543 = vpop.f32.mrb[0].mxu0
        %v1544 = vadd.f32 0.0, %v1543
        %v1545 = vpop.f32.mrb[0].mxu0
        %1546 = vmatprep.mubr.f32.mxu0 0.0
        %1547 = vmatmul.mubr.f32.gmra.mrb[0].mxu0 %v1271
        %v1548 = vpop.f32.mrb[0].mxu0
        %v1549 = vadd.f32 0.0, %v1548
        %v1550 = vpop.f32.mrb[0].mxu0
        %1551 = vmatprep.mubr.f32.mxu0 0.0
        %1552 = vmatmul.mubr.f32.gmra.mrb[0].mxu0 %v1274
        %v1553 = vpop.f32.mrb[0].mxu0
        %v1554 = vadd.f32 0.0, %v1553
        %v1555 = vpop.f32.mrb[0].mxu0
        %1556 = vmatprep.mubr.f32.mxu0 0.0
        %1557 = vmatmul.mubr.f32.gmra.mrb[0].mxu0 %v1277
        %v1558 = vpop.f32.mrb[0].mxu0
        %v1559 = vadd.f32 0.0, %v1558
        %v1560 = vpop.f32.mrb[0].mxu0
        %1561 = vmatprep.mubr.f32.mxu0 0.0
        %1562 = vmatmul.mubr.f32.gmra.mrb[0].mxu0 %v1280
        %v1563 = vpop.f32.mrb[0].mxu0
        %v1564 = vadd.f32 0.0, %v1563
        %v1565 = vpop.f32.mrb[0].mxu0
        %1566 = vmatprep.mubr.f32.mxu0 0.0
        %1567 = vmatmul.mubr.f32.gmra.mrb[0].mxu0 %v1283
        %v1568 = vpop.f32.mrb[0].mxu0
        %v1569 = vadd.f32 0.0, %v1568
        %v1570 = vpop.f32.mrb[0].mxu0
        %1571 = vmatprep.mubr.f32.mxu0 0.0
        %1572 = vmatmul.mubr.f32.gmra.mrb[0].mxu0 %v1286
        %v1573 = vpop.f32.mrb[0].mxu0
        %v1574 = vadd.f32 0.0, %v1573
        %v1575 = vpop.f32.mrb[0].mxu0
        %1576 = vmatprep.mubr.f32.mxu0 0.0
        %1577 = vmatmul.mubr.f32.gmra.mrb[0].mxu0 %v1289
        %v1578 = vpop.f32.mrb[0].mxu0
        %v1579 = vadd.f32 0.0, %v1578
        %v1580 = vpop.f32.mrb[0].mxu0
        %1581 = vmatprep.mubr.f32.mxu0 0.0
        %1582 = vmatmul.mubr.f32.gmra.mrb[0].mxu0 %v1292
        %v1583 = vpop.f32.mrb[0].mxu0
        %v1584 = vadd.f32 0.0, %v1583
        %v1585 = vpop.f32.mrb[0].mxu0
        %1586 = vmatprep.mubr.f32.mxu0 0.0
        %1587 = vmatmul.mubr.f32.gmra.mrb[0].mxu0 %v1295
        %v1588 = vpop.f32.mrb[0].mxu0
        %v1589 = vadd.f32 0.0, %v1588
        %v1590 = vpop.f32.mrb[0].mxu0
        %1591 = vmatprep.mubr.f32.mxu0 0.0
        %1592 = vmatmul.mubr.f32.gmra.mrb[0].mxu0 %v1298
        %v1593 = vpop.f32.mrb[0].mxu0
        %v1594 = vadd.f32 0.0, %v1593
        %v1595 = vpop.f32.mrb[0].mxu0
        %1596 = vmatprep.mubr.f32.mxu0 0.0
        %1597 = vmatmul.mubr.f32.gmra.mrb[0].mxu0 %v1301
        %v1598 = vpop.f32.mrb[0].mxu0
        %v1599 = vadd.f32 0.0, %v1598
        %v1600 = vpop.f32.mrb[0].mxu0
        %1601 = vmatprep.mubr.f32.mxu0 0.0
        %1602 = vmatmul.mubr.f32.gmra.mrb[0].mxu0 %v1304
        %v1603 = vpop.f32.mrb[0].mxu0
        %v1604 = vadd.f32 0.0, %v1603
        %v1605 = vpop.f32.mrb[0].mxu0
        %1606 = vmatprep.mubr.f32.mxu0 0.0
        %1607 = vmatmul.mubr.f32.gmra.mrb[0].mxu0 %v1307
        %v1608 = vpop.f32.mrb[0].mxu0
        %v1609 = vadd.f32 0.0, %v1608
        %v1610 = vpop.f32.mrb[0].mxu0
        %1611 = vmatprep.mubr.f32.mxu0 0.0
        %1612 = vmatmul.mubr.f32.gmra.mrb[0].mxu0 %v1310
        %v1613 = vpop.f32.mrb[0].mxu0
        %v1614 = vadd.f32 0.0, %v1613
        %v1615 = vpop.f32.mrb[0].mxu0
        %1616 = vmatprep.mubr.f32.mxu0 0.0
        %1617 = vmatmul.mubr.f32.gmra.mrb[0].mxu0 %v1313
        %v1618 = vpop.f32.mrb[0].mxu0
        %v1619 = vadd.f32 0.0, %v1618
        %v1620 = vpop.f32.mrb[0].mxu0
        %1621 = vmatprep.mubr.f32.mxu0 0.0
        %1622 = vmatmul.mubr.f32.gmra.mrb[0].mxu0 %v1316
        %v1623 = vpop.f32.mrb[0].mxu0
        %v1624 = vadd.f32 0.0, %v1623
        %v1625 = vpop.f32.mrb[0].mxu0
        %1626 = vmatprep.mubr.f32.mxu0 0.0
        %1627 = vmatmul.mubr.f32.gmra.mrb[0].mxu0 %v1319
        %v1628 = vpop.f32.mrb[0].mxu0
        %v1629 = vadd.f32 0.0, %v1628
        %v1630 = vpop.f32.mrb[0].mxu0
        %1631 = vmatprep.mubr.f32.mxu0 0.0
        %1632 = vmatmul.mubr.f32.gmra.mrb[0].mxu0 %v1322
        %v1633 = vpop.f32.mrb[0].mxu0
        %v1634 = vadd.f32 0.0, %v1633
        %v1635 = vpop.f32.mrb[0].mxu0
        %1636 = vmatprep.mubr.f32.mxu0 0.0
        %1637 = vmatmul.mubr.f32.gmra.mrb[0].mxu0 %v1325
        %v1638 = vpop.f32.mrb[0].mxu0
        %v1639 = vadd.f32 0.0, %v1638
        %v1640 = vpop.f32.mrb[0].mxu0
        %1641 = vmatprep.mubr.f32.mxu0 0.0
        %1642 = vmatmul.mubr.f32.gmra.mrb[0].mxu0 %v1328
        %v1643 = vpop.f32.mrb[0].mxu0
        %v1644 = vadd.f32 0.0, %v1643
        %v1645 = vpop.f32.mrb[0].mxu0
        %1646 = vmatprep.mubr.f32.mxu0 0.0
        %1647 = vmatmul.mubr.f32.gmra.mrb[0].mxu0 %v1331
        %v1648 = vpop.f32.mrb[0].mxu0
        %v1649 = vadd.f32 0.0, %v1648
        %v1650 = vpop.f32.mrb[0].mxu0
        %1651 = vmatprep.mubr.f32.mxu0 0.0
        %1652 = vmatmul.mubr.f32.gmra.mrb[0].mxu0 %v1334
        %v1653 = vpop.f32.mrb[0].mxu0
        %v1654 = vadd.f32 0.0, %v1653
        %v1655 = vpop.f32.mrb[0].mxu0
        %1656 = vmatprep.mubr.f32.mxu0 0.0
        %1657 = vmatmul.mubr.f32.gmra.mrb[0].mxu0 %v1337
        %v1658 = vpop.f32.mrb[0].mxu0
        %v1659 = vadd.f32 0.0, %v1658
        %v1660 = vpop.f32.mrb[0].mxu0
        %1661 = vmatprep.mubr.f32.mxu0 0.0
        %1662 = vmatmul.mubr.f32.gmra.mrb[0].mxu0 %v1340
        %v1663 = vpop.f32.mrb[0].mxu0
        %v1664 = vadd.f32 0.0, %v1663
        %v1665 = vpop.f32.mrb[0].mxu0
        %1666 = vmatprep.mubr.f32.mxu0 0.0
        %1667 = vmatmul.mubr.f32.gmra.mrb[0].mxu0 %v1343
        %v1668 = vpop.f32.mrb[0].mxu0
        %v1669 = vadd.f32 0.0, %v1668
        %v1670 = vpop.f32.mrb[0].mxu0
        %1671 = vmatprep.mubr.f32.mxu0 0.0
        %1672 = vmatmul.mubr.f32.gmra.mrb[0].mxu0 %v1346
        %v1673 = vpop.f32.mrb[0].mxu0
        %v1674 = vadd.f32 0.0, %v1673
        %v1675 = vpop.f32.mrb[0].mxu0
        %1676 = vmatprep.mubr.f32.mxu0 0.0
        %1677 = vmatmul.mubr.f32.gmra.mrb[0].mxu0 %v1349
        %v1678 = vpop.f32.mrb[0].mxu0
        %v1679 = vadd.f32 0.0, %v1678
        %v1680 = vpop.f32.mrb[0].mxu0
        %1681 = vmatprep.mubr.f32.mxu0 0.0
        %1682 = vmatmul.mubr.f32.gmra.mrb[0].mxu0 %v1352
        %v1683 = vpop.f32.mrb[0].mxu0
        %v1684 = vadd.f32 0.0, %v1683
        %v1685 = vpop.f32.mrb[0].mxu0
        %1686 = vmatprep.mubr.f32.mxu0 0.0
        %1687 = vmatmul.mubr.f32.gmra.mrb[0].mxu0 %v1355
        %v1688 = vpop.f32.mrb[0].mxu0
        %v1689 = vadd.f32 0.0, %v1688
        %v1690 = vpop.f32.mrb[0].mxu0
        %1691 = vmatprep.mubr.f32.mxu0 0.0
        %1692 = vmatmul.mubr.f32.gmra.mrb[0].mxu0 %v1358
        %v1693 = vpop.f32.mrb[0].mxu0
        %v1694 = vadd.f32 0.0, %v1693
        %v1695 = vpop.f32.mrb[0].mxu0
        %1696 = vmatprep.mubr.f32.mxu0 0.0
        %1697 = vmatmul.mubr.f32.gmra.mrb[0].mxu0 %v1361
        %v1698 = vpop.f32.mrb[0].mxu0
        %v1699 = vadd.f32 0.0, %v1698
        %v1700 = vpop.f32.mrb[0].mxu0
        %1701 = vdwg.mxu0
        %v1703 = vsel %vm1200, 0.0, 0
        %v1706 = vsel %vm1363, %v431, 0
        %1708 = vmatprep.subr.mxu0 0.0
        %1709 = vmatpush1.msra.mxu0 %v430
        %1710 = vmatprep.subr.mxu0 0.0
        %1711 = vmatpush1.msra.mxu0 %v1706
        %1712 = vmatprep.subr.mxu0 0.0
        %1713 = vmatpush1.msra.mxu0 0.0
        %1714 = vmatprep.subr.mxu0 0.0
        %1715 = vmatpush1.msra.mxu0 0.0
        %1716 = vmatprep.subr.mxu0 0.0
        %1717 = vmatpush1.msra.mxu0 0.0
        %1718 = vmatprep.subr.mxu0 0.0
        %1719 = vmatpush1.msra.mxu0 0.0
        %1720 = vmatprep.subr.mxu0 0.0
        %1721 = vmatpush1.msra.mxu0 0.0
        %1722 = vmatprep.subr.mxu0 0.0
        %1723 = vmatpush1.msra.mxu0 0.0
        %1724 = vmatprep.subr.mxu0 0.0
        %1725 = vmatpush1.msra.mxu0 0.0
        %1726 = vmatprep.subr.mxu0 0.0
        %1727 = vmatpush1.msra.mxu0 0.0
        %1728 = vmatprep.subr.mxu0 0.0
        %1729 = vmatpush1.msra.mxu0 0.0
        %1730 = vmatprep.subr.mxu0 0.0
        %1731 = vmatpush1.msra.mxu0 0.0
        %1732 = vmatprep.subr.mxu0 0.0
        %1733 = vmatpush1.msra.mxu0 0.0
        %1734 = vmatprep.subr.mxu0 0.0
        %1735 = vmatpush1.msra.mxu0 0.0
        %1736 = vmatprep.subr.mxu0 0.0
        %1737 = vmatpush1.msra.mxu0 0.0
        %1738 = vmatprep.subr.mxu0 0.0
        %1739 = vmatpush1.msra.mxu0 0.0
        %1740 = vmatprep.subr.mxu0 0.0
        %1741 = vmatpush1.msra.mxu0 0.0
        %1742 = vmatprep.subr.mxu0 0.0
        %1743 = vmatpush1.msra.mxu0 0.0
        %1744 = vmatprep.subr.mxu0 0.0
        %1745 = vmatpush1.msra.mxu0 0.0
        %1746 = vmatprep.subr.mxu0 0.0
        %1747 = vmatpush1.msra.mxu0 0.0
        %1748 = vmatprep.subr.mxu0 0.0
        %1749 = vmatpush1.msra.mxu0 0.0
        %1750 = vmatprep.subr.mxu0 0.0
        %1751 = vmatpush1.msra.mxu0 0.0
        %1752 = vmatprep.subr.mxu0 0.0
        %1753 = vmatpush1.msra.mxu0 0.0
        %1754 = vmatprep.subr.mxu0 0.0
        %1755 = vmatpush1.msra.mxu0 0.0
        %1756 = vmatprep.subr.mxu0 0.0
        %1757 = vmatpush1.msra.mxu0 0.0
        %1758 = vmatprep.subr.mxu0 0.0
        %1759 = vmatpush1.msra.mxu0 0.0
        %1760 = vmatprep.subr.mxu0 0.0
        %1761 = vmatpush1.msra.mxu0 0.0
        %1762 = vmatprep.subr.mxu0 0.0
        %1763 = vmatpush1.msra.mxu0 0.0
        %1764 = vmatprep.subr.mxu0 0.0
        %1765 = vmatpush1.msra.mxu0 0.0
        %1766 = vmatprep.subr.mxu0 0.0
        %1767 = vmatpush1.msra.mxu0 0.0
        %1768 = vmatprep.subr.mxu0 0.0
        %1769 = vmatpush1.msra.mxu0 0.0
        %1770 = vmatprep.subr.mxu0 0.0
        %1771 = vmatpush1.msra.mxu0 0.0
        %1772 = vmatprep.mubr.f32.mxu0 0.0
        %1773 = vmatmul.mubr.f32.gmra.mrb[0].mxu0 %v1703
        %v1774 = vpop.f32.mrb[0].mxu0
        %v1775 = vadd.f32 %v1434, %v1774
        %v1776 = vpop.f32.mrb[0].mxu0
        %1777 = vmatprep.mubr.f32.mxu0 0.0
        %1778 = vmatmul.mubr.f32.gmra.mrb[0].mxu0 %v1703
        %v1779 = vpop.f32.mrb[0].mxu0
        %v1780 = vadd.f32 %v1439, %v1779
        %v1781 = vpop.f32.mrb[0].mxu0
        %1782 = vmatprep.mubr.f32.mxu0 0.0
        %1783 = vmatmul.mubr.f32.gmra.mrb[0].mxu0 %v1703
        %v1784 = vpop.f32.mrb[0].mxu0
        %v1785 = vadd.f32 %v1444, %v1784
        %v1786 = vpop.f32.mrb[0].mxu0
        %1787 = vmatprep.mubr.f32.mxu0 0.0
        %1788 = vmatmul.mubr.f32.gmra.mrb[0].mxu0 %v1202
        %v1789 = vpop.f32.mrb[0].mxu0
        %v1790 = vadd.f32 %v1449, %v1789
        %v1791 = vpop.f32.mrb[0].mxu0
        %1792 = vmatprep.mubr.f32.mxu0 0.0
        %1793 = vmatmul.mubr.f32.gmra.mrb[0].mxu0 %v1205
        %v1794 = vpop.f32.mrb[0].mxu0
        %v1795 = vadd.f32 %v1454, %v1794
        %v1796 = vpop.f32.mrb[0].mxu0
        %1797 = vmatprep.mubr.f32.mxu0 0.0
        %1798 = vmatmul.mubr.f32.gmra.mrb[0].mxu0 %v1208
        %v1799 = vpop.f32.mrb[0].mxu0
        %v1800 = vadd.f32 %v1459, %v1799
        %v1801 = vpop.f32.mrb[0].mxu0
        %1802 = vmatprep.mubr.f32.mxu0 0.0
        %1803 = vmatmul.mubr.f32.gmra.mrb[0].mxu0 %v1211
        %v1804 = vpop.f32.mrb[0].mxu0
        %v1805 = vadd.f32 %v1464, %v1804
        %v1806 = vpop.f32.mrb[0].mxu0
        %1807 = vmatprep.mubr.f32.mxu0 0.0
        %1808 = vmatmul.mubr.f32.gmra.mrb[0].mxu0 %v1214
        %v1809 = vpop.f32.mrb[0].mxu0
        %v1810 = vadd.f32 %v1469, %v1809
        %v1811 = vpop.f32.mrb[0].mxu0
        %1812 = vmatprep.mubr.f32.mxu0 0.0
        %1813 = vmatmul.mubr.f32.gmra.mrb[0].mxu0 %v1217
        %v1814 = vpop.f32.mrb[0].mxu0
        %v1815 = vadd.f32 %v1474, %v1814
        %v1816 = vpop.f32.mrb[0].mxu0
        %1817 = vmatprep.mubr.f32.mxu0 0.0
        %1818 = vmatmul.mubr.f32.gmra.mrb[0].mxu0 %v1220
        %v1819 = vpop.f32.mrb[0].mxu0
        %v1820 = vadd.f32 %v1479, %v1819
        %v1821 = vpop.f32.mrb[0].mxu0
        %1822 = vmatprep.mubr.f32.mxu0 0.0
        %1823 = vmatmul.mubr.f32.gmra.mrb[0].mxu0 %v1223
        %v1824 = vpop.f32.mrb[0].mxu0
        %v1825 = vadd.f32 %v1484, %v1824
        %v1826 = vpop.f32.mrb[0].mxu0
        %1827 = vmatprep.mubr.f32.mxu0 0.0
        %1828 = vmatmul.mubr.f32.gmra.mrb[0].mxu0 %v1226
        %v1829 = vpop.f32.mrb[0].mxu0
        %v1830 = vadd.f32 %v1489, %v1829
        %v1831 = vpop.f32.mrb[0].mxu0
        %1832 = vmatprep.mubr.f32.mxu0 0.0
        %1833 = vmatmul.mubr.f32.gmra.mrb[0].mxu0 %v1229
        %v1834 = vpop.f32.mrb[0].mxu0
        %v1835 = vadd.f32 %v1494, %v1834
        %v1836 = vpop.f32.mrb[0].mxu0
        %1837 = vmatprep.mubr.f32.mxu0 0.0
        %1838 = vmatmul.mubr.f32.gmra.mrb[0].mxu0 %v1232
        %v1839 = vpop.f32.mrb[0].mxu0
        %v1840 = vadd.f32 %v1499, %v1839
        %v1841 = vpop.f32.mrb[0].mxu0
        %1842 = vmatprep.mubr.f32.mxu0 0.0
        %1843 = vmatmul.mubr.f32.gmra.mrb[0].mxu0 %v1235
        %v1844 = vpop.f32.mrb[0].mxu0
        %v1845 = vadd.f32 %v1504, %v1844
        %v1846 = vpop.f32.mrb[0].mxu0
        %1847 = vmatprep.mubr.f32.mxu0 0.0
        %1848 = vmatmul.mubr.f32.gmra.mrb[0].mxu0 %v1238
        %v1849 = vpop.f32.mrb[0].mxu0
        %v1850 = vadd.f32 %v1509, %v1849
        %v1851 = vpop.f32.mrb[0].mxu0
        %1852 = vmatprep.mubr.f32.mxu0 0.0
        %1853 = vmatmul.mubr.f32.gmra.mrb[0].mxu0 %v1241
        %v1854 = vpop.f32.mrb[0].mxu0
        %v1855 = vadd.f32 %v1514, %v1854
        %v1856 = vpop.f32.mrb[0].mxu0
        %1857 = vmatprep.mubr.f32.mxu0 0.0
        %1858 = vmatmul.mubr.f32.gmra.mrb[0].mxu0 %v1244
        %v1859 = vpop.f32.mrb[0].mxu0
        %v1860 = vadd.f32 %v1519, %v1859
        %v1861 = vpop.f32.mrb[0].mxu0
        %1862 = vmatprep.mubr.f32.mxu0 0.0
        %1863 = vmatmul.mubr.f32.gmra.mrb[0].mxu0 %v1247
        %v1864 = vpop.f32.mrb[0].mxu0
        %v1865 = vadd.f32 %v1524, %v1864
        %v1866 = vpop.f32.mrb[0].mxu0
        %1867 = vmatprep.mubr.f32.mxu0 0.0
        %1868 = vmatmul.mubr.f32.gmra.mrb[0].mxu0 %v1250
        %v1869 = vpop.f32.mrb[0].mxu0
        %v1870 = vadd.f32 %v1529, %v1869
        %v1871 = vpop.f32.mrb[0].mxu0
        %1872 = vmatprep.mubr.f32.mxu0 0.0
        %1873 = vmatmul.mubr.f32.gmra.mrb[0].mxu0 %v1253
        %v1874 = vpop.f32.mrb[0].mxu0
        %v1875 = vadd.f32 %v1534, %v1874
        %v1876 = vpop.f32.mrb[0].mxu0
        %1877 = vmatprep.mubr.f32.mxu0 0.0
        %1878 = vmatmul.mubr.f32.gmra.mrb[0].mxu0 %v1256
        %v1879 = vpop.f32.mrb[0].mxu0
        %v1880 = vadd.f32 %v1539, %v1879
        %v1881 = vpop.f32.mrb[0].mxu0
        %1882 = vmatprep.mubr.f32.mxu0 0.0
        %1883 = vmatmul.mubr.f32.gmra.mrb[0].mxu0 %v1259
        %v1884 = vpop.f32.mrb[0].mxu0
        %v1885 = vadd.f32 %v1544, %v1884
        %v1886 = vpop.f32.mrb[0].mxu0
        %1887 = vmatprep.mubr.f32.mxu0 0.0
        %1888 = vmatmul.mubr.f32.gmra.mrb[0].mxu0 %v1262
        %v1889 = vpop.f32.mrb[0].mxu0
        %v1890 = vadd.f32 %v1549, %v1889
        %v1891 = vpop.f32.mrb[0].mxu0
        %1892 = vmatprep.mubr.f32.mxu0 0.0
        %1893 = vmatmul.mubr.f32.gmra.mrb[0].mxu0 %v1265
        %v1894 = vpop.f32.mrb[0].mxu0
        %v1895 = vadd.f32 %v1554, %v1894
        %v1896 = vpop.f32.mrb[0].mxu0
        %1897 = vmatprep.mubr.f32.mxu0 0.0
        %1898 = vmatmul.mubr.f32.gmra.mrb[0].mxu0 %v1268
        %v1899 = vpop.f32.mrb[0].mxu0
        %v1900 = vadd.f32 %v1559, %v1899
        %v1901 = vpop.f32.mrb[0].mxu0
        %1902 = vmatprep.mubr.f32.mxu0 0.0
        %1903 = vmatmul.mubr.f32.gmra.mrb[0].mxu0 %v1271
        %v1904 = vpop.f32.mrb[0].mxu0
        %v1905 = vadd.f32 %v1564, %v1904
        %v1906 = vpop.f32.mrb[0].mxu0
        %1907 = vmatprep.mubr.f32.mxu0 0.0
        %1908 = vmatmul.mubr.f32.gmra.mrb[0].mxu0 %v1274
        %v1909 = vpop.f32.mrb[0].mxu0
        %v1910 = vadd.f32 %v1569, %v1909
        %v1911 = vpop.f32.mrb[0].mxu0
        %1912 = vmatprep.mubr.f32.mxu0 0.0
        %1913 = vmatmul.mubr.f32.gmra.mrb[0].mxu0 %v1277
        %v1914 = vpop.f32.mrb[0].mxu0
        %v1915 = vadd.f32 %v1574, %v1914
        %v1916 = vpop.f32.mrb[0].mxu0
        %1917 = vmatprep.mubr.f32.mxu0 0.0
        %1918 = vmatmul.mubr.f32.gmra.mrb[0].mxu0 %v1280
        %v1919 = vpop.f32.mrb[0].mxu0
        %v1920 = vadd.f32 %v1579, %v1919
        %v1921 = vpop.f32.mrb[0].mxu0
        %1922 = vmatprep.mubr.f32.mxu0 0.0
        %1923 = vmatmul.mubr.f32.gmra.mrb[0].mxu0 %v1283
        %v1924 = vpop.f32.mrb[0].mxu0
        %v1925 = vadd.f32 %v1584, %v1924
        %v1926 = vpop.f32.mrb[0].mxu0
        %1927 = vmatprep.mubr.f32.mxu0 0.0
        %1928 = vmatmul.mubr.f32.gmra.mrb[0].mxu0 %v1286
        %v1929 = vpop.f32.mrb[0].mxu0
        %v1930 = vadd.f32 %v1589, %v1929
        %v1931 = vpop.f32.mrb[0].mxu0
        %1932 = vmatprep.mubr.f32.mxu0 0.0
        %1933 = vmatmul.mubr.f32.gmra.mrb[0].mxu0 %v1289
        %v1934 = vpop.f32.mrb[0].mxu0
        %v1935 = vadd.f32 %v1594, %v1934
        %v1936 = vpop.f32.mrb[0].mxu0
        %1937 = vmatprep.mubr.f32.mxu0 0.0
        %1938 = vmatmul.mubr.f32.gmra.mrb[0].mxu0 %v1292
        %v1939 = vpop.f32.mrb[0].mxu0
        %v1940 = vadd.f32 %v1599, %v1939
        %v1941 = vpop.f32.mrb[0].mxu0
        %1942 = vmatprep.mubr.f32.mxu0 0.0
        %1943 = vmatmul.mubr.f32.gmra.mrb[0].mxu0 %v1295
        %v1944 = vpop.f32.mrb[0].mxu0
        %v1945 = vadd.f32 %v1604, %v1944
        %v1946 = vpop.f32.mrb[0].mxu0
        %1947 = vmatprep.mubr.f32.mxu0 0.0
        %1948 = vmatmul.mubr.f32.gmra.mrb[0].mxu0 %v1298
        %v1949 = vpop.f32.mrb[0].mxu0
        %v1950 = vadd.f32 %v1609, %v1949
        %v1951 = vpop.f32.mrb[0].mxu0
        %1952 = vmatprep.mubr.f32.mxu0 0.0
        %1953 = vmatmul.mubr.f32.gmra.mrb[0].mxu0 %v1301
        %v1954 = vpop.f32.mrb[0].mxu0
        %v1955 = vadd.f32 %v1614, %v1954
        %v1956 = vpop.f32.mrb[0].mxu0
        %1957 = vmatprep.mubr.f32.mxu0 0.0
        %1958 = vmatmul.mubr.f32.gmra.mrb[0].mxu0 %v1304
        %v1959 = vpop.f32.mrb[0].mxu0
        %v1960 = vadd.f32 %v1619, %v1959
        %v1961 = vpop.f32.mrb[0].mxu0
        %1962 = vmatprep.mubr.f32.mxu0 0.0
        %1963 = vmatmul.mubr.f32.gmra.mrb[0].mxu0 %v1307
        %v1964 = vpop.f32.mrb[0].mxu0
        %v1965 = vadd.f32 %v1624, %v1964
        %v1966 = vpop.f32.mrb[0].mxu0
        %1967 = vmatprep.mubr.f32.mxu0 0.0
        %1968 = vmatmul.mubr.f32.gmra.mrb[0].mxu0 %v1310
        %v1969 = vpop.f32.mrb[0].mxu0
        %v1970 = vadd.f32 %v1629, %v1969
        %v1971 = vpop.f32.mrb[0].mxu0
        %1972 = vmatprep.mubr.f32.mxu0 0.0
        %1973 = vmatmul.mubr.f32.gmra.mrb[0].mxu0 %v1313
        %v1974 = vpop.f32.mrb[0].mxu0
        %v1975 = vadd.f32 %v1634, %v1974
        %v1976 = vpop.f32.mrb[0].mxu0
        %1977 = vmatprep.mubr.f32.mxu0 0.0
        %1978 = vmatmul.mubr.f32.gmra.mrb[0].mxu0 %v1316
        %v1979 = vpop.f32.mrb[0].mxu0
        %v1980 = vadd.f32 %v1639, %v1979
        %v1981 = vpop.f32.mrb[0].mxu0
        %1982 = vmatprep.mubr.f32.mxu0 0.0
        %1983 = vmatmul.mubr.f32.gmra.mrb[0].mxu0 %v1319
        %v1984 = vpop.f32.mrb[0].mxu0
        %v1985 = vadd.f32 %v1644, %v1984
        %v1986 = vpop.f32.mrb[0].mxu0
        %1987 = vmatprep.mubr.f32.mxu0 0.0
        %1988 = vmatmul.mubr.f32.gmra.mrb[0].mxu0 %v1322
        %v1989 = vpop.f32.mrb[0].mxu0
        %v1990 = vadd.f32 %v1649, %v1989
        %v1991 = vpop.f32.mrb[0].mxu0
        %1992 = vmatprep.mubr.f32.mxu0 0.0
        %1993 = vmatmul.mubr.f32.gmra.mrb[0].mxu0 %v1325
        %v1994 = vpop.f32.mrb[0].mxu0
        %v1995 = vadd.f32 %v1654, %v1994
        %v1996 = vpop.f32.mrb[0].mxu0
        %1997 = vmatprep.mubr.f32.mxu0 0.0
        %1998 = vmatmul.mubr.f32.gmra.mrb[0].mxu0 %v1328
        %v1999 = vpop.f32.mrb[0].mxu0
        %v2000 = vadd.f32 %v1659, %v1999
        %v2001 = vpop.f32.mrb[0].mxu0
        %2002 = vmatprep.mubr.f32.mxu0 0.0
        %2003 = vmatmul.mubr.f32.gmra.mrb[0].mxu0 %v1331
        %v2004 = vpop.f32.mrb[0].mxu0
        %v2005 = vadd.f32 %v1664, %v2004
        %v2006 = vpop.f32.mrb[0].mxu0
        %2007 = vmatprep.mubr.f32.mxu0 0.0
        %2008 = vmatmul.mubr.f32.gmra.mrb[0].mxu0 %v1334
        %v2009 = vpop.f32.mrb[0].mxu0
        %v2010 = vadd.f32 %v1669, %v2009
        %v2011 = vpop.f32.mrb[0].mxu0
        %2012 = vmatprep.mubr.f32.mxu0 0.0
        %2013 = vmatmul.mubr.f32.gmra.mrb[0].mxu0 %v1337
        %v2014 = vpop.f32.mrb[0].mxu0
        %v2015 = vadd.f32 %v1674, %v2014
        %v2016 = vpop.f32.mrb[0].mxu0
        %2017 = vmatprep.mubr.f32.mxu0 0.0
        %2018 = vmatmul.mubr.f32.gmra.mrb[0].mxu0 %v1340
        %v2019 = vpop.f32.mrb[0].mxu0
        %v2020 = vadd.f32 %v1679, %v2019
        %v2021 = vpop.f32.mrb[0].mxu0
        %2022 = vmatprep.mubr.f32.mxu0 0.0
        %2023 = vmatmul.mubr.f32.gmra.mrb[0].mxu0 %v1343
        %v2024 = vpop.f32.mrb[0].mxu0
        %v2025 = vadd.f32 %v1684, %v2024
        %v2026 = vpop.f32.mrb[0].mxu0
        %2027 = vmatprep.mubr.f32.mxu0 0.0
        %2028 = vmatmul.mubr.f32.gmra.mrb[0].mxu0 %v1346
        %v2029 = vpop.f32.mrb[0].mxu0
        %v2030 = vadd.f32 %v1689, %v2029
        %v2031 = vpop.f32.mrb[0].mxu0
        %2032 = vmatprep.mubr.f32.mxu0 0.0
        %2033 = vmatmul.mubr.f32.gmra.mrb[0].mxu0 %v1349
        %v2034 = vpop.f32.mrb[0].mxu0
        %v2035 = vadd.f32 %v1694, %v2034
        %v2036 = vpop.f32.mrb[0].mxu0
        %2037 = vmatprep.mubr.f32.mxu0 0.0
        %2038 = vmatmul.mubr.f32.gmra.mrb[0].mxu0 %v1352
        %v2039 = vpop.f32.mrb[0].mxu0
        %v2040 = vadd.f32 %v1699, %v2039
        %v2041 = vpop.f32.mrb[0].mxu0
        %2042 = vdwg.mxu0
        %v2044 = vsel %vm1363, %v437, 0
        %2046 = vmatprep.subr.mxu0 0.0
        %2047 = vmatpush1.msra.mxu0 %v436
        %2048 = vmatprep.subr.mxu0 0.0
        %2049 = vmatpush1.msra.mxu0 %v2044
        %2050 = vmatprep.subr.mxu0 0.0
        %2051 = vmatpush1.msra.mxu0 0.0
        %2052 = vmatprep.subr.mxu0 0.0
        %2053 = vmatpush1.msra.mxu0 0.0
        %2054 = vmatprep.subr.mxu0 0.0
        %2055 = vmatpush1.msra.mxu0 0.0
        %2056 = vmatprep.subr.mxu0 0.0
        %2057 = vmatpush1.msra.mxu0 0.0
        %2058 = vmatprep.subr.mxu0 0.0
        %2059 = vmatpush1.msra.mxu0 0.0
        %2060 = vmatprep.subr.mxu0 0.0
        %2061 = vmatpush1.msra.mxu0 0.0
        %2062 = vmatprep.subr.mxu0 0.0
        %2063 = vmatpush1.msra.mxu0 0.0
        %2064 = vmatprep.subr.mxu0 0.0
        %2065 = vmatpush1.msra.mxu0 0.0
        %2066 = vmatprep.subr.mxu0 0.0
        %2067 = vmatpush1.msra.mxu0 0.0
        %2068 = vmatprep.subr.mxu0 0.0
        %2069 = vmatpush1.msra.mxu0 0.0
        %2070 = vmatprep.subr.mxu0 0.0
        %2071 = vmatpush1.msra.mxu0 0.0
        %2072 = vmatprep.subr.mxu0 0.0
        %2073 = vmatpush1.msra.mxu0 0.0
        %2074 = vmatprep.subr.mxu0 0.0
        %2075 = vmatpush1.msra.mxu0 0.0
        %2076 = vmatprep.subr.mxu0 0.0
        %2077 = vmatpush1.msra.mxu0 0.0
        %2078 = vmatprep.subr.mxu0 0.0
        %2079 = vmatpush1.msra.mxu0 0.0
        %2080 = vmatprep.subr.mxu0 0.0
        %2081 = vmatpush1.msra.mxu0 0.0
        %2082 = vmatprep.subr.mxu0 0.0
        %2083 = vmatpush1.msra.mxu0 0.0
        %2084 = vmatprep.subr.mxu0 0.0
        %2085 = vmatpush1.msra.mxu0 0.0
        %2086 = vmatprep.subr.mxu0 0.0
        %2087 = vmatpush1.msra.mxu0 0.0
        %2088 = vmatprep.subr.mxu0 0.0
        %2089 = vmatpush1.msra.mxu0 0.0
        %2090 = vmatprep.subr.mxu0 0.0
        %2091 = vmatpush1.msra.mxu0 0.0
        %2092 = vmatprep.subr.mxu0 0.0
        %2093 = vmatpush1.msra.mxu0 0.0
        %2094 = vmatprep.subr.mxu0 0.0
        %2095 = vmatpush1.msra.mxu0 0.0
        %2096 = vmatprep.subr.mxu0 0.0
        %2097 = vmatpush1.msra.mxu0 0.0
        %2098 = vmatprep.subr.mxu0 0.0
        %2099 = vmatpush1.msra.mxu0 0.0
        %2100 = vmatprep.subr.mxu0 0.0
        %2101 = vmatpush1.msra.mxu0 0.0
        %2102 = vmatprep.subr.mxu0 0.0
        %2103 = vmatpush1.msra.mxu0 0.0
        %2104 = vmatprep.subr.mxu0 0.0
        %2105 = vmatpush1.msra.mxu0 0.0
        %2106 = vmatprep.subr.mxu0 0.0
        %2107 = vmatpush1.msra.mxu0 0.0
        %2108 = vmatprep.subr.mxu0 0.0
        %2109 = vmatpush1.msra.mxu0 0.0
        %2110 = vmatprep.mubr.f32.mxu0 0.0
        %2111 = vmatmul.mubr.f32.gmra.mrb[0].mxu0 %v1211
        %v2112 = vpop.f32.mrb[0].mxu0
        %v2113 = vadd.f32 0.0, %v2112
        %v2114 = vpop.f32.mrb[0].mxu0
        %2115 = vmatprep.mubr.f32.mxu0 0.0
        %2116 = vmatmul.mubr.f32.gmra.mrb[0].mxu0 %v1214
        %v2117 = vpop.f32.mrb[0].mxu0
        %v2118 = vadd.f32 0.0, %v2117
        %v2119 = vpop.f32.mrb[0].mxu0
        %2120 = vmatprep.mubr.f32.mxu0 0.0
        %2121 = vmatmul.mubr.f32.gmra.mrb[0].mxu0 %v1217
        %v2122 = vpop.f32.mrb[0].mxu0
        %v2123 = vadd.f32 0.0, %v2122
        %v2124 = vpop.f32.mrb[0].mxu0
        %2125 = vmatprep.mubr.f32.mxu0 0.0
        %2126 = vmatmul.mubr.f32.gmra.mrb[0].mxu0 %v1220
        %v2127 = vpop.f32.mrb[0].mxu0
        %v2128 = vadd.f32 0.0, %v2127
        %v2129 = vpop.f32.mrb[0].mxu0
        %2130 = vmatprep.mubr.f32.mxu0 0.0
        %2131 = vmatmul.mubr.f32.gmra.mrb[0].mxu0 %v1223
        %v2132 = vpop.f32.mrb[0].mxu0
        %v2133 = vadd.f32 0.0, %v2132
        %v2134 = vpop.f32.mrb[0].mxu0
        %2135 = vmatprep.mubr.f32.mxu0 0.0
        %2136 = vmatmul.mubr.f32.gmra.mrb[0].mxu0 %v1226
        %v2137 = vpop.f32.mrb[0].mxu0
        %v2138 = vadd.f32 0.0, %v2137
        %v2139 = vpop.f32.mrb[0].mxu0
        %2140 = vmatprep.mubr.f32.mxu0 0.0
        %2141 = vmatmul.mubr.f32.gmra.mrb[0].mxu0 %v1229
        %v2142 = vpop.f32.mrb[0].mxu0
        %v2143 = vadd.f32 0.0, %v2142
        %v2144 = vpop.f32.mrb[0].mxu0
        %2145 = vmatprep.mubr.f32.mxu0 0.0
        %2146 = vmatmul.mubr.f32.gmra.mrb[0].mxu0 %v1232
        %v2147 = vpop.f32.mrb[0].mxu0
        %v2148 = vadd.f32 0.0, %v2147
        %v2149 = vpop.f32.mrb[0].mxu0
        %2150 = vmatprep.mubr.f32.mxu0 0.0
        %2151 = vmatmul.mubr.f32.gmra.mrb[0].mxu0 %v1235
        %v2152 = vpop.f32.mrb[0].mxu0
        %v2153 = vadd.f32 0.0, %v2152
        %v2154 = vpop.f32.mrb[0].mxu0
        %2155 = vmatprep.mubr.f32.mxu0 0.0
        %2156 = vmatmul.mubr.f32.gmra.mrb[0].mxu0 %v1238
        %v2157 = vpop.f32.mrb[0].mxu0
        %v2158 = vadd.f32 0.0, %v2157
        %v2159 = vpop.f32.mrb[0].mxu0
        %2160 = vmatprep.mubr.f32.mxu0 0.0
        %2161 = vmatmul.mubr.f32.gmra.mrb[0].mxu0 %v1241
        %v2162 = vpop.f32.mrb[0].mxu0
        %v2163 = vadd.f32 0.0, %v2162
        %v2164 = vpop.f32.mrb[0].mxu0
        %2165 = vmatprep.mubr.f32.mxu0 0.0
        %2166 = vmatmul.mubr.f32.gmra.mrb[0].mxu0 %v1244
        %v2167 = vpop.f32.mrb[0].mxu0
        %v2168 = vadd.f32 0.0, %v2167
        %v2169 = vpop.f32.mrb[0].mxu0
        %2170 = vmatprep.mubr.f32.mxu0 0.0
        %2171 = vmatmul.mubr.f32.gmra.mrb[0].mxu0 %v1247
        %v2172 = vpop.f32.mrb[0].mxu0
        %v2173 = vadd.f32 0.0, %v2172
        %v2174 = vpop.f32.mrb[0].mxu0
        %2175 = vmatprep.mubr.f32.mxu0 0.0
        %2176 = vmatmul.mubr.f32.gmra.mrb[0].mxu0 %v1250
        %v2177 = vpop.f32.mrb[0].mxu0
        %v2178 = vadd.f32 0.0, %v2177
        %v2179 = vpop.f32.mrb[0].mxu0
        %2180 = vmatprep.mubr.f32.mxu0 0.0
        %2181 = vmatmul.mubr.f32.gmra.mrb[0].mxu0 %v1253
        %v2182 = vpop.f32.mrb[0].mxu0
        %v2183 = vadd.f32 0.0, %v2182
        %v2184 = vpop.f32.mrb[0].mxu0
        %2185 = vmatprep.mubr.f32.mxu0 0.0
        %2186 = vmatmul.mubr.f32.gmra.mrb[0].mxu0 %v1256
        %v2187 = vpop.f32.mrb[0].mxu0
        %v2188 = vadd.f32 0.0, %v2187
        %v2189 = vpop.f32.mrb[0].mxu0
        %2190 = vmatprep.mubr.f32.mxu0 0.0
        %2191 = vmatmul.mubr.f32.gmra.mrb[0].mxu0 %v1259
        %v2192 = vpop.f32.mrb[0].mxu0
        %v2193 = vadd.f32 0.0, %v2192
        %v2194 = vpop.f32.mrb[0].mxu0
        %2195 = vmatprep.mubr.f32.mxu0 0.0
        %2196 = vmatmul.mubr.f32.gmra.mrb[0].mxu0 %v1262
        %v2197 = vpop.f32.mrb[0].mxu0
        %v2198 = vadd.f32 0.0, %v2197
        %v2199 = vpop.f32.mrb[0].mxu0
        %2200 = vmatprep.mubr.f32.mxu0 0.0
        %2201 = vmatmul.mubr.f32.gmra.mrb[0].mxu0 %v1265
        %v2202 = vpop.f32.mrb[0].mxu0
        %v2203 = vadd.f32 0.0, %v2202
        %v2204 = vpop.f32.mrb[0].mxu0
        %2205 = vmatprep.mubr.f32.mxu0 0.0
        %2206 = vmatmul.mubr.f32.gmra.mrb[0].mxu0 %v1268
        %v2207 = vpop.f32.mrb[0].mxu0
        %v2208 = vadd.f32 0.0, %v2207
        %v2209 = vpop.f32.mrb[0].mxu0
        %2210 = vmatprep.mubr.f32.mxu0 0.0
        %2211 = vmatmul.mubr.f32.gmra.mrb[0].mxu0 %v1271
        %v2212 = vpop.f32.mrb[0].mxu0
        %v2213 = vadd.f32 0.0, %v2212
        %v2214 = vpop.f32.mrb[0].mxu0
        %2215 = vmatprep.mubr.f32.mxu0 0.0
        %2216 = vmatmul.mubr.f32.gmra.mrb[0].mxu0 %v1274
        %v2217 = vpop.f32.mrb[0].mxu0
        %v2218 = vadd.f32 0.0, %v2217
        %v2219 = vpop.f32.mrb[0].mxu0
        %2220 = vmatprep.mubr.f32.mxu0 0.0
        %2221 = vmatmul.mubr.f32.gmra.mrb[0].mxu0 %v1277
        %v2222 = vpop.f32.mrb[0].mxu0
        %v2223 = vadd.f32 0.0, %v2222
        %v2224 = vpop.f32.mrb[0].mxu0
        %2225 = vmatprep.mubr.f32.mxu0 0.0
        %2226 = vmatmul.mubr.f32.gmra.mrb[0].mxu0 %v1280
        %v2227 = vpop.f32.mrb[0].mxu0
        %v2228 = vadd.f32 0.0, %v2227
        %v2229 = vpop.f32.mrb[0].mxu0
        %2230 = vmatprep.mubr.f32.mxu0 0.0
        %2231 = vmatmul.mubr.f32.gmra.mrb[0].mxu0 %v1283
        %v2232 = vpop.f32.mrb[0].mxu0
        %v2233 = vadd.f32 0.0, %v2232
        %v2234 = vpop.f32.mrb[0].mxu0
        %2235 = vmatprep.mubr.f32.mxu0 0.0
        %2236 = vmatmul.mubr.f32.gmra.mrb[0].mxu0 %v1286
        %v2237 = vpop.f32.mrb[0].mxu0
        %v2238 = vadd.f32 0.0, %v2237
        %v2239 = vpop.f32.mrb[0].mxu0
        %2240 = vmatprep.mubr.f32.mxu0 0.0
        %2241 = vmatmul.mubr.f32.gmra.mrb[0].mxu0 %v1289
        %v2242 = vpop.f32.mrb[0].mxu0
        %v2243 = vadd.f32 0.0, %v2242
        %v2244 = vpop.f32.mrb[0].mxu0
        %2245 = vmatprep.mubr.f32.mxu0 0.0
        %2246 = vmatmul.mubr.f32.gmra.mrb[0].mxu0 %v1292
        %v2247 = vpop.f32.mrb[0].mxu0
        %v2248 = vadd.f32 0.0, %v2247
        %v2249 = vpop.f32.mrb[0].mxu0
        %2250 = vmatprep.mubr.f32.mxu0 0.0
        %2251 = vmatmul.mubr.f32.gmra.mrb[0].mxu0 %v1295
        %v2252 = vpop.f32.mrb[0].mxu0
        %v2253 = vadd.f32 0.0, %v2252
        %v2254 = vpop.f32.mrb[0].mxu0
        %2255 = vmatprep.mubr.f32.mxu0 0.0
        %2256 = vmatmul.mubr.f32.gmra.mrb[0].mxu0 %v1298
        %v2257 = vpop.f32.mrb[0].mxu0
        %v2258 = vadd.f32 0.0, %v2257
        %v2259 = vpop.f32.mrb[0].mxu0
        %2260 = vmatprep.mubr.f32.mxu0 0.0
        %2261 = vmatmul.mubr.f32.gmra.mrb[0].mxu0 %v1301
        %v2262 = vpop.f32.mrb[0].mxu0
        %v2263 = vadd.f32 0.0, %v2262
        %v2264 = vpop.f32.mrb[0].mxu0
        %2265 = vmatprep.mubr.f32.mxu0 0.0
        %2266 = vmatmul.mubr.f32.gmra.mrb[0].mxu0 %v1304
        %v2267 = vpop.f32.mrb[0].mxu0
        %v2268 = vadd.f32 0.0, %v2267
        %v2269 = vpop.f32.mrb[0].mxu0
        %2270 = vmatprep.mubr.f32.mxu0 0.0
        %2271 = vmatmul.mubr.f32.gmra.mrb[0].mxu0 %v1307
        %v2272 = vpop.f32.mrb[0].mxu0
        %v2273 = vadd.f32 0.0, %v2272
        %v2274 = vpop.f32.mrb[0].mxu0
        %2275 = vmatprep.mubr.f32.mxu0 0.0
        %2276 = vmatmul.mubr.f32.gmra.mrb[0].mxu0 %v1310
        %v2277 = vpop.f32.mrb[0].mxu0
        %v2278 = vadd.f32 0.0, %v2277
        %v2279 = vpop.f32.mrb[0].mxu0
        %2280 = vmatprep.mubr.f32.mxu0 0.0
        %2281 = vmatmul.mubr.f32.gmra.mrb[0].mxu0 %v1313
        %v2282 = vpop.f32.mrb[0].mxu0
        %v2283 = vadd.f32 0.0, %v2282
        %v2284 = vpop.f32.mrb[0].mxu0
        %2285 = vmatprep.mubr.f32.mxu0 0.0
        %2286 = vmatmul.mubr.f32.gmra.mrb[0].mxu0 %v1316
        %v2287 = vpop.f32.mrb[0].mxu0
        %v2288 = vadd.f32 0.0, %v2287
        %v2289 = vpop.f32.mrb[0].mxu0
        %2290 = vmatprep.mubr.f32.mxu0 0.0
        %2291 = vmatmul.mubr.f32.gmra.mrb[0].mxu0 %v1319
        %v2292 = vpop.f32.mrb[0].mxu0
        %v2293 = vadd.f32 0.0, %v2292
        %v2294 = vpop.f32.mrb[0].mxu0
        %2295 = vmatprep.mubr.f32.mxu0 0.0
        %2296 = vmatmul.mubr.f32.gmra.mrb[0].mxu0 %v1322
        %v2297 = vpop.f32.mrb[0].mxu0
        %v2298 = vadd.f32 0.0, %v2297
        %v2299 = vpop.f32.mrb[0].mxu0
        %2300 = vmatprep.mubr.f32.mxu0 0.0
        %2301 = vmatmul.mubr.f32.gmra.mrb[0].mxu0 %v1325
        %v2302 = vpop.f32.mrb[0].mxu0
        %v2303 = vadd.f32 0.0, %v2302
        %v2304 = vpop.f32.mrb[0].mxu0
        %2305 = vmatprep.mubr.f32.mxu0 0.0
        %2306 = vmatmul.mubr.f32.gmra.mrb[0].mxu0 %v1328
        %v2307 = vpop.f32.mrb[0].mxu0
        %v2308 = vadd.f32 0.0, %v2307
        %v2309 = vpop.f32.mrb[0].mxu0
        %2310 = vmatprep.mubr.f32.mxu0 0.0
        %2311 = vmatmul.mubr.f32.gmra.mrb[0].mxu0 %v1331
        %v2312 = vpop.f32.mrb[0].mxu0
        %v2313 = vadd.f32 0.0, %v2312
        %v2314 = vpop.f32.mrb[0].mxu0
        %2315 = vmatprep.mubr.f32.mxu0 0.0
        %2316 = vmatmul.mubr.f32.gmra.mrb[0].mxu0 %v1334
        %v2317 = vpop.f32.mrb[0].mxu0
        %v2318 = vadd.f32 0.0, %v2317
        %v2319 = vpop.f32.mrb[0].mxu0
        %2320 = vmatprep.mubr.f32.mxu0 0.0
        %2321 = vmatmul.mubr.f32.gmra.mrb[0].mxu0 %v1337
        %v2322 = vpop.f32.mrb[0].mxu0
        %v2323 = vadd.f32 0.0, %v2322
        %v2324 = vpop.f32.mrb[0].mxu0
        %2325 = vmatprep.mubr.f32.mxu0 0.0
        %2326 = vmatmul.mubr.f32.gmra.mrb[0].mxu0 %v1340
        %v2327 = vpop.f32.mrb[0].mxu0
        %v2328 = vadd.f32 0.0, %v2327
        %v2329 = vpop.f32.mrb[0].mxu0
        %2330 = vmatprep.mubr.f32.mxu0 0.0
        %2331 = vmatmul.mubr.f32.gmra.mrb[0].mxu0 %v1343
        %v2332 = vpop.f32.mrb[0].mxu0
        %v2333 = vadd.f32 0.0, %v2332
        %v2334 = vpop.f32.mrb[0].mxu0
        %2335 = vmatprep.mubr.f32.mxu0 0.0
        %2336 = vmatmul.mubr.f32.gmra.mrb[0].mxu0 %v1346
        %v2337 = vpop.f32.mrb[0].mxu0
        %v2338 = vadd.f32 0.0, %v2337
        %v2339 = vpop.f32.mrb[0].mxu0
        %2340 = vmatprep.mubr.f32.mxu0 0.0
        %2341 = vmatmul.mubr.f32.gmra.mrb[0].mxu0 %v1349
        %v2342 = vpop.f32.mrb[0].mxu0
        %v2343 = vadd.f32 0.0, %v2342
        %v2344 = vpop.f32.mrb[0].mxu0
        %2345 = vmatprep.mubr.f32.mxu0 0.0
        %2346 = vmatmul.mubr.f32.gmra.mrb[0].mxu0 %v1352
        %v2347 = vpop.f32.mrb[0].mxu0
        %v2348 = vadd.f32 0.0, %v2347
        %v2349 = vpop.f32.mrb[0].mxu0
        %2350 = vmatprep.mubr.f32.mxu0 0.0
        %2351 = vmatmul.mubr.f32.gmra.mrb[0].mxu0 %v1355
        %v2352 = vpop.f32.mrb[0].mxu0
        %v2353 = vadd.f32 0.0, %v2352
        %v2354 = vpop.f32.mrb[0].mxu0
        %2355 = vmatprep.mubr.f32.mxu0 0.0
        %2356 = vmatmul.mubr.f32.gmra.mrb[0].mxu0 %v1358
        %v2357 = vpop.f32.mrb[0].mxu0
        %v2358 = vadd.f32 0.0, %v2357
        %v2359 = vpop.f32.mrb[0].mxu0
        %2360 = vmatprep.mubr.f32.mxu0 0.0
        %2361 = vmatmul.mubr.f32.gmra.mrb[0].mxu0 %v1361
        %v2362 = vpop.f32.mrb[0].mxu0
        %v2363 = vadd.f32 0.0, %v2362
        %v2364 = vpop.f32.mrb[0].mxu0
        %2365 = vmatprep.mubr.f32.mxu0 0.0
        %2366 = vmatmul.mubr.f32.gmra.mrb[0].mxu0 %v1703
        %v2367 = vpop.f32.mrb[0].mxu0
        %v2368 = vadd.f32 0.0, %v2367
        %v2369 = vpop.f32.mrb[0].mxu0
        %2370 = vmatprep.mubr.f32.mxu0 0.0
        %2371 = vmatmul.mubr.f32.gmra.mrb[0].mxu0 %v1703
        %v2372 = vpop.f32.mrb[0].mxu0
        %v2373 = vadd.f32 0.0, %v2372
        %v2374 = vpop.f32.mrb[0].mxu0
        %2375 = vmatprep.mubr.f32.mxu0 0.0
        %2376 = vmatmul.mubr.f32.gmra.mrb[0].mxu0 %v1703
        %v2377 = vpop.f32.mrb[0].mxu0
        %v2378 = vadd.f32 0.0, %v2377
        %v2379 = vpop.f32.mrb[0].mxu0
        %2380 = vdwg.mxu0
        %v2381 = vadd.f32 %v1775, %v2113
        %v2382 = vadd.f32 %v1780, %v2118
        %v2383 = vadd.f32 %v1785, %v2123
        %v2384 = vadd.f32 %v1790, %v2128
        %v2385 = vadd.f32 %v1795, %v2133
        %v2386 = vadd.f32 %v1800, %v2138
        %v2387 = vadd.f32 %v1805, %v2143
        %v2388 = vadd.f32 %v1810, %v2148
        %v2389 = vadd.f32 %v1815, %v2153
        %v2390 = vadd.f32 %v1820, %v2158
        %v2391 = vadd.f32 %v1825, %v2163
        %v2392 = vadd.f32 %v1830, %v2168
        %v2393 = vadd.f32 %v1835, %v2173
        %v2394 = vadd.f32 %v1840, %v2178
        %v2395 = vadd.f32 %v1845, %v2183
        %v2396 = vadd.f32 %v1850, %v2188
        %v2397 = vadd.f32 %v1855, %v2193
        %v2398 = vadd.f32 %v1860, %v2198
        %v2399 = vadd.f32 %v1865, %v2203
        %v2400 = vadd.f32 %v1870, %v2208
        %v2401 = vadd.f32 %v1875, %v2213
        %v2402 = vadd.f32 %v1880, %v2218
        %v2403 = vadd.f32 %v1885, %v2223
        %v2404 = vadd.f32 %v1890, %v2228
        %v2405 = vadd.f32 %v1895, %v2233
        %v2406 = vadd.f32 %v1900, %v2238
        %v2407 = vadd.f32 %v1905, %v2243
        %v2408 = vadd.f32 %v1910, %v2248
        %v2409 = vadd.f32 %v1915, %v2253
        %v2410 = vadd.f32 %v1920, %v2258
        %v2411 = vadd.f32 %v1925, %v2263
        %v2412 = vadd.f32 %v1930, %v2268
        %v2413 = vadd.f32 %v1935, %v2273
        %v2414 = vadd.f32 %v1940, %v2278
        %v2415 = vadd.f32 %v1945, %v2283
        %v2416 = vadd.f32 %v1950, %v2288
        %v2417 = vadd.f32 %v1955, %v2293
        %v2418 = vadd.f32 %v1960, %v2298
        %v2419 = vadd.f32 %v1965, %v2303
        %v2420 = vadd.f32 %v1970, %v2308
        %v2421 = vadd.f32 %v1975, %v2313
        %v2422 = vadd.f32 %v1980, %v2318
        %v2423 = vadd.f32 %v1985, %v2323
        %v2424 = vadd.f32 %v1990, %v2328
        %v2425 = vadd.f32 %v1995, %v2333
        %v2426 = vadd.f32 %v2000, %v2338
        %v2427 = vadd.f32 %v2005, %v2343
        %v2428 = vadd.f32 %v2010, %v2348
        %v2429 = vadd.f32 %v2015, %v2353
        %v2430 = vadd.f32 %v2020, %v2358
        %v2431 = vadd.f32 %v2025, %v2363
        %v2432 = vadd.f32 %v2030, %v2368
        %v2433 = vadd.f32 %v2035, %v2373
        %v2434 = vadd.f32 %v2040, %v2378
        %v2435 = vld [vmem:[%s2] sm:$0x1]
        %v2437 = vlaneseq
        %v2438 = vshrl.u32 %v2437, 7
        %v2439 = vsub.s32 0, %v2438
        %v2440 = vrot.slane %v2435, %v2439
        %v2442 = vadd.f32 %v2381, %v2440
        %v2443 = vadd.f32 %v2382, %v2440
        %v2444 = vadd.f32 %v2383, %v2440
        %v2445 = vadd.f32 %v2384, %v2440
        %v2446 = vadd.f32 %v2385, %v2440
        %v2447 = vadd.f32 %v2386, %v2440
        %v2448 = vadd.f32 %v2387, %v2440
        %v2449 = vadd.f32 %v2388, %v2440
        %v2450 = vadd.f32 %v2389, %v2440
        %v2451 = vadd.f32 %v2390, %v2440
        %v2452 = vadd.f32 %v2391, %v2440
        %v2453 = vadd.f32 %v2392, %v2440
        %v2454 = vadd.f32 %v2393, %v2440
        %v2455 = vadd.f32 %v2394, %v2440
        %v2456 = vadd.f32 %v2395, %v2440
        %v2457 = vadd.f32 %v2396, %v2440
        %v2458 = vadd.f32 %v2397, %v2440
        %v2459 = vadd.f32 %v2398, %v2440
        %v2460 = vadd.f32 %v2399, %v2440
        %v2461 = vadd.f32 %v2400, %v2440
        %v2462 = vadd.f32 %v2401, %v2440
        %v2463 = vadd.f32 %v2402, %v2440
        %v2464 = vadd.f32 %v2403, %v2440
        %v2465 = vadd.f32 %v2404, %v2440
        %v2466 = vadd.f32 %v2405, %v2440
        %v2467 = vadd.f32 %v2406, %v2440
        %v2468 = vadd.f32 %v2407, %v2440
        %v2469 = vadd.f32 %v2408, %v2440
        %v2470 = vadd.f32 %v2409, %v2440
        %v2471 = vadd.f32 %v2410, %v2440
        %v2472 = vadd.f32 %v2411, %v2440
        %v2473 = vadd.f32 %v2412, %v2440
        %v2474 = vadd.f32 %v2413, %v2440
        %v2475 = vadd.f32 %v2414, %v2440
        %v2476 = vadd.f32 %v2415, %v2440
        %v2477 = vadd.f32 %v2416, %v2440
        %v2478 = vadd.f32 %v2417, %v2440
        %v2479 = vadd.f32 %v2418, %v2440
        %v2480 = vadd.f32 %v2419, %v2440
        %v2481 = vadd.f32 %v2420, %v2440
        %v2482 = vadd.f32 %v2421, %v2440
        %v2483 = vadd.f32 %v2422, %v2440
        %v2484 = vadd.f32 %v2423, %v2440
        %v2485 = vadd.f32 %v2424, %v2440
        %v2486 = vadd.f32 %v2425, %v2440
        %v2487 = vadd.f32 %v2426, %v2440
        %v2488 = vadd.f32 %v2427, %v2440
        %v2489 = vadd.f32 %v2428, %v2440
        %v2490 = vadd.f32 %v2429, %v2440
        %v2491 = vadd.f32 %v2430, %v2440
        %v2492 = vadd.f32 %v2431, %v2440
        %v2493 = vadd.f32 %v2432, %v2440
        %v2494 = vadd.f32 %v2433, %v2440
        %v2495 = vadd.f32 %v2434, %v2440
        %vm2496 = vcmp.ge.f32.partialorder %v2442, 0.0
        %vm2497 = vcmp.ge.f32.partialorder %v2443, 0.0
        %vm2498 = vcmp.ge.f32.partialorder %v2444, 0.0
        %vm2499 = vcmp.ge.f32.partialorder %v2445, 0.0
        %vm2500 = vcmp.ge.f32.partialorder %v2446, 0.0
        %vm2501 = vcmp.ge.f32.partialorder %v2447, 0.0
        %vm2502 = vcmp.ge.f32.partialorder %v2448, 0.0
        %vm2503 = vcmp.ge.f32.partialorder %v2449, 0.0
        %vm2504 = vcmp.ge.f32.partialorder %v2450, 0.0
        %vm2505 = vcmp.ge.f32.partialorder %v2451, 0.0
        %vm2506 = vcmp.ge.f32.partialorder %v2452, 0.0
        %vm2507 = vcmp.ge.f32.partialorder %v2453, 0.0
        %vm2508 = vcmp.ge.f32.partialorder %v2454, 0.0
        %vm2509 = vcmp.ge.f32.partialorder %v2455, 0.0
        %vm2510 = vcmp.ge.f32.partialorder %v2456, 0.0
        %vm2511 = vcmp.ge.f32.partialorder %v2457, 0.0
        %vm2512 = vcmp.ge.f32.partialorder %v2458, 0.0
        %vm2513 = vcmp.ge.f32.partialorder %v2459, 0.0
        %vm2514 = vcmp.ge.f32.partialorder %v2460, 0.0
        %vm2515 = vcmp.ge.f32.partialorder %v2461, 0.0
        %vm2516 = vcmp.ge.f32.partialorder %v2462, 0.0
        %vm2517 = vcmp.ge.f32.partialorder %v2463, 0.0
        %vm2518 = vcmp.ge.f32.partialorder %v2464, 0.0
        %vm2519 = vcmp.ge.f32.partialorder %v2465, 0.0
        %vm2520 = vcmp.ge.f32.partialorder %v2466, 0.0
        %vm2521 = vcmp.ge.f32.partialorder %v2467, 0.0
        %vm2522 = vcmp.ge.f32.partialorder %v2468, 0.0
        %vm2523 = vcmp.ge.f32.partialorder %v2469, 0.0
        %vm2524 = vcmp.ge.f32.partialorder %v2470, 0.0
        %vm2525 = vcmp.ge.f32.partialorder %v2471, 0.0
        %vm2526 = vcmp.ge.f32.partialorder %v2472, 0.0
        %vm2527 = vcmp.ge.f32.partialorder %v2473, 0.0
        %vm2528 = vcmp.ge.f32.partialorder %v2474, 0.0
        %vm2529 = vcmp.ge.f32.partialorder %v2475, 0.0
        %vm2530 = vcmp.ge.f32.partialorder %v2476, 0.0
        %vm2531 = vcmp.ge.f32.partialorder %v2477, 0.0
        %vm2532 = vcmp.ge.f32.partialorder %v2478, 0.0
        %vm2533 = vcmp.ge.f32.partialorder %v2479, 0.0
        %vm2534 = vcmp.ge.f32.partialorder %v2480, 0.0
        %vm2535 = vcmp.ge.f32.partialorder %v2481, 0.0
        %vm2536 = vcmp.ge.f32.partialorder %v2482, 0.0
        %vm2537 = vcmp.ge.f32.partialorder %v2483, 0.0
        %vm2538 = vcmp.ge.f32.partialorder %v2484, 0.0
        %vm2539 = vcmp.ge.f32.partialorder %v2485, 0.0
        %vm2540 = vcmp.ge.f32.partialorder %v2486, 0.0
        %vm2541 = vcmp.ge.f32.partialorder %v2487, 0.0
        %vm2542 = vcmp.ge.f32.partialorder %v2488, 0.0
        %vm2543 = vcmp.ge.f32.partialorder %v2489, 0.0
        %vm2544 = vcmp.ge.f32.partialorder %v2490, 0.0
        %vm2545 = vcmp.ge.f32.partialorder %v2491, 0.0
        %vm2546 = vcmp.ge.f32.partialorder %v2492, 0.0
        %vm2547 = vcmp.ge.f32.partialorder %v2493, 0.0
        %vm2548 = vcmp.ge.f32.partialorder %v2494, 0.0
        %vm2549 = vcmp.ge.f32.partialorder %v2495, 0.0
        %v2550 = vmul.f32 %v2442, 0.1
        %v2551 = vmul.f32 %v2443, 0.1
        %v2552 = vmul.f32 %v2444, 0.1
        %v2553 = vmul.f32 %v2445, 0.1
        %v2554 = vmul.f32 %v2446, 0.1
        %v2555 = vmul.f32 %v2447, 0.1
        %v2556 = vmul.f32 %v2448, 0.1
        %v2557 = vmul.f32 %v2449, 0.1
        %v2558 = vmul.f32 %v2450, 0.1
        %v2559 = vmul.f32 %v2451, 0.1
        %v2560 = vmul.f32 %v2452, 0.1
        %v2561 = vmul.f32 %v2453, 0.1
        %v2562 = vmul.f32 %v2454, 0.1
        %v2563 = vmul.f32 %v2455, 0.1
        %v2564 = vmul.f32 %v2456, 0.1
        %v2565 = vmul.f32 %v2457, 0.1
        %v2566 = vmul.f32 %v2458, 0.1
        %v2567 = vmul.f32 %v2459, 0.1
        %v2568 = vmul.f32 %v2460, 0.1
        %v2569 = vmul.f32 %v2461, 0.1
        %v2570 = vmul.f32 %v2462, 0.1
        %v2571 = vmul.f32 %v2463, 0.1
        %v2572 = vmul.f32 %v2464, 0.1
        %v2573 = vmul.f32 %v2465, 0.1
        %v2574 = vmul.f32 %v2466, 0.1
        %v2575 = vmul.f32 %v2467, 0.1
        %v2576 = vmul.f32 %v2468, 0.1
        %v2577 = vmul.f32 %v2469, 0.1
        %v2578 = vmul.f32 %v2470, 0.1
        %v2579 = vmul.f32 %v2471, 0.1
        %v2580 = vmul.f32 %v2472, 0.1
        %v2581 = vmul.f32 %v2473, 0.1
        %v2582 = vmul.f32 %v2474, 0.1
        %v2583 = vmul.f32 %v2475, 0.1
        %v2584 = vmul.f32 %v2476, 0.1
        %v2585 = vmul.f32 %v2477, 0.1
        %v2586 = vmul.f32 %v2478, 0.1
        %v2587 = vmul.f32 %v2479, 0.1
        %v2588 = vmul.f32 %v2480, 0.1
        %v2589 = vmul.f32 %v2481, 0.1
        %v2590 = vmul.f32 %v2482, 0.1
        %v2591 = vmul.f32 %v2483, 0.1
        %v2592 = vmul.f32 %v2484, 0.1
        %v2593 = vmul.f32 %v2485, 0.1
        %v2594 = vmul.f32 %v2486, 0.1
        %v2595 = vmul.f32 %v2487, 0.1
        %v2596 = vmul.f32 %v2488, 0.1
        %v2597 = vmul.f32 %v2489, 0.1
        %v2598 = vmul.f32 %v2490, 0.1
        %v2599 = vmul.f32 %v2491, 0.1
        %v2600 = vmul.f32 %v2492, 0.1
        %v2601 = vmul.f32 %v2493, 0.1
        %v2602 = vmul.f32 %v2494, 0.1
        %v2603 = vmul.f32 %v2495, 0.1
        %v2604 = vsel %vm2496, %v2442, %v2550
        %v2605 = vsel %vm2497, %v2443, %v2551
        %v2606 = vsel %vm2498, %v2444, %v2552
        %v2607 = vsel %vm2499, %v2445, %v2553
        %v2608 = vsel %vm2500, %v2446, %v2554
        %v2609 = vsel %vm2501, %v2447, %v2555
        %v2610 = vsel %vm2502, %v2448, %v2556
        %v2611 = vsel %vm2503, %v2449, %v2557
        %v2612 = vsel %vm2504, %v2450, %v2558
        %v2613 = vsel %vm2505, %v2451, %v2559
        %v2614 = vsel %vm2506, %v2452, %v2560
        %v2615 = vsel %vm2507, %v2453, %v2561
        %v2616 = vsel %vm2508, %v2454, %v2562
        %v2617 = vsel %vm2509, %v2455, %v2563
        %v2618 = vsel %vm2510, %v2456, %v2564
        %v2619 = vsel %vm2511, %v2457, %v2565
        %v2620 = vsel %vm2512, %v2458, %v2566
        %v2621 = vsel %vm2513, %v2459, %v2567
        %v2622 = vsel %vm2514, %v2460, %v2568
        %v2623 = vsel %vm2515, %v2461, %v2569
        %v2624 = vsel %vm2516, %v2462, %v2570
        %v2625 = vsel %vm2517, %v2463, %v2571
        %v2626 = vsel %vm2518, %v2464, %v2572
        %v2627 = vsel %vm2519, %v2465, %v2573
        %v2628 = vsel %vm2520, %v2466, %v2574
        %v2629 = vsel %vm2521, %v2467, %v2575
        %v2630 = vsel %vm2522, %v2468, %v2576
        %v2631 = vsel %vm2523, %v2469, %v2577
        %v2632 = vsel %vm2524, %v2470, %v2578
        %v2633 = vsel %vm2525, %v2471, %v2579
        %v2634 = vsel %vm2526, %v2472, %v2580
        %v2635 = vsel %vm2527, %v2473, %v2581
        %v2636 = vsel %vm2528, %v2474, %v2582
        %v2637 = vsel %vm2529, %v2475, %v2583
        %v2638 = vsel %vm2530, %v2476, %v2584
        %v2639 = vsel %vm2531, %v2477, %v2585
        %v2640 = vsel %vm2532, %v2478, %v2586
        %v2641 = vsel %vm2533, %v2479, %v2587
        %v2642 = vsel %vm2534, %v2480, %v2588
        %v2643 = vsel %vm2535, %v2481, %v2589
        %v2644 = vsel %vm2536, %v2482, %v2590
        %v2645 = vsel %vm2537, %v2483, %v2591
        %v2646 = vsel %vm2538, %v2484, %v2592
        %v2647 = vsel %vm2539, %v2485, %v2593
        %v2648 = vsel %vm2540, %v2486, %v2594
        %v2649 = vsel %vm2541, %v2487, %v2595
        %v2650 = vsel %vm2542, %v2488, %v2596
        %v2651 = vsel %vm2543, %v2489, %v2597
        %v2652 = vsel %vm2544, %v2490, %v2598
        %v2653 = vsel %vm2545, %v2491, %v2599
        %v2654 = vsel %vm2546, %v2492, %v2600
        %v2655 = vsel %vm2547, %v2493, %v2601
        %v2656 = vsel %vm2548, %v2494, %v2602
        %v2657 = vsel %vm2549, %v2495, %v2603
        %2659 = vset.pattern.permute.xlu0 0
        %2660 = vperm.xlu0 %2659, %v318
        %v2661 = vpop.permute.xlu0 %2660
        %2664 = vset.pattern.permute.xlu0 0
        %2665 = vperm.xlu0 %2664, %v319
        %v2666 = vpop.permute.xlu0 %2665
        %2669 = vset.pattern.permute.xlu0 0
        %2670 = vperm.xlu0 %2669, %v320
        %v2671 = vpop.permute.xlu0 %2670
        %2674 = vset.pattern.permute.xlu0 0
        %2675 = vperm.xlu0 %2674, %v321
        %v2676 = vpop.permute.xlu0 %2675
        %2679 = vset.pattern.permute.xlu0 0
        %2680 = vperm.xlu0 %2679, %v322
        %v2681 = vpop.permute.xlu0 %2680
        %2684 = vset.pattern.permute.xlu0 0
        %2685 = vperm.xlu0 %2684, %v323
        %v2686 = vpop.permute.xlu0 %2685
        %2689 = vset.pattern.permute.xlu0 0
        %2690 = vperm.xlu0 %2689, %v324
        %v2691 = vpop.permute.xlu0 %2690
        %2694 = vset.pattern.permute.xlu0 0
        %2695 = vperm.xlu0 %2694, %v325
        %v2696 = vpop.permute.xlu0 %2695
        %2699 = vset.pattern.permute.xlu0 0
        %2700 = vperm.xlu0 %2699, %v326
        %v2701 = vpop.permute.xlu0 %2700
        %2704 = vset.pattern.permute.xlu0 0
        %2705 = vperm.xlu0 %2704, %v327
        %v2706 = vpop.permute.xlu0 %2705
        %2709 = vset.pattern.permute.xlu0 0
        %2710 = vperm.xlu0 %2709, %v328
        %v2711 = vpop.permute.xlu0 %2710
        %2714 = vset.pattern.permute.xlu0 0
        %2715 = vperm.xlu0 %2714, %v329
        %v2716 = vpop.permute.xlu0 %2715
        %2719 = vset.pattern.permute.xlu0 0
        %2720 = vperm.xlu0 %2719, %v330
        %v2721 = vpop.permute.xlu0 %2720
        %2724 = vset.pattern.permute.xlu0 0
        %2725 = vperm.xlu0 %2724, %v331
        %v2726 = vpop.permute.xlu0 %2725
        %2729 = vset.pattern.permute.xlu0 0
        %2730 = vperm.xlu0 %2729, %v332
        %v2731 = vpop.permute.xlu0 %2730
        %2734 = vset.pattern.permute.xlu0 0
        %2735 = vperm.xlu0 %2734, %v333
        %v2736 = vpop.permute.xlu0 %2735
        %2739 = vset.pattern.permute.xlu0 0
        %2740 = vperm.xlu0 %2739, %v334
        %v2741 = vpop.permute.xlu0 %2740
        %2744 = vset.pattern.permute.xlu0 0
        %2745 = vperm.xlu0 %2744, %v335
        %v2746 = vpop.permute.xlu0 %2745
        %2749 = vset.pattern.permute.xlu0 0
        %2750 = vperm.xlu0 %2749, %v336
        %v2751 = vpop.permute.xlu0 %2750
        %2754 = vset.pattern.permute.xlu0 0
        %2755 = vperm.xlu0 %2754, %v337
        %v2756 = vpop.permute.xlu0 %2755
        %2759 = vset.pattern.permute.xlu0 0
        %2760 = vperm.xlu0 %2759, %v338
        %v2761 = vpop.permute.xlu0 %2760
        %2764 = vset.pattern.permute.xlu0 0
        %2765 = vperm.xlu0 %2764, %v339
        %v2766 = vpop.permute.xlu0 %2765
        %2769 = vset.pattern.permute.xlu0 0
        %2770 = vperm.xlu0 %2769, %v340
        %v2771 = vpop.permute.xlu0 %2770
        %2774 = vset.pattern.permute.xlu0 0
        %2775 = vperm.xlu0 %2774, %v341
        %v2776 = vpop.permute.xlu0 %2775
        %2779 = vset.pattern.permute.xlu0 0
        %2780 = vperm.xlu0 %2779, %v342
        %v2781 = vpop.permute.xlu0 %2780
        %2784 = vset.pattern.permute.xlu0 0
        %2785 = vperm.xlu0 %2784, %v343
        %v2786 = vpop.permute.xlu0 %2785
        %2789 = vset.pattern.permute.xlu0 0
        %2790 = vperm.xlu0 %2789, %v344
        %v2791 = vpop.permute.xlu0 %2790
        %2794 = vset.pattern.permute.xlu0 0
        %2795 = vperm.xlu0 %2794, %v345
        %v2796 = vpop.permute.xlu0 %2795
        %2799 = vset.pattern.permute.xlu0 0
        %2800 = vperm.xlu0 %2799, %v346
        %v2801 = vpop.permute.xlu0 %2800
        %2804 = vset.pattern.permute.xlu0 0
        %2805 = vperm.xlu0 %2804, %v347
        %v2806 = vpop.permute.xlu0 %2805
        %2809 = vset.pattern.permute.xlu0 0
        %2810 = vperm.xlu0 %2809, %v348
        %v2811 = vpop.permute.xlu0 %2810
        %2814 = vset.pattern.permute.xlu0 0
        %2815 = vperm.xlu0 %2814, %v349
        %v2816 = vpop.permute.xlu0 %2815
        %2819 = vset.pattern.permute.xlu0 0
        %2820 = vperm.xlu0 %2819, %v350
        %v2821 = vpop.permute.xlu0 %2820
        %2824 = vset.pattern.permute.xlu0 0
        %2825 = vperm.xlu0 %2824, %v351
        %v2826 = vpop.permute.xlu0 %2825
        %2829 = vset.pattern.permute.xlu0 0
        %2830 = vperm.xlu0 %2829, %v352
        %v2831 = vpop.permute.xlu0 %2830
        %2834 = vset.pattern.permute.xlu0 0
        %2835 = vperm.xlu0 %2834, %v353
        %v2836 = vpop.permute.xlu0 %2835
        %2839 = vset.pattern.permute.xlu0 0
        %2840 = vperm.xlu0 %2839, %v354
        %v2841 = vpop.permute.xlu0 %2840
        %2844 = vset.pattern.permute.xlu0 0
        %2845 = vperm.xlu0 %2844, %v355
        %v2846 = vpop.permute.xlu0 %2845
        %2849 = vset.pattern.permute.xlu0 0
        %2850 = vperm.xlu0 %2849, %v356
        %v2851 = vpop.permute.xlu0 %2850
        %2854 = vset.pattern.permute.xlu0 0
        %2855 = vperm.xlu0 %2854, %v357
        %v2856 = vpop.permute.xlu0 %2855
        %2859 = vset.pattern.permute.xlu0 0
        %2860 = vperm.xlu0 %2859, %v358
        %v2861 = vpop.permute.xlu0 %2860
        %2864 = vset.pattern.permute.xlu0 0
        %2865 = vperm.xlu0 %2864, %v359
        %v2866 = vpop.permute.xlu0 %2865
        %2869 = vset.pattern.permute.xlu0 0
        %2870 = vperm.xlu0 %2869, %v360
        %v2871 = vpop.permute.xlu0 %2870
        %2874 = vset.pattern.permute.xlu0 0
        %2875 = vperm.xlu0 %2874, %v361
        %v2876 = vpop.permute.xlu0 %2875
        %2879 = vset.pattern.permute.xlu0 0
        %2880 = vperm.xlu0 %2879, %v362
        %v2881 = vpop.permute.xlu0 %2880
        %2884 = vset.pattern.permute.xlu0 0
        %2885 = vperm.xlu0 %2884, %v363
        %v2886 = vpop.permute.xlu0 %2885
        %2889 = vset.pattern.permute.xlu0 0
        %2890 = vperm.xlu0 %2889, %v364
        %v2891 = vpop.permute.xlu0 %2890
        %2894 = vset.pattern.permute.xlu0 0
        %2895 = vperm.xlu0 %2894, %v365
        %v2896 = vpop.permute.xlu0 %2895
        %2899 = vset.pattern.permute.xlu0 0
        %2900 = vperm.xlu0 %2899, %v366
        %v2901 = vpop.permute.xlu0 %2900
        %2904 = vset.pattern.permute.xlu0 0
        %2905 = vperm.xlu0 %2904, %v367
        %v2906 = vpop.permute.xlu0 %2905
        %2909 = vset.pattern.permute.xlu0 0
        %2910 = vperm.xlu0 %2909, %v368
        %v2911 = vpop.permute.xlu0 %2910
        %2914 = vset.pattern.permute.xlu0 0
        %2915 = vperm.xlu0 %2914, %v369
        %v2916 = vpop.permute.xlu0 %2915
        %2919 = vset.pattern.permute.xlu0 0
        %2920 = vperm.xlu0 %2919, %v370
        %v2921 = vpop.permute.xlu0 %2920
        %2924 = vset.pattern.permute.xlu0 0
        %2925 = vperm.xlu0 %2924, %v371
        %v2926 = vpop.permute.xlu0 %2925
        %v2928 = vmul.f32 %v2604, %v2661
        %v2929 = vmul.f32 %v2605, %v2666
        %v2930 = vmul.f32 %v2606, %v2671
        %v2931 = vmul.f32 %v2607, %v2676
        %v2932 = vmul.f32 %v2608, %v2681
        %v2933 = vmul.f32 %v2609, %v2686
        %v2934 = vmul.f32 %v2610, %v2691
        %v2935 = vmul.f32 %v2611, %v2696
        %v2936 = vmul.f32 %v2612, %v2701
        %v2937 = vmul.f32 %v2613, %v2706
        %v2938 = vmul.f32 %v2614, %v2711
        %v2939 = vmul.f32 %v2615, %v2716
        %v2940 = vmul.f32 %v2616, %v2721
        %v2941 = vmul.f32 %v2617, %v2726
        %v2942 = vmul.f32 %v2618, %v2731
        %v2943 = vmul.f32 %v2619, %v2736
        %v2944 = vmul.f32 %v2620, %v2741
        %v2945 = vmul.f32 %v2621, %v2746
        %v2946 = vmul.f32 %v2622, %v2751
        %v2947 = vmul.f32 %v2623, %v2756
        %v2948 = vmul.f32 %v2624, %v2761
        %v2949 = vmul.f32 %v2625, %v2766
        %v2950 = vmul.f32 %v2626, %v2771
        %v2951 = vmul.f32 %v2627, %v2776
        %v2952 = vmul.f32 %v2628, %v2781
        %v2953 = vmul.f32 %v2629, %v2786
        %v2954 = vmul.f32 %v2630, %v2791
        %v2955 = vmul.f32 %v2631, %v2796
        %v2956 = vmul.f32 %v2632, %v2801
        %v2957 = vmul.f32 %v2633, %v2806
        %v2958 = vmul.f32 %v2634, %v2811
        %v2959 = vmul.f32 %v2635, %v2816
        %v2960 = vmul.f32 %v2636, %v2821
        %v2961 = vmul.f32 %v2637, %v2826
        %v2962 = vmul.f32 %v2638, %v2831
        %v2963 = vmul.f32 %v2639, %v2836
        %v2964 = vmul.f32 %v2640, %v2841
        %v2965 = vmul.f32 %v2641, %v2846
        %v2966 = vmul.f32 %v2642, %v2851
        %v2967 = vmul.f32 %v2643, %v2856
        %v2968 = vmul.f32 %v2644, %v2861
        %v2969 = vmul.f32 %v2645, %v2866
        %v2970 = vmul.f32 %v2646, %v2871
        %v2971 = vmul.f32 %v2647, %v2876
        %v2972 = vmul.f32 %v2648, %v2881
        %v2973 = vmul.f32 %v2649, %v2886
        %v2974 = vmul.f32 %v2650, %v2891
        %v2975 = vmul.f32 %v2651, %v2896
        %v2976 = vmul.f32 %v2652, %v2901
        %v2977 = vmul.f32 %v2653, %v2906
        %v2978 = vmul.f32 %v2654, %v2911
        %v2979 = vmul.f32 %v2655, %v2916
        %v2980 = vmul.f32 %v2656, %v2921
        %v2981 = vmul.f32 %v2657, %v2926
        %vm2982 = vcmask 261120
        %2983 = vst.msk [vmem:[#allocation2] sm:$0xff] %vm2982, %v2928
        %2984 = vst.msk [vmem:[#allocation2 + $0x8] sm:$0xff] %vm2982, %v2929
        %2985 = vst.msk [vmem:[#allocation2 + $0x10] sm:$0xff] %vm2982, %v2930
        %2986 = vst.msk [vmem:[#allocation2 + $0x18] sm:$0xff] %vm2982, %v2931
        %2987 = vst.msk [vmem:[#allocation2 + $0x20] sm:$0xff] %vm2982, %v2932
        %2988 = vst.msk [vmem:[#allocation2 + $0x28] sm:$0xff] %vm2982, %v2933
        %2989 = vst.msk [vmem:[#allocation2 + $0x30] sm:$0xff] %vm2982, %v2934
        %2990 = vst.msk [vmem:[#allocation2 + $0x38] sm:$0xff] %vm2982, %v2935
        %2991 = vst.msk [vmem:[#allocation2 + $0x40] sm:$0xff] %vm2982, %v2936
        %2992 = vst.msk [vmem:[#allocation2 + $0x48] sm:$0xff] %vm2982, %v2937
        %2993 = vst.msk [vmem:[#allocation2 + $0x50] sm:$0xff] %vm2982, %v2938
        %2994 = vst.msk [vmem:[#allocation2 + $0x58] sm:$0xff] %vm2982, %v2939
        %2995 = vst.msk [vmem:[#allocation2 + $0x60] sm:$0xff] %vm2982, %v2940
        %2996 = vst.msk [vmem:[#allocation2 + $0x68] sm:$0xff] %vm2982, %v2941
        %2997 = vst.msk [vmem:[#allocation2 + $0x70] sm:$0xff] %vm2982, %v2942
        %2998 = vst.msk [vmem:[#allocation2 + $0x78] sm:$0xff] %vm2982, %v2943
        %2999 = vst.msk [vmem:[#allocation2 + $0x80] sm:$0xff] %vm2982, %v2944
        %3000 = vst.msk [vmem:[#allocation2 + $0x88] sm:$0xff] %vm2982, %v2945
        %3001 = vst.msk [vmem:[#allocation2 + $0x90] sm:$0xff] %vm2982, %v2946
        %3002 = vst.msk [vmem:[#allocation2 + $0x98] sm:$0xff] %vm2982, %v2947
        %3003 = vst.msk [vmem:[#allocation2 + $0xa0] sm:$0xff] %vm2982, %v2948
        %3004 = vst.msk [vmem:[#allocation2 + $0xa8] sm:$0xff] %vm2982, %v2949
        %3005 = vst.msk [vmem:[#allocation2 + $0xb0] sm:$0xff] %vm2982, %v2950
        %3006 = vst.msk [vmem:[#allocation2 + $0xb8] sm:$0xff] %vm2982, %v2951
        %3007 = vst.msk [vmem:[#allocation2 + $0xc0] sm:$0xff] %vm2982, %v2952
        %3008 = vst.msk [vmem:[#allocation2 + $0xc8] sm:$0xff] %vm2982, %v2953
        %3009 = vst.msk [vmem:[#allocation2 + $0xd0] sm:$0xff] %vm2982, %v2954
        %3010 = vst.msk [vmem:[#allocation2 + $0xd8] sm:$0xff] %vm2982, %v2955
        %3011 = vst.msk [vmem:[#allocation2 + $0xe0] sm:$0xff] %vm2982, %v2956
        %3012 = vst.msk [vmem:[#allocation2 + $0xe8] sm:$0xff] %vm2982, %v2957
        %3013 = vst.msk [vmem:[#allocation2 + $0xf0] sm:$0xff] %vm2982, %v2958
        %3014 = vst.msk [vmem:[#allocation2 + $0xf8] sm:$0xff] %vm2982, %v2959
        %3015 = vst.msk [vmem:[#allocation2 + $0x100] sm:$0xff] %vm2982, %v2960
        %3016 = vst.msk [vmem:[#allocation2 + $0x108] sm:$0xff] %vm2982, %v2961
        %3017 = vst.msk [vmem:[#allocation2 + $0x110] sm:$0xff] %vm2982, %v2962
        %3018 = vst.msk [vmem:[#allocation2 + $0x118] sm:$0xff] %vm2982, %v2963
        %3019 = vst.msk [vmem:[#allocation2 + $0x120] sm:$0xff] %vm2982, %v2964
        %3020 = vst.msk [vmem:[#allocation2 + $0x128] sm:$0xff] %vm2982, %v2965
        %3021 = vst.msk [vmem:[#allocation2 + $0x130] sm:$0xff] %vm2982, %v2966
        %3022 = vst.msk [vmem:[#allocation2 + $0x138] sm:$0xff] %vm2982, %v2967
        %3023 = vst.msk [vmem:[#allocation2 + $0x140] sm:$0xff] %vm2982, %v2968
        %3024 = vst.msk [vmem:[#allocation2 + $0x148] sm:$0xff] %vm2982, %v2969
        %3025 = vst.msk [vmem:[#allocation2 + $0x150] sm:$0xff] %vm2982, %v2970
        %3026 = vst.msk [vmem:[#allocation2 + $0x158] sm:$0xff] %vm2982, %v2971
        %3027 = vst.msk [vmem:[#allocation2 + $0x160] sm:$0xff] %vm2982, %v2972
        %3028 = vst.msk [vmem:[#allocation2 + $0x168] sm:$0xff] %vm2982, %v2973
        %3029 = vst.msk [vmem:[#allocation2 + $0x170] sm:$0xff] %vm2982, %v2974
        %3030 = vst.msk [vmem:[#allocation2 + $0x178] sm:$0xff] %vm2982, %v2975
        %3031 = vst.msk [vmem:[#allocation2 + $0x180] sm:$0xff] %vm2982, %v2976
        %3032 = vst.msk [vmem:[#allocation2 + $0x188] sm:$0xff] %vm2982, %v2977
        %3033 = vst.msk [vmem:[#allocation2 + $0x190] sm:$0xff] %vm2982, %v2978
        %3034 = vst.msk [vmem:[#allocation2 + $0x198] sm:$0xff] %vm2982, %v2979
        %3035 = vst.msk [vmem:[#allocation2 + $0x1a0] sm:$0xff] %vm2982, %v2980
        %3036 = vst.msk [vmem:[#allocation2 + $0x1a8] sm:$0xff] %vm2982, %v2981
      $region56: #{residual_blocks_with_input_conv.1} parent=51 // pred_fallthru
        _
      %p3037 = scmp.gt.s32.totalorder %s24, 0
      // Predicated region
      $region57: #{residual_blocks_with_input_conv.1} parent=51 // pred_check
        %p3038 = pneg %p3037
      $region58: #{residual_blocks_with_input_conv.1} parent=51 // pred_check_branch
        %3040 = sbr.rel (%p3038) target = $region60
      $region59: #{residual_blocks_with_input_conv.1} parent=51 // pred_region
        %s3041 = ssub.s32 %s24, 1
        %p3042 = scmp.gt.s32.totalorder %s3041, 0
        %s3043 = scalar_select %p3042, %s3041, 0
        %v3044 = vld [vmem:[#allocation2] sm:$0xff]
        %v3045 = vld [vmem:[#allocation2 + $0x8] sm:$0xff]
        %v3046 = vld [vmem:[#allocation2 + $0x10] sm:$0xff]
        %v3047 = vld [vmem:[#allocation2 + $0x18] sm:$0xff]
        %v3048 = vld [vmem:[#allocation2 + $0x20] sm:$0xff]
        %v3049 = vld [vmem:[#allocation2 + $0x28] sm:$0xff]
        %v3050 = vld [vmem:[#allocation2 + $0x30] sm:$0xff]
        %v3051 = vld [vmem:[#allocation2 + $0x38] sm:$0xff]
        %v3052 = vld [vmem:[#allocation2 + $0x40] sm:$0xff]
        %v3053 = vld [vmem:[#allocation2 + $0x48] sm:$0xff]
        %v3054 = vld [vmem:[#allocation2 + $0x50] sm:$0xff]
        %v3055 = vld [vmem:[#allocation2 + $0x58] sm:$0xff]
        %v3056 = vld [vmem:[#allocation2 + $0x60] sm:$0xff]
        %v3057 = vld [vmem:[#allocation2 + $0x68] sm:$0xff]
        %v3058 = vld [vmem:[#allocation2 + $0x70] sm:$0xff]
        %v3059 = vld [vmem:[#allocation2 + $0x78] sm:$0xff]
        %v3060 = vld [vmem:[#allocation2 + $0x80] sm:$0xff]
        %v3061 = vld [vmem:[#allocation2 + $0x88] sm:$0xff]
        %v3062 = vld [vmem:[#allocation2 + $0x90] sm:$0xff]
        %v3063 = vld [vmem:[#allocation2 + $0x98] sm:$0xff]
        %v3064 = vld [vmem:[#allocation2 + $0xa0] sm:$0xff]
        %v3065 = vld [vmem:[#allocation2 + $0xa8] sm:$0xff]
        %v3066 = vld [vmem:[#allocation2 + $0xb0] sm:$0xff]
        %v3067 = vld [vmem:[#allocation2 + $0xb8] sm:$0xff]
        %v3068 = vld [vmem:[#allocation2 + $0xc0] sm:$0xff]
        %v3069 = vld [vmem:[#allocation2 + $0xc8] sm:$0xff]
        %v3070 = vld [vmem:[#allocation2 + $0xd0] sm:$0xff]
        %v3071 = vld [vmem:[#allocation2 + $0xd8] sm:$0xff]
        %v3072 = vld [vmem:[#allocation2 + $0xe0] sm:$0xff]
        %v3073 = vld [vmem:[#allocation2 + $0xe8] sm:$0xff]
        %v3074 = vld [vmem:[#allocation2 + $0xf0] sm:$0xff]
        %v3075 = vld [vmem:[#allocation2 + $0xf8] sm:$0xff]
        %v3076 = vld [vmem:[#allocation2 + $0x100] sm:$0xff]
        %v3077 = vld [vmem:[#allocation2 + $0x108] sm:$0xff]
        %v3078 = vld [vmem:[#allocation2 + $0x110] sm:$0xff]
        %v3079 = vld [vmem:[#allocation2 + $0x118] sm:$0xff]
        %v3080 = vld [vmem:[#allocation2 + $0x120] sm:$0xff]
        %v3081 = vld [vmem:[#allocation2 + $0x128] sm:$0xff]
        %v3082 = vld [vmem:[#allocation2 + $0x130] sm:$0xff]
        %v3083 = vld [vmem:[#allocation2 + $0x138] sm:$0xff]
        %v3084 = vld [vmem:[#allocation2 + $0x140] sm:$0xff]
        %v3085 = vld [vmem:[#allocation2 + $0x148] sm:$0xff]
        %v3086 = vld [vmem:[#allocation2 + $0x150] sm:$0xff]
        %v3087 = vld [vmem:[#allocation2 + $0x158] sm:$0xff]
        %v3088 = vld [vmem:[#allocation2 + $0x160] sm:$0xff]
        %v3089 = vld [vmem:[#allocation2 + $0x168] sm:$0xff]
        %v3090 = vld [vmem:[#allocation2 + $0x170] sm:$0xff]
        %v3091 = vld [vmem:[#allocation2 + $0x178] sm:$0xff]
        %v3092 = vld [vmem:[#allocation2 + $0x180] sm:$0xff]
        %v3093 = vld [vmem:[#allocation2 + $0x188] sm:$0xff]
        %v3094 = vld [vmem:[#allocation2 + $0x190] sm:$0xff]
        %v3095 = vld [vmem:[#allocation2 + $0x198] sm:$0xff]
        %v3096 = vld [vmem:[#allocation2 + $0x1a0] sm:$0xff]
        %v3097 = vld [vmem:[#allocation2 + $0x1a8] sm:$0xff]
        %s3098 = smul.u32 %s3043, 3
        %s3099 = smul.u32 %s3098, 96
        %s3100 = scalar_lea.vmem %s3, %s3099
        %v3101 = vld [vmem:[%s3100] sm:$0xff]
        %v3102 = vld [vmem:[%s3100 + $0x8] sm:$0xff]
        %v3103 = vld [vmem:[%s3100 + $0x10] sm:$0xff]
        %v3104 = vld [vmem:[%s3100 + $0x18] sm:$0xff]
        %v3105 = vld [vmem:[%s3100 + $0x20] sm:$0xff]
        %v3106 = vld [vmem:[%s3100 + $0x28] sm:$0xff]
        %v3107 = vld [vmem:[%s3100 + $0x30] sm:$0xff]
        %v3108 = vld [vmem:[%s3100 + $0x38] sm:$0xff]
        %v3109 = vld [vmem:[%s3100 + $0x40] sm:$0xff]
        %v3110 = vld [vmem:[%s3100 + $0x48] sm:$0xff]
        %v3111 = vld [vmem:[%s3100 + $0x50] sm:$0xff]
        %v3112 = vld [vmem:[%s3100 + $0x58] sm:$0xff]
        %s3113 = sadd.s32 %s3098, 1
        %s3114 = smul.u32 %s3113, 96
        %s3115 = scalar_lea.vmem %s3, %s3114
        %v3116 = vld [vmem:[%s3115] sm:$0xff]
        %v3117 = vld [vmem:[%s3115 + $0x8] sm:$0xff]
        %v3118 = vld [vmem:[%s3115 + $0x10] sm:$0xff]
        %v3119 = vld [vmem:[%s3115 + $0x18] sm:$0xff]
        %v3120 = vld [vmem:[%s3115 + $0x20] sm:$0xff]
        %v3121 = vld [vmem:[%s3115 + $0x28] sm:$0xff]
        %v3122 = vld [vmem:[%s3115 + $0x30] sm:$0xff]
        %v3123 = vld [vmem:[%s3115 + $0x38] sm:$0xff]
        %v3124 = vld [vmem:[%s3115 + $0x40] sm:$0xff]
        %v3125 = vld [vmem:[%s3115 + $0x48] sm:$0xff]
        %v3126 = vld [vmem:[%s3115 + $0x50] sm:$0xff]
        %v3127 = vld [vmem:[%s3115 + $0x58] sm:$0xff]
        %s3128 = sadd.s32 %s3098, 2
        %s3129 = smul.u32 %s3128, 96
        %s3130 = scalar_lea.vmem %s3, %s3129
        %v3131 = vld [vmem:[%s3130] sm:$0xff]
        %v3132 = vld [vmem:[%s3130 + $0x8] sm:$0xff]
        %v3133 = vld [vmem:[%s3130 + $0x10] sm:$0xff]
        %v3134 = vld [vmem:[%s3130 + $0x18] sm:$0xff]
        %v3135 = vld [vmem:[%s3130 + $0x20] sm:$0xff]
        %v3136 = vld [vmem:[%s3130 + $0x28] sm:$0xff]
        %v3137 = vld [vmem:[%s3130 + $0x30] sm:$0xff]
        %v3138 = vld [vmem:[%s3130 + $0x38] sm:$0xff]
        %v3139 = vld [vmem:[%s3130 + $0x40] sm:$0xff]
        %v3140 = vld [vmem:[%s3130 + $0x48] sm:$0xff]
        %v3141 = vld [vmem:[%s3130 + $0x50] sm:$0xff]
        %v3142 = vld [vmem:[%s3130 + $0x58] sm:$0xff]
        %v3143 = vrot.slane %v3044, 7
        %v3144 = vrot.slane %v3045, 7
        %v3145 = vrot.slane %v3046, 7
        %v3146 = vrot.slane %v3047, 7
        %v3147 = vrot.slane %v3048, 7
        %v3148 = vrot.slane %v3049, 7
        %v3149 = vrot.slane %v3050, 7
        %v3150 = vrot.slane %v3051, 7
        %v3151 = vrot.slane %v3052, 7
        %v3152 = vrot.slane %v3053, 7
        %v3153 = vrot.slane %v3054, 7
        %v3154 = vrot.slane %v3055, 7
        %v3155 = vrot.slane %v3056, 7
        %v3156 = vrot.slane %v3057, 7
        %v3157 = vrot.slane %v3058, 7
        %v3158 = vrot.slane %v3059, 7
        %v3159 = vrot.slane %v3060, 7
        %v3160 = vrot.slane %v3061, 7
        %v3161 = vrot.slane %v3062, 7
        %v3162 = vrot.slane %v3063, 7
        %v3163 = vrot.slane %v3064, 7
        %v3164 = vrot.slane %v3065, 7
        %v3165 = vrot.slane %v3066, 7
        %v3166 = vrot.slane %v3067, 7
        %v3167 = vrot.slane %v3068, 7
        %v3168 = vrot.slane %v3069, 7
        %v3169 = vrot.slane %v3070, 7
        %v3170 = vrot.slane %v3071, 7
        %v3171 = vrot.slane %v3072, 7
        %v3172 = vrot.slane %v3073, 7
        %v3173 = vrot.slane %v3074, 7
        %v3174 = vrot.slane %v3075, 7
        %v3175 = vrot.slane %v3076, 7
        %v3176 = vrot.slane %v3077, 7
        %v3177 = vrot.slane %v3078, 7
        %v3178 = vrot.slane %v3079, 7
        %v3179 = vrot.slane %v3080, 7
        %v3180 = vrot.slane %v3081, 7
        %v3181 = vrot.slane %v3082, 7
        %v3182 = vrot.slane %v3083, 7
        %v3183 = vrot.slane %v3084, 7
        %v3184 = vrot.slane %v3085, 7
        %v3185 = vrot.slane %v3086, 7
        %v3186 = vrot.slane %v3087, 7
        %v3187 = vrot.slane %v3088, 7
        %v3188 = vrot.slane %v3089, 7
        %v3189 = vrot.slane %v3090, 7
        %v3190 = vrot.slane %v3091, 7
        %v3191 = vrot.slane %v3092, 7
        %v3192 = vrot.slane %v3093, 7
        %v3193 = vrot.slane %v3094, 7
        %v3194 = vrot.slane %v3095, 7
        %v3195 = vrot.slane %v3096, 7
        %v3196 = vrot.slane %v3097, 7
        %v3197 = vlaneseq
        %v3198 = vshrl.u32 %v3197, 7
        %vm3199 = vcmp.lt.s32.totalorder %v3198, 1
        %v3200 = vsel %vm3199, %v3195, %v3196
        %v3201 = vsel %vm3199, %v3194, %v3195
        %v3202 = vsel %vm3199, %v3193, %v3194
        %v3203 = vsel %vm3199, %v3192, %v3193
        %v3204 = vsel %vm3199, %v3191, %v3192
        %v3205 = vsel %vm3199, %v3190, %v3191
        %v3206 = vsel %vm3199, %v3189, %v3190
        %v3207 = vsel %vm3199, %v3188, %v3189
        %v3208 = vsel %vm3199, %v3187, %v3188
        %v3209 = vsel %vm3199, %v3186, %v3187
        %v3210 = vsel %vm3199, %v3185, %v3186
        %v3211 = vsel %vm3199, %v3184, %v3185
        %v3212 = vsel %vm3199, %v3183, %v3184
        %v3213 = vsel %vm3199, %v3182, %v3183
        %v3214 = vsel %vm3199, %v3181, %v3182
        %v3215 = vsel %vm3199, %v3180, %v3181
        %v3216 = vsel %vm3199, %v3179, %v3180
        %v3217 = vsel %vm3199, %v3178, %v3179
        %v3218 = vsel %vm3199, %v3177, %v3178
        %v3219 = vsel %vm3199, %v3176, %v3177
        %v3220 = vsel %vm3199, %v3175, %v3176
        %v3221 = vsel %vm3199, %v3174, %v3175
        %v3222 = vsel %vm3199, %v3173, %v3174
        %v3223 = vsel %vm3199, %v3172, %v3173
        %v3224 = vsel %vm3199, %v3171, %v3172
        %v3225 = vsel %vm3199, %v3170, %v3171
        %v3226 = vsel %vm3199, %v3169, %v3170
        %v3227 = vsel %vm3199, %v3168, %v3169
        %v3228 = vsel %vm3199, %v3167, %v3168
        %v3229 = vsel %vm3199, %v3166, %v3167
        %v3230 = vsel %vm3199, %v3165, %v3166
        %v3231 = vsel %vm3199, %v3164, %v3165
        %v3232 = vsel %vm3199, %v3163, %v3164
        %v3233 = vsel %vm3199, %v3162, %v3163
        %v3234 = vsel %vm3199, %v3161, %v3162
        %v3235 = vsel %vm3199, %v3160, %v3161
        %v3236 = vsel %vm3199, %v3159, %v3160
        %v3237 = vsel %vm3199, %v3158, %v3159
        %v3238 = vsel %vm3199, %v3157, %v3158
        %v3239 = vsel %vm3199, %v3156, %v3157
        %v3240 = vsel %vm3199, %v3155, %v3156
        %v3241 = vsel %vm3199, %v3154, %v3155
        %v3242 = vsel %vm3199, %v3153, %v3154
        %v3243 = vsel %vm3199, %v3152, %v3153
        %v3244 = vsel %vm3199, %v3151, %v3152
        %v3245 = vsel %vm3199, %v3150, %v3151
        %v3246 = vsel %vm3199, %v3149, %v3150
        %v3247 = vsel %vm3199, %v3148, %v3149
        %v3248 = vsel %vm3199, %v3147, %v3148
        %v3249 = vsel %vm3199, %v3146, %v3147
        %v3250 = vsel %vm3199, %v3145, %v3146
        %v3251 = vsel %vm3199, %v3144, %v3145
        %v3252 = vsel %vm3199, %v3143, %v3144
        %v3253 = vsel %vm3199, %v3196, %v3143
        %v3254 = vrot.slane %v3044, 1
        %v3255 = vrot.slane %v3045, 1
        %v3256 = vrot.slane %v3046, 1
        %v3257 = vrot.slane %v3047, 1
        %v3258 = vrot.slane %v3048, 1
        %v3259 = vrot.slane %v3049, 1
        %v3260 = vrot.slane %v3050, 1
        %v3261 = vrot.slane %v3051, 1
        %v3262 = vrot.slane %v3052, 1
        %v3263 = vrot.slane %v3053, 1
        %v3264 = vrot.slane %v3054, 1
        %v3265 = vrot.slane %v3055, 1
        %v3266 = vrot.slane %v3056, 1
        %v3267 = vrot.slane %v3057, 1
        %v3268 = vrot.slane %v3058, 1
        %v3269 = vrot.slane %v3059, 1
        %v3270 = vrot.slane %v3060, 1
        %v3271 = vrot.slane %v3061, 1
        %v3272 = vrot.slane %v3062, 1
        %v3273 = vrot.slane %v3063, 1
        %v3274 = vrot.slane %v3064, 1
        %v3275 = vrot.slane %v3065, 1
        %v3276 = vrot.slane %v3066, 1
        %v3277 = vrot.slane %v3067, 1
        %v3278 = vrot.slane %v3068, 1
        %v3279 = vrot.slane %v3069, 1
        %v3280 = vrot.slane %v3070, 1
        %v3281 = vrot.slane %v3071, 1
        %v3282 = vrot.slane %v3072, 1
        %v3283 = vrot.slane %v3073, 1
        %v3284 = vrot.slane %v3074, 1
        %v3285 = vrot.slane %v3075, 1
        %v3286 = vrot.slane %v3076, 1
        %v3287 = vrot.slane %v3077, 1
        %v3288 = vrot.slane %v3078, 1
        %v3289 = vrot.slane %v3079, 1
        %v3290 = vrot.slane %v3080, 1
        %v3291 = vrot.slane %v3081, 1
        %v3292 = vrot.slane %v3082, 1
        %v3293 = vrot.slane %v3083, 1
        %v3294 = vrot.slane %v3084, 1
        %v3295 = vrot.slane %v3085, 1
        %v3296 = vrot.slane %v3086, 1
        %v3297 = vrot.slane %v3087, 1
        %v3298 = vrot.slane %v3088, 1
        %v3299 = vrot.slane %v3089, 1
        %v3300 = vrot.slane %v3090, 1
        %v3301 = vrot.slane %v3091, 1
        %v3302 = vrot.slane %v3092, 1
        %v3303 = vrot.slane %v3093, 1
        %v3304 = vrot.slane %v3094, 1
        %v3305 = vrot.slane %v3095, 1
        %v3306 = vrot.slane %v3096, 1
        %v3307 = vrot.slane %v3097, 1
        %vm3308 = vcmp.lt.s32.totalorder %v3198, 7
        %v3309 = vsel %vm3308, %v3306, %v3307
        %v3310 = vsel %vm3308, %v3305, %v3306
        %v3311 = vsel %vm3308, %v3304, %v3305
        %v3312 = vsel %vm3308, %v3303, %v3304
        %v3313 = vsel %vm3308, %v3302, %v3303
        %v3314 = vsel %vm3308, %v3301, %v3302
        %v3315 = vsel %vm3308, %v3300, %v3301
        %v3316 = vsel %vm3308, %v3299, %v3300
        %v3317 = vsel %vm3308, %v3298, %v3299
        %v3318 = vsel %vm3308, %v3297, %v3298
        %v3319 = vsel %vm3308, %v3296, %v3297
        %v3320 = vsel %vm3308, %v3295, %v3296
        %v3321 = vsel %vm3308, %v3294, %v3295
        %v3322 = vsel %vm3308, %v3293, %v3294
        %v3323 = vsel %vm3308, %v3292, %v3293
        %v3324 = vsel %vm3308, %v3291, %v3292
        %v3325 = vsel %vm3308, %v3290, %v3291
        %v3326 = vsel %vm3308, %v3289, %v3290
        %v3327 = vsel %vm3308, %v3288, %v3289
        %v3328 = vsel %vm3308, %v3287, %v3288
        %v3329 = vsel %vm3308, %v3286, %v3287
        %v3330 = vsel %vm3308, %v3285, %v3286
        %v3331 = vsel %vm3308, %v3284, %v3285
        %v3332 = vsel %vm3308, %v3283, %v3284
        %v3333 = vsel %vm3308, %v3282, %v3283
        %v3334 = vsel %vm3308, %v3281, %v3282
        %v3335 = vsel %vm3308, %v3280, %v3281
        %v3336 = vsel %vm3308, %v3279, %v3280
        %v3337 = vsel %vm3308, %v3278, %v3279
        %v3338 = vsel %vm3308, %v3277, %v3278
        %v3339 = vsel %vm3308, %v3276, %v3277
        %v3340 = vsel %vm3308, %v3275, %v3276
        %v3341 = vsel %vm3308, %v3274, %v3275
        %v3342 = vsel %vm3308, %v3273, %v3274
        %v3343 = vsel %vm3308, %v3272, %v3273
        %v3344 = vsel %vm3308, %v3271, %v3272
        %v3345 = vsel %vm3308, %v3270, %v3271
        %v3346 = vsel %vm3308, %v3269, %v3270
        %v3347 = vsel %vm3308, %v3268, %v3269
        %v3348 = vsel %vm3308, %v3267, %v3268
        %v3349 = vsel %vm3308, %v3266, %v3267
        %v3350 = vsel %vm3308, %v3265, %v3266
        %v3351 = vsel %vm3308, %v3264, %v3265
        %v3352 = vsel %vm3308, %v3263, %v3264
        %v3353 = vsel %vm3308, %v3262, %v3263
        %v3354 = vsel %vm3308, %v3261, %v3262
        %v3355 = vsel %vm3308, %v3260, %v3261
        %v3356 = vsel %vm3308, %v3259, %v3260
        %v3357 = vsel %vm3308, %v3258, %v3259
        %v3358 = vsel %vm3308, %v3257, %v3258
        %v3359 = vsel %vm3308, %v3256, %v3257
        %v3360 = vsel %vm3308, %v3255, %v3256
        %v3361 = vsel %vm3308, %v3254, %v3255
        %v3362 = vsel %vm3308, %v3307, %v3254
        %3417 = vrot.lane.b32.xlu0 %v3044, 32
        %v3418 = vpop.permute.xlu0 %3417
        %3419 = vrot.lane.b32.xlu0 %v3045, 32
        %v3420 = vpop.permute.xlu0 %3419
        %3421 = vrot.lane.b32.xlu0 %v3046, 32
        %v3422 = vpop.permute.xlu0 %3421
        %3423 = vrot.lane.b32.xlu0 %v3047, 32
        %v3424 = vpop.permute.xlu0 %3423
        %3425 = vrot.lane.b32.xlu0 %v3048, 32
        %v3426 = vpop.permute.xlu0 %3425
        %3427 = vrot.lane.b32.xlu0 %v3049, 32
        %v3428 = vpop.permute.xlu0 %3427
        %3429 = vrot.lane.b32.xlu0 %v3050, 32
        %v3430 = vpop.permute.xlu0 %3429
        %3431 = vrot.lane.b32.xlu0 %v3051, 32
        %v3432 = vpop.permute.xlu0 %3431
        %3433 = vrot.lane.b32.xlu0 %v3052, 32
        %v3434 = vpop.permute.xlu0 %3433
        %3435 = vrot.lane.b32.xlu0 %v3053, 32
        %v3436 = vpop.permute.xlu0 %3435
        %3437 = vrot.lane.b32.xlu0 %v3054, 32
        %v3438 = vpop.permute.xlu0 %3437
        %3439 = vrot.lane.b32.xlu0 %v3055, 32
        %v3440 = vpop.permute.xlu0 %3439
        %3441 = vrot.lane.b32.xlu0 %v3056, 32
        %v3442 = vpop.permute.xlu0 %3441
        %3443 = vrot.lane.b32.xlu0 %v3057, 32
        %v3444 = vpop.permute.xlu0 %3443
        %3445 = vrot.lane.b32.xlu0 %v3058, 32
        %v3446 = vpop.permute.xlu0 %3445
        %3447 = vrot.lane.b32.xlu0 %v3059, 32
        %v3448 = vpop.permute.xlu0 %3447
        %3449 = vrot.lane.b32.xlu0 %v3060, 32
        %v3450 = vpop.permute.xlu0 %3449
        %3451 = vrot.lane.b32.xlu0 %v3061, 32
        %v3452 = vpop.permute.xlu0 %3451
        %3453 = vrot.lane.b32.xlu0 %v3062, 32
        %v3454 = vpop.permute.xlu0 %3453
        %3455 = vrot.lane.b32.xlu0 %v3063, 32
        %v3456 = vpop.permute.xlu0 %3455
        %3457 = vrot.lane.b32.xlu0 %v3064, 32
        %v3458 = vpop.permute.xlu0 %3457
        %3459 = vrot.lane.b32.xlu0 %v3065, 32
        %v3460 = vpop.permute.xlu0 %3459
        %3461 = vrot.lane.b32.xlu0 %v3066, 32
        %v3462 = vpop.permute.xlu0 %3461
        %3463 = vrot.lane.b32.xlu0 %v3067, 32
        %v3464 = vpop.permute.xlu0 %3463
        %3465 = vrot.lane.b32.xlu0 %v3068, 32
        %v3466 = vpop.permute.xlu0 %3465
        %3467 = vrot.lane.b32.xlu0 %v3069, 32
        %v3468 = vpop.permute.xlu0 %3467
        %3469 = vrot.lane.b32.xlu0 %v3070, 32
        %v3470 = vpop.permute.xlu0 %3469
        %3471 = vrot.lane.b32.xlu0 %v3071, 32
        %v3472 = vpop.permute.xlu0 %3471
        %3473 = vrot.lane.b32.xlu0 %v3072, 32
        %v3474 = vpop.permute.xlu0 %3473
        %3475 = vrot.lane.b32.xlu0 %v3073, 32
        %v3476 = vpop.permute.xlu0 %3475
        %3477 = vrot.lane.b32.xlu0 %v3074, 32
        %v3478 = vpop.permute.xlu0 %3477
        %3479 = vrot.lane.b32.xlu0 %v3075, 32
        %v3480 = vpop.permute.xlu0 %3479
        %3481 = vrot.lane.b32.xlu0 %v3076, 32
        %v3482 = vpop.permute.xlu0 %3481
        %3483 = vrot.lane.b32.xlu0 %v3077, 32
        %v3484 = vpop.permute.xlu0 %3483
        %3485 = vrot.lane.b32.xlu0 %v3078, 32
        %v3486 = vpop.permute.xlu0 %3485
        %3487 = vrot.lane.b32.xlu0 %v3079, 32
        %v3488 = vpop.permute.xlu0 %3487
        %3489 = vrot.lane.b32.xlu0 %v3080, 32
        %v3490 = vpop.permute.xlu0 %3489
        %3491 = vrot.lane.b32.xlu0 %v3081, 32
        %v3492 = vpop.permute.xlu0 %3491
        %3493 = vrot.lane.b32.xlu0 %v3082, 32
        %v3494 = vpop.permute.xlu0 %3493
        %3495 = vrot.lane.b32.xlu0 %v3083, 32
        %v3496 = vpop.permute.xlu0 %3495
        %3497 = vrot.lane.b32.xlu0 %v3084, 32
        %v3498 = vpop.permute.xlu0 %3497
        %3499 = vrot.lane.b32.xlu0 %v3085, 32
        %v3500 = vpop.permute.xlu0 %3499
        %3501 = vrot.lane.b32.xlu0 %v3086, 32
        %v3502 = vpop.permute.xlu0 %3501
        %3503 = vrot.lane.b32.xlu0 %v3087, 32
        %v3504 = vpop.permute.xlu0 %3503
        %3505 = vrot.lane.b32.xlu0 %v3088, 32
        %v3506 = vpop.permute.xlu0 %3505
        %3507 = vrot.lane.b32.xlu0 %v3089, 32
        %v3508 = vpop.permute.xlu0 %3507
        %3509 = vrot.lane.b32.xlu0 %v3090, 32
        %v3510 = vpop.permute.xlu0 %3509
        %3511 = vrot.lane.b32.xlu0 %v3091, 32
        %v3512 = vpop.permute.xlu0 %3511
        %3513 = vrot.lane.b32.xlu0 %v3092, 32
        %v3514 = vpop.permute.xlu0 %3513
        %3515 = vrot.lane.b32.xlu0 %v3093, 32
        %v3516 = vpop.permute.xlu0 %3515
        %3517 = vrot.lane.b32.xlu0 %v3094, 32
        %v3518 = vpop.permute.xlu0 %3517
        %3519 = vrot.lane.b32.xlu0 %v3095, 32
        %v3520 = vpop.permute.xlu0 %3519
        %3521 = vrot.lane.b32.xlu0 %v3096, 32
        %v3522 = vpop.permute.xlu0 %3521
        %3523 = vrot.lane.b32.xlu0 %v3097, 32
        %v3524 = vpop.permute.xlu0 %3523
        %3633 = vrot.lane.b32.xlu0 %v3361, 64
        %v3634 = vpop.permute.xlu0 %3633
        %3635 = vrot.lane.b32.xlu0 %v3360, 64
        %v3636 = vpop.permute.xlu0 %3635
        %3637 = vrot.lane.b32.xlu0 %v3359, 64
        %v3638 = vpop.permute.xlu0 %3637
        %3639 = vrot.lane.b32.xlu0 %v3358, 64
        %v3640 = vpop.permute.xlu0 %3639
        %3641 = vrot.lane.b32.xlu0 %v3357, 64
        %v3642 = vpop.permute.xlu0 %3641
        %3643 = vrot.lane.b32.xlu0 %v3356, 64
        %v3644 = vpop.permute.xlu0 %3643
        %3645 = vrot.lane.b32.xlu0 %v3355, 64
        %v3646 = vpop.permute.xlu0 %3645
        %3647 = vrot.lane.b32.xlu0 %v3354, 64
        %v3648 = vpop.permute.xlu0 %3647
        %3649 = vrot.lane.b32.xlu0 %v3353, 64
        %v3650 = vpop.permute.xlu0 %3649
        %3651 = vrot.lane.b32.xlu0 %v3352, 64
        %v3652 = vpop.permute.xlu0 %3651
        %3653 = vrot.lane.b32.xlu0 %v3351, 64
        %v3654 = vpop.permute.xlu0 %3653
        %3655 = vrot.lane.b32.xlu0 %v3350, 64
        %v3656 = vpop.permute.xlu0 %3655
        %3657 = vrot.lane.b32.xlu0 %v3349, 64
        %v3658 = vpop.permute.xlu0 %3657
        %3659 = vrot.lane.b32.xlu0 %v3348, 64
        %v3660 = vpop.permute.xlu0 %3659
        %3661 = vrot.lane.b32.xlu0 %v3347, 64
        %v3662 = vpop.permute.xlu0 %3661
        %3663 = vrot.lane.b32.xlu0 %v3346, 64
        %v3664 = vpop.permute.xlu0 %3663
        %3665 = vrot.lane.b32.xlu0 %v3345, 64
        %v3666 = vpop.permute.xlu0 %3665
        %3667 = vrot.lane.b32.xlu0 %v3344, 64
        %v3668 = vpop.permute.xlu0 %3667
        %3669 = vrot.lane.b32.xlu0 %v3343, 64
        %v3670 = vpop.permute.xlu0 %3669
        %3671 = vrot.lane.b32.xlu0 %v3342, 64
        %v3672 = vpop.permute.xlu0 %3671
        %3673 = vrot.lane.b32.xlu0 %v3341, 64
        %v3674 = vpop.permute.xlu0 %3673
        %3675 = vrot.lane.b32.xlu0 %v3340, 64
        %v3676 = vpop.permute.xlu0 %3675
        %3677 = vrot.lane.b32.xlu0 %v3339, 64
        %v3678 = vpop.permute.xlu0 %3677
        %3679 = vrot.lane.b32.xlu0 %v3338, 64
        %v3680 = vpop.permute.xlu0 %3679
        %3681 = vrot.lane.b32.xlu0 %v3337, 64
        %v3682 = vpop.permute.xlu0 %3681
        %3683 = vrot.lane.b32.xlu0 %v3336, 64
        %v3684 = vpop.permute.xlu0 %3683
        %3685 = vrot.lane.b32.xlu0 %v3335, 64
        %v3686 = vpop.permute.xlu0 %3685
        %3687 = vrot.lane.b32.xlu0 %v3334, 64
        %v3688 = vpop.permute.xlu0 %3687
        %3689 = vrot.lane.b32.xlu0 %v3333, 64
        %v3690 = vpop.permute.xlu0 %3689
        %3691 = vrot.lane.b32.xlu0 %v3332, 64
        %v3692 = vpop.permute.xlu0 %3691
        %3693 = vrot.lane.b32.xlu0 %v3331, 64
        %v3694 = vpop.permute.xlu0 %3693
        %3695 = vrot.lane.b32.xlu0 %v3330, 64
        %v3696 = vpop.permute.xlu0 %3695
        %3697 = vrot.lane.b32.xlu0 %v3329, 64
        %v3698 = vpop.permute.xlu0 %3697
        %3699 = vrot.lane.b32.xlu0 %v3328, 64
        %v3700 = vpop.permute.xlu0 %3699
        %3701 = vrot.lane.b32.xlu0 %v3327, 64
        %v3702 = vpop.permute.xlu0 %3701
        %3703 = vrot.lane.b32.xlu0 %v3326, 64
        %v3704 = vpop.permute.xlu0 %3703
        %3705 = vrot.lane.b32.xlu0 %v3325, 64
        %v3706 = vpop.permute.xlu0 %3705
        %3707 = vrot.lane.b32.xlu0 %v3324, 64
        %v3708 = vpop.permute.xlu0 %3707
        %3709 = vrot.lane.b32.xlu0 %v3323, 64
        %v3710 = vpop.permute.xlu0 %3709
        %3711 = vrot.lane.b32.xlu0 %v3322, 64
        %v3712 = vpop.permute.xlu0 %3711
        %3713 = vrot.lane.b32.xlu0 %v3321, 64
        %v3714 = vpop.permute.xlu0 %3713
        %3715 = vrot.lane.b32.xlu0 %v3320, 64
        %v3716 = vpop.permute.xlu0 %3715
        %3717 = vrot.lane.b32.xlu0 %v3319, 64
        %v3718 = vpop.permute.xlu0 %3717
        %3719 = vrot.lane.b32.xlu0 %v3318, 64
        %v3720 = vpop.permute.xlu0 %3719
        %3721 = vrot.lane.b32.xlu0 %v3317, 64
        %v3722 = vpop.permute.xlu0 %3721
        %3723 = vrot.lane.b32.xlu0 %v3316, 64
        %v3724 = vpop.permute.xlu0 %3723
        %3725 = vrot.lane.b32.xlu0 %v3315, 64
        %v3726 = vpop.permute.xlu0 %3725
        %3727 = vrot.lane.b32.xlu0 %v3314, 64
        %v3728 = vpop.permute.xlu0 %3727
        %3729 = vrot.lane.b32.xlu0 %v3313, 64
        %v3730 = vpop.permute.xlu0 %3729
        %3731 = vrot.lane.b32.xlu0 %v3312, 64
        %v3732 = vpop.permute.xlu0 %3731
        %3733 = vrot.lane.b32.xlu0 %v3311, 64
        %v3734 = vpop.permute.xlu0 %3733
        %3735 = vrot.lane.b32.xlu0 %v3310, 64
        %v3736 = vpop.permute.xlu0 %3735
        %3737 = vrot.lane.b32.xlu0 %v3309, 64
        %v3738 = vpop.permute.xlu0 %3737
        %3739 = vrot.lane.b32.xlu0 %v3362, 64
        %v3740 = vpop.permute.xlu0 %3739
        %vm3795 = vcmask 261120
        %v3796 = vsel %vm3795, %v3253, %v3418
        %v3797 = vsel %vm3795, %v3252, %v3420
        %v3798 = vsel %vm3795, %v3251, %v3422
        %v3799 = vsel %vm3795, %v3250, %v3424
        %v3800 = vsel %vm3795, %v3249, %v3426
        %v3801 = vsel %vm3795, %v3248, %v3428
        %v3802 = vsel %vm3795, %v3247, %v3430
        %v3803 = vsel %vm3795, %v3246, %v3432
        %v3804 = vsel %vm3795, %v3245, %v3434
        %v3805 = vsel %vm3795, %v3244, %v3436
        %v3806 = vsel %vm3795, %v3243, %v3438
        %v3807 = vsel %vm3795, %v3242, %v3440
        %v3808 = vsel %vm3795, %v3241, %v3442
        %v3809 = vsel %vm3795, %v3240, %v3444
        %v3810 = vsel %vm3795, %v3239, %v3446
        %v3811 = vsel %vm3795, %v3238, %v3448
        %v3812 = vsel %vm3795, %v3237, %v3450
        %v3813 = vsel %vm3795, %v3236, %v3452
        %v3814 = vsel %vm3795, %v3235, %v3454
        %v3815 = vsel %vm3795, %v3234, %v3456
        %v3816 = vsel %vm3795, %v3233, %v3458
        %v3817 = vsel %vm3795, %v3232, %v3460
        %v3818 = vsel %vm3795, %v3231, %v3462
        %v3819 = vsel %vm3795, %v3230, %v3464
        %v3820 = vsel %vm3795, %v3229, %v3466
        %v3821 = vsel %vm3795, %v3228, %v3468
        %v3822 = vsel %vm3795, %v3227, %v3470
        %v3823 = vsel %vm3795, %v3226, %v3472
        %v3824 = vsel %vm3795, %v3225, %v3474
        %v3825 = vsel %vm3795, %v3224, %v3476
        %v3826 = vsel %vm3795, %v3223, %v3478
        %v3827 = vsel %vm3795, %v3222, %v3480
        %v3828 = vsel %vm3795, %v3221, %v3482
        %v3829 = vsel %vm3795, %v3220, %v3484
        %v3830 = vsel %vm3795, %v3219, %v3486
        %v3831 = vsel %vm3795, %v3218, %v3488
        %v3832 = vsel %vm3795, %v3217, %v3490
        %v3833 = vsel %vm3795, %v3216, %v3492
        %v3834 = vsel %vm3795, %v3215, %v3494
        %v3835 = vsel %vm3795, %v3214, %v3496
        %v3836 = vsel %vm3795, %v3213, %v3498
        %v3837 = vsel %vm3795, %v3212, %v3500
        %v3838 = vsel %vm3795, %v3211, %v3502
        %v3839 = vsel %vm3795, %v3210, %v3504
        %v3840 = vsel %vm3795, %v3209, %v3506
        %v3841 = vsel %vm3795, %v3208, %v3508
        %v3842 = vsel %vm3795, %v3207, %v3510
        %v3843 = vsel %vm3795, %v3206, %v3512
        %v3844 = vsel %vm3795, %v3205, %v3514
        %v3845 = vsel %vm3795, %v3204, %v3516
        %v3846 = vsel %vm3795, %v3203, %v3518
        %v3847 = vsel %vm3795, %v3202, %v3520
        %v3848 = vsel %vm3795, %v3201, %v3522
        %v3849 = vsel %vm3795, %v3200, %v3524
        %vm3850 = vcmask 523264
        %v3851 = vsel %vm3850, %v3796, %v3634
        %v3852 = vsel %vm3850, %v3797, %v3636
        %v3853 = vsel %vm3850, %v3798, %v3638
        %v3854 = vsel %vm3850, %v3799, %v3640
        %v3855 = vsel %vm3850, %v3800, %v3642
        %v3856 = vsel %vm3850, %v3801, %v3644
        %v3857 = vsel %vm3850, %v3802, %v3646
        %v3858 = vsel %vm3850, %v3803, %v3648
        %v3859 = vsel %vm3850, %v3804, %v3650
        %v3860 = vsel %vm3850, %v3805, %v3652
        %v3861 = vsel %vm3850, %v3806, %v3654
        %v3862 = vsel %vm3850, %v3807, %v3656
        %v3863 = vsel %vm3850, %v3808, %v3658
        %v3864 = vsel %vm3850, %v3809, %v3660
        %v3865 = vsel %vm3850, %v3810, %v3662
        %v3866 = vsel %vm3850, %v3811, %v3664
        %v3867 = vsel %vm3850, %v3812, %v3666
        %v3868 = vsel %vm3850, %v3813, %v3668
        %v3869 = vsel %vm3850, %v3814, %v3670
        %v3870 = vsel %vm3850, %v3815, %v3672
        %v3871 = vsel %vm3850, %v3816, %v3674
        %v3872 = vsel %vm3850, %v3817, %v3676
        %v3873 = vsel %vm3850, %v3818, %v3678
        %v3874 = vsel %vm3850, %v3819, %v3680
        %v3875 = vsel %vm3850, %v3820, %v3682
        %v3876 = vsel %vm3850, %v3821, %v3684
        %v3877 = vsel %vm3850, %v3822, %v3686
        %v3878 = vsel %vm3850, %v3823, %v3688
        %v3879 = vsel %vm3850, %v3824, %v3690
        %v3880 = vsel %vm3850, %v3825, %v3692
        %v3881 = vsel %vm3850, %v3826, %v3694
        %v3882 = vsel %vm3850, %v3827, %v3696
        %v3883 = vsel %vm3850, %v3828, %v3698
        %v3884 = vsel %vm3850, %v3829, %v3700
        %v3885 = vsel %vm3850, %v3830, %v3702
        %v3886 = vsel %vm3850, %v3831, %v3704
        %v3887 = vsel %vm3850, %v3832, %v3706
        %v3888 = vsel %vm3850, %v3833, %v3708
        %v3889 = vsel %vm3850, %v3834, %v3710
        %v3890 = vsel %vm3850, %v3835, %v3712
        %v3891 = vsel %vm3850, %v3836, %v3714
        %v3892 = vsel %vm3850, %v3837, %v3716
        %v3893 = vsel %vm3850, %v3838, %v3718
        %v3894 = vsel %vm3850, %v3839, %v3720
        %v3895 = vsel %vm3850, %v3840, %v3722
        %v3896 = vsel %vm3850, %v3841, %v3724
        %v3897 = vsel %vm3850, %v3842, %v3726
        %v3898 = vsel %vm3850, %v3843, %v3728
        %v3899 = vsel %vm3850, %v3844, %v3730
        %v3900 = vsel %vm3850, %v3845, %v3732
        %v3901 = vsel %vm3850, %v3846, %v3734
        %v3902 = vsel %vm3850, %v3847, %v3736
        %v3903 = vsel %vm3850, %v3848, %v3738
        %v3904 = vsel %vm3850, %v3849, %v3740
        %vm3905 = vcmask 785408
        %v3907 = vsel %vm3905, %v3851, 0
        %v3910 = vsel %vm3905, %v3852, 0
        %v3913 = vsel %vm3905, %v3853, 0
        %v3916 = vsel %vm3905, %v3854, 0
        %v3919 = vsel %vm3905, %v3855, 0
        %v3922 = vsel %vm3905, %v3856, 0
        %v3925 = vsel %vm3905, %v3857, 0
        %v3928 = vsel %vm3905, %v3858, 0
        %v3931 = vsel %vm3905, %v3859, 0
        %v3934 = vsel %vm3905, %v3860, 0
        %v3937 = vsel %vm3905, %v3861, 0
        %v3940 = vsel %vm3905, %v3862, 0
        %v3943 = vsel %vm3905, %v3863, 0
        %v3946 = vsel %vm3905, %v3864, 0
        %v3949 = vsel %vm3905, %v3865, 0
        %v3952 = vsel %vm3905, %v3866, 0
        %v3955 = vsel %vm3905, %v3867, 0
        %v3958 = vsel %vm3905, %v3868, 0
        %v3961 = vsel %vm3905, %v3869, 0
        %v3964 = vsel %vm3905, %v3870, 0
        %v3967 = vsel %vm3905, %v3871, 0
        %v3970 = vsel %vm3905, %v3872, 0
        %v3973 = vsel %vm3905, %v3873, 0
        %v3976 = vsel %vm3905, %v3874, 0
        %v3979 = vsel %vm3905, %v3875, 0
        %v3982 = vsel %vm3905, %v3876, 0
        %v3985 = vsel %vm3905, %v3877, 0
        %v3988 = vsel %vm3905, %v3878, 0
        %v3991 = vsel %vm3905, %v3879, 0
        %v3994 = vsel %vm3905, %v3880, 0
        %v3997 = vsel %vm3905, %v3881, 0
        %v4000 = vsel %vm3905, %v3882, 0
        %v4003 = vsel %vm3905, %v3883, 0
        %v4006 = vsel %vm3905, %v3884, 0
        %v4009 = vsel %vm3905, %v3885, 0
        %v4012 = vsel %vm3905, %v3886, 0
        %v4015 = vsel %vm3905, %v3887, 0
        %v4018 = vsel %vm3905, %v3888, 0
        %v4021 = vsel %vm3905, %v3889, 0
        %v4024 = vsel %vm3905, %v3890, 0
        %v4027 = vsel %vm3905, %v3891, 0
        %v4030 = vsel %vm3905, %v3892, 0
        %v4033 = vsel %vm3905, %v3893, 0
        %v4036 = vsel %vm3905, %v3894, 0
        %v4039 = vsel %vm3905, %v3895, 0
        %v4042 = vsel %vm3905, %v3896, 0
        %v4045 = vsel %vm3905, %v3897, 0
        %v4048 = vsel %vm3905, %v3898, 0
        %v4051 = vsel %vm3905, %v3899, 0
        %v4054 = vsel %vm3905, %v3900, 0
        %v4057 = vsel %vm3905, %v3901, 0
        %v4060 = vsel %vm3905, %v3902, 0
        %v4063 = vsel %vm3905, %v3903, 0
        %v4066 = vsel %vm3905, %v3904, 0
        %4068 = vmatprep.subr.mxu0 0.0
        %4069 = vmatpush1.msra.mxu0 %v3116
        %4070 = vmatprep.subr.mxu0 0.0
        %4071 = vmatpush1.msra.mxu0 %v3117
        %4072 = vmatprep.subr.mxu0 0.0
        %4073 = vmatpush1.msra.mxu0 %v3118
        %4074 = vmatprep.subr.mxu0 0.0
        %4075 = vmatpush1.msra.mxu0 %v3119
        %4076 = vmatprep.subr.mxu0 0.0
        %4077 = vmatpush1.msra.mxu0 %v3120
        %4078 = vmatprep.subr.mxu0 0.0
        %4079 = vmatpush1.msra.mxu0 %v3121
        %4080 = vmatprep.subr.mxu0 0.0
        %4081 = vmatpush1.msra.mxu0 %v3122
        %4082 = vmatprep.subr.mxu0 0.0
        %4083 = vmatpush1.msra.mxu0 %v3123
        %4084 = vmatprep.subr.mxu0 0.0
        %4085 = vmatpush1.msra.mxu0 %v3124
        %4086 = vmatprep.subr.mxu0 0.0
        %4087 = vmatpush1.msra.mxu0 %v3125
        %4088 = vmatprep.subr.mxu0 0.0
        %4089 = vmatpush1.msra.mxu0 %v3126
        %4090 = vmatprep.subr.mxu0 0.0
        %4091 = vmatpush1.msra.mxu0 %v3127
        %4092 = vmatprep.subr.mxu0 0.0
        %4093 = vmatpush1.msra.mxu0 0.0
        %4094 = vmatprep.subr.mxu0 0.0
        %4095 = vmatpush1.msra.mxu0 0.0
        %4096 = vmatprep.subr.mxu0 0.0
        %4097 = vmatpush1.msra.mxu0 0.0
        %4098 = vmatprep.subr.mxu0 0.0
        %4099 = vmatpush1.msra.mxu0 0.0
        %4100 = vmatprep.subr.mxu0 0.0
        %4101 = vmatpush1.msra.mxu0 0.0
        %4102 = vmatprep.subr.mxu0 0.0
        %4103 = vmatpush1.msra.mxu0 0.0
        %4104 = vmatprep.subr.mxu0 0.0
        %4105 = vmatpush1.msra.mxu0 0.0
        %4106 = vmatprep.subr.mxu0 0.0
        %4107 = vmatpush1.msra.mxu0 0.0
        %4108 = vmatprep.subr.mxu0 0.0
        %4109 = vmatpush1.msra.mxu0 0.0
        %4110 = vmatprep.subr.mxu0 0.0
        %4111 = vmatpush1.msra.mxu0 0.0
        %4112 = vmatprep.subr.mxu0 0.0
        %4113 = vmatpush1.msra.mxu0 0.0
        %4114 = vmatprep.subr.mxu0 0.0
        %4115 = vmatpush1.msra.mxu0 0.0
        %4116 = vmatprep.subr.mxu0 0.0
        %4117 = vmatpush1.msra.mxu0 0.0
        %4118 = vmatprep.subr.mxu0 0.0
        %4119 = vmatpush1.msra.mxu0 0.0
        %4120 = vmatprep.subr.mxu0 0.0
        %4121 = vmatpush1.msra.mxu0 0.0
        %4122 = vmatprep.subr.mxu0 0.0
        %4123 = vmatpush1.msra.mxu0 0.0
        %4124 = vmatprep.subr.mxu0 0.0
        %4125 = vmatpush1.msra.mxu0 0.0
        %4126 = vmatprep.subr.mxu0 0.0
        %4127 = vmatpush1.msra.mxu0 0.0
        %4128 = vmatprep.subr.mxu0 0.0
        %4129 = vmatpush1.msra.mxu0 0.0
        %4130 = vmatprep.subr.mxu0 0.0
        %4131 = vmatpush1.msra.mxu0 0.0
        %4132 = vmatprep.mubr.f32.mxu0 0.0
        %4133 = vmatmul.mubr.f32.gmra.mrb[0].mxu0 %v3907
        %v4134 = vpop.f32.mrb[0].mxu0
        %v4135 = vadd.f32 0.0, %v4134
        %v4136 = vpop.f32.mrb[0].mxu0
        %4137 = vmatprep.mubr.f32.mxu0 0.0
        %4138 = vmatmul.mubr.f32.gmra.mrb[0].mxu0 %v3910
        %v4139 = vpop.f32.mrb[0].mxu0
        %v4140 = vadd.f32 0.0, %v4139
        %v4141 = vpop.f32.mrb[0].mxu0
        %4142 = vmatprep.mubr.f32.mxu0 0.0
        %4143 = vmatmul.mubr.f32.gmra.mrb[0].mxu0 %v3913
        %v4144 = vpop.f32.mrb[0].mxu0
        %v4145 = vadd.f32 0.0, %v4144
        %v4146 = vpop.f32.mrb[0].mxu0
        %4147 = vmatprep.mubr.f32.mxu0 0.0
        %4148 = vmatmul.mubr.f32.gmra.mrb[0].mxu0 %v3916
        %v4149 = vpop.f32.mrb[0].mxu0
        %v4150 = vadd.f32 0.0, %v4149
        %v4151 = vpop.f32.mrb[0].mxu0
        %4152 = vmatprep.mubr.f32.mxu0 0.0
        %4153 = vmatmul.mubr.f32.gmra.mrb[0].mxu0 %v3919
        %v4154 = vpop.f32.mrb[0].mxu0
        %v4155 = vadd.f32 0.0, %v4154
        %v4156 = vpop.f32.mrb[0].mxu0
        %4157 = vmatprep.mubr.f32.mxu0 0.0
        %4158 = vmatmul.mubr.f32.gmra.mrb[0].mxu0 %v3922
        %v4159 = vpop.f32.mrb[0].mxu0
        %v4160 = vadd.f32 0.0, %v4159
        %v4161 = vpop.f32.mrb[0].mxu0
        %4162 = vmatprep.mubr.f32.mxu0 0.0
        %4163 = vmatmul.mubr.f32.gmra.mrb[0].mxu0 %v3925
        %v4164 = vpop.f32.mrb[0].mxu0
        %v4165 = vadd.f32 0.0, %v4164
        %v4166 = vpop.f32.mrb[0].mxu0
        %4167 = vmatprep.mubr.f32.mxu0 0.0
        %4168 = vmatmul.mubr.f32.gmra.mrb[0].mxu0 %v3928
        %v4169 = vpop.f32.mrb[0].mxu0
        %v4170 = vadd.f32 0.0, %v4169
        %v4171 = vpop.f32.mrb[0].mxu0
        %4172 = vmatprep.mubr.f32.mxu0 0.0
        %4173 = vmatmul.mubr.f32.gmra.mrb[0].mxu0 %v3931
        %v4174 = vpop.f32.mrb[0].mxu0
        %v4175 = vadd.f32 0.0, %v4174
        %v4176 = vpop.f32.mrb[0].mxu0
        %4177 = vmatprep.mubr.f32.mxu0 0.0
        %4178 = vmatmul.mubr.f32.gmra.mrb[0].mxu0 %v3934
        %v4179 = vpop.f32.mrb[0].mxu0
        %v4180 = vadd.f32 0.0, %v4179
        %v4181 = vpop.f32.mrb[0].mxu0
        %4182 = vmatprep.mubr.f32.mxu0 0.0
        %4183 = vmatmul.mubr.f32.gmra.mrb[0].mxu0 %v3937
        %v4184 = vpop.f32.mrb[0].mxu0
        %v4185 = vadd.f32 0.0, %v4184
        %v4186 = vpop.f32.mrb[0].mxu0
        %4187 = vmatprep.mubr.f32.mxu0 0.0
        %4188 = vmatmul.mubr.f32.gmra.mrb[0].mxu0 %v3940
        %v4189 = vpop.f32.mrb[0].mxu0
        %v4190 = vadd.f32 0.0, %v4189
        %v4191 = vpop.f32.mrb[0].mxu0
        %4192 = vmatprep.mubr.f32.mxu0 0.0
        %4193 = vmatmul.mubr.f32.gmra.mrb[0].mxu0 %v3943
        %v4194 = vpop.f32.mrb[0].mxu0
        %v4195 = vadd.f32 0.0, %v4194
        %v4196 = vpop.f32.mrb[0].mxu0
        %4197 = vmatprep.mubr.f32.mxu0 0.0
        %4198 = vmatmul.mubr.f32.gmra.mrb[0].mxu0 %v3946
        %v4199 = vpop.f32.mrb[0].mxu0
        %v4200 = vadd.f32 0.0, %v4199
        %v4201 = vpop.f32.mrb[0].mxu0
        %4202 = vmatprep.mubr.f32.mxu0 0.0
        %4203 = vmatmul.mubr.f32.gmra.mrb[0].mxu0 %v3949
        %v4204 = vpop.f32.mrb[0].mxu0
        %v4205 = vadd.f32 0.0, %v4204
        %v4206 = vpop.f32.mrb[0].mxu0
        %4207 = vmatprep.mubr.f32.mxu0 0.0
        %4208 = vmatmul.mubr.f32.gmra.mrb[0].mxu0 %v3952
        %v4209 = vpop.f32.mrb[0].mxu0
        %v4210 = vadd.f32 0.0, %v4209
        %v4211 = vpop.f32.mrb[0].mxu0
        %4212 = vmatprep.mubr.f32.mxu0 0.0
        %4213 = vmatmul.mubr.f32.gmra.mrb[0].mxu0 %v3955
        %v4214 = vpop.f32.mrb[0].mxu0
        %v4215 = vadd.f32 0.0, %v4214
        %v4216 = vpop.f32.mrb[0].mxu0
        %4217 = vmatprep.mubr.f32.mxu0 0.0
        %4218 = vmatmul.mubr.f32.gmra.mrb[0].mxu0 %v3958
        %v4219 = vpop.f32.mrb[0].mxu0
        %v4220 = vadd.f32 0.0, %v4219
        %v4221 = vpop.f32.mrb[0].mxu0
        %4222 = vmatprep.mubr.f32.mxu0 0.0
        %4223 = vmatmul.mubr.f32.gmra.mrb[0].mxu0 %v3961
        %v4224 = vpop.f32.mrb[0].mxu0
        %v4225 = vadd.f32 0.0, %v4224
        %v4226 = vpop.f32.mrb[0].mxu0
        %4227 = vmatprep.mubr.f32.mxu0 0.0
        %4228 = vmatmul.mubr.f32.gmra.mrb[0].mxu0 %v3964
        %v4229 = vpop.f32.mrb[0].mxu0
        %v4230 = vadd.f32 0.0, %v4229
        %v4231 = vpop.f32.mrb[0].mxu0
        %4232 = vmatprep.mubr.f32.mxu0 0.0
        %4233 = vmatmul.mubr.f32.gmra.mrb[0].mxu0 %v3967
        %v4234 = vpop.f32.mrb[0].mxu0
        %v4235 = vadd.f32 0.0, %v4234
        %v4236 = vpop.f32.mrb[0].mxu0
        %4237 = vmatprep.mubr.f32.mxu0 0.0
        %4238 = vmatmul.mubr.f32.gmra.mrb[0].mxu0 %v3970
        %v4239 = vpop.f32.mrb[0].mxu0
        %v4240 = vadd.f32 0.0, %v4239
        %v4241 = vpop.f32.mrb[0].mxu0
        %4242 = vmatprep.mubr.f32.mxu0 0.0
        %4243 = vmatmul.mubr.f32.gmra.mrb[0].mxu0 %v3973
        %v4244 = vpop.f32.mrb[0].mxu0
        %v4245 = vadd.f32 0.0, %v4244
        %v4246 = vpop.f32.mrb[0].mxu0
        %4247 = vmatprep.mubr.f32.mxu0 0.0
        %4248 = vmatmul.mubr.f32.gmra.mrb[0].mxu0 %v3976
        %v4249 = vpop.f32.mrb[0].mxu0
        %v4250 = vadd.f32 0.0, %v4249
        %v4251 = vpop.f32.mrb[0].mxu0
        %4252 = vmatprep.mubr.f32.mxu0 0.0
        %4253 = vmatmul.mubr.f32.gmra.mrb[0].mxu0 %v3979
        %v4254 = vpop.f32.mrb[0].mxu0
        %v4255 = vadd.f32 0.0, %v4254
        %v4256 = vpop.f32.mrb[0].mxu0
        %4257 = vmatprep.mubr.f32.mxu0 0.0
        %4258 = vmatmul.mubr.f32.gmra.mrb[0].mxu0 %v3982
        %v4259 = vpop.f32.mrb[0].mxu0
        %v4260 = vadd.f32 0.0, %v4259
        %v4261 = vpop.f32.mrb[0].mxu0
        %4262 = vmatprep.mubr.f32.mxu0 0.0
        %4263 = vmatmul.mubr.f32.gmra.mrb[0].mxu0 %v3985
        %v4264 = vpop.f32.mrb[0].mxu0
        %v4265 = vadd.f32 0.0, %v4264
        %v4266 = vpop.f32.mrb[0].mxu0
        %4267 = vmatprep.mubr.f32.mxu0 0.0
        %4268 = vmatmul.mubr.f32.gmra.mrb[0].mxu0 %v3988
        %v4269 = vpop.f32.mrb[0].mxu0
        %v4270 = vadd.f32 0.0, %v4269
        %v4271 = vpop.f32.mrb[0].mxu0
        %4272 = vmatprep.mubr.f32.mxu0 0.0
        %4273 = vmatmul.mubr.f32.gmra.mrb[0].mxu0 %v3991
        %v4274 = vpop.f32.mrb[0].mxu0
        %v4275 = vadd.f32 0.0, %v4274
        %v4276 = vpop.f32.mrb[0].mxu0
        %4277 = vmatprep.mubr.f32.mxu0 0.0
        %4278 = vmatmul.mubr.f32.gmra.mrb[0].mxu0 %v3994
        %v4279 = vpop.f32.mrb[0].mxu0
        %v4280 = vadd.f32 0.0, %v4279
        %v4281 = vpop.f32.mrb[0].mxu0
        %4282 = vmatprep.mubr.f32.mxu0 0.0
        %4283 = vmatmul.mubr.f32.gmra.mrb[0].mxu0 %v3997
        %v4284 = vpop.f32.mrb[0].mxu0
        %v4285 = vadd.f32 0.0, %v4284
        %v4286 = vpop.f32.mrb[0].mxu0
        %4287 = vmatprep.mubr.f32.mxu0 0.0
        %4288 = vmatmul.mubr.f32.gmra.mrb[0].mxu0 %v4000
        %v4289 = vpop.f32.mrb[0].mxu0
        %v4290 = vadd.f32 0.0, %v4289
        %v4291 = vpop.f32.mrb[0].mxu0
        %4292 = vmatprep.mubr.f32.mxu0 0.0
        %4293 = vmatmul.mubr.f32.gmra.mrb[0].mxu0 %v4003
        %v4294 = vpop.f32.mrb[0].mxu0
        %v4295 = vadd.f32 0.0, %v4294
        %v4296 = vpop.f32.mrb[0].mxu0
        %4297 = vmatprep.mubr.f32.mxu0 0.0
        %4298 = vmatmul.mubr.f32.gmra.mrb[0].mxu0 %v4006
        %v4299 = vpop.f32.mrb[0].mxu0
        %v4300 = vadd.f32 0.0, %v4299
        %v4301 = vpop.f32.mrb[0].mxu0
        %4302 = vmatprep.mubr.f32.mxu0 0.0
        %4303 = vmatmul.mubr.f32.gmra.mrb[0].mxu0 %v4009
        %v4304 = vpop.f32.mrb[0].mxu0
        %v4305 = vadd.f32 0.0, %v4304
        %v4306 = vpop.f32.mrb[0].mxu0
        %4307 = vmatprep.mubr.f32.mxu0 0.0
        %4308 = vmatmul.mubr.f32.gmra.mrb[0].mxu0 %v4012
        %v4309 = vpop.f32.mrb[0].mxu0
        %v4310 = vadd.f32 0.0, %v4309
        %v4311 = vpop.f32.mrb[0].mxu0
        %4312 = vmatprep.mubr.f32.mxu0 0.0
        %4313 = vmatmul.mubr.f32.gmra.mrb[0].mxu0 %v4015
        %v4314 = vpop.f32.mrb[0].mxu0
        %v4315 = vadd.f32 0.0, %v4314
        %v4316 = vpop.f32.mrb[0].mxu0
        %4317 = vmatprep.mubr.f32.mxu0 0.0
        %4318 = vmatmul.mubr.f32.gmra.mrb[0].mxu0 %v4018
        %v4319 = vpop.f32.mrb[0].mxu0
        %v4320 = vadd.f32 0.0, %v4319
        %v4321 = vpop.f32.mrb[0].mxu0
        %4322 = vmatprep.mubr.f32.mxu0 0.0
        %4323 = vmatmul.mubr.f32.gmra.mrb[0].mxu0 %v4021
        %v4324 = vpop.f32.mrb[0].mxu0
        %v4325 = vadd.f32 0.0, %v4324
        %v4326 = vpop.f32.mrb[0].mxu0
        %4327 = vmatprep.mubr.f32.mxu0 0.0
        %4328 = vmatmul.mubr.f32.gmra.mrb[0].mxu0 %v4024
        %v4329 = vpop.f32.mrb[0].mxu0
        %v4330 = vadd.f32 0.0, %v4329
        %v4331 = vpop.f32.mrb[0].mxu0
        %4332 = vmatprep.mubr.f32.mxu0 0.0
        %4333 = vmatmul.mubr.f32.gmra.mrb[0].mxu0 %v4027
        %v4334 = vpop.f32.mrb[0].mxu0
        %v4335 = vadd.f32 0.0, %v4334
        %v4336 = vpop.f32.mrb[0].mxu0
        %4337 = vmatprep.mubr.f32.mxu0 0.0
        %4338 = vmatmul.mubr.f32.gmra.mrb[0].mxu0 %v4030
        %v4339 = vpop.f32.mrb[0].mxu0
        %v4340 = vadd.f32 0.0, %v4339
        %v4341 = vpop.f32.mrb[0].mxu0
        %4342 = vmatprep.mubr.f32.mxu0 0.0
        %4343 = vmatmul.mubr.f32.gmra.mrb[0].mxu0 %v4033
        %v4344 = vpop.f32.mrb[0].mxu0
        %v4345 = vadd.f32 0.0, %v4344
        %v4346 = vpop.f32.mrb[0].mxu0
        %4347 = vmatprep.mubr.f32.mxu0 0.0
        %4348 = vmatmul.mubr.f32.gmra.mrb[0].mxu0 %v4036
        %v4349 = vpop.f32.mrb[0].mxu0
        %v4350 = vadd.f32 0.0, %v4349
        %v4351 = vpop.f32.mrb[0].mxu0
        %4352 = vmatprep.mubr.f32.mxu0 0.0
        %4353 = vmatmul.mubr.f32.gmra.mrb[0].mxu0 %v4039
        %v4354 = vpop.f32.mrb[0].mxu0
        %v4355 = vadd.f32 0.0, %v4354
        %v4356 = vpop.f32.mrb[0].mxu0
        %4357 = vmatprep.mubr.f32.mxu0 0.0
        %4358 = vmatmul.mubr.f32.gmra.mrb[0].mxu0 %v4042
        %v4359 = vpop.f32.mrb[0].mxu0
        %v4360 = vadd.f32 0.0, %v4359
        %v4361 = vpop.f32.mrb[0].mxu0
        %4362 = vmatprep.mubr.f32.mxu0 0.0
        %4363 = vmatmul.mubr.f32.gmra.mrb[0].mxu0 %v4045
        %v4364 = vpop.f32.mrb[0].mxu0
        %v4365 = vadd.f32 0.0, %v4364
        %v4366 = vpop.f32.mrb[0].mxu0
        %4367 = vmatprep.mubr.f32.mxu0 0.0
        %4368 = vmatmul.mubr.f32.gmra.mrb[0].mxu0 %v4048
        %v4369 = vpop.f32.mrb[0].mxu0
        %v4370 = vadd.f32 0.0, %v4369
        %v4371 = vpop.f32.mrb[0].mxu0
        %4372 = vmatprep.mubr.f32.mxu0 0.0
        %4373 = vmatmul.mubr.f32.gmra.mrb[0].mxu0 %v4051
        %v4374 = vpop.f32.mrb[0].mxu0
        %v4375 = vadd.f32 0.0, %v4374
        %v4376 = vpop.f32.mrb[0].mxu0
        %4377 = vmatprep.mubr.f32.mxu0 0.0
        %4378 = vmatmul.mubr.f32.gmra.mrb[0].mxu0 %v4054
        %v4379 = vpop.f32.mrb[0].mxu0
        %v4380 = vadd.f32 0.0, %v4379
        %v4381 = vpop.f32.mrb[0].mxu0
        %4382 = vmatprep.mubr.f32.mxu0 0.0
        %4383 = vmatmul.mubr.f32.gmra.mrb[0].mxu0 %v4057
        %v4384 = vpop.f32.mrb[0].mxu0
        %v4385 = vadd.f32 0.0, %v4384
        %v4386 = vpop.f32.mrb[0].mxu0
        %4387 = vmatprep.mubr.f32.mxu0 0.0
        %4388 = vmatmul.mubr.f32.gmra.mrb[0].mxu0 %v4060
        %v4389 = vpop.f32.mrb[0].mxu0
        %v4390 = vadd.f32 0.0, %v4389
        %v4391 = vpop.f32.mrb[0].mxu0
        %4392 = vmatprep.mubr.f32.mxu0 0.0
        %4393 = vmatmul.mubr.f32.gmra.mrb[0].mxu0 %v4063
        %v4394 = vpop.f32.mrb[0].mxu0
        %v4395 = vadd.f32 0.0, %v4394
        %v4396 = vpop.f32.mrb[0].mxu0
        %4397 = vmatprep.mubr.f32.mxu0 0.0
        %4398 = vmatmul.mubr.f32.gmra.mrb[0].mxu0 %v4066
        %v4399 = vpop.f32.mrb[0].mxu0
        %v4400 = vadd.f32 0.0, %v4399
        %v4401 = vpop.f32.mrb[0].mxu0
        %4402 = vdwg.mxu0
        %v4404 = vsel %vm3905, 0.0, 0
        %4406 = vmatprep.subr.mxu0 0.0
        %4407 = vmatpush1.msra.mxu0 %v3101
        %4408 = vmatprep.subr.mxu0 0.0
        %4409 = vmatpush1.msra.mxu0 %v3102
        %4410 = vmatprep.subr.mxu0 0.0
        %4411 = vmatpush1.msra.mxu0 %v3103
        %4412 = vmatprep.subr.mxu0 0.0
        %4413 = vmatpush1.msra.mxu0 %v3104
        %4414 = vmatprep.subr.mxu0 0.0
        %4415 = vmatpush1.msra.mxu0 %v3105
        %4416 = vmatprep.subr.mxu0 0.0
        %4417 = vmatpush1.msra.mxu0 %v3106
        %4418 = vmatprep.subr.mxu0 0.0
        %4419 = vmatpush1.msra.mxu0 %v3107
        %4420 = vmatprep.subr.mxu0 0.0
        %4421 = vmatpush1.msra.mxu0 %v3108
        %4422 = vmatprep.subr.mxu0 0.0
        %4423 = vmatpush1.msra.mxu0 %v3109
        %4424 = vmatprep.subr.mxu0 0.0
        %4425 = vmatpush1.msra.mxu0 %v3110
        %4426 = vmatprep.subr.mxu0 0.0
        %4427 = vmatpush1.msra.mxu0 %v3111
        %4428 = vmatprep.subr.mxu0 0.0
        %4429 = vmatpush1.msra.mxu0 %v3112
        %4430 = vmatprep.subr.mxu0 0.0
        %4431 = vmatpush1.msra.mxu0 0.0
        %4432 = vmatprep.subr.mxu0 0.0
        %4433 = vmatpush1.msra.mxu0 0.0
        %4434 = vmatprep.subr.mxu0 0.0
        %4435 = vmatpush1.msra.mxu0 0.0
        %4436 = vmatprep.subr.mxu0 0.0
        %4437 = vmatpush1.msra.mxu0 0.0
        %4438 = vmatprep.subr.mxu0 0.0
        %4439 = vmatpush1.msra.mxu0 0.0
        %4440 = vmatprep.subr.mxu0 0.0
        %4441 = vmatpush1.msra.mxu0 0.0
        %4442 = vmatprep.subr.mxu0 0.0
        %4443 = vmatpush1.msra.mxu0 0.0
        %4444 = vmatprep.subr.mxu0 0.0
        %4445 = vmatpush1.msra.mxu0 0.0
        %4446 = vmatprep.subr.mxu0 0.0
        %4447 = vmatpush1.msra.mxu0 0.0
        %4448 = vmatprep.subr.mxu0 0.0
        %4449 = vmatpush1.msra.mxu0 0.0
        %4450 = vmatprep.subr.mxu0 0.0
        %4451 = vmatpush1.msra.mxu0 0.0
        %4452 = vmatprep.subr.mxu0 0.0
        %4453 = vmatpush1.msra.mxu0 0.0
        %4454 = vmatprep.subr.mxu0 0.0
        %4455 = vmatpush1.msra.mxu0 0.0
        %4456 = vmatprep.subr.mxu0 0.0
        %4457 = vmatpush1.msra.mxu0 0.0
        %4458 = vmatprep.subr.mxu0 0.0
        %4459 = vmatpush1.msra.mxu0 0.0
        %4460 = vmatprep.subr.mxu0 0.0
        %4461 = vmatpush1.msra.mxu0 0.0
        %4462 = vmatprep.subr.mxu0 0.0
        %4463 = vmatpush1.msra.mxu0 0.0
        %4464 = vmatprep.subr.mxu0 0.0
        %4465 = vmatpush1.msra.mxu0 0.0
        %4466 = vmatprep.subr.mxu0 0.0
        %4467 = vmatpush1.msra.mxu0 0.0
        %4468 = vmatprep.subr.mxu0 0.0
        %4469 = vmatpush1.msra.mxu0 0.0
        %4470 = vmatprep.mubr.f32.mxu0 0.0
        %4471 = vmatmul.mubr.f32.gmra.mrb[0].mxu0 %v4404
        %v4472 = vpop.f32.mrb[0].mxu0
        %v4473 = vadd.f32 %v4135, %v4472
        %v4474 = vpop.f32.mrb[0].mxu0
        %4475 = vmatprep.mubr.f32.mxu0 0.0
        %4476 = vmatmul.mubr.f32.gmra.mrb[0].mxu0 %v4404
        %v4477 = vpop.f32.mrb[0].mxu0
        %v4478 = vadd.f32 %v4140, %v4477
        %v4479 = vpop.f32.mrb[0].mxu0
        %4480 = vmatprep.mubr.f32.mxu0 0.0
        %4481 = vmatmul.mubr.f32.gmra.mrb[0].mxu0 %v4404
        %v4482 = vpop.f32.mrb[0].mxu0
        %v4483 = vadd.f32 %v4145, %v4482
        %v4484 = vpop.f32.mrb[0].mxu0
        %4485 = vmatprep.mubr.f32.mxu0 0.0
        %4486 = vmatmul.mubr.f32.gmra.mrb[0].mxu0 %v3907
        %v4487 = vpop.f32.mrb[0].mxu0
        %v4488 = vadd.f32 %v4150, %v4487
        %v4489 = vpop.f32.mrb[0].mxu0
        %4490 = vmatprep.mubr.f32.mxu0 0.0
        %4491 = vmatmul.mubr.f32.gmra.mrb[0].mxu0 %v3910
        %v4492 = vpop.f32.mrb[0].mxu0
        %v4493 = vadd.f32 %v4155, %v4492
        %v4494 = vpop.f32.mrb[0].mxu0
        %4495 = vmatprep.mubr.f32.mxu0 0.0
        %4496 = vmatmul.mubr.f32.gmra.mrb[0].mxu0 %v3913
        %v4497 = vpop.f32.mrb[0].mxu0
        %v4498 = vadd.f32 %v4160, %v4497
        %v4499 = vpop.f32.mrb[0].mxu0
        %4500 = vmatprep.mubr.f32.mxu0 0.0
        %4501 = vmatmul.mubr.f32.gmra.mrb[0].mxu0 %v3916
        %v4502 = vpop.f32.mrb[0].mxu0
        %v4503 = vadd.f32 %v4165, %v4502
        %v4504 = vpop.f32.mrb[0].mxu0
        %4505 = vmatprep.mubr.f32.mxu0 0.0
        %4506 = vmatmul.mubr.f32.gmra.mrb[0].mxu0 %v3919
        %v4507 = vpop.f32.mrb[0].mxu0
        %v4508 = vadd.f32 %v4170, %v4507
        %v4509 = vpop.f32.mrb[0].mxu0
        %4510 = vmatprep.mubr.f32.mxu0 0.0
        %4511 = vmatmul.mubr.f32.gmra.mrb[0].mxu0 %v3922
        %v4512 = vpop.f32.mrb[0].mxu0
        %v4513 = vadd.f32 %v4175, %v4512
        %v4514 = vpop.f32.mrb[0].mxu0
        %4515 = vmatprep.mubr.f32.mxu0 0.0
        %4516 = vmatmul.mubr.f32.gmra.mrb[0].mxu0 %v3925
        %v4517 = vpop.f32.mrb[0].mxu0
        %v4518 = vadd.f32 %v4180, %v4517
        %v4519 = vpop.f32.mrb[0].mxu0
        %4520 = vmatprep.mubr.f32.mxu0 0.0
        %4521 = vmatmul.mubr.f32.gmra.mrb[0].mxu0 %v3928
        %v4522 = vpop.f32.mrb[0].mxu0
        %v4523 = vadd.f32 %v4185, %v4522
        %v4524 = vpop.f32.mrb[0].mxu0
        %4525 = vmatprep.mubr.f32.mxu0 0.0
        %4526 = vmatmul.mubr.f32.gmra.mrb[0].mxu0 %v3931
        %v4527 = vpop.f32.mrb[0].mxu0
        %v4528 = vadd.f32 %v4190, %v4527
        %v4529 = vpop.f32.mrb[0].mxu0
        %4530 = vmatprep.mubr.f32.mxu0 0.0
        %4531 = vmatmul.mubr.f32.gmra.mrb[0].mxu0 %v3934
        %v4532 = vpop.f32.mrb[0].mxu0
        %v4533 = vadd.f32 %v4195, %v4532
        %v4534 = vpop.f32.mrb[0].mxu0
        %4535 = vmatprep.mubr.f32.mxu0 0.0
        %4536 = vmatmul.mubr.f32.gmra.mrb[0].mxu0 %v3937
        %v4537 = vpop.f32.mrb[0].mxu0
        %v4538 = vadd.f32 %v4200, %v4537
        %v4539 = vpop.f32.mrb[0].mxu0
        %4540 = vmatprep.mubr.f32.mxu0 0.0
        %4541 = vmatmul.mubr.f32.gmra.mrb[0].mxu0 %v3940
        %v4542 = vpop.f32.mrb[0].mxu0
        %v4543 = vadd.f32 %v4205, %v4542
        %v4544 = vpop.f32.mrb[0].mxu0
        %4545 = vmatprep.mubr.f32.mxu0 0.0
        %4546 = vmatmul.mubr.f32.gmra.mrb[0].mxu0 %v3943
        %v4547 = vpop.f32.mrb[0].mxu0
        %v4548 = vadd.f32 %v4210, %v4547
        %v4549 = vpop.f32.mrb[0].mxu0
        %4550 = vmatprep.mubr.f32.mxu0 0.0
        %4551 = vmatmul.mubr.f32.gmra.mrb[0].mxu0 %v3946
        %v4552 = vpop.f32.mrb[0].mxu0
        %v4553 = vadd.f32 %v4215, %v4552
        %v4554 = vpop.f32.mrb[0].mxu0
        %4555 = vmatprep.mubr.f32.mxu0 0.0
        %4556 = vmatmul.mubr.f32.gmra.mrb[0].mxu0 %v3949
        %v4557 = vpop.f32.mrb[0].mxu0
        %v4558 = vadd.f32 %v4220, %v4557
        %v4559 = vpop.f32.mrb[0].mxu0
        %4560 = vmatprep.mubr.f32.mxu0 0.0
        %4561 = vmatmul.mubr.f32.gmra.mrb[0].mxu0 %v3952
        %v4562 = vpop.f32.mrb[0].mxu0
        %v4563 = vadd.f32 %v4225, %v4562
        %v4564 = vpop.f32.mrb[0].mxu0
        %4565 = vmatprep.mubr.f32.mxu0 0.0
        %4566 = vmatmul.mubr.f32.gmra.mrb[0].mxu0 %v3955
        %v4567 = vpop.f32.mrb[0].mxu0
        %v4568 = vadd.f32 %v4230, %v4567
        %v4569 = vpop.f32.mrb[0].mxu0
        %4570 = vmatprep.mubr.f32.mxu0 0.0
        %4571 = vmatmul.mubr.f32.gmra.mrb[0].mxu0 %v3958
        %v4572 = vpop.f32.mrb[0].mxu0
        %v4573 = vadd.f32 %v4235, %v4572
        %v4574 = vpop.f32.mrb[0].mxu0
        %4575 = vmatprep.mubr.f32.mxu0 0.0
        %4576 = vmatmul.mubr.f32.gmra.mrb[0].mxu0 %v3961
        %v4577 = vpop.f32.mrb[0].mxu0
        %v4578 = vadd.f32 %v4240, %v4577
        %v4579 = vpop.f32.mrb[0].mxu0
        %4580 = vmatprep.mubr.f32.mxu0 0.0
        %4581 = vmatmul.mubr.f32.gmra.mrb[0].mxu0 %v3964
        %v4582 = vpop.f32.mrb[0].mxu0
        %v4583 = vadd.f32 %v4245, %v4582
        %v4584 = vpop.f32.mrb[0].mxu0
        %4585 = vmatprep.mubr.f32.mxu0 0.0
        %4586 = vmatmul.mubr.f32.gmra.mrb[0].mxu0 %v3967
        %v4587 = vpop.f32.mrb[0].mxu0
        %v4588 = vadd.f32 %v4250, %v4587
        %v4589 = vpop.f32.mrb[0].mxu0
        %4590 = vmatprep.mubr.f32.mxu0 0.0
        %4591 = vmatmul.mubr.f32.gmra.mrb[0].mxu0 %v3970
        %v4592 = vpop.f32.mrb[0].mxu0
        %v4593 = vadd.f32 %v4255, %v4592
        %v4594 = vpop.f32.mrb[0].mxu0
        %4595 = vmatprep.mubr.f32.mxu0 0.0
        %4596 = vmatmul.mubr.f32.gmra.mrb[0].mxu0 %v3973
        %v4597 = vpop.f32.mrb[0].mxu0
        %v4598 = vadd.f32 %v4260, %v4597
        %v4599 = vpop.f32.mrb[0].mxu0
        %4600 = vmatprep.mubr.f32.mxu0 0.0
        %4601 = vmatmul.mubr.f32.gmra.mrb[0].mxu0 %v3976
        %v4602 = vpop.f32.mrb[0].mxu0
        %v4603 = vadd.f32 %v4265, %v4602
        %v4604 = vpop.f32.mrb[0].mxu0
        %4605 = vmatprep.mubr.f32.mxu0 0.0
        %4606 = vmatmul.mubr.f32.gmra.mrb[0].mxu0 %v3979
        %v4607 = vpop.f32.mrb[0].mxu0
        %v4608 = vadd.f32 %v4270, %v4607
        %v4609 = vpop.f32.mrb[0].mxu0
        %4610 = vmatprep.mubr.f32.mxu0 0.0
        %4611 = vmatmul.mubr.f32.gmra.mrb[0].mxu0 %v3982
        %v4612 = vpop.f32.mrb[0].mxu0
        %v4613 = vadd.f32 %v4275, %v4612
        %v4614 = vpop.f32.mrb[0].mxu0
        %4615 = vmatprep.mubr.f32.mxu0 0.0
        %4616 = vmatmul.mubr.f32.gmra.mrb[0].mxu0 %v3985
        %v4617 = vpop.f32.mrb[0].mxu0
        %v4618 = vadd.f32 %v4280, %v4617
        %v4619 = vpop.f32.mrb[0].mxu0
        %4620 = vmatprep.mubr.f32.mxu0 0.0
        %4621 = vmatmul.mubr.f32.gmra.mrb[0].mxu0 %v3988
        %v4622 = vpop.f32.mrb[0].mxu0
        %v4623 = vadd.f32 %v4285, %v4622
        %v4624 = vpop.f32.mrb[0].mxu0
        %4625 = vmatprep.mubr.f32.mxu0 0.0
        %4626 = vmatmul.mubr.f32.gmra.mrb[0].mxu0 %v3991
        %v4627 = vpop.f32.mrb[0].mxu0
        %v4628 = vadd.f32 %v4290, %v4627
        %v4629 = vpop.f32.mrb[0].mxu0
        %4630 = vmatprep.mubr.f32.mxu0 0.0
        %4631 = vmatmul.mubr.f32.gmra.mrb[0].mxu0 %v3994
        %v4632 = vpop.f32.mrb[0].mxu0
        %v4633 = vadd.f32 %v4295, %v4632
        %v4634 = vpop.f32.mrb[0].mxu0
        %4635 = vmatprep.mubr.f32.mxu0 0.0
        %4636 = vmatmul.mubr.f32.gmra.mrb[0].mxu0 %v3997
        %v4637 = vpop.f32.mrb[0].mxu0
        %v4638 = vadd.f32 %v4300, %v4637
        %v4639 = vpop.f32.mrb[0].mxu0
        %4640 = vmatprep.mubr.f32.mxu0 0.0
        %4641 = vmatmul.mubr.f32.gmra.mrb[0].mxu0 %v4000
        %v4642 = vpop.f32.mrb[0].mxu0
        %v4643 = vadd.f32 %v4305, %v4642
        %v4644 = vpop.f32.mrb[0].mxu0
        %4645 = vmatprep.mubr.f32.mxu0 0.0
        %4646 = vmatmul.mubr.f32.gmra.mrb[0].mxu0 %v4003
        %v4647 = vpop.f32.mrb[0].mxu0
        %v4648 = vadd.f32 %v4310, %v4647
        %v4649 = vpop.f32.mrb[0].mxu0
        %4650 = vmatprep.mubr.f32.mxu0 0.0
        %4651 = vmatmul.mubr.f32.gmra.mrb[0].mxu0 %v4006
        %v4652 = vpop.f32.mrb[0].mxu0
        %v4653 = vadd.f32 %v4315, %v4652
        %v4654 = vpop.f32.mrb[0].mxu0
        %4655 = vmatprep.mubr.f32.mxu0 0.0
        %4656 = vmatmul.mubr.f32.gmra.mrb[0].mxu0 %v4009
        %v4657 = vpop.f32.mrb[0].mxu0
        %v4658 = vadd.f32 %v4320, %v4657
        %v4659 = vpop.f32.mrb[0].mxu0
        %4660 = vmatprep.mubr.f32.mxu0 0.0
        %4661 = vmatmul.mubr.f32.gmra.mrb[0].mxu0 %v4012
        %v4662 = vpop.f32.mrb[0].mxu0
        %v4663 = vadd.f32 %v4325, %v4662
        %v4664 = vpop.f32.mrb[0].mxu0
        %4665 = vmatprep.mubr.f32.mxu0 0.0
        %4666 = vmatmul.mubr.f32.gmra.mrb[0].mxu0 %v4015
        %v4667 = vpop.f32.mrb[0].mxu0
        %v4668 = vadd.f32 %v4330, %v4667
        %v4669 = vpop.f32.mrb[0].mxu0
        %4670 = vmatprep.mubr.f32.mxu0 0.0
        %4671 = vmatmul.mubr.f32.gmra.mrb[0].mxu0 %v4018
        %v4672 = vpop.f32.mrb[0].mxu0
        %v4673 = vadd.f32 %v4335, %v4672
        %v4674 = vpop.f32.mrb[0].mxu0
        %4675 = vmatprep.mubr.f32.mxu0 0.0
        %4676 = vmatmul.mubr.f32.gmra.mrb[0].mxu0 %v4021
        %v4677 = vpop.f32.mrb[0].mxu0
        %v4678 = vadd.f32 %v4340, %v4677
        %v4679 = vpop.f32.mrb[0].mxu0
        %4680 = vmatprep.mubr.f32.mxu0 0.0
        %4681 = vmatmul.mubr.f32.gmra.mrb[0].mxu0 %v4024
        %v4682 = vpop.f32.mrb[0].mxu0
        %v4683 = vadd.f32 %v4345, %v4682
        %v4684 = vpop.f32.mrb[0].mxu0
        %4685 = vmatprep.mubr.f32.mxu0 0.0
        %4686 = vmatmul.mubr.f32.gmra.mrb[0].mxu0 %v4027
        %v4687 = vpop.f32.mrb[0].mxu0
        %v4688 = vadd.f32 %v4350, %v4687
        %v4689 = vpop.f32.mrb[0].mxu0
        %4690 = vmatprep.mubr.f32.mxu0 0.0
        %4691 = vmatmul.mubr.f32.gmra.mrb[0].mxu0 %v4030
        %v4692 = vpop.f32.mrb[0].mxu0
        %v4693 = vadd.f32 %v4355, %v4692
        %v4694 = vpop.f32.mrb[0].mxu0
        %4695 = vmatprep.mubr.f32.mxu0 0.0
        %4696 = vmatmul.mubr.f32.gmra.mrb[0].mxu0 %v4033
        %v4697 = vpop.f32.mrb[0].mxu0
        %v4698 = vadd.f32 %v4360, %v4697
        %v4699 = vpop.f32.mrb[0].mxu0
        %4700 = vmatprep.mubr.f32.mxu0 0.0
        %4701 = vmatmul.mubr.f32.gmra.mrb[0].mxu0 %v4036
        %v4702 = vpop.f32.mrb[0].mxu0
        %v4703 = vadd.f32 %v4365, %v4702
        %v4704 = vpop.f32.mrb[0].mxu0
        %4705 = vmatprep.mubr.f32.mxu0 0.0
        %4706 = vmatmul.mubr.f32.gmra.mrb[0].mxu0 %v4039
        %v4707 = vpop.f32.mrb[0].mxu0
        %v4708 = vadd.f32 %v4370, %v4707
        %v4709 = vpop.f32.mrb[0].mxu0
        %4710 = vmatprep.mubr.f32.mxu0 0.0
        %4711 = vmatmul.mubr.f32.gmra.mrb[0].mxu0 %v4042
        %v4712 = vpop.f32.mrb[0].mxu0
        %v4713 = vadd.f32 %v4375, %v4712
        %v4714 = vpop.f32.mrb[0].mxu0
        %4715 = vmatprep.mubr.f32.mxu0 0.0
        %4716 = vmatmul.mubr.f32.gmra.mrb[0].mxu0 %v4045
        %v4717 = vpop.f32.mrb[0].mxu0
        %v4718 = vadd.f32 %v4380, %v4717
        %v4719 = vpop.f32.mrb[0].mxu0
        %4720 = vmatprep.mubr.f32.mxu0 0.0
        %4721 = vmatmul.mubr.f32.gmra.mrb[0].mxu0 %v4048
        %v4722 = vpop.f32.mrb[0].mxu0
        %v4723 = vadd.f32 %v4385, %v4722
        %v4724 = vpop.f32.mrb[0].mxu0
        %4725 = vmatprep.mubr.f32.mxu0 0.0
        %4726 = vmatmul.mubr.f32.gmra.mrb[0].mxu0 %v4051
        %v4727 = vpop.f32.mrb[0].mxu0
        %v4728 = vadd.f32 %v4390, %v4727
        %v4729 = vpop.f32.mrb[0].mxu0
        %4730 = vmatprep.mubr.f32.mxu0 0.0
        %4731 = vmatmul.mubr.f32.gmra.mrb[0].mxu0 %v4054
        %v4732 = vpop.f32.mrb[0].mxu0
        %v4733 = vadd.f32 %v4395, %v4732
        %v4734 = vpop.f32.mrb[0].mxu0
        %4735 = vmatprep.mubr.f32.mxu0 0.0
        %4736 = vmatmul.mubr.f32.gmra.mrb[0].mxu0 %v4057
        %v4737 = vpop.f32.mrb[0].mxu0
        %v4738 = vadd.f32 %v4400, %v4737
        %v4739 = vpop.f32.mrb[0].mxu0
        %4740 = vdwg.mxu0
        %4741 = vmatprep.subr.mxu0 0.0
        %4742 = vmatpush1.msra.mxu0 %v3131
        %4743 = vmatprep.subr.mxu0 0.0
        %4744 = vmatpush1.msra.mxu0 %v3132
        %4745 = vmatprep.subr.mxu0 0.0
        %4746 = vmatpush1.msra.mxu0 %v3133
        %4747 = vmatprep.subr.mxu0 0.0
        %4748 = vmatpush1.msra.mxu0 %v3134
        %4749 = vmatprep.subr.mxu0 0.0
        %4750 = vmatpush1.msra.mxu0 %v3135
        %4751 = vmatprep.subr.mxu0 0.0
        %4752 = vmatpush1.msra.mxu0 %v3136
        %4753 = vmatprep.subr.mxu0 0.0
        %4754 = vmatpush1.msra.mxu0 %v3137
        %4755 = vmatprep.subr.mxu0 0.0
        %4756 = vmatpush1.msra.mxu0 %v3138
        %4757 = vmatprep.subr.mxu0 0.0
        %4758 = vmatpush1.msra.mxu0 %v3139
        %4759 = vmatprep.subr.mxu0 0.0
        %4760 = vmatpush1.msra.mxu0 %v3140
        %4761 = vmatprep.subr.mxu0 0.0
        %4762 = vmatpush1.msra.mxu0 %v3141
        %4763 = vmatprep.subr.mxu0 0.0
        %4764 = vmatpush1.msra.mxu0 %v3142
        %4765 = vmatprep.subr.mxu0 0.0
        %4766 = vmatpush1.msra.mxu0 0.0
        %4767 = vmatprep.subr.mxu0 0.0
        %4768 = vmatpush1.msra.mxu0 0.0
        %4769 = vmatprep.subr.mxu0 0.0
        %4770 = vmatpush1.msra.mxu0 0.0
        %4771 = vmatprep.subr.mxu0 0.0
        %4772 = vmatpush1.msra.mxu0 0.0
        %4773 = vmatprep.subr.mxu0 0.0
        %4774 = vmatpush1.msra.mxu0 0.0
        %4775 = vmatprep.subr.mxu0 0.0
        %4776 = vmatpush1.msra.mxu0 0.0
        %4777 = vmatprep.subr.mxu0 0.0
        %4778 = vmatpush1.msra.mxu0 0.0
        %4779 = vmatprep.subr.mxu0 0.0
        %4780 = vmatpush1.msra.mxu0 0.0
        %4781 = vmatprep.subr.mxu0 0.0
        %4782 = vmatpush1.msra.mxu0 0.0
        %4783 = vmatprep.subr.mxu0 0.0
        %4784 = vmatpush1.msra.mxu0 0.0
        %4785 = vmatprep.subr.mxu0 0.0
        %4786 = vmatpush1.msra.mxu0 0.0
        %4787 = vmatprep.subr.mxu0 0.0
        %4788 = vmatpush1.msra.mxu0 0.0
        %4789 = vmatprep.subr.mxu0 0.0
        %4790 = vmatpush1.msra.mxu0 0.0
        %4791 = vmatprep.subr.mxu0 0.0
        %4792 = vmatpush1.msra.mxu0 0.0
        %4793 = vmatprep.subr.mxu0 0.0
        %4794 = vmatpush1.msra.mxu0 0.0
        %4795 = vmatprep.subr.mxu0 0.0
        %4796 = vmatpush1.msra.mxu0 0.0
        %4797 = vmatprep.subr.mxu0 0.0
        %4798 = vmatpush1.msra.mxu0 0.0
        %4799 = vmatprep.subr.mxu0 0.0
        %4800 = vmatpush1.msra.mxu0 0.0
        %4801 = vmatprep.subr.mxu0 0.0
        %4802 = vmatpush1.msra.mxu0 0.0
        %4803 = vmatprep.subr.mxu0 0.0
        %4804 = vmatpush1.msra.mxu0 0.0
        %4805 = vmatprep.mubr.f32.mxu0 0.0
        %4806 = vmatmul.mubr.f32.gmra.mrb[0].mxu0 %v3916
        %v4807 = vpop.f32.mrb[0].mxu0
        %v4808 = vadd.f32 0.0, %v4807
        %v4809 = vpop.f32.mrb[0].mxu0
        %4810 = vmatprep.mubr.f32.mxu0 0.0
        %4811 = vmatmul.mubr.f32.gmra.mrb[0].mxu0 %v3919
        %v4812 = vpop.f32.mrb[0].mxu0
        %v4813 = vadd.f32 0.0, %v4812
        %v4814 = vpop.f32.mrb[0].mxu0
        %4815 = vmatprep.mubr.f32.mxu0 0.0
        %4816 = vmatmul.mubr.f32.gmra.mrb[0].mxu0 %v3922
        %v4817 = vpop.f32.mrb[0].mxu0
        %v4818 = vadd.f32 0.0, %v4817
        %v4819 = vpop.f32.mrb[0].mxu0
        %4820 = vmatprep.mubr.f32.mxu0 0.0
        %4821 = vmatmul.mubr.f32.gmra.mrb[0].mxu0 %v3925
        %v4822 = vpop.f32.mrb[0].mxu0
        %v4823 = vadd.f32 0.0, %v4822
        %v4824 = vpop.f32.mrb[0].mxu0
        %4825 = vmatprep.mubr.f32.mxu0 0.0
        %4826 = vmatmul.mubr.f32.gmra.mrb[0].mxu0 %v3928
        %v4827 = vpop.f32.mrb[0].mxu0
        %v4828 = vadd.f32 0.0, %v4827
        %v4829 = vpop.f32.mrb[0].mxu0
        %4830 = vmatprep.mubr.f32.mxu0 0.0
        %4831 = vmatmul.mubr.f32.gmra.mrb[0].mxu0 %v3931
        %v4832 = vpop.f32.mrb[0].mxu0
        %v4833 = vadd.f32 0.0, %v4832
        %v4834 = vpop.f32.mrb[0].mxu0
        %4835 = vmatprep.mubr.f32.mxu0 0.0
        %4836 = vmatmul.mubr.f32.gmra.mrb[0].mxu0 %v3934
        %v4837 = vpop.f32.mrb[0].mxu0
        %v4838 = vadd.f32 0.0, %v4837
        %v4839 = vpop.f32.mrb[0].mxu0
        %4840 = vmatprep.mubr.f32.mxu0 0.0
        %4841 = vmatmul.mubr.f32.gmra.mrb[0].mxu0 %v3937
        %v4842 = vpop.f32.mrb[0].mxu0
        %v4843 = vadd.f32 0.0, %v4842
        %v4844 = vpop.f32.mrb[0].mxu0
        %4845 = vmatprep.mubr.f32.mxu0 0.0
        %4846 = vmatmul.mubr.f32.gmra.mrb[0].mxu0 %v3940
        %v4847 = vpop.f32.mrb[0].mxu0
        %v4848 = vadd.f32 0.0, %v4847
        %v4849 = vpop.f32.mrb[0].mxu0
        %4850 = vmatprep.mubr.f32.mxu0 0.0
        %4851 = vmatmul.mubr.f32.gmra.mrb[0].mxu0 %v3943
        %v4852 = vpop.f32.mrb[0].mxu0
        %v4853 = vadd.f32 0.0, %v4852
        %v4854 = vpop.f32.mrb[0].mxu0
        %4855 = vmatprep.mubr.f32.mxu0 0.0
        %4856 = vmatmul.mubr.f32.gmra.mrb[0].mxu0 %v3946
        %v4857 = vpop.f32.mrb[0].mxu0
        %v4858 = vadd.f32 0.0, %v4857
        %v4859 = vpop.f32.mrb[0].mxu0
        %4860 = vmatprep.mubr.f32.mxu0 0.0
        %4861 = vmatmul.mubr.f32.gmra.mrb[0].mxu0 %v3949
        %v4862 = vpop.f32.mrb[0].mxu0
        %v4863 = vadd.f32 0.0, %v4862
        %v4864 = vpop.f32.mrb[0].mxu0
        %4865 = vmatprep.mubr.f32.mxu0 0.0
        %4866 = vmatmul.mubr.f32.gmra.mrb[0].mxu0 %v3952
        %v4867 = vpop.f32.mrb[0].mxu0
        %v4868 = vadd.f32 0.0, %v4867
        %v4869 = vpop.f32.mrb[0].mxu0
        %4870 = vmatprep.mubr.f32.mxu0 0.0
        %4871 = vmatmul.mubr.f32.gmra.mrb[0].mxu0 %v3955
        %v4872 = vpop.f32.mrb[0].mxu0
        %v4873 = vadd.f32 0.0, %v4872
        %v4874 = vpop.f32.mrb[0].mxu0
        %4875 = vmatprep.mubr.f32.mxu0 0.0
        %4876 = vmatmul.mubr.f32.gmra.mrb[0].mxu0 %v3958
        %v4877 = vpop.f32.mrb[0].mxu0
        %v4878 = vadd.f32 0.0, %v4877
        %v4879 = vpop.f32.mrb[0].mxu0
        %4880 = vmatprep.mubr.f32.mxu0 0.0
        %4881 = vmatmul.mubr.f32.gmra.mrb[0].mxu0 %v3961
        %v4882 = vpop.f32.mrb[0].mxu0
        %v4883 = vadd.f32 0.0, %v4882
        %v4884 = vpop.f32.mrb[0].mxu0
        %4885 = vmatprep.mubr.f32.mxu0 0.0
        %4886 = vmatmul.mubr.f32.gmra.mrb[0].mxu0 %v3964
        %v4887 = vpop.f32.mrb[0].mxu0
        %v4888 = vadd.f32 0.0, %v4887
        %v4889 = vpop.f32.mrb[0].mxu0
        %4890 = vmatprep.mubr.f32.mxu0 0.0
        %4891 = vmatmul.mubr.f32.gmra.mrb[0].mxu0 %v3967
        %v4892 = vpop.f32.mrb[0].mxu0
        %v4893 = vadd.f32 0.0, %v4892
        %v4894 = vpop.f32.mrb[0].mxu0
        %4895 = vmatprep.mubr.f32.mxu0 0.0
        %4896 = vmatmul.mubr.f32.gmra.mrb[0].mxu0 %v3970
        %v4897 = vpop.f32.mrb[0].mxu0
        %v4898 = vadd.f32 0.0, %v4897
        %v4899 = vpop.f32.mrb[0].mxu0
        %4900 = vmatprep.mubr.f32.mxu0 0.0
        %4901 = vmatmul.mubr.f32.gmra.mrb[0].mxu0 %v3973
        %v4902 = vpop.f32.mrb[0].mxu0
        %v4903 = vadd.f32 0.0, %v4902
        %v4904 = vpop.f32.mrb[0].mxu0
        %4905 = vmatprep.mubr.f32.mxu0 0.0
        %4906 = vmatmul.mubr.f32.gmra.mrb[0].mxu0 %v3976
        %v4907 = vpop.f32.mrb[0].mxu0
        %v4908 = vadd.f32 0.0, %v4907
        %v4909 = vpop.f32.mrb[0].mxu0
        %4910 = vmatprep.mubr.f32.mxu0 0.0
        %4911 = vmatmul.mubr.f32.gmra.mrb[0].mxu0 %v3979
        %v4912 = vpop.f32.mrb[0].mxu0
        %v4913 = vadd.f32 0.0, %v4912
        %v4914 = vpop.f32.mrb[0].mxu0
        %4915 = vmatprep.mubr.f32.mxu0 0.0
        %4916 = vmatmul.mubr.f32.gmra.mrb[0].mxu0 %v3982
        %v4917 = vpop.f32.mrb[0].mxu0
        %v4918 = vadd.f32 0.0, %v4917
        %v4919 = vpop.f32.mrb[0].mxu0
        %4920 = vmatprep.mubr.f32.mxu0 0.0
        %4921 = vmatmul.mubr.f32.gmra.mrb[0].mxu0 %v3985
        %v4922 = vpop.f32.mrb[0].mxu0
        %v4923 = vadd.f32 0.0, %v4922
        %v4924 = vpop.f32.mrb[0].mxu0
        %4925 = vmatprep.mubr.f32.mxu0 0.0
        %4926 = vmatmul.mubr.f32.gmra.mrb[0].mxu0 %v3988
        %v4927 = vpop.f32.mrb[0].mxu0
        %v4928 = vadd.f32 0.0, %v4927
        %v4929 = vpop.f32.mrb[0].mxu0
        %4930 = vmatprep.mubr.f32.mxu0 0.0
        %4931 = vmatmul.mubr.f32.gmra.mrb[0].mxu0 %v3991
        %v4932 = vpop.f32.mrb[0].mxu0
        %v4933 = vadd.f32 0.0, %v4932
        %v4934 = vpop.f32.mrb[0].mxu0
        %4935 = vmatprep.mubr.f32.mxu0 0.0
        %4936 = vmatmul.mubr.f32.gmra.mrb[0].mxu0 %v3994
        %v4937 = vpop.f32.mrb[0].mxu0
        %v4938 = vadd.f32 0.0, %v4937
        %v4939 = vpop.f32.mrb[0].mxu0
        %4940 = vmatprep.mubr.f32.mxu0 0.0
        %4941 = vmatmul.mubr.f32.gmra.mrb[0].mxu0 %v3997
        %v4942 = vpop.f32.mrb[0].mxu0
        %v4943 = vadd.f32 0.0, %v4942
        %v4944 = vpop.f32.mrb[0].mxu0
        %4945 = vmatprep.mubr.f32.mxu0 0.0
        %4946 = vmatmul.mubr.f32.gmra.mrb[0].mxu0 %v4000
        %v4947 = vpop.f32.mrb[0].mxu0
        %v4948 = vadd.f32 0.0, %v4947
        %v4949 = vpop.f32.mrb[0].mxu0
        %4950 = vmatprep.mubr.f32.mxu0 0.0
        %4951 = vmatmul.mubr.f32.gmra.mrb[0].mxu0 %v4003
        %v4952 = vpop.f32.mrb[0].mxu0
        %v4953 = vadd.f32 0.0, %v4952
        %v4954 = vpop.f32.mrb[0].mxu0
        %4955 = vmatprep.mubr.f32.mxu0 0.0
        %4956 = vmatmul.mubr.f32.gmra.mrb[0].mxu0 %v4006
        %v4957 = vpop.f32.mrb[0].mxu0
        %v4958 = vadd.f32 0.0, %v4957
        %v4959 = vpop.f32.mrb[0].mxu0
        %4960 = vmatprep.mubr.f32.mxu0 0.0
        %4961 = vmatmul.mubr.f32.gmra.mrb[0].mxu0 %v4009
        %v4962 = vpop.f32.mrb[0].mxu0
        %v4963 = vadd.f32 0.0, %v4962
        %v4964 = vpop.f32.mrb[0].mxu0
        %4965 = vmatprep.mubr.f32.mxu0 0.0
        %4966 = vmatmul.mubr.f32.gmra.mrb[0].mxu0 %v4012
        %v4967 = vpop.f32.mrb[0].mxu0
        %v4968 = vadd.f32 0.0, %v4967
        %v4969 = vpop.f32.mrb[0].mxu0
        %4970 = vmatprep.mubr.f32.mxu0 0.0
        %4971 = vmatmul.mubr.f32.gmra.mrb[0].mxu0 %v4015
        %v4972 = vpop.f32.mrb[0].mxu0
        %v4973 = vadd.f32 0.0, %v4972
        %v4974 = vpop.f32.mrb[0].mxu0
        %4975 = vmatprep.mubr.f32.mxu0 0.0
        %4976 = vmatmul.mubr.f32.gmra.mrb[0].mxu0 %v4018
        %v4977 = vpop.f32.mrb[0].mxu0
        %v4978 = vadd.f32 0.0, %v4977
        %v4979 = vpop.f32.mrb[0].mxu0
        %4980 = vmatprep.mubr.f32.mxu0 0.0
        %4981 = vmatmul.mubr.f32.gmra.mrb[0].mxu0 %v4021
        %v4982 = vpop.f32.mrb[0].mxu0
        %v4983 = vadd.f32 0.0, %v4982
        %v4984 = vpop.f32.mrb[0].mxu0
        %4985 = vmatprep.mubr.f32.mxu0 0.0
        %4986 = vmatmul.mubr.f32.gmra.mrb[0].mxu0 %v4024
        %v4987 = vpop.f32.mrb[0].mxu0
        %v4988 = vadd.f32 0.0, %v4987
        %v4989 = vpop.f32.mrb[0].mxu0
        %4990 = vmatprep.mubr.f32.mxu0 0.0
        %4991 = vmatmul.mubr.f32.gmra.mrb[0].mxu0 %v4027
        %v4992 = vpop.f32.mrb[0].mxu0
        %v4993 = vadd.f32 0.0, %v4992
        %v4994 = vpop.f32.mrb[0].mxu0
        %4995 = vmatprep.mubr.f32.mxu0 0.0
        %4996 = vmatmul.mubr.f32.gmra.mrb[0].mxu0 %v4030
        %v4997 = vpop.f32.mrb[0].mxu0
        %v4998 = vadd.f32 0.0, %v4997
        %v4999 = vpop.f32.mrb[0].mxu0
        %5000 = vmatprep.mubr.f32.mxu0 0.0
        %5001 = vmatmul.mubr.f32.gmra.mrb[0].mxu0 %v4033
        %v5002 = vpop.f32.mrb[0].mxu0
        %v5003 = vadd.f32 0.0, %v5002
        %v5004 = vpop.f32.mrb[0].mxu0
        %5005 = vmatprep.mubr.f32.mxu0 0.0
        %5006 = vmatmul.mubr.f32.gmra.mrb[0].mxu0 %v4036
        %v5007 = vpop.f32.mrb[0].mxu0
        %v5008 = vadd.f32 0.0, %v5007
        %v5009 = vpop.f32.mrb[0].mxu0
        %5010 = vmatprep.mubr.f32.mxu0 0.0
        %5011 = vmatmul.mubr.f32.gmra.mrb[0].mxu0 %v4039
        %v5012 = vpop.f32.mrb[0].mxu0
        %v5013 = vadd.f32 0.0, %v5012
        %v5014 = vpop.f32.mrb[0].mxu0
        %5015 = vmatprep.mubr.f32.mxu0 0.0
        %5016 = vmatmul.mubr.f32.gmra.mrb[0].mxu0 %v4042
        %v5017 = vpop.f32.mrb[0].mxu0
        %v5018 = vadd.f32 0.0, %v5017
        %v5019 = vpop.f32.mrb[0].mxu0
        %5020 = vmatprep.mubr.f32.mxu0 0.0
        %5021 = vmatmul.mubr.f32.gmra.mrb[0].mxu0 %v4045
        %v5022 = vpop.f32.mrb[0].mxu0
        %v5023 = vadd.f32 0.0, %v5022
        %v5024 = vpop.f32.mrb[0].mxu0
        %5025 = vmatprep.mubr.f32.mxu0 0.0
        %5026 = vmatmul.mubr.f32.gmra.mrb[0].mxu0 %v4048
        %v5027 = vpop.f32.mrb[0].mxu0
        %v5028 = vadd.f32 0.0, %v5027
        %v5029 = vpop.f32.mrb[0].mxu0
        %5030 = vmatprep.mubr.f32.mxu0 0.0
        %5031 = vmatmul.mubr.f32.gmra.mrb[0].mxu0 %v4051
        %v5032 = vpop.f32.mrb[0].mxu0
        %v5033 = vadd.f32 0.0, %v5032
        %v5034 = vpop.f32.mrb[0].mxu0
        %5035 = vmatprep.mubr.f32.mxu0 0.0
        %5036 = vmatmul.mubr.f32.gmra.mrb[0].mxu0 %v4054
        %v5037 = vpop.f32.mrb[0].mxu0
        %v5038 = vadd.f32 0.0, %v5037
        %v5039 = vpop.f32.mrb[0].mxu0
        %5040 = vmatprep.mubr.f32.mxu0 0.0
        %5041 = vmatmul.mubr.f32.gmra.mrb[0].mxu0 %v4057
        %v5042 = vpop.f32.mrb[0].mxu0
        %v5043 = vadd.f32 0.0, %v5042
        %v5044 = vpop.f32.mrb[0].mxu0
        %5045 = vmatprep.mubr.f32.mxu0 0.0
        %5046 = vmatmul.mubr.f32.gmra.mrb[0].mxu0 %v4060
        %v5047 = vpop.f32.mrb[0].mxu0
        %v5048 = vadd.f32 0.0, %v5047
        %v5049 = vpop.f32.mrb[0].mxu0
        %5050 = vmatprep.mubr.f32.mxu0 0.0
        %5051 = vmatmul.mubr.f32.gmra.mrb[0].mxu0 %v4063
        %v5052 = vpop.f32.mrb[0].mxu0
        %v5053 = vadd.f32 0.0, %v5052
        %v5054 = vpop.f32.mrb[0].mxu0
        %5055 = vmatprep.mubr.f32.mxu0 0.0
        %5056 = vmatmul.mubr.f32.gmra.mrb[0].mxu0 %v4066
        %v5057 = vpop.f32.mrb[0].mxu0
        %v5058 = vadd.f32 0.0, %v5057
        %v5059 = vpop.f32.mrb[0].mxu0
        %5060 = vmatprep.mubr.f32.mxu0 0.0
        %5061 = vmatmul.mubr.f32.gmra.mrb[0].mxu0 %v4404
        %v5062 = vpop.f32.mrb[0].mxu0
        %v5063 = vadd.f32 0.0, %v5062
        %v5064 = vpop.f32.mrb[0].mxu0
        %5065 = vmatprep.mubr.f32.mxu0 0.0
        %5066 = vmatmul.mubr.f32.gmra.mrb[0].mxu0 %v4404
        %v5067 = vpop.f32.mrb[0].mxu0
        %v5068 = vadd.f32 0.0, %v5067
        %v5069 = vpop.f32.mrb[0].mxu0
        %5070 = vmatprep.mubr.f32.mxu0 0.0
        %5071 = vmatmul.mubr.f32.gmra.mrb[0].mxu0 %v4404
        %v5072 = vpop.f32.mrb[0].mxu0
        %v5073 = vadd.f32 0.0, %v5072
        %v5074 = vpop.f32.mrb[0].mxu0
        %5075 = vdwg.mxu0
        %v5076 = vadd.f32 %v4473, %v4808
        %v5077 = vadd.f32 %v4478, %v4813
        %v5078 = vadd.f32 %v4483, %v4818
        %v5079 = vadd.f32 %v4488, %v4823
        %v5080 = vadd.f32 %v4493, %v4828
        %v5081 = vadd.f32 %v4498, %v4833
        %v5082 = vadd.f32 %v4503, %v4838
        %v5083 = vadd.f32 %v4508, %v4843
        %v5084 = vadd.f32 %v4513, %v4848
        %v5085 = vadd.f32 %v4518, %v4853
        %v5086 = vadd.f32 %v4523, %v4858
        %v5087 = vadd.f32 %v4528, %v4863
        %v5088 = vadd.f32 %v4533, %v4868
        %v5089 = vadd.f32 %v4538, %v4873
        %v5090 = vadd.f32 %v4543, %v4878
        %v5091 = vadd.f32 %v4548, %v4883
        %v5092 = vadd.f32 %v4553, %v4888
        %v5093 = vadd.f32 %v4558, %v4893
        %v5094 = vadd.f32 %v4563, %v4898
        %v5095 = vadd.f32 %v4568, %v4903
        %v5096 = vadd.f32 %v4573, %v4908
        %v5097 = vadd.f32 %v4578, %v4913
        %v5098 = vadd.f32 %v4583, %v4918
        %v5099 = vadd.f32 %v4588, %v4923
        %v5100 = vadd.f32 %v4593, %v4928
        %v5101 = vadd.f32 %v4598, %v4933
        %v5102 = vadd.f32 %v4603, %v4938
        %v5103 = vadd.f32 %v4608, %v4943
        %v5104 = vadd.f32 %v4613, %v4948
        %v5105 = vadd.f32 %v4618, %v4953
        %v5106 = vadd.f32 %v4623, %v4958
        %v5107 = vadd.f32 %v4628, %v4963
        %v5108 = vadd.f32 %v4633, %v4968
        %v5109 = vadd.f32 %v4638, %v4973
        %v5110 = vadd.f32 %v4643, %v4978
        %v5111 = vadd.f32 %v4648, %v4983
        %v5112 = vadd.f32 %v4653, %v4988
        %v5113 = vadd.f32 %v4658, %v4993
        %v5114 = vadd.f32 %v4663, %v4998
        %v5115 = vadd.f32 %v4668, %v5003
        %v5116 = vadd.f32 %v4673, %v5008
        %v5117 = vadd.f32 %v4678, %v5013
        %v5118 = vadd.f32 %v4683, %v5018
        %v5119 = vadd.f32 %v4688, %v5023
        %v5120 = vadd.f32 %v4693, %v5028
        %v5121 = vadd.f32 %v4698, %v5033
        %v5122 = vadd.f32 %v4703, %v5038
        %v5123 = vadd.f32 %v4708, %v5043
        %v5124 = vadd.f32 %v4713, %v5048
        %v5125 = vadd.f32 %v4718, %v5053
        %v5126 = vadd.f32 %v4723, %v5058
        %v5127 = vadd.f32 %v4728, %v5063
        %v5128 = vadd.f32 %v4733, %v5068
        %v5129 = vadd.f32 %v4738, %v5073
        %s5130 = scalar_lea.vmem %s4, %s3043
        %v5131 = vld [vmem:[%s5130] sm:$0x1]
        %v5133 = vlaneseq
        %v5134 = vshrl.u32 %v5133, 7
        %v5135 = vsub.s32 0, %v5134
        %v5136 = vrot.slane %v5131, %v5135
        %v5138 = vadd.f32 %v5076, %v5136
        %v5139 = vadd.f32 %v5077, %v5136
        %v5140 = vadd.f32 %v5078, %v5136
        %v5141 = vadd.f32 %v5079, %v5136
        %v5142 = vadd.f32 %v5080, %v5136
        %v5143 = vadd.f32 %v5081, %v5136
        %v5144 = vadd.f32 %v5082, %v5136
        %v5145 = vadd.f32 %v5083, %v5136
        %v5146 = vadd.f32 %v5084, %v5136
        %v5147 = vadd.f32 %v5085, %v5136
        %v5148 = vadd.f32 %v5086, %v5136
        %v5149 = vadd.f32 %v5087, %v5136
        %v5150 = vadd.f32 %v5088, %v5136
        %v5151 = vadd.f32 %v5089, %v5136
        %v5152 = vadd.f32 %v5090, %v5136
        %v5153 = vadd.f32 %v5091, %v5136
        %v5154 = vadd.f32 %v5092, %v5136
        %v5155 = vadd.f32 %v5093, %v5136
        %v5156 = vadd.f32 %v5094, %v5136
        %v5157 = vadd.f32 %v5095, %v5136
        %v5158 = vadd.f32 %v5096, %v5136
        %v5159 = vadd.f32 %v5097, %v5136
        %v5160 = vadd.f32 %v5098, %v5136
        %v5161 = vadd.f32 %v5099, %v5136
        %v5162 = vadd.f32 %v5100, %v5136
        %v5163 = vadd.f32 %v5101, %v5136
        %v5164 = vadd.f32 %v5102, %v5136
        %v5165 = vadd.f32 %v5103, %v5136
        %v5166 = vadd.f32 %v5104, %v5136
        %v5167 = vadd.f32 %v5105, %v5136
        %v5168 = vadd.f32 %v5106, %v5136
        %v5169 = vadd.f32 %v5107, %v5136
        %v5170 = vadd.f32 %v5108, %v5136
        %v5171 = vadd.f32 %v5109, %v5136
        %v5172 = vadd.f32 %v5110, %v5136
        %v5173 = vadd.f32 %v5111, %v5136
        %v5174 = vadd.f32 %v5112, %v5136
        %v5175 = vadd.f32 %v5113, %v5136
        %v5176 = vadd.f32 %v5114, %v5136
        %v5177 = vadd.f32 %v5115, %v5136
        %v5178 = vadd.f32 %v5116, %v5136
        %v5179 = vadd.f32 %v5117, %v5136
        %v5180 = vadd.f32 %v5118, %v5136
        %v5181 = vadd.f32 %v5119, %v5136
        %v5182 = vadd.f32 %v5120, %v5136
        %v5183 = vadd.f32 %v5121, %v5136
        %v5184 = vadd.f32 %v5122, %v5136
        %v5185 = vadd.f32 %v5123, %v5136
        %v5186 = vadd.f32 %v5124, %v5136
        %v5187 = vadd.f32 %v5125, %v5136
        %v5188 = vadd.f32 %v5126, %v5136
        %v5189 = vadd.f32 %v5127, %v5136
        %v5190 = vadd.f32 %v5128, %v5136
        %v5191 = vadd.f32 %v5129, %v5136
        %v5192 = vmax.f32 %v5138, 0.0
        %v5193 = vmax.f32 %v5139, 0.0
        %v5194 = vmax.f32 %v5140, 0.0
        %v5195 = vmax.f32 %v5141, 0.0
        %v5196 = vmax.f32 %v5142, 0.0
        %v5197 = vmax.f32 %v5143, 0.0
        %v5198 = vmax.f32 %v5144, 0.0
        %v5199 = vmax.f32 %v5145, 0.0
        %v5200 = vmax.f32 %v5146, 0.0
        %v5201 = vmax.f32 %v5147, 0.0
        %v5202 = vmax.f32 %v5148, 0.0
        %v5203 = vmax.f32 %v5149, 0.0
        %v5204 = vmax.f32 %v5150, 0.0
        %v5205 = vmax.f32 %v5151, 0.0
        %v5206 = vmax.f32 %v5152, 0.0
        %v5207 = vmax.f32 %v5153, 0.0
        %v5208 = vmax.f32 %v5154, 0.0
        %v5209 = vmax.f32 %v5155, 0.0
        %v5210 = vmax.f32 %v5156, 0.0
        %v5211 = vmax.f32 %v5157, 0.0
        %v5212 = vmax.f32 %v5158, 0.0
        %v5213 = vmax.f32 %v5159, 0.0
        %v5214 = vmax.f32 %v5160, 0.0
        %v5215 = vmax.f32 %v5161, 0.0
        %v5216 = vmax.f32 %v5162, 0.0
        %v5217 = vmax.f32 %v5163, 0.0
        %v5218 = vmax.f32 %v5164, 0.0
        %v5219 = vmax.f32 %v5165, 0.0
        %v5220 = vmax.f32 %v5166, 0.0
        %v5221 = vmax.f32 %v5167, 0.0
        %v5222 = vmax.f32 %v5168, 0.0
        %v5223 = vmax.f32 %v5169, 0.0
        %v5224 = vmax.f32 %v5170, 0.0
        %v5225 = vmax.f32 %v5171, 0.0
        %v5226 = vmax.f32 %v5172, 0.0
        %v5227 = vmax.f32 %v5173, 0.0
        %v5228 = vmax.f32 %v5174, 0.0
        %v5229 = vmax.f32 %v5175, 0.0
        %v5230 = vmax.f32 %v5176, 0.0
        %v5231 = vmax.f32 %v5177, 0.0
        %v5232 = vmax.f32 %v5178, 0.0
        %v5233 = vmax.f32 %v5179, 0.0
        %v5234 = vmax.f32 %v5180, 0.0
        %v5235 = vmax.f32 %v5181, 0.0
        %v5236 = vmax.f32 %v5182, 0.0
        %v5237 = vmax.f32 %v5183, 0.0
        %v5238 = vmax.f32 %v5184, 0.0
        %v5239 = vmax.f32 %v5185, 0.0
        %v5240 = vmax.f32 %v5186, 0.0
        %v5241 = vmax.f32 %v5187, 0.0
        %v5242 = vmax.f32 %v5188, 0.0
        %v5243 = vmax.f32 %v5189, 0.0
        %v5244 = vmax.f32 %v5190, 0.0
        %v5245 = vmax.f32 %v5191, 0.0
        %5247 = vset.pattern.permute.xlu0 0
        %5248 = vperm.xlu0 %5247, %v318
        %v5249 = vpop.permute.xlu0 %5248
        %5252 = vset.pattern.permute.xlu0 0
        %5253 = vperm.xlu0 %5252, %v319
        %v5254 = vpop.permute.xlu0 %5253
        %5257 = vset.pattern.permute.xlu0 0
        %5258 = vperm.xlu0 %5257, %v320
        %v5259 = vpop.permute.xlu0 %5258
        %5262 = vset.pattern.permute.xlu0 0
        %5263 = vperm.xlu0 %5262, %v321
        %v5264 = vpop.permute.xlu0 %5263
        %5267 = vset.pattern.permute.xlu0 0
        %5268 = vperm.xlu0 %5267, %v322
        %v5269 = vpop.permute.xlu0 %5268
        %5272 = vset.pattern.permute.xlu0 0
        %5273 = vperm.xlu0 %5272, %v323
        %v5274 = vpop.permute.xlu0 %5273
        %5277 = vset.pattern.permute.xlu0 0
        %5278 = vperm.xlu0 %5277, %v324
        %v5279 = vpop.permute.xlu0 %5278
        %5282 = vset.pattern.permute.xlu0 0
        %5283 = vperm.xlu0 %5282, %v325
        %v5284 = vpop.permute.xlu0 %5283
        %5287 = vset.pattern.permute.xlu0 0
        %5288 = vperm.xlu0 %5287, %v326
        %v5289 = vpop.permute.xlu0 %5288
        %5292 = vset.pattern.permute.xlu0 0
        %5293 = vperm.xlu0 %5292, %v327
        %v5294 = vpop.permute.xlu0 %5293
        %5297 = vset.pattern.permute.xlu0 0
        %5298 = vperm.xlu0 %5297, %v328
        %v5299 = vpop.permute.xlu0 %5298
        %5302 = vset.pattern.permute.xlu0 0
        %5303 = vperm.xlu0 %5302, %v329
        %v5304 = vpop.permute.xlu0 %5303
        %5307 = vset.pattern.permute.xlu0 0
        %5308 = vperm.xlu0 %5307, %v330
        %v5309 = vpop.permute.xlu0 %5308
        %5312 = vset.pattern.permute.xlu0 0
        %5313 = vperm.xlu0 %5312, %v331
        %v5314 = vpop.permute.xlu0 %5313
        %5317 = vset.pattern.permute.xlu0 0
        %5318 = vperm.xlu0 %5317, %v332
        %v5319 = vpop.permute.xlu0 %5318
        %5322 = vset.pattern.permute.xlu0 0
        %5323 = vperm.xlu0 %5322, %v333
        %v5324 = vpop.permute.xlu0 %5323
        %5327 = vset.pattern.permute.xlu0 0
        %5328 = vperm.xlu0 %5327, %v334
        %v5329 = vpop.permute.xlu0 %5328
        %5332 = vset.pattern.permute.xlu0 0
        %5333 = vperm.xlu0 %5332, %v335
        %v5334 = vpop.permute.xlu0 %5333
        %5337 = vset.pattern.permute.xlu0 0
        %5338 = vperm.xlu0 %5337, %v336
        %v5339 = vpop.permute.xlu0 %5338
        %5342 = vset.pattern.permute.xlu0 0
        %5343 = vperm.xlu0 %5342, %v337
        %v5344 = vpop.permute.xlu0 %5343
        %5347 = vset.pattern.permute.xlu0 0
        %5348 = vperm.xlu0 %5347, %v338
        %v5349 = vpop.permute.xlu0 %5348
        %5352 = vset.pattern.permute.xlu0 0
        %5353 = vperm.xlu0 %5352, %v339
        %v5354 = vpop.permute.xlu0 %5353
        %5357 = vset.pattern.permute.xlu0 0
        %5358 = vperm.xlu0 %5357, %v340
        %v5359 = vpop.permute.xlu0 %5358
        %5362 = vset.pattern.permute.xlu0 0
        %5363 = vperm.xlu0 %5362, %v341
        %v5364 = vpop.permute.xlu0 %5363
        %5367 = vset.pattern.permute.xlu0 0
        %5368 = vperm.xlu0 %5367, %v342
        %v5369 = vpop.permute.xlu0 %5368
        %5372 = vset.pattern.permute.xlu0 0
        %5373 = vperm.xlu0 %5372, %v343
        %v5374 = vpop.permute.xlu0 %5373
        %5377 = vset.pattern.permute.xlu0 0
        %5378 = vperm.xlu0 %5377, %v344
        %v5379 = vpop.permute.xlu0 %5378
        %5382 = vset.pattern.permute.xlu0 0
        %5383 = vperm.xlu0 %5382, %v345
        %v5384 = vpop.permute.xlu0 %5383
        %5387 = vset.pattern.permute.xlu0 0
        %5388 = vperm.xlu0 %5387, %v346
        %v5389 = vpop.permute.xlu0 %5388
        %5392 = vset.pattern.permute.xlu0 0
        %5393 = vperm.xlu0 %5392, %v347
        %v5394 = vpop.permute.xlu0 %5393
        %5397 = vset.pattern.permute.xlu0 0
        %5398 = vperm.xlu0 %5397, %v348
        %v5399 = vpop.permute.xlu0 %5398
        %5402 = vset.pattern.permute.xlu0 0
        %5403 = vperm.xlu0 %5402, %v349
        %v5404 = vpop.permute.xlu0 %5403
        %5407 = vset.pattern.permute.xlu0 0
        %5408 = vperm.xlu0 %5407, %v350
        %v5409 = vpop.permute.xlu0 %5408
        %5412 = vset.pattern.permute.xlu0 0
        %5413 = vperm.xlu0 %5412, %v351
        %v5414 = vpop.permute.xlu0 %5413
        %5417 = vset.pattern.permute.xlu0 0
        %5418 = vperm.xlu0 %5417, %v352
        %v5419 = vpop.permute.xlu0 %5418
        %5422 = vset.pattern.permute.xlu0 0
        %5423 = vperm.xlu0 %5422, %v353
        %v5424 = vpop.permute.xlu0 %5423
        %5427 = vset.pattern.permute.xlu0 0
        %5428 = vperm.xlu0 %5427, %v354
        %v5429 = vpop.permute.xlu0 %5428
        %5432 = vset.pattern.permute.xlu0 0
        %5433 = vperm.xlu0 %5432, %v355
        %v5434 = vpop.permute.xlu0 %5433
        %5437 = vset.pattern.permute.xlu0 0
        %5438 = vperm.xlu0 %5437, %v356
        %v5439 = vpop.permute.xlu0 %5438
        %5442 = vset.pattern.permute.xlu0 0
        %5443 = vperm.xlu0 %5442, %v357
        %v5444 = vpop.permute.xlu0 %5443
        %5447 = vset.pattern.permute.xlu0 0
        %5448 = vperm.xlu0 %5447, %v358
        %v5449 = vpop.permute.xlu0 %5448
        %5452 = vset.pattern.permute.xlu0 0
        %5453 = vperm.xlu0 %5452, %v359
        %v5454 = vpop.permute.xlu0 %5453
        %5457 = vset.pattern.permute.xlu0 0
        %5458 = vperm.xlu0 %5457, %v360
        %v5459 = vpop.permute.xlu0 %5458
        %5462 = vset.pattern.permute.xlu0 0
        %5463 = vperm.xlu0 %5462, %v361
        %v5464 = vpop.permute.xlu0 %5463
        %5467 = vset.pattern.permute.xlu0 0
        %5468 = vperm.xlu0 %5467, %v362
        %v5469 = vpop.permute.xlu0 %5468
        %5472 = vset.pattern.permute.xlu0 0
        %5473 = vperm.xlu0 %5472, %v363
        %v5474 = vpop.permute.xlu0 %5473
        %5477 = vset.pattern.permute.xlu0 0
        %5478 = vperm.xlu0 %5477, %v364
        %v5479 = vpop.permute.xlu0 %5478
        %5482 = vset.pattern.permute.xlu0 0
        %5483 = vperm.xlu0 %5482, %v365
        %v5484 = vpop.permute.xlu0 %5483
        %5487 = vset.pattern.permute.xlu0 0
        %5488 = vperm.xlu0 %5487, %v366
        %v5489 = vpop.permute.xlu0 %5488
        %5492 = vset.pattern.permute.xlu0 0
        %5493 = vperm.xlu0 %5492, %v367
        %v5494 = vpop.permute.xlu0 %5493
        %5497 = vset.pattern.permute.xlu0 0
        %5498 = vperm.xlu0 %5497, %v368
        %v5499 = vpop.permute.xlu0 %5498
        %5502 = vset.pattern.permute.xlu0 0
        %5503 = vperm.xlu0 %5502, %v369
        %v5504 = vpop.permute.xlu0 %5503
        %5507 = vset.pattern.permute.xlu0 0
        %5508 = vperm.xlu0 %5507, %v370
        %v5509 = vpop.permute.xlu0 %5508
        %5512 = vset.pattern.permute.xlu0 0
        %5513 = vperm.xlu0 %5512, %v371
        %v5514 = vpop.permute.xlu0 %5513
        %v5516 = vmul.f32 %v5192, %v5249
        %v5517 = vmul.f32 %v5193, %v5254
        %v5518 = vmul.f32 %v5194, %v5259
        %v5519 = vmul.f32 %v5195, %v5264
        %v5520 = vmul.f32 %v5196, %v5269
        %v5521 = vmul.f32 %v5197, %v5274
        %v5522 = vmul.f32 %v5198, %v5279
        %v5523 = vmul.f32 %v5199, %v5284
        %v5524 = vmul.f32 %v5200, %v5289
        %v5525 = vmul.f32 %v5201, %v5294
        %v5526 = vmul.f32 %v5202, %v5299
        %v5527 = vmul.f32 %v5203, %v5304
        %v5528 = vmul.f32 %v5204, %v5309
        %v5529 = vmul.f32 %v5205, %v5314
        %v5530 = vmul.f32 %v5206, %v5319
        %v5531 = vmul.f32 %v5207, %v5324
        %v5532 = vmul.f32 %v5208, %v5329
        %v5533 = vmul.f32 %v5209, %v5334
        %v5534 = vmul.f32 %v5210, %v5339
        %v5535 = vmul.f32 %v5211, %v5344
        %v5536 = vmul.f32 %v5212, %v5349
        %v5537 = vmul.f32 %v5213, %v5354
        %v5538 = vmul.f32 %v5214, %v5359
        %v5539 = vmul.f32 %v5215, %v5364
        %v5540 = vmul.f32 %v5216, %v5369
        %v5541 = vmul.f32 %v5217, %v5374
        %v5542 = vmul.f32 %v5218, %v5379
        %v5543 = vmul.f32 %v5219, %v5384
        %v5544 = vmul.f32 %v5220, %v5389
        %v5545 = vmul.f32 %v5221, %v5394
        %v5546 = vmul.f32 %v5222, %v5399
        %v5547 = vmul.f32 %v5223, %v5404
        %v5548 = vmul.f32 %v5224, %v5409
        %v5549 = vmul.f32 %v5225, %v5414
        %v5550 = vmul.f32 %v5226, %v5419
        %v5551 = vmul.f32 %v5227, %v5424
        %v5552 = vmul.f32 %v5228, %v5429
        %v5553 = vmul.f32 %v5229, %v5434
        %v5554 = vmul.f32 %v5230, %v5439
        %v5555 = vmul.f32 %v5231, %v5444
        %v5556 = vmul.f32 %v5232, %v5449
        %v5557 = vmul.f32 %v5233, %v5454
        %v5558 = vmul.f32 %v5234, %v5459
        %v5559 = vmul.f32 %v5235, %v5464
        %v5560 = vmul.f32 %v5236, %v5469
        %v5561 = vmul.f32 %v5237, %v5474
        %v5562 = vmul.f32 %v5238, %v5479
        %v5563 = vmul.f32 %v5239, %v5484
        %v5564 = vmul.f32 %v5240, %v5489
        %v5565 = vmul.f32 %v5241, %v5494
        %v5566 = vmul.f32 %v5242, %v5499
        %v5567 = vmul.f32 %v5243, %v5504
        %v5568 = vmul.f32 %v5244, %v5509
        %v5569 = vmul.f32 %v5245, %v5514
        %s5570 = scalar_lea.vmem %s5, %s3099
        %v5571 = vld [vmem:[%s5570] sm:$0xff]
        %v5572 = vld [vmem:[%s5570 + $0x8] sm:$0xff]
        %v5573 = vld [vmem:[%s5570 + $0x10] sm:$0xff]
        %v5574 = vld [vmem:[%s5570 + $0x18] sm:$0xff]
        %v5575 = vld [vmem:[%s5570 + $0x20] sm:$0xff]
        %v5576 = vld [vmem:[%s5570 + $0x28] sm:$0xff]
        %v5577 = vld [vmem:[%s5570 + $0x30] sm:$0xff]
        %v5578 = vld [vmem:[%s5570 + $0x38] sm:$0xff]
        %v5579 = vld [vmem:[%s5570 + $0x40] sm:$0xff]
        %v5580 = vld [vmem:[%s5570 + $0x48] sm:$0xff]
        %v5581 = vld [vmem:[%s5570 + $0x50] sm:$0xff]
        %v5582 = vld [vmem:[%s5570 + $0x58] sm:$0xff]
        %s5583 = scalar_lea.vmem %s5, %s3114
        %v5584 = vld [vmem:[%s5583] sm:$0xff]
        %v5585 = vld [vmem:[%s5583 + $0x8] sm:$0xff]
        %v5586 = vld [vmem:[%s5583 + $0x10] sm:$0xff]
        %v5587 = vld [vmem:[%s5583 + $0x18] sm:$0xff]
        %v5588 = vld [vmem:[%s5583 + $0x20] sm:$0xff]
        %v5589 = vld [vmem:[%s5583 + $0x28] sm:$0xff]
        %v5590 = vld [vmem:[%s5583 + $0x30] sm:$0xff]
        %v5591 = vld [vmem:[%s5583 + $0x38] sm:$0xff]
        %v5592 = vld [vmem:[%s5583 + $0x40] sm:$0xff]
        %v5593 = vld [vmem:[%s5583 + $0x48] sm:$0xff]
        %v5594 = vld [vmem:[%s5583 + $0x50] sm:$0xff]
        %v5595 = vld [vmem:[%s5583 + $0x58] sm:$0xff]
        %s5596 = scalar_lea.vmem %s5, %s3129
        %v5597 = vld [vmem:[%s5596] sm:$0xff]
        %v5598 = vld [vmem:[%s5596 + $0x8] sm:$0xff]
        %v5599 = vld [vmem:[%s5596 + $0x10] sm:$0xff]
        %v5600 = vld [vmem:[%s5596 + $0x18] sm:$0xff]
        %v5601 = vld [vmem:[%s5596 + $0x20] sm:$0xff]
        %v5602 = vld [vmem:[%s5596 + $0x28] sm:$0xff]
        %v5603 = vld [vmem:[%s5596 + $0x30] sm:$0xff]
        %v5604 = vld [vmem:[%s5596 + $0x38] sm:$0xff]
        %v5605 = vld [vmem:[%s5596 + $0x40] sm:$0xff]
        %v5606 = vld [vmem:[%s5596 + $0x48] sm:$0xff]
        %v5607 = vld [vmem:[%s5596 + $0x50] sm:$0xff]
        %v5608 = vld [vmem:[%s5596 + $0x58] sm:$0xff]
        %v5609 = vrot.slane %v5516, 7
        %v5610 = vrot.slane %v5517, 7
        %v5611 = vrot.slane %v5518, 7
        %v5612 = vrot.slane %v5519, 7
        %v5613 = vrot.slane %v5520, 7
        %v5614 = vrot.slane %v5521, 7
        %v5615 = vrot.slane %v5522, 7
        %v5616 = vrot.slane %v5523, 7
        %v5617 = vrot.slane %v5524, 7
        %v5618 = vrot.slane %v5525, 7
        %v5619 = vrot.slane %v5526, 7
        %v5620 = vrot.slane %v5527, 7
        %v5621 = vrot.slane %v5528, 7
        %v5622 = vrot.slane %v5529, 7
        %v5623 = vrot.slane %v5530, 7
        %v5624 = vrot.slane %v5531, 7
        %v5625 = vrot.slane %v5532, 7
        %v5626 = vrot.slane %v5533, 7
        %v5627 = vrot.slane %v5534, 7
        %v5628 = vrot.slane %v5535, 7
        %v5629 = vrot.slane %v5536, 7
        %v5630 = vrot.slane %v5537, 7
        %v5631 = vrot.slane %v5538, 7
        %v5632 = vrot.slane %v5539, 7
        %v5633 = vrot.slane %v5540, 7
        %v5634 = vrot.slane %v5541, 7
        %v5635 = vrot.slane %v5542, 7
        %v5636 = vrot.slane %v5543, 7
        %v5637 = vrot.slane %v5544, 7
        %v5638 = vrot.slane %v5545, 7
        %v5639 = vrot.slane %v5546, 7
        %v5640 = vrot.slane %v5547, 7
        %v5641 = vrot.slane %v5548, 7
        %v5642 = vrot.slane %v5549, 7
        %v5643 = vrot.slane %v5550, 7
        %v5644 = vrot.slane %v5551, 7
        %v5645 = vrot.slane %v5552, 7
        %v5646 = vrot.slane %v5553, 7
        %v5647 = vrot.slane %v5554, 7
        %v5648 = vrot.slane %v5555, 7
        %v5649 = vrot.slane %v5556, 7
        %v5650 = vrot.slane %v5557, 7
        %v5651 = vrot.slane %v5558, 7
        %v5652 = vrot.slane %v5559, 7
        %v5653 = vrot.slane %v5560, 7
        %v5654 = vrot.slane %v5561, 7
        %v5655 = vrot.slane %v5562, 7
        %v5656 = vrot.slane %v5563, 7
        %v5657 = vrot.slane %v5564, 7
        %v5658 = vrot.slane %v5565, 7
        %v5659 = vrot.slane %v5566, 7
        %v5660 = vrot.slane %v5567, 7
        %v5661 = vrot.slane %v5568, 7
        %v5662 = vrot.slane %v5569, 7
        %v5663 = vsel %vm3199, %v5661, %v5662
        %v5664 = vsel %vm3199, %v5660, %v5661
        %v5665 = vsel %vm3199, %v5659, %v5660
        %v5666 = vsel %vm3199, %v5658, %v5659
        %v5667 = vsel %vm3199, %v5657, %v5658
        %v5668 = vsel %vm3199, %v5656, %v5657
        %v5669 = vsel %vm3199, %v5655, %v5656
        %v5670 = vsel %vm3199, %v5654, %v5655
        %v5671 = vsel %vm3199, %v5653, %v5654
        %v5672 = vsel %vm3199, %v5652, %v5653
        %v5673 = vsel %vm3199, %v5651, %v5652
        %v5674 = vsel %vm3199, %v5650, %v5651
        %v5675 = vsel %vm3199, %v5649, %v5650
        %v5676 = vsel %vm3199, %v5648, %v5649
        %v5677 = vsel %vm3199, %v5647, %v5648
        %v5678 = vsel %vm3199, %v5646, %v5647
        %v5679 = vsel %vm3199, %v5645, %v5646
        %v5680 = vsel %vm3199, %v5644, %v5645
        %v5681 = vsel %vm3199, %v5643, %v5644
        %v5682 = vsel %vm3199, %v5642, %v5643
        %v5683 = vsel %vm3199, %v5641, %v5642
        %v5684 = vsel %vm3199, %v5640, %v5641
        %v5685 = vsel %vm3199, %v5639, %v5640
        %v5686 = vsel %vm3199, %v5638, %v5639
        %v5687 = vsel %vm3199, %v5637, %v5638
        %v5688 = vsel %vm3199, %v5636, %v5637
        %v5689 = vsel %vm3199, %v5635, %v5636
        %v5690 = vsel %vm3199, %v5634, %v5635
        %v5691 = vsel %vm3199, %v5633, %v5634
        %v5692 = vsel %vm3199, %v5632, %v5633
        %v5693 = vsel %vm3199, %v5631, %v5632
        %v5694 = vsel %vm3199, %v5630, %v5631
        %v5695 = vsel %vm3199, %v5629, %v5630
        %v5696 = vsel %vm3199, %v5628, %v5629
        %v5697 = vsel %vm3199, %v5627, %v5628
        %v5698 = vsel %vm3199, %v5626, %v5627
        %v5699 = vsel %vm3199, %v5625, %v5626
        %v5700 = vsel %vm3199, %v5624, %v5625
        %v5701 = vsel %vm3199, %v5623, %v5624
        %v5702 = vsel %vm3199, %v5622, %v5623
        %v5703 = vsel %vm3199, %v5621, %v5622
        %v5704 = vsel %vm3199, %v5620, %v5621
        %v5705 = vsel %vm3199, %v5619, %v5620
        %v5706 = vsel %vm3199, %v5618, %v5619
        %v5707 = vsel %vm3199, %v5617, %v5618
        %v5708 = vsel %vm3199, %v5616, %v5617
        %v5709 = vsel %vm3199, %v5615, %v5616
        %v5710 = vsel %vm3199, %v5614, %v5615
        %v5711 = vsel %vm3199, %v5613, %v5614
        %v5712 = vsel %vm3199, %v5612, %v5613
        %v5713 = vsel %vm3199, %v5611, %v5612
        %v5714 = vsel %vm3199, %v5610, %v5611
        %v5715 = vsel %vm3199, %v5609, %v5610
        %v5716 = vsel %vm3199, %v5662, %v5609
        %v5717 = vrot.slane %v5516, 1
        %v5718 = vrot.slane %v5517, 1
        %v5719 = vrot.slane %v5518, 1
        %v5720 = vrot.slane %v5519, 1
        %v5721 = vrot.slane %v5520, 1
        %v5722 = vrot.slane %v5521, 1
        %v5723 = vrot.slane %v5522, 1
        %v5724 = vrot.slane %v5523, 1
        %v5725 = vrot.slane %v5524, 1
        %v5726 = vrot.slane %v5525, 1
        %v5727 = vrot.slane %v5526, 1
        %v5728 = vrot.slane %v5527, 1
        %v5729 = vrot.slane %v5528, 1
        %v5730 = vrot.slane %v5529, 1
        %v5731 = vrot.slane %v5530, 1
        %v5732 = vrot.slane %v5531, 1
        %v5733 = vrot.slane %v5532, 1
        %v5734 = vrot.slane %v5533, 1
        %v5735 = vrot.slane %v5534, 1
        %v5736 = vrot.slane %v5535, 1
        %v5737 = vrot.slane %v5536, 1
        %v5738 = vrot.slane %v5537, 1
        %v5739 = vrot.slane %v5538, 1
        %v5740 = vrot.slane %v5539, 1
        %v5741 = vrot.slane %v5540, 1
        %v5742 = vrot.slane %v5541, 1
        %v5743 = vrot.slane %v5542, 1
        %v5744 = vrot.slane %v5543, 1
        %v5745 = vrot.slane %v5544, 1
        %v5746 = vrot.slane %v5545, 1
        %v5747 = vrot.slane %v5546, 1
        %v5748 = vrot.slane %v5547, 1
        %v5749 = vrot.slane %v5548, 1
        %v5750 = vrot.slane %v5549, 1
        %v5751 = vrot.slane %v5550, 1
        %v5752 = vrot.slane %v5551, 1
        %v5753 = vrot.slane %v5552, 1
        %v5754 = vrot.slane %v5553, 1
        %v5755 = vrot.slane %v5554, 1
        %v5756 = vrot.slane %v5555, 1
        %v5757 = vrot.slane %v5556, 1
        %v5758 = vrot.slane %v5557, 1
        %v5759 = vrot.slane %v5558, 1
        %v5760 = vrot.slane %v5559, 1
        %v5761 = vrot.slane %v5560, 1
        %v5762 = vrot.slane %v5561, 1
        %v5763 = vrot.slane %v5562, 1
        %v5764 = vrot.slane %v5563, 1
        %v5765 = vrot.slane %v5564, 1
        %v5766 = vrot.slane %v5565, 1
        %v5767 = vrot.slane %v5566, 1
        %v5768 = vrot.slane %v5567, 1
        %v5769 = vrot.slane %v5568, 1
        %v5770 = vrot.slane %v5569, 1
        %v5771 = vsel %vm3308, %v5769, %v5770
        %v5772 = vsel %vm3308, %v5768, %v5769
        %v5773 = vsel %vm3308, %v5767, %v5768
        %v5774 = vsel %vm3308, %v5766, %v5767
        %v5775 = vsel %vm3308, %v5765, %v5766
        %v5776 = vsel %vm3308, %v5764, %v5765
        %v5777 = vsel %vm3308, %v5763, %v5764
        %v5778 = vsel %vm3308, %v5762, %v5763
        %v5779 = vsel %vm3308, %v5761, %v5762
        %v5780 = vsel %vm3308, %v5760, %v5761
        %v5781 = vsel %vm3308, %v5759, %v5760
        %v5782 = vsel %vm3308, %v5758, %v5759
        %v5783 = vsel %vm3308, %v5757, %v5758
        %v5784 = vsel %vm3308, %v5756, %v5757
        %v5785 = vsel %vm3308, %v5755, %v5756
        %v5786 = vsel %vm3308, %v5754, %v5755
        %v5787 = vsel %vm3308, %v5753, %v5754
        %v5788 = vsel %vm3308, %v5752, %v5753
        %v5789 = vsel %vm3308, %v5751, %v5752
        %v5790 = vsel %vm3308, %v5750, %v5751
        %v5791 = vsel %vm3308, %v5749, %v5750
        %v5792 = vsel %vm3308, %v5748, %v5749
        %v5793 = vsel %vm3308, %v5747, %v5748
        %v5794 = vsel %vm3308, %v5746, %v5747
        %v5795 = vsel %vm3308, %v5745, %v5746
        %v5796 = vsel %vm3308, %v5744, %v5745
        %v5797 = vsel %vm3308, %v5743, %v5744
        %v5798 = vsel %vm3308, %v5742, %v5743
        %v5799 = vsel %vm3308, %v5741, %v5742
        %v5800 = vsel %vm3308, %v5740, %v5741
        %v5801 = vsel %vm3308, %v5739, %v5740
        %v5802 = vsel %vm3308, %v5738, %v5739
        %v5803 = vsel %vm3308, %v5737, %v5738
        %v5804 = vsel %vm3308, %v5736, %v5737
        %v5805 = vsel %vm3308, %v5735, %v5736
        %v5806 = vsel %vm3308, %v5734, %v5735
        %v5807 = vsel %vm3308, %v5733, %v5734
        %v5808 = vsel %vm3308, %v5732, %v5733
        %v5809 = vsel %vm3308, %v5731, %v5732
        %v5810 = vsel %vm3308, %v5730, %v5731
        %v5811 = vsel %vm3308, %v5729, %v5730
        %v5812 = vsel %vm3308, %v5728, %v5729
        %v5813 = vsel %vm3308, %v5727, %v5728
        %v5814 = vsel %vm3308, %v5726, %v5727
        %v5815 = vsel %vm3308, %v5725, %v5726
        %v5816 = vsel %vm3308, %v5724, %v5725
        %v5817 = vsel %vm3308, %v5723, %v5724
        %v5818 = vsel %vm3308, %v5722, %v5723
        %v5819 = vsel %vm3308, %v5721, %v5722
        %v5820 = vsel %vm3308, %v5720, %v5721
        %v5821 = vsel %vm3308, %v5719, %v5720
        %v5822 = vsel %vm3308, %v5718, %v5719
        %v5823 = vsel %vm3308, %v5717, %v5718
        %v5824 = vsel %vm3308, %v5770, %v5717
        %5879 = vrot.lane.b32.xlu0 %v5516, 32
        %v5880 = vpop.permute.xlu0 %5879
        %5881 = vrot.lane.b32.xlu0 %v5517, 32
        %v5882 = vpop.permute.xlu0 %5881
        %5883 = vrot.lane.b32.xlu0 %v5518, 32
        %v5884 = vpop.permute.xlu0 %5883
        %5885 = vrot.lane.b32.xlu0 %v5519, 32
        %v5886 = vpop.permute.xlu0 %5885
        %5887 = vrot.lane.b32.xlu0 %v5520, 32
        %v5888 = vpop.permute.xlu0 %5887
        %5889 = vrot.lane.b32.xlu0 %v5521, 32
        %v5890 = vpop.permute.xlu0 %5889
        %5891 = vrot.lane.b32.xlu0 %v5522, 32
        %v5892 = vpop.permute.xlu0 %5891
        %5893 = vrot.lane.b32.xlu0 %v5523, 32
        %v5894 = vpop.permute.xlu0 %5893
        %5895 = vrot.lane.b32.xlu0 %v5524, 32
        %v5896 = vpop.permute.xlu0 %5895
        %5897 = vrot.lane.b32.xlu0 %v5525, 32
        %v5898 = vpop.permute.xlu0 %5897
        %5899 = vrot.lane.b32.xlu0 %v5526, 32
        %v5900 = vpop.permute.xlu0 %5899
        %5901 = vrot.lane.b32.xlu0 %v5527, 32
        %v5902 = vpop.permute.xlu0 %5901
        %5903 = vrot.lane.b32.xlu0 %v5528, 32
        %v5904 = vpop.permute.xlu0 %5903
        %5905 = vrot.lane.b32.xlu0 %v5529, 32
        %v5906 = vpop.permute.xlu0 %5905
        %5907 = vrot.lane.b32.xlu0 %v5530, 32
        %v5908 = vpop.permute.xlu0 %5907
        %5909 = vrot.lane.b32.xlu0 %v5531, 32
        %v5910 = vpop.permute.xlu0 %5909
        %5911 = vrot.lane.b32.xlu0 %v5532, 32
        %v5912 = vpop.permute.xlu0 %5911
        %5913 = vrot.lane.b32.xlu0 %v5533, 32
        %v5914 = vpop.permute.xlu0 %5913
        %5915 = vrot.lane.b32.xlu0 %v5534, 32
        %v5916 = vpop.permute.xlu0 %5915
        %5917 = vrot.lane.b32.xlu0 %v5535, 32
        %v5918 = vpop.permute.xlu0 %5917
        %5919 = vrot.lane.b32.xlu0 %v5536, 32
        %v5920 = vpop.permute.xlu0 %5919
        %5921 = vrot.lane.b32.xlu0 %v5537, 32
        %v5922 = vpop.permute.xlu0 %5921
        %5923 = vrot.lane.b32.xlu0 %v5538, 32
        %v5924 = vpop.permute.xlu0 %5923
        %5925 = vrot.lane.b32.xlu0 %v5539, 32
        %v5926 = vpop.permute.xlu0 %5925
        %5927 = vrot.lane.b32.xlu0 %v5540, 32
        %v5928 = vpop.permute.xlu0 %5927
        %5929 = vrot.lane.b32.xlu0 %v5541, 32
        %v5930 = vpop.permute.xlu0 %5929
        %5931 = vrot.lane.b32.xlu0 %v5542, 32
        %v5932 = vpop.permute.xlu0 %5931
        %5933 = vrot.lane.b32.xlu0 %v5543, 32
        %v5934 = vpop.permute.xlu0 %5933
        %5935 = vrot.lane.b32.xlu0 %v5544, 32
        %v5936 = vpop.permute.xlu0 %5935
        %5937 = vrot.lane.b32.xlu0 %v5545, 32
        %v5938 = vpop.permute.xlu0 %5937
        %5939 = vrot.lane.b32.xlu0 %v5546, 32
        %v5940 = vpop.permute.xlu0 %5939
        %5941 = vrot.lane.b32.xlu0 %v5547, 32
        %v5942 = vpop.permute.xlu0 %5941
        %5943 = vrot.lane.b32.xlu0 %v5548, 32
        %v5944 = vpop.permute.xlu0 %5943
        %5945 = vrot.lane.b32.xlu0 %v5549, 32
        %v5946 = vpop.permute.xlu0 %5945
        %5947 = vrot.lane.b32.xlu0 %v5550, 32
        %v5948 = vpop.permute.xlu0 %5947
        %5949 = vrot.lane.b32.xlu0 %v5551, 32
        %v5950 = vpop.permute.xlu0 %5949
        %5951 = vrot.lane.b32.xlu0 %v5552, 32
        %v5952 = vpop.permute.xlu0 %5951
        %5953 = vrot.lane.b32.xlu0 %v5553, 32
        %v5954 = vpop.permute.xlu0 %5953
        %5955 = vrot.lane.b32.xlu0 %v5554, 32
        %v5956 = vpop.permute.xlu0 %5955
        %5957 = vrot.lane.b32.xlu0 %v5555, 32
        %v5958 = vpop.permute.xlu0 %5957
        %5959 = vrot.lane.b32.xlu0 %v5556, 32
        %v5960 = vpop.permute.xlu0 %5959
        %5961 = vrot.lane.b32.xlu0 %v5557, 32
        %v5962 = vpop.permute.xlu0 %5961
        %5963 = vrot.lane.b32.xlu0 %v5558, 32
        %v5964 = vpop.permute.xlu0 %5963
        %5965 = vrot.lane.b32.xlu0 %v5559, 32
        %v5966 = vpop.permute.xlu0 %5965
        %5967 = vrot.lane.b32.xlu0 %v5560, 32
        %v5968 = vpop.permute.xlu0 %5967
        %5969 = vrot.lane.b32.xlu0 %v5561, 32
        %v5970 = vpop.permute.xlu0 %5969
        %5971 = vrot.lane.b32.xlu0 %v5562, 32
        %v5972 = vpop.permute.xlu0 %5971
        %5973 = vrot.lane.b32.xlu0 %v5563, 32
        %v5974 = vpop.permute.xlu0 %5973
        %5975 = vrot.lane.b32.xlu0 %v5564, 32
        %v5976 = vpop.permute.xlu0 %5975
        %5977 = vrot.lane.b32.xlu0 %v5565, 32
        %v5978 = vpop.permute.xlu0 %5977
        %5979 = vrot.lane.b32.xlu0 %v5566, 32
        %v5980 = vpop.permute.xlu0 %5979
        %5981 = vrot.lane.b32.xlu0 %v5567, 32
        %v5982 = vpop.permute.xlu0 %5981
        %5983 = vrot.lane.b32.xlu0 %v5568, 32
        %v5984 = vpop.permute.xlu0 %5983
        %5985 = vrot.lane.b32.xlu0 %v5569, 32
        %v5986 = vpop.permute.xlu0 %5985
        %6095 = vrot.lane.b32.xlu0 %v5823, 64
        %v6096 = vpop.permute.xlu0 %6095
        %6097 = vrot.lane.b32.xlu0 %v5822, 64
        %v6098 = vpop.permute.xlu0 %6097
        %6099 = vrot.lane.b32.xlu0 %v5821, 64
        %v6100 = vpop.permute.xlu0 %6099
        %6101 = vrot.lane.b32.xlu0 %v5820, 64
        %v6102 = vpop.permute.xlu0 %6101
        %6103 = vrot.lane.b32.xlu0 %v5819, 64
        %v6104 = vpop.permute.xlu0 %6103
        %6105 = vrot.lane.b32.xlu0 %v5818, 64
        %v6106 = vpop.permute.xlu0 %6105
        %6107 = vrot.lane.b32.xlu0 %v5817, 64
        %v6108 = vpop.permute.xlu0 %6107
        %6109 = vrot.lane.b32.xlu0 %v5816, 64
        %v6110 = vpop.permute.xlu0 %6109
        %6111 = vrot.lane.b32.xlu0 %v5815, 64
        %v6112 = vpop.permute.xlu0 %6111
        %6113 = vrot.lane.b32.xlu0 %v5814, 64
        %v6114 = vpop.permute.xlu0 %6113
        %6115 = vrot.lane.b32.xlu0 %v5813, 64
        %v6116 = vpop.permute.xlu0 %6115
        %6117 = vrot.lane.b32.xlu0 %v5812, 64
        %v6118 = vpop.permute.xlu0 %6117
        %6119 = vrot.lane.b32.xlu0 %v5811, 64
        %v6120 = vpop.permute.xlu0 %6119
        %6121 = vrot.lane.b32.xlu0 %v5810, 64
        %v6122 = vpop.permute.xlu0 %6121
        %6123 = vrot.lane.b32.xlu0 %v5809, 64
        %v6124 = vpop.permute.xlu0 %6123
        %6125 = vrot.lane.b32.xlu0 %v5808, 64
        %v6126 = vpop.permute.xlu0 %6125
        %6127 = vrot.lane.b32.xlu0 %v5807, 64
        %v6128 = vpop.permute.xlu0 %6127
        %6129 = vrot.lane.b32.xlu0 %v5806, 64
        %v6130 = vpop.permute.xlu0 %6129
        %6131 = vrot.lane.b32.xlu0 %v5805, 64
        %v6132 = vpop.permute.xlu0 %6131
        %6133 = vrot.lane.b32.xlu0 %v5804, 64
        %v6134 = vpop.permute.xlu0 %6133
        %6135 = vrot.lane.b32.xlu0 %v5803, 64
        %v6136 = vpop.permute.xlu0 %6135
        %6137 = vrot.lane.b32.xlu0 %v5802, 64
        %v6138 = vpop.permute.xlu0 %6137
        %6139 = vrot.lane.b32.xlu0 %v5801, 64
        %v6140 = vpop.permute.xlu0 %6139
        %6141 = vrot.lane.b32.xlu0 %v5800, 64
        %v6142 = vpop.permute.xlu0 %6141
        %6143 = vrot.lane.b32.xlu0 %v5799, 64
        %v6144 = vpop.permute.xlu0 %6143
        %6145 = vrot.lane.b32.xlu0 %v5798, 64
        %v6146 = vpop.permute.xlu0 %6145
        %6147 = vrot.lane.b32.xlu0 %v5797, 64
        %v6148 = vpop.permute.xlu0 %6147
        %6149 = vrot.lane.b32.xlu0 %v5796, 64
        %v6150 = vpop.permute.xlu0 %6149
        %6151 = vrot.lane.b32.xlu0 %v5795, 64
        %v6152 = vpop.permute.xlu0 %6151
        %6153 = vrot.lane.b32.xlu0 %v5794, 64
        %v6154 = vpop.permute.xlu0 %6153
        %6155 = vrot.lane.b32.xlu0 %v5793, 64
        %v6156 = vpop.permute.xlu0 %6155
        %6157 = vrot.lane.b32.xlu0 %v5792, 64
        %v6158 = vpop.permute.xlu0 %6157
        %6159 = vrot.lane.b32.xlu0 %v5791, 64
        %v6160 = vpop.permute.xlu0 %6159
        %6161 = vrot.lane.b32.xlu0 %v5790, 64
        %v6162 = vpop.permute.xlu0 %6161
        %6163 = vrot.lane.b32.xlu0 %v5789, 64
        %v6164 = vpop.permute.xlu0 %6163
        %6165 = vrot.lane.b32.xlu0 %v5788, 64
        %v6166 = vpop.permute.xlu0 %6165
        %6167 = vrot.lane.b32.xlu0 %v5787, 64
        %v6168 = vpop.permute.xlu0 %6167
        %6169 = vrot.lane.b32.xlu0 %v5786, 64
        %v6170 = vpop.permute.xlu0 %6169
        %6171 = vrot.lane.b32.xlu0 %v5785, 64
        %v6172 = vpop.permute.xlu0 %6171
        %6173 = vrot.lane.b32.xlu0 %v5784, 64
        %v6174 = vpop.permute.xlu0 %6173
        %6175 = vrot.lane.b32.xlu0 %v5783, 64
        %v6176 = vpop.permute.xlu0 %6175
        %6177 = vrot.lane.b32.xlu0 %v5782, 64
        %v6178 = vpop.permute.xlu0 %6177
        %6179 = vrot.lane.b32.xlu0 %v5781, 64
        %v6180 = vpop.permute.xlu0 %6179
        %6181 = vrot.lane.b32.xlu0 %v5780, 64
        %v6182 = vpop.permute.xlu0 %6181
        %6183 = vrot.lane.b32.xlu0 %v5779, 64
        %v6184 = vpop.permute.xlu0 %6183
        %6185 = vrot.lane.b32.xlu0 %v5778, 64
        %v6186 = vpop.permute.xlu0 %6185
        %6187 = vrot.lane.b32.xlu0 %v5777, 64
        %v6188 = vpop.permute.xlu0 %6187
        %6189 = vrot.lane.b32.xlu0 %v5776, 64
        %v6190 = vpop.permute.xlu0 %6189
        %6191 = vrot.lane.b32.xlu0 %v5775, 64
        %v6192 = vpop.permute.xlu0 %6191
        %6193 = vrot.lane.b32.xlu0 %v5774, 64
        %v6194 = vpop.permute.xlu0 %6193
        %6195 = vrot.lane.b32.xlu0 %v5773, 64
        %v6196 = vpop.permute.xlu0 %6195
        %6197 = vrot.lane.b32.xlu0 %v5772, 64
        %v6198 = vpop.permute.xlu0 %6197
        %6199 = vrot.lane.b32.xlu0 %v5771, 64
        %v6200 = vpop.permute.xlu0 %6199
        %6201 = vrot.lane.b32.xlu0 %v5824, 64
        %v6202 = vpop.permute.xlu0 %6201
        %v6257 = vsel %vm3795, %v5716, %v5880
        %v6258 = vsel %vm3795, %v5715, %v5882
        %v6259 = vsel %vm3795, %v5714, %v5884
        %v6260 = vsel %vm3795, %v5713, %v5886
        %v6261 = vsel %vm3795, %v5712, %v5888
        %v6262 = vsel %vm3795, %v5711, %v5890
        %v6263 = vsel %vm3795, %v5710, %v5892
        %v6264 = vsel %vm3795, %v5709, %v5894
        %v6265 = vsel %vm3795, %v5708, %v5896
        %v6266 = vsel %vm3795, %v5707, %v5898
        %v6267 = vsel %vm3795, %v5706, %v5900
        %v6268 = vsel %vm3795, %v5705, %v5902
        %v6269 = vsel %vm3795, %v5704, %v5904
        %v6270 = vsel %vm3795, %v5703, %v5906
        %v6271 = vsel %vm3795, %v5702, %v5908
        %v6272 = vsel %vm3795, %v5701, %v5910
        %v6273 = vsel %vm3795, %v5700, %v5912
        %v6274 = vsel %vm3795, %v5699, %v5914
        %v6275 = vsel %vm3795, %v5698, %v5916
        %v6276 = vsel %vm3795, %v5697, %v5918
        %v6277 = vsel %vm3795, %v5696, %v5920
        %v6278 = vsel %vm3795, %v5695, %v5922
        %v6279 = vsel %vm3795, %v5694, %v5924
        %v6280 = vsel %vm3795, %v5693, %v5926
        %v6281 = vsel %vm3795, %v5692, %v5928
        %v6282 = vsel %vm3795, %v5691, %v5930
        %v6283 = vsel %vm3795, %v5690, %v5932
        %v6284 = vsel %vm3795, %v5689, %v5934
        %v6285 = vsel %vm3795, %v5688, %v5936
        %v6286 = vsel %vm3795, %v5687, %v5938
        %v6287 = vsel %vm3795, %v5686, %v5940
        %v6288 = vsel %vm3795, %v5685, %v5942
        %v6289 = vsel %vm3795, %v5684, %v5944
        %v6290 = vsel %vm3795, %v5683, %v5946
        %v6291 = vsel %vm3795, %v5682, %v5948
        %v6292 = vsel %vm3795, %v5681, %v5950
        %v6293 = vsel %vm3795, %v5680, %v5952
        %v6294 = vsel %vm3795, %v5679, %v5954
        %v6295 = vsel %vm3795, %v5678, %v5956
        %v6296 = vsel %vm3795, %v5677, %v5958
        %v6297 = vsel %vm3795, %v5676, %v5960
        %v6298 = vsel %vm3795, %v5675, %v5962
        %v6299 = vsel %vm3795, %v5674, %v5964
        %v6300 = vsel %vm3795, %v5673, %v5966
        %v6301 = vsel %vm3795, %v5672, %v5968
        %v6302 = vsel %vm3795, %v5671, %v5970
        %v6303 = vsel %vm3795, %v5670, %v5972
        %v6304 = vsel %vm3795, %v5669, %v5974
        %v6305 = vsel %vm3795, %v5668, %v5976
        %v6306 = vsel %vm3795, %v5667, %v5978
        %v6307 = vsel %vm3795, %v5666, %v5980
        %v6308 = vsel %vm3795, %v5665, %v5982
        %v6309 = vsel %vm3795, %v5664, %v5984
        %v6310 = vsel %vm3795, %v5663, %v5986
        %v6311 = vsel %vm3850, %v6257, %v6096
        %v6312 = vsel %vm3850, %v6258, %v6098
        %v6313 = vsel %vm3850, %v6259, %v6100
        %v6314 = vsel %vm3850, %v6260, %v6102
        %v6315 = vsel %vm3850, %v6261, %v6104
        %v6316 = vsel %vm3850, %v6262, %v6106
        %v6317 = vsel %vm3850, %v6263, %v6108
        %v6318 = vsel %vm3850, %v6264, %v6110
        %v6319 = vsel %vm3850, %v6265, %v6112
        %v6320 = vsel %vm3850, %v6266, %v6114
        %v6321 = vsel %vm3850, %v6267, %v6116
        %v6322 = vsel %vm3850, %v6268, %v6118
        %v6323 = vsel %vm3850, %v6269, %v6120
        %v6324 = vsel %vm3850, %v6270, %v6122
        %v6325 = vsel %vm3850, %v6271, %v6124
        %v6326 = vsel %vm3850, %v6272, %v6126
        %v6327 = vsel %vm3850, %v6273, %v6128
        %v6328 = vsel %vm3850, %v6274, %v6130
        %v6329 = vsel %vm3850, %v6275, %v6132
        %v6330 = vsel %vm3850, %v6276, %v6134
        %v6331 = vsel %vm3850, %v6277, %v6136
        %v6332 = vsel %vm3850, %v6278, %v6138
        %v6333 = vsel %vm3850, %v6279, %v6140
        %v6334 = vsel %vm3850, %v6280, %v6142
        %v6335 = vsel %vm3850, %v6281, %v6144
        %v6336 = vsel %vm3850, %v6282, %v6146
        %v6337 = vsel %vm3850, %v6283, %v6148
        %v6338 = vsel %vm3850, %v6284, %v6150
        %v6339 = vsel %vm3850, %v6285, %v6152
        %v6340 = vsel %vm3850, %v6286, %v6154
        %v6341 = vsel %vm3850, %v6287, %v6156
        %v6342 = vsel %vm3850, %v6288, %v6158
        %v6343 = vsel %vm3850, %v6289, %v6160
        %v6344 = vsel %vm3850, %v6290, %v6162
        %v6345 = vsel %vm3850, %v6291, %v6164
        %v6346 = vsel %vm3850, %v6292, %v6166
        %v6347 = vsel %vm3850, %v6293, %v6168
        %v6348 = vsel %vm3850, %v6294, %v6170
        %v6349 = vsel %vm3850, %v6295, %v6172
        %v6350 = vsel %vm3850, %v6296, %v6174
        %v6351 = vsel %vm3850, %v6297, %v6176
        %v6352 = vsel %vm3850, %v6298, %v6178
        %v6353 = vsel %vm3850, %v6299, %v6180
        %v6354 = vsel %vm3850, %v6300, %v6182
        %v6355 = vsel %vm3850, %v6301, %v6184
        %v6356 = vsel %vm3850, %v6302, %v6186
        %v6357 = vsel %vm3850, %v6303, %v6188
        %v6358 = vsel %vm3850, %v6304, %v6190
        %v6359 = vsel %vm3850, %v6305, %v6192
        %v6360 = vsel %vm3850, %v6306, %v6194
        %v6361 = vsel %vm3850, %v6307, %v6196
        %v6362 = vsel %vm3850, %v6308, %v6198
        %v6363 = vsel %vm3850, %v6309, %v6200
        %v6364 = vsel %vm3850, %v6310, %v6202
        %v6366 = vsel %vm3905, %v6311, 0
        %v6369 = vsel %vm3905, %v6312, 0
        %v6372 = vsel %vm3905, %v6313, 0
        %v6375 = vsel %vm3905, %v6314, 0
        %v6378 = vsel %vm3905, %v6315, 0
        %v6381 = vsel %vm3905, %v6316, 0
        %v6384 = vsel %vm3905, %v6317, 0
        %v6387 = vsel %vm3905, %v6318, 0
        %v6390 = vsel %vm3905, %v6319, 0
        %v6393 = vsel %vm3905, %v6320, 0
        %v6396 = vsel %vm3905, %v6321, 0
        %v6399 = vsel %vm3905, %v6322, 0
        %v6402 = vsel %vm3905, %v6323, 0
        %v6405 = vsel %vm3905, %v6324, 0
        %v6408 = vsel %vm3905, %v6325, 0
        %v6411 = vsel %vm3905, %v6326, 0
        %v6414 = vsel %vm3905, %v6327, 0
        %v6417 = vsel %vm3905, %v6328, 0
        %v6420 = vsel %vm3905, %v6329, 0
        %v6423 = vsel %vm3905, %v6330, 0
        %v6426 = vsel %vm3905, %v6331, 0
        %v6429 = vsel %vm3905, %v6332, 0
        %v6432 = vsel %vm3905, %v6333, 0
        %v6435 = vsel %vm3905, %v6334, 0
        %v6438 = vsel %vm3905, %v6335, 0
        %v6441 = vsel %vm3905, %v6336, 0
        %v6444 = vsel %vm3905, %v6337, 0
        %v6447 = vsel %vm3905, %v6338, 0
        %v6450 = vsel %vm3905, %v6339, 0
        %v6453 = vsel %vm3905, %v6340, 0
        %v6456 = vsel %vm3905, %v6341, 0
        %v6459 = vsel %vm3905, %v6342, 0
        %v6462 = vsel %vm3905, %v6343, 0
        %v6465 = vsel %vm3905, %v6344, 0
        %v6468 = vsel %vm3905, %v6345, 0
        %v6471 = vsel %vm3905, %v6346, 0
        %v6474 = vsel %vm3905, %v6347, 0
        %v6477 = vsel %vm3905, %v6348, 0
        %v6480 = vsel %vm3905, %v6349, 0
        %v6483 = vsel %vm3905, %v6350, 0
        %v6486 = vsel %vm3905, %v6351, 0
        %v6489 = vsel %vm3905, %v6352, 0
        %v6492 = vsel %vm3905, %v6353, 0
        %v6495 = vsel %vm3905, %v6354, 0
        %v6498 = vsel %vm3905, %v6355, 0
        %v6501 = vsel %vm3905, %v6356, 0
        %v6504 = vsel %vm3905, %v6357, 0
        %v6507 = vsel %vm3905, %v6358, 0
        %v6510 = vsel %vm3905, %v6359, 0
        %v6513 = vsel %vm3905, %v6360, 0
        %v6516 = vsel %vm3905, %v6361, 0
        %v6519 = vsel %vm3905, %v6362, 0
        %v6522 = vsel %vm3905, %v6363, 0
        %v6525 = vsel %vm3905, %v6364, 0
        %6527 = vmatprep.subr.mxu0 0.0
        %6528 = vmatpush1.msra.mxu0 %v5584
        %6529 = vmatprep.subr.mxu0 0.0
        %6530 = vmatpush1.msra.mxu0 %v5585
        %6531 = vmatprep.subr.mxu0 0.0
        %6532 = vmatpush1.msra.mxu0 %v5586
        %6533 = vmatprep.subr.mxu0 0.0
        %6534 = vmatpush1.msra.mxu0 %v5587
        %6535 = vmatprep.subr.mxu0 0.0
        %6536 = vmatpush1.msra.mxu0 %v5588
        %6537 = vmatprep.subr.mxu0 0.0
        %6538 = vmatpush1.msra.mxu0 %v5589
        %6539 = vmatprep.subr.mxu0 0.0
        %6540 = vmatpush1.msra.mxu0 %v5590
        %6541 = vmatprep.subr.mxu0 0.0
        %6542 = vmatpush1.msra.mxu0 %v5591
        %6543 = vmatprep.subr.mxu0 0.0
        %6544 = vmatpush1.msra.mxu0 %v5592
        %6545 = vmatprep.subr.mxu0 0.0
        %6546 = vmatpush1.msra.mxu0 %v5593
        %6547 = vmatprep.subr.mxu0 0.0
        %6548 = vmatpush1.msra.mxu0 %v5594
        %6549 = vmatprep.subr.mxu0 0.0
        %6550 = vmatpush1.msra.mxu0 %v5595
        %6551 = vmatprep.subr.mxu0 0.0
        %6552 = vmatpush1.msra.mxu0 0.0
        %6553 = vmatprep.subr.mxu0 0.0
        %6554 = vmatpush1.msra.mxu0 0.0
        %6555 = vmatprep.subr.mxu0 0.0
        %6556 = vmatpush1.msra.mxu0 0.0
        %6557 = vmatprep.subr.mxu0 0.0
        %6558 = vmatpush1.msra.mxu0 0.0
        %6559 = vmatprep.subr.mxu0 0.0
        %6560 = vmatpush1.msra.mxu0 0.0
        %6561 = vmatprep.subr.mxu0 0.0
        %6562 = vmatpush1.msra.mxu0 0.0
        %6563 = vmatprep.subr.mxu0 0.0
        %6564 = vmatpush1.msra.mxu0 0.0
        %6565 = vmatprep.subr.mxu0 0.0
        %6566 = vmatpush1.msra.mxu0 0.0
        %6567 = vmatprep.subr.mxu0 0.0
        %6568 = vmatpush1.msra.mxu0 0.0
        %6569 = vmatprep.subr.mxu0 0.0
        %6570 = vmatpush1.msra.mxu0 0.0
        %6571 = vmatprep.subr.mxu0 0.0
        %6572 = vmatpush1.msra.mxu0 0.0
        %6573 = vmatprep.subr.mxu0 0.0
        %6574 = vmatpush1.msra.mxu0 0.0
        %6575 = vmatprep.subr.mxu0 0.0
        %6576 = vmatpush1.msra.mxu0 0.0
        %6577 = vmatprep.subr.mxu0 0.0
        %6578 = vmatpush1.msra.mxu0 0.0
        %6579 = vmatprep.subr.mxu0 0.0
        %6580 = vmatpush1.msra.mxu0 0.0
        %6581 = vmatprep.subr.mxu0 0.0
        %6582 = vmatpush1.msra.mxu0 0.0
        %6583 = vmatprep.subr.mxu0 0.0
        %6584 = vmatpush1.msra.mxu0 0.0
        %6585 = vmatprep.subr.mxu0 0.0
        %6586 = vmatpush1.msra.mxu0 0.0
        %6587 = vmatprep.subr.mxu0 0.0
        %6588 = vmatpush1.msra.mxu0 0.0
        %6589 = vmatprep.subr.mxu0 0.0
        %6590 = vmatpush1.msra.mxu0 0.0
        %6591 = vmatprep.mubr.f32.mxu0 0.0
        %6592 = vmatmul.mubr.f32.gmra.mrb[0].mxu0 %v6366
        %v6593 = vpop.f32.mrb[0].mxu0
        %v6594 = vadd.f32 0.0, %v6593
        %v6595 = vpop.f32.mrb[0].mxu0
        %6596 = vmatprep.mubr.f32.mxu0 0.0
        %6597 = vmatmul.mubr.f32.gmra.mrb[0].mxu0 %v6369
        %v6598 = vpop.f32.mrb[0].mxu0
        %v6599 = vadd.f32 0.0, %v6598
        %v6600 = vpop.f32.mrb[0].mxu0
        %6601 = vmatprep.mubr.f32.mxu0 0.0
        %6602 = vmatmul.mubr.f32.gmra.mrb[0].mxu0 %v6372
        %v6603 = vpop.f32.mrb[0].mxu0
        %v6604 = vadd.f32 0.0, %v6603
        %v6605 = vpop.f32.mrb[0].mxu0
        %6606 = vmatprep.mubr.f32.mxu0 0.0
        %6607 = vmatmul.mubr.f32.gmra.mrb[0].mxu0 %v6375
        %v6608 = vpop.f32.mrb[0].mxu0
        %v6609 = vadd.f32 0.0, %v6608
        %v6610 = vpop.f32.mrb[0].mxu0
        %6611 = vmatprep.mubr.f32.mxu0 0.0
        %6612 = vmatmul.mubr.f32.gmra.mrb[0].mxu0 %v6378
        %v6613 = vpop.f32.mrb[0].mxu0
        %v6614 = vadd.f32 0.0, %v6613
        %v6615 = vpop.f32.mrb[0].mxu0
        %6616 = vmatprep.mubr.f32.mxu0 0.0
        %6617 = vmatmul.mubr.f32.gmra.mrb[0].mxu0 %v6381
        %v6618 = vpop.f32.mrb[0].mxu0
        %v6619 = vadd.f32 0.0, %v6618
        %v6620 = vpop.f32.mrb[0].mxu0
        %6621 = vmatprep.mubr.f32.mxu0 0.0
        %6622 = vmatmul.mubr.f32.gmra.mrb[0].mxu0 %v6384
        %v6623 = vpop.f32.mrb[0].mxu0
        %v6624 = vadd.f32 0.0, %v6623
        %v6625 = vpop.f32.mrb[0].mxu0
        %6626 = vmatprep.mubr.f32.mxu0 0.0
        %6627 = vmatmul.mubr.f32.gmra.mrb[0].mxu0 %v6387
        %v6628 = vpop.f32.mrb[0].mxu0
        %v6629 = vadd.f32 0.0, %v6628
        %v6630 = vpop.f32.mrb[0].mxu0
        %6631 = vmatprep.mubr.f32.mxu0 0.0
        %6632 = vmatmul.mubr.f32.gmra.mrb[0].mxu0 %v6390
        %v6633 = vpop.f32.mrb[0].mxu0
        %v6634 = vadd.f32 0.0, %v6633
        %v6635 = vpop.f32.mrb[0].mxu0
        %6636 = vmatprep.mubr.f32.mxu0 0.0
        %6637 = vmatmul.mubr.f32.gmra.mrb[0].mxu0 %v6393
        %v6638 = vpop.f32.mrb[0].mxu0
        %v6639 = vadd.f32 0.0, %v6638
        %v6640 = vpop.f32.mrb[0].mxu0
        %6641 = vmatprep.mubr.f32.mxu0 0.0
        %6642 = vmatmul.mubr.f32.gmra.mrb[0].mxu0 %v6396
        %v6643 = vpop.f32.mrb[0].mxu0
        %v6644 = vadd.f32 0.0, %v6643
        %v6645 = vpop.f32.mrb[0].mxu0
        %6646 = vmatprep.mubr.f32.mxu0 0.0
        %6647 = vmatmul.mubr.f32.gmra.mrb[0].mxu0 %v6399
        %v6648 = vpop.f32.mrb[0].mxu0
        %v6649 = vadd.f32 0.0, %v6648
        %v6650 = vpop.f32.mrb[0].mxu0
        %6651 = vmatprep.mubr.f32.mxu0 0.0
        %6652 = vmatmul.mubr.f32.gmra.mrb[0].mxu0 %v6402
        %v6653 = vpop.f32.mrb[0].mxu0
        %v6654 = vadd.f32 0.0, %v6653
        %v6655 = vpop.f32.mrb[0].mxu0
        %6656 = vmatprep.mubr.f32.mxu0 0.0
        %6657 = vmatmul.mubr.f32.gmra.mrb[0].mxu0 %v6405
        %v6658 = vpop.f32.mrb[0].mxu0
        %v6659 = vadd.f32 0.0, %v6658
        %v6660 = vpop.f32.mrb[0].mxu0
        %6661 = vmatprep.mubr.f32.mxu0 0.0
        %6662 = vmatmul.mubr.f32.gmra.mrb[0].mxu0 %v6408
        %v6663 = vpop.f32.mrb[0].mxu0
        %v6664 = vadd.f32 0.0, %v6663
        %v6665 = vpop.f32.mrb[0].mxu0
        %6666 = vmatprep.mubr.f32.mxu0 0.0
        %6667 = vmatmul.mubr.f32.gmra.mrb[0].mxu0 %v6411
        %v6668 = vpop.f32.mrb[0].mxu0
        %v6669 = vadd.f32 0.0, %v6668
        %v6670 = vpop.f32.mrb[0].mxu0
        %6671 = vmatprep.mubr.f32.mxu0 0.0
        %6672 = vmatmul.mubr.f32.gmra.mrb[0].mxu0 %v6414
        %v6673 = vpop.f32.mrb[0].mxu0
        %v6674 = vadd.f32 0.0, %v6673
        %v6675 = vpop.f32.mrb[0].mxu0
        %6676 = vmatprep.mubr.f32.mxu0 0.0
        %6677 = vmatmul.mubr.f32.gmra.mrb[0].mxu0 %v6417
        %v6678 = vpop.f32.mrb[0].mxu0
        %v6679 = vadd.f32 0.0, %v6678
        %v6680 = vpop.f32.mrb[0].mxu0
        %6681 = vmatprep.mubr.f32.mxu0 0.0
        %6682 = vmatmul.mubr.f32.gmra.mrb[0].mxu0 %v6420
        %v6683 = vpop.f32.mrb[0].mxu0
        %v6684 = vadd.f32 0.0, %v6683
        %v6685 = vpop.f32.mrb[0].mxu0
        %6686 = vmatprep.mubr.f32.mxu0 0.0
        %6687 = vmatmul.mubr.f32.gmra.mrb[0].mxu0 %v6423
        %v6688 = vpop.f32.mrb[0].mxu0
        %v6689 = vadd.f32 0.0, %v6688
        %v6690 = vpop.f32.mrb[0].mxu0
        %6691 = vmatprep.mubr.f32.mxu0 0.0
        %6692 = vmatmul.mubr.f32.gmra.mrb[0].mxu0 %v6426
        %v6693 = vpop.f32.mrb[0].mxu0
        %v6694 = vadd.f32 0.0, %v6693
        %v6695 = vpop.f32.mrb[0].mxu0
        %6696 = vmatprep.mubr.f32.mxu0 0.0
        %6697 = vmatmul.mubr.f32.gmra.mrb[0].mxu0 %v6429
        %v6698 = vpop.f32.mrb[0].mxu0
        %v6699 = vadd.f32 0.0, %v6698
        %v6700 = vpop.f32.mrb[0].mxu0
        %6701 = vmatprep.mubr.f32.mxu0 0.0
        %6702 = vmatmul.mubr.f32.gmra.mrb[0].mxu0 %v6432
        %v6703 = vpop.f32.mrb[0].mxu0
        %v6704 = vadd.f32 0.0, %v6703
        %v6705 = vpop.f32.mrb[0].mxu0
        %6706 = vmatprep.mubr.f32.mxu0 0.0
        %6707 = vmatmul.mubr.f32.gmra.mrb[0].mxu0 %v6435
        %v6708 = vpop.f32.mrb[0].mxu0
        %v6709 = vadd.f32 0.0, %v6708
        %v6710 = vpop.f32.mrb[0].mxu0
        %6711 = vmatprep.mubr.f32.mxu0 0.0
        %6712 = vmatmul.mubr.f32.gmra.mrb[0].mxu0 %v6438
        %v6713 = vpop.f32.mrb[0].mxu0
        %v6714 = vadd.f32 0.0, %v6713
        %v6715 = vpop.f32.mrb[0].mxu0
        %6716 = vmatprep.mubr.f32.mxu0 0.0
        %6717 = vmatmul.mubr.f32.gmra.mrb[0].mxu0 %v6441
        %v6718 = vpop.f32.mrb[0].mxu0
        %v6719 = vadd.f32 0.0, %v6718
        %v6720 = vpop.f32.mrb[0].mxu0
        %6721 = vmatprep.mubr.f32.mxu0 0.0
        %6722 = vmatmul.mubr.f32.gmra.mrb[0].mxu0 %v6444
        %v6723 = vpop.f32.mrb[0].mxu0
        %v6724 = vadd.f32 0.0, %v6723
        %v6725 = vpop.f32.mrb[0].mxu0
        %6726 = vmatprep.mubr.f32.mxu0 0.0
        %6727 = vmatmul.mubr.f32.gmra.mrb[0].mxu0 %v6447
        %v6728 = vpop.f32.mrb[0].mxu0
        %v6729 = vadd.f32 0.0, %v6728
        %v6730 = vpop.f32.mrb[0].mxu0
        %6731 = vmatprep.mubr.f32.mxu0 0.0
        %6732 = vmatmul.mubr.f32.gmra.mrb[0].mxu0 %v6450
        %v6733 = vpop.f32.mrb[0].mxu0
        %v6734 = vadd.f32 0.0, %v6733
        %v6735 = vpop.f32.mrb[0].mxu0
        %6736 = vmatprep.mubr.f32.mxu0 0.0
        %6737 = vmatmul.mubr.f32.gmra.mrb[0].mxu0 %v6453
        %v6738 = vpop.f32.mrb[0].mxu0
        %v6739 = vadd.f32 0.0, %v6738
        %v6740 = vpop.f32.mrb[0].mxu0
        %6741 = vmatprep.mubr.f32.mxu0 0.0
        %6742 = vmatmul.mubr.f32.gmra.mrb[0].mxu0 %v6456
        %v6743 = vpop.f32.mrb[0].mxu0
        %v6744 = vadd.f32 0.0, %v6743
        %v6745 = vpop.f32.mrb[0].mxu0
        %6746 = vmatprep.mubr.f32.mxu0 0.0
        %6747 = vmatmul.mubr.f32.gmra.mrb[0].mxu0 %v6459
        %v6748 = vpop.f32.mrb[0].mxu0
        %v6749 = vadd.f32 0.0, %v6748
        %v6750 = vpop.f32.mrb[0].mxu0
        %6751 = vmatprep.mubr.f32.mxu0 0.0
        %6752 = vmatmul.mubr.f32.gmra.mrb[0].mxu0 %v6462
        %v6753 = vpop.f32.mrb[0].mxu0
        %v6754 = vadd.f32 0.0, %v6753
        %v6755 = vpop.f32.mrb[0].mxu0
        %6756 = vmatprep.mubr.f32.mxu0 0.0
        %6757 = vmatmul.mubr.f32.gmra.mrb[0].mxu0 %v6465
        %v6758 = vpop.f32.mrb[0].mxu0
        %v6759 = vadd.f32 0.0, %v6758
        %v6760 = vpop.f32.mrb[0].mxu0
        %6761 = vmatprep.mubr.f32.mxu0 0.0
        %6762 = vmatmul.mubr.f32.gmra.mrb[0].mxu0 %v6468
        %v6763 = vpop.f32.mrb[0].mxu0
        %v6764 = vadd.f32 0.0, %v6763
        %v6765 = vpop.f32.mrb[0].mxu0
        %6766 = vmatprep.mubr.f32.mxu0 0.0
        %6767 = vmatmul.mubr.f32.gmra.mrb[0].mxu0 %v6471
        %v6768 = vpop.f32.mrb[0].mxu0
        %v6769 = vadd.f32 0.0, %v6768
        %v6770 = vpop.f32.mrb[0].mxu0
        %6771 = vmatprep.mubr.f32.mxu0 0.0
        %6772 = vmatmul.mubr.f32.gmra.mrb[0].mxu0 %v6474
        %v6773 = vpop.f32.mrb[0].mxu0
        %v6774 = vadd.f32 0.0, %v6773
        %v6775 = vpop.f32.mrb[0].mxu0
        %6776 = vmatprep.mubr.f32.mxu0 0.0
        %6777 = vmatmul.mubr.f32.gmra.mrb[0].mxu0 %v6477
        %v6778 = vpop.f32.mrb[0].mxu0
        %v6779 = vadd.f32 0.0, %v6778
        %v6780 = vpop.f32.mrb[0].mxu0
        %6781 = vmatprep.mubr.f32.mxu0 0.0
        %6782 = vmatmul.mubr.f32.gmra.mrb[0].mxu0 %v6480
        %v6783 = vpop.f32.mrb[0].mxu0
        %v6784 = vadd.f32 0.0, %v6783
        %v6785 = vpop.f32.mrb[0].mxu0
        %6786 = vmatprep.mubr.f32.mxu0 0.0
        %6787 = vmatmul.mubr.f32.gmra.mrb[0].mxu0 %v6483
        %v6788 = vpop.f32.mrb[0].mxu0
        %v6789 = vadd.f32 0.0, %v6788
        %v6790 = vpop.f32.mrb[0].mxu0
        %6791 = vmatprep.mubr.f32.mxu0 0.0
        %6792 = vmatmul.mubr.f32.gmra.mrb[0].mxu0 %v6486
        %v6793 = vpop.f32.mrb[0].mxu0
        %v6794 = vadd.f32 0.0, %v6793
        %v6795 = vpop.f32.mrb[0].mxu0
        %6796 = vmatprep.mubr.f32.mxu0 0.0
        %6797 = vmatmul.mubr.f32.gmra.mrb[0].mxu0 %v6489
        %v6798 = vpop.f32.mrb[0].mxu0
        %v6799 = vadd.f32 0.0, %v6798
        %v6800 = vpop.f32.mrb[0].mxu0
        %6801 = vmatprep.mubr.f32.mxu0 0.0
        %6802 = vmatmul.mubr.f32.gmra.mrb[0].mxu0 %v6492
        %v6803 = vpop.f32.mrb[0].mxu0
        %v6804 = vadd.f32 0.0, %v6803
        %v6805 = vpop.f32.mrb[0].mxu0
        %6806 = vmatprep.mubr.f32.mxu0 0.0
        %6807 = vmatmul.mubr.f32.gmra.mrb[0].mxu0 %v6495
        %v6808 = vpop.f32.mrb[0].mxu0
        %v6809 = vadd.f32 0.0, %v6808
        %v6810 = vpop.f32.mrb[0].mxu0
        %6811 = vmatprep.mubr.f32.mxu0 0.0
        %6812 = vmatmul.mubr.f32.gmra.mrb[0].mxu0 %v6498
        %v6813 = vpop.f32.mrb[0].mxu0
        %v6814 = vadd.f32 0.0, %v6813
        %v6815 = vpop.f32.mrb[0].mxu0
        %6816 = vmatprep.mubr.f32.mxu0 0.0
        %6817 = vmatmul.mubr.f32.gmra.mrb[0].mxu0 %v6501
        %v6818 = vpop.f32.mrb[0].mxu0
        %v6819 = vadd.f32 0.0, %v6818
        %v6820 = vpop.f32.mrb[0].mxu0
        %6821 = vmatprep.mubr.f32.mxu0 0.0
        %6822 = vmatmul.mubr.f32.gmra.mrb[0].mxu0 %v6504
        %v6823 = vpop.f32.mrb[0].mxu0
        %v6824 = vadd.f32 0.0, %v6823
        %v6825 = vpop.f32.mrb[0].mxu0
        %6826 = vmatprep.mubr.f32.mxu0 0.0
        %6827 = vmatmul.mubr.f32.gmra.mrb[0].mxu0 %v6507
        %v6828 = vpop.f32.mrb[0].mxu0
        %v6829 = vadd.f32 0.0, %v6828
        %v6830 = vpop.f32.mrb[0].mxu0
        %6831 = vmatprep.mubr.f32.mxu0 0.0
        %6832 = vmatmul.mubr.f32.gmra.mrb[0].mxu0 %v6510
        %v6833 = vpop.f32.mrb[0].mxu0
        %v6834 = vadd.f32 0.0, %v6833
        %v6835 = vpop.f32.mrb[0].mxu0
        %6836 = vmatprep.mubr.f32.mxu0 0.0
        %6837 = vmatmul.mubr.f32.gmra.mrb[0].mxu0 %v6513
        %v6838 = vpop.f32.mrb[0].mxu0
        %v6839 = vadd.f32 0.0, %v6838
        %v6840 = vpop.f32.mrb[0].mxu0
        %6841 = vmatprep.mubr.f32.mxu0 0.0
        %6842 = vmatmul.mubr.f32.gmra.mrb[0].mxu0 %v6516
        %v6843 = vpop.f32.mrb[0].mxu0
        %v6844 = vadd.f32 0.0, %v6843
        %v6845 = vpop.f32.mrb[0].mxu0
        %6846 = vmatprep.mubr.f32.mxu0 0.0
        %6847 = vmatmul.mubr.f32.gmra.mrb[0].mxu0 %v6519
        %v6848 = vpop.f32.mrb[0].mxu0
        %v6849 = vadd.f32 0.0, %v6848
        %v6850 = vpop.f32.mrb[0].mxu0
        %6851 = vmatprep.mubr.f32.mxu0 0.0
        %6852 = vmatmul.mubr.f32.gmra.mrb[0].mxu0 %v6522
        %v6853 = vpop.f32.mrb[0].mxu0
        %v6854 = vadd.f32 0.0, %v6853
        %v6855 = vpop.f32.mrb[0].mxu0
        %6856 = vmatprep.mubr.f32.mxu0 0.0
        %6857 = vmatmul.mubr.f32.gmra.mrb[0].mxu0 %v6525
        %v6858 = vpop.f32.mrb[0].mxu0
        %v6859 = vadd.f32 0.0, %v6858
        %v6860 = vpop.f32.mrb[0].mxu0
        %6861 = vdwg.mxu0
        %6862 = vmatprep.subr.mxu0 0.0
        %6863 = vmatpush1.msra.mxu0 %v5571
        %6864 = vmatprep.subr.mxu0 0.0
        %6865 = vmatpush1.msra.mxu0 %v5572
        %6866 = vmatprep.subr.mxu0 0.0
        %6867 = vmatpush1.msra.mxu0 %v5573
        %6868 = vmatprep.subr.mxu0 0.0
        %6869 = vmatpush1.msra.mxu0 %v5574
        %6870 = vmatprep.subr.mxu0 0.0
        %6871 = vmatpush1.msra.mxu0 %v5575
        %6872 = vmatprep.subr.mxu0 0.0
        %6873 = vmatpush1.msra.mxu0 %v5576
        %6874 = vmatprep.subr.mxu0 0.0
        %6875 = vmatpush1.msra.mxu0 %v5577
        %6876 = vmatprep.subr.mxu0 0.0
        %6877 = vmatpush1.msra.mxu0 %v5578
        %6878 = vmatprep.subr.mxu0 0.0
        %6879 = vmatpush1.msra.mxu0 %v5579
        %6880 = vmatprep.subr.mxu0 0.0
        %6881 = vmatpush1.msra.mxu0 %v5580
        %6882 = vmatprep.subr.mxu0 0.0
        %6883 = vmatpush1.msra.mxu0 %v5581
        %6884 = vmatprep.subr.mxu0 0.0
        %6885 = vmatpush1.msra.mxu0 %v5582
        %6886 = vmatprep.subr.mxu0 0.0
        %6887 = vmatpush1.msra.mxu0 0.0
        %6888 = vmatprep.subr.mxu0 0.0
        %6889 = vmatpush1.msra.mxu0 0.0
        %6890 = vmatprep.subr.mxu0 0.0
        %6891 = vmatpush1.msra.mxu0 0.0
        %6892 = vmatprep.subr.mxu0 0.0
        %6893 = vmatpush1.msra.mxu0 0.0
        %6894 = vmatprep.subr.mxu0 0.0
        %6895 = vmatpush1.msra.mxu0 0.0
        %6896 = vmatprep.subr.mxu0 0.0
        %6897 = vmatpush1.msra.mxu0 0.0
        %6898 = vmatprep.subr.mxu0 0.0
        %6899 = vmatpush1.msra.mxu0 0.0
        %6900 = vmatprep.subr.mxu0 0.0
        %6901 = vmatpush1.msra.mxu0 0.0
        %6902 = vmatprep.subr.mxu0 0.0
        %6903 = vmatpush1.msra.mxu0 0.0
        %6904 = vmatprep.subr.mxu0 0.0
        %6905 = vmatpush1.msra.mxu0 0.0
        %6906 = vmatprep.subr.mxu0 0.0
        %6907 = vmatpush1.msra.mxu0 0.0
        %6908 = vmatprep.subr.mxu0 0.0
        %6909 = vmatpush1.msra.mxu0 0.0
        %6910 = vmatprep.subr.mxu0 0.0
        %6911 = vmatpush1.msra.mxu0 0.0
        %6912 = vmatprep.subr.mxu0 0.0
        %6913 = vmatpush1.msra.mxu0 0.0
        %6914 = vmatprep.subr.mxu0 0.0
        %6915 = vmatpush1.msra.mxu0 0.0
        %6916 = vmatprep.subr.mxu0 0.0
        %6917 = vmatpush1.msra.mxu0 0.0
        %6918 = vmatprep.subr.mxu0 0.0
        %6919 = vmatpush1.msra.mxu0 0.0
        %6920 = vmatprep.subr.mxu0 0.0
        %6921 = vmatpush1.msra.mxu0 0.0
        %6922 = vmatprep.subr.mxu0 0.0
        %6923 = vmatpush1.msra.mxu0 0.0
        %6924 = vmatprep.subr.mxu0 0.0
        %6925 = vmatpush1.msra.mxu0 0.0
        %6926 = vmatprep.mubr.f32.mxu0 0.0
        %6927 = vmatmul.mubr.f32.gmra.mrb[0].mxu0 %v4404
        %v6928 = vpop.f32.mrb[0].mxu0
        %v6929 = vadd.f32 %v6594, %v6928
        %v6930 = vpop.f32.mrb[0].mxu0
        %6931 = vmatprep.mubr.f32.mxu0 0.0
        %6932 = vmatmul.mubr.f32.gmra.mrb[0].mxu0 %v4404
        %v6933 = vpop.f32.mrb[0].mxu0
        %v6934 = vadd.f32 %v6599, %v6933
        %v6935 = vpop.f32.mrb[0].mxu0
        %6936 = vmatprep.mubr.f32.mxu0 0.0
        %6937 = vmatmul.mubr.f32.gmra.mrb[0].mxu0 %v4404
        %v6938 = vpop.f32.mrb[0].mxu0
        %v6939 = vadd.f32 %v6604, %v6938
        %v6940 = vpop.f32.mrb[0].mxu0
        %6941 = vmatprep.mubr.f32.mxu0 0.0
        %6942 = vmatmul.mubr.f32.gmra.mrb[0].mxu0 %v6366
        %v6943 = vpop.f32.mrb[0].mxu0
        %v6944 = vadd.f32 %v6609, %v6943
        %v6945 = vpop.f32.mrb[0].mxu0
        %6946 = vmatprep.mubr.f32.mxu0 0.0
        %6947 = vmatmul.mubr.f32.gmra.mrb[0].mxu0 %v6369
        %v6948 = vpop.f32.mrb[0].mxu0
        %v6949 = vadd.f32 %v6614, %v6948
        %v6950 = vpop.f32.mrb[0].mxu0
        %6951 = vmatprep.mubr.f32.mxu0 0.0
        %6952 = vmatmul.mubr.f32.gmra.mrb[0].mxu0 %v6372
        %v6953 = vpop.f32.mrb[0].mxu0
        %v6954 = vadd.f32 %v6619, %v6953
        %v6955 = vpop.f32.mrb[0].mxu0
        %6956 = vmatprep.mubr.f32.mxu0 0.0
        %6957 = vmatmul.mubr.f32.gmra.mrb[0].mxu0 %v6375
        %v6958 = vpop.f32.mrb[0].mxu0
        %v6959 = vadd.f32 %v6624, %v6958
        %v6960 = vpop.f32.mrb[0].mxu0
        %6961 = vmatprep.mubr.f32.mxu0 0.0
        %6962 = vmatmul.mubr.f32.gmra.mrb[0].mxu0 %v6378
        %v6963 = vpop.f32.mrb[0].mxu0
        %v6964 = vadd.f32 %v6629, %v6963
        %v6965 = vpop.f32.mrb[0].mxu0
        %6966 = vmatprep.mubr.f32.mxu0 0.0
        %6967 = vmatmul.mubr.f32.gmra.mrb[0].mxu0 %v6381
        %v6968 = vpop.f32.mrb[0].mxu0
        %v6969 = vadd.f32 %v6634, %v6968
        %v6970 = vpop.f32.mrb[0].mxu0
        %6971 = vmatprep.mubr.f32.mxu0 0.0
        %6972 = vmatmul.mubr.f32.gmra.mrb[0].mxu0 %v6384
        %v6973 = vpop.f32.mrb[0].mxu0
        %v6974 = vadd.f32 %v6639, %v6973
        %v6975 = vpop.f32.mrb[0].mxu0
        %6976 = vmatprep.mubr.f32.mxu0 0.0
        %6977 = vmatmul.mubr.f32.gmra.mrb[0].mxu0 %v6387
        %v6978 = vpop.f32.mrb[0].mxu0
        %v6979 = vadd.f32 %v6644, %v6978
        %v6980 = vpop.f32.mrb[0].mxu0
        %6981 = vmatprep.mubr.f32.mxu0 0.0
        %6982 = vmatmul.mubr.f32.gmra.mrb[0].mxu0 %v6390
        %v6983 = vpop.f32.mrb[0].mxu0
        %v6984 = vadd.f32 %v6649, %v6983
        %v6985 = vpop.f32.mrb[0].mxu0
        %6986 = vmatprep.mubr.f32.mxu0 0.0
        %6987 = vmatmul.mubr.f32.gmra.mrb[0].mxu0 %v6393
        %v6988 = vpop.f32.mrb[0].mxu0
        %v6989 = vadd.f32 %v6654, %v6988
        %v6990 = vpop.f32.mrb[0].mxu0
        %6991 = vmatprep.mubr.f32.mxu0 0.0
        %6992 = vmatmul.mubr.f32.gmra.mrb[0].mxu0 %v6396
        %v6993 = vpop.f32.mrb[0].mxu0
        %v6994 = vadd.f32 %v6659, %v6993
        %v6995 = vpop.f32.mrb[0].mxu0
        %6996 = vmatprep.mubr.f32.mxu0 0.0
        %6997 = vmatmul.mubr.f32.gmra.mrb[0].mxu0 %v6399
        %v6998 = vpop.f32.mrb[0].mxu0
        %v6999 = vadd.f32 %v6664, %v6998
        %v7000 = vpop.f32.mrb[0].mxu0
        %7001 = vmatprep.mubr.f32.mxu0 0.0
        %7002 = vmatmul.mubr.f32.gmra.mrb[0].mxu0 %v6402
        %v7003 = vpop.f32.mrb[0].mxu0
        %v7004 = vadd.f32 %v6669, %v7003
        %v7005 = vpop.f32.mrb[0].mxu0
        %7006 = vmatprep.mubr.f32.mxu0 0.0
        %7007 = vmatmul.mubr.f32.gmra.mrb[0].mxu0 %v6405
        %v7008 = vpop.f32.mrb[0].mxu0
        %v7009 = vadd.f32 %v6674, %v7008
        %v7010 = vpop.f32.mrb[0].mxu0
        %7011 = vmatprep.mubr.f32.mxu0 0.0
        %7012 = vmatmul.mubr.f32.gmra.mrb[0].mxu0 %v6408
        %v7013 = vpop.f32.mrb[0].mxu0
        %v7014 = vadd.f32 %v6679, %v7013
        %v7015 = vpop.f32.mrb[0].mxu0
        %7016 = vmatprep.mubr.f32.mxu0 0.0
        %7017 = vmatmul.mubr.f32.gmra.mrb[0].mxu0 %v6411
        %v7018 = vpop.f32.mrb[0].mxu0
        %v7019 = vadd.f32 %v6684, %v7018
        %v7020 = vpop.f32.mrb[0].mxu0
        %7021 = vmatprep.mubr.f32.mxu0 0.0
        %7022 = vmatmul.mubr.f32.gmra.mrb[0].mxu0 %v6414
        %v7023 = vpop.f32.mrb[0].mxu0
        %v7024 = vadd.f32 %v6689, %v7023
        %v7025 = vpop.f32.mrb[0].mxu0
        %7026 = vmatprep.mubr.f32.mxu0 0.0
        %7027 = vmatmul.mubr.f32.gmra.mrb[0].mxu0 %v6417
        %v7028 = vpop.f32.mrb[0].mxu0
        %v7029 = vadd.f32 %v6694, %v7028
        %v7030 = vpop.f32.mrb[0].mxu0
        %7031 = vmatprep.mubr.f32.mxu0 0.0
        %7032 = vmatmul.mubr.f32.gmra.mrb[0].mxu0 %v6420
        %v7033 = vpop.f32.mrb[0].mxu0
        %v7034 = vadd.f32 %v6699, %v7033
        %v7035 = vpop.f32.mrb[0].mxu0
        %7036 = vmatprep.mubr.f32.mxu0 0.0
        %7037 = vmatmul.mubr.f32.gmra.mrb[0].mxu0 %v6423
        %v7038 = vpop.f32.mrb[0].mxu0
        %v7039 = vadd.f32 %v6704, %v7038
        %v7040 = vpop.f32.mrb[0].mxu0
        %7041 = vmatprep.mubr.f32.mxu0 0.0
        %7042 = vmatmul.mubr.f32.gmra.mrb[0].mxu0 %v6426
        %v7043 = vpop.f32.mrb[0].mxu0
        %v7044 = vadd.f32 %v6709, %v7043
        %v7045 = vpop.f32.mrb[0].mxu0
        %7046 = vmatprep.mubr.f32.mxu0 0.0
        %7047 = vmatmul.mubr.f32.gmra.mrb[0].mxu0 %v6429
        %v7048 = vpop.f32.mrb[0].mxu0
        %v7049 = vadd.f32 %v6714, %v7048
        %v7050 = vpop.f32.mrb[0].mxu0
        %7051 = vmatprep.mubr.f32.mxu0 0.0
        %7052 = vmatmul.mubr.f32.gmra.mrb[0].mxu0 %v6432
        %v7053 = vpop.f32.mrb[0].mxu0
        %v7054 = vadd.f32 %v6719, %v7053
        %v7055 = vpop.f32.mrb[0].mxu0
        %7056 = vmatprep.mubr.f32.mxu0 0.0
        %7057 = vmatmul.mubr.f32.gmra.mrb[0].mxu0 %v6435
        %v7058 = vpop.f32.mrb[0].mxu0
        %v7059 = vadd.f32 %v6724, %v7058
        %v7060 = vpop.f32.mrb[0].mxu0
        %7061 = vmatprep.mubr.f32.mxu0 0.0
        %7062 = vmatmul.mubr.f32.gmra.mrb[0].mxu0 %v6438
        %v7063 = vpop.f32.mrb[0].mxu0
        %v7064 = vadd.f32 %v6729, %v7063
        %v7065 = vpop.f32.mrb[0].mxu0
        %7066 = vmatprep.mubr.f32.mxu0 0.0
        %7067 = vmatmul.mubr.f32.gmra.mrb[0].mxu0 %v6441
        %v7068 = vpop.f32.mrb[0].mxu0
        %v7069 = vadd.f32 %v6734, %v7068
        %v7070 = vpop.f32.mrb[0].mxu0
        %7071 = vmatprep.mubr.f32.mxu0 0.0
        %7072 = vmatmul.mubr.f32.gmra.mrb[0].mxu0 %v6444
        %v7073 = vpop.f32.mrb[0].mxu0
        %v7074 = vadd.f32 %v6739, %v7073
        %v7075 = vpop.f32.mrb[0].mxu0
        %7076 = vmatprep.mubr.f32.mxu0 0.0
        %7077 = vmatmul.mubr.f32.gmra.mrb[0].mxu0 %v6447
        %v7078 = vpop.f32.mrb[0].mxu0
        %v7079 = vadd.f32 %v6744, %v7078
        %v7080 = vpop.f32.mrb[0].mxu0
        %7081 = vmatprep.mubr.f32.mxu0 0.0
        %7082 = vmatmul.mubr.f32.gmra.mrb[0].mxu0 %v6450
        %v7083 = vpop.f32.mrb[0].mxu0
        %v7084 = vadd.f32 %v6749, %v7083
        %v7085 = vpop.f32.mrb[0].mxu0
        %7086 = vmatprep.mubr.f32.mxu0 0.0
        %7087 = vmatmul.mubr.f32.gmra.mrb[0].mxu0 %v6453
        %v7088 = vpop.f32.mrb[0].mxu0
        %v7089 = vadd.f32 %v6754, %v7088
        %v7090 = vpop.f32.mrb[0].mxu0
        %7091 = vmatprep.mubr.f32.mxu0 0.0
        %7092 = vmatmul.mubr.f32.gmra.mrb[0].mxu0 %v6456
        %v7093 = vpop.f32.mrb[0].mxu0
        %v7094 = vadd.f32 %v6759, %v7093
        %v7095 = vpop.f32.mrb[0].mxu0
        %7096 = vmatprep.mubr.f32.mxu0 0.0
        %7097 = vmatmul.mubr.f32.gmra.mrb[0].mxu0 %v6459
        %v7098 = vpop.f32.mrb[0].mxu0
        %v7099 = vadd.f32 %v6764, %v7098
        %v7100 = vpop.f32.mrb[0].mxu0
        %7101 = vmatprep.mubr.f32.mxu0 0.0
        %7102 = vmatmul.mubr.f32.gmra.mrb[0].mxu0 %v6462
        %v7103 = vpop.f32.mrb[0].mxu0
        %v7104 = vadd.f32 %v6769, %v7103
        %v7105 = vpop.f32.mrb[0].mxu0
        %7106 = vmatprep.mubr.f32.mxu0 0.0
        %7107 = vmatmul.mubr.f32.gmra.mrb[0].mxu0 %v6465
        %v7108 = vpop.f32.mrb[0].mxu0
        %v7109 = vadd.f32 %v6774, %v7108
        %v7110 = vpop.f32.mrb[0].mxu0
        %7111 = vmatprep.mubr.f32.mxu0 0.0
        %7112 = vmatmul.mubr.f32.gmra.mrb[0].mxu0 %v6468
        %v7113 = vpop.f32.mrb[0].mxu0
        %v7114 = vadd.f32 %v6779, %v7113
        %v7115 = vpop.f32.mrb[0].mxu0
        %7116 = vmatprep.mubr.f32.mxu0 0.0
        %7117 = vmatmul.mubr.f32.gmra.mrb[0].mxu0 %v6471
        %v7118 = vpop.f32.mrb[0].mxu0
        %v7119 = vadd.f32 %v6784, %v7118
        %v7120 = vpop.f32.mrb[0].mxu0
        %7121 = vmatprep.mubr.f32.mxu0 0.0
        %7122 = vmatmul.mubr.f32.gmra.mrb[0].mxu0 %v6474
        %v7123 = vpop.f32.mrb[0].mxu0
        %v7124 = vadd.f32 %v6789, %v7123
        %v7125 = vpop.f32.mrb[0].mxu0
        %7126 = vmatprep.mubr.f32.mxu0 0.0
        %7127 = vmatmul.mubr.f32.gmra.mrb[0].mxu0 %v6477
        %v7128 = vpop.f32.mrb[0].mxu0
        %v7129 = vadd.f32 %v6794, %v7128
        %v7130 = vpop.f32.mrb[0].mxu0
        %7131 = vmatprep.mubr.f32.mxu0 0.0
        %7132 = vmatmul.mubr.f32.gmra.mrb[0].mxu0 %v6480
        %v7133 = vpop.f32.mrb[0].mxu0
        %v7134 = vadd.f32 %v6799, %v7133
        %v7135 = vpop.f32.mrb[0].mxu0
        %7136 = vmatprep.mubr.f32.mxu0 0.0
        %7137 = vmatmul.mubr.f32.gmra.mrb[0].mxu0 %v6483
        %v7138 = vpop.f32.mrb[0].mxu0
        %v7139 = vadd.f32 %v6804, %v7138
        %v7140 = vpop.f32.mrb[0].mxu0
        %7141 = vmatprep.mubr.f32.mxu0 0.0
        %7142 = vmatmul.mubr.f32.gmra.mrb[0].mxu0 %v6486
        %v7143 = vpop.f32.mrb[0].mxu0
        %v7144 = vadd.f32 %v6809, %v7143
        %v7145 = vpop.f32.mrb[0].mxu0
        %7146 = vmatprep.mubr.f32.mxu0 0.0
        %7147 = vmatmul.mubr.f32.gmra.mrb[0].mxu0 %v6489
        %v7148 = vpop.f32.mrb[0].mxu0
        %v7149 = vadd.f32 %v6814, %v7148
        %v7150 = vpop.f32.mrb[0].mxu0
        %7151 = vmatprep.mubr.f32.mxu0 0.0
        %7152 = vmatmul.mubr.f32.gmra.mrb[0].mxu0 %v6492
        %v7153 = vpop.f32.mrb[0].mxu0
        %v7154 = vadd.f32 %v6819, %v7153
        %v7155 = vpop.f32.mrb[0].mxu0
        %7156 = vmatprep.mubr.f32.mxu0 0.0
        %7157 = vmatmul.mubr.f32.gmra.mrb[0].mxu0 %v6495
        %v7158 = vpop.f32.mrb[0].mxu0
        %v7159 = vadd.f32 %v6824, %v7158
        %v7160 = vpop.f32.mrb[0].mxu0
        %7161 = vmatprep.mubr.f32.mxu0 0.0
        %7162 = vmatmul.mubr.f32.gmra.mrb[0].mxu0 %v6498
        %v7163 = vpop.f32.mrb[0].mxu0
        %v7164 = vadd.f32 %v6829, %v7163
        %v7165 = vpop.f32.mrb[0].mxu0
        %7166 = vmatprep.mubr.f32.mxu0 0.0
        %7167 = vmatmul.mubr.f32.gmra.mrb[0].mxu0 %v6501
        %v7168 = vpop.f32.mrb[0].mxu0
        %v7169 = vadd.f32 %v6834, %v7168
        %v7170 = vpop.f32.mrb[0].mxu0
        %7171 = vmatprep.mubr.f32.mxu0 0.0
        %7172 = vmatmul.mubr.f32.gmra.mrb[0].mxu0 %v6504
        %v7173 = vpop.f32.mrb[0].mxu0
        %v7174 = vadd.f32 %v6839, %v7173
        %v7175 = vpop.f32.mrb[0].mxu0
        %7176 = vmatprep.mubr.f32.mxu0 0.0
        %7177 = vmatmul.mubr.f32.gmra.mrb[0].mxu0 %v6507
        %v7178 = vpop.f32.mrb[0].mxu0
        %v7179 = vadd.f32 %v6844, %v7178
        %v7180 = vpop.f32.mrb[0].mxu0
        %7181 = vmatprep.mubr.f32.mxu0 0.0
        %7182 = vmatmul.mubr.f32.gmra.mrb[0].mxu0 %v6510
        %v7183 = vpop.f32.mrb[0].mxu0
        %v7184 = vadd.f32 %v6849, %v7183
        %v7185 = vpop.f32.mrb[0].mxu0
        %7186 = vmatprep.mubr.f32.mxu0 0.0
        %7187 = vmatmul.mubr.f32.gmra.mrb[0].mxu0 %v6513
        %v7188 = vpop.f32.mrb[0].mxu0
        %v7189 = vadd.f32 %v6854, %v7188
        %v7190 = vpop.f32.mrb[0].mxu0
        %7191 = vmatprep.mubr.f32.mxu0 0.0
        %7192 = vmatmul.mubr.f32.gmra.mrb[0].mxu0 %v6516
        %v7193 = vpop.f32.mrb[0].mxu0
        %v7194 = vadd.f32 %v6859, %v7193
        %v7195 = vpop.f32.mrb[0].mxu0
        %7196 = vdwg.mxu0
        %7197 = vmatprep.subr.mxu0 0.0
        %7198 = vmatpush1.msra.mxu0 %v5597
        %7199 = vmatprep.subr.mxu0 0.0
        %7200 = vmatpush1.msra.mxu0 %v5598
        %7201 = vmatprep.subr.mxu0 0.0
        %7202 = vmatpush1.msra.mxu0 %v5599
        %7203 = vmatprep.subr.mxu0 0.0
        %7204 = vmatpush1.msra.mxu0 %v5600
        %7205 = vmatprep.subr.mxu0 0.0
        %7206 = vmatpush1.msra.mxu0 %v5601
        %7207 = vmatprep.subr.mxu0 0.0
        %7208 = vmatpush1.msra.mxu0 %v5602
        %7209 = vmatprep.subr.mxu0 0.0
        %7210 = vmatpush1.msra.mxu0 %v5603
        %7211 = vmatprep.subr.mxu0 0.0
        %7212 = vmatpush1.msra.mxu0 %v5604
        %7213 = vmatprep.subr.mxu0 0.0
        %7214 = vmatpush1.msra.mxu0 %v5605
        %7215 = vmatprep.subr.mxu0 0.0
        %7216 = vmatpush1.msra.mxu0 %v5606
        %7217 = vmatprep.subr.mxu0 0.0
        %7218 = vmatpush1.msra.mxu0 %v5607
        %7219 = vmatprep.subr.mxu0 0.0
        %7220 = vmatpush1.msra.mxu0 %v5608
        %7221 = vmatprep.subr.mxu0 0.0
        %7222 = vmatpush1.msra.mxu0 0.0
        %7223 = vmatprep.subr.mxu0 0.0
        %7224 = vmatpush1.msra.mxu0 0.0
        %7225 = vmatprep.subr.mxu0 0.0
        %7226 = vmatpush1.msra.mxu0 0.0
        %7227 = vmatprep.subr.mxu0 0.0
        %7228 = vmatpush1.msra.mxu0 0.0
        %7229 = vmatprep.subr.mxu0 0.0
        %7230 = vmatpush1.msra.mxu0 0.0
        %7231 = vmatprep.subr.mxu0 0.0
        %7232 = vmatpush1.msra.mxu0 0.0
        %7233 = vmatprep.subr.mxu0 0.0
        %7234 = vmatpush1.msra.mxu0 0.0
        %7235 = vmatprep.subr.mxu0 0.0
        %7236 = vmatpush1.msra.mxu0 0.0
        %7237 = vmatprep.subr.mxu0 0.0
        %7238 = vmatpush1.msra.mxu0 0.0
        %7239 = vmatprep.subr.mxu0 0.0
        %7240 = vmatpush1.msra.mxu0 0.0
        %7241 = vmatprep.subr.mxu0 0.0
        %7242 = vmatpush1.msra.mxu0 0.0
        %7243 = vmatprep.subr.mxu0 0.0
        %7244 = vmatpush1.msra.mxu0 0.0
        %7245 = vmatprep.subr.mxu0 0.0
        %7246 = vmatpush1.msra.mxu0 0.0
        %7247 = vmatprep.subr.mxu0 0.0
        %7248 = vmatpush1.msra.mxu0 0.0
        %7249 = vmatprep.subr.mxu0 0.0
        %7250 = vmatpush1.msra.mxu0 0.0
        %7251 = vmatprep.subr.mxu0 0.0
        %7252 = vmatpush1.msra.mxu0 0.0
        %7253 = vmatprep.subr.mxu0 0.0
        %7254 = vmatpush1.msra.mxu0 0.0
        %7255 = vmatprep.subr.mxu0 0.0
        %7256 = vmatpush1.msra.mxu0 0.0
        %7257 = vmatprep.subr.mxu0 0.0
        %7258 = vmatpush1.msra.mxu0 0.0
        %7259 = vmatprep.subr.mxu0 0.0
        %7260 = vmatpush1.msra.mxu0 0.0
        %7261 = vmatprep.mubr.f32.mxu0 0.0
        %7262 = vmatmul.mubr.f32.gmra.mrb[0].mxu0 %v6375
        %v7263 = vpop.f32.mrb[0].mxu0
        %v7264 = vadd.f32 0.0, %v7263
        %v7265 = vpop.f32.mrb[0].mxu0
        %7266 = vmatprep.mubr.f32.mxu0 0.0
        %7267 = vmatmul.mubr.f32.gmra.mrb[0].mxu0 %v6378
        %v7268 = vpop.f32.mrb[0].mxu0
        %v7269 = vadd.f32 0.0, %v7268
        %v7270 = vpop.f32.mrb[0].mxu0
        %7271 = vmatprep.mubr.f32.mxu0 0.0
        %7272 = vmatmul.mubr.f32.gmra.mrb[0].mxu0 %v6381
        %v7273 = vpop.f32.mrb[0].mxu0
        %v7274 = vadd.f32 0.0, %v7273
        %v7275 = vpop.f32.mrb[0].mxu0
        %7276 = vmatprep.mubr.f32.mxu0 0.0
        %7277 = vmatmul.mubr.f32.gmra.mrb[0].mxu0 %v6384
        %v7278 = vpop.f32.mrb[0].mxu0
        %v7279 = vadd.f32 0.0, %v7278
        %v7280 = vpop.f32.mrb[0].mxu0
        %7281 = vmatprep.mubr.f32.mxu0 0.0
        %7282 = vmatmul.mubr.f32.gmra.mrb[0].mxu0 %v6387
        %v7283 = vpop.f32.mrb[0].mxu0
        %v7284 = vadd.f32 0.0, %v7283
        %v7285 = vpop.f32.mrb[0].mxu0
        %7286 = vmatprep.mubr.f32.mxu0 0.0
        %7287 = vmatmul.mubr.f32.gmra.mrb[0].mxu0 %v6390
        %v7288 = vpop.f32.mrb[0].mxu0
        %v7289 = vadd.f32 0.0, %v7288
        %v7290 = vpop.f32.mrb[0].mxu0
        %7291 = vmatprep.mubr.f32.mxu0 0.0
        %7292 = vmatmul.mubr.f32.gmra.mrb[0].mxu0 %v6393
        %v7293 = vpop.f32.mrb[0].mxu0
        %v7294 = vadd.f32 0.0, %v7293
        %v7295 = vpop.f32.mrb[0].mxu0
        %7296 = vmatprep.mubr.f32.mxu0 0.0
        %7297 = vmatmul.mubr.f32.gmra.mrb[0].mxu0 %v6396
        %v7298 = vpop.f32.mrb[0].mxu0
        %v7299 = vadd.f32 0.0, %v7298
        %v7300 = vpop.f32.mrb[0].mxu0
        %7301 = vmatprep.mubr.f32.mxu0 0.0
        %7302 = vmatmul.mubr.f32.gmra.mrb[0].mxu0 %v6399
        %v7303 = vpop.f32.mrb[0].mxu0
        %v7304 = vadd.f32 0.0, %v7303
        %v7305 = vpop.f32.mrb[0].mxu0
        %7306 = vmatprep.mubr.f32.mxu0 0.0
        %7307 = vmatmul.mubr.f32.gmra.mrb[0].mxu0 %v6402
        %v7308 = vpop.f32.mrb[0].mxu0
        %v7309 = vadd.f32 0.0, %v7308
        %v7310 = vpop.f32.mrb[0].mxu0
        %7311 = vmatprep.mubr.f32.mxu0 0.0
        %7312 = vmatmul.mubr.f32.gmra.mrb[0].mxu0 %v6405
        %v7313 = vpop.f32.mrb[0].mxu0
        %v7314 = vadd.f32 0.0, %v7313
        %v7315 = vpop.f32.mrb[0].mxu0
        %7316 = vmatprep.mubr.f32.mxu0 0.0
        %7317 = vmatmul.mubr.f32.gmra.mrb[0].mxu0 %v6408
        %v7318 = vpop.f32.mrb[0].mxu0
        %v7319 = vadd.f32 0.0, %v7318
        %v7320 = vpop.f32.mrb[0].mxu0
        %7321 = vmatprep.mubr.f32.mxu0 0.0
        %7322 = vmatmul.mubr.f32.gmra.mrb[0].mxu0 %v6411
        %v7323 = vpop.f32.mrb[0].mxu0
        %v7324 = vadd.f32 0.0, %v7323
        %v7325 = vpop.f32.mrb[0].mxu0
        %7326 = vmatprep.mubr.f32.mxu0 0.0
        %7327 = vmatmul.mubr.f32.gmra.mrb[0].mxu0 %v6414
        %v7328 = vpop.f32.mrb[0].mxu0
        %v7329 = vadd.f32 0.0, %v7328
        %v7330 = vpop.f32.mrb[0].mxu0
        %7331 = vmatprep.mubr.f32.mxu0 0.0
        %7332 = vmatmul.mubr.f32.gmra.mrb[0].mxu0 %v6417
        %v7333 = vpop.f32.mrb[0].mxu0
        %v7334 = vadd.f32 0.0, %v7333
        %v7335 = vpop.f32.mrb[0].mxu0
        %7336 = vmatprep.mubr.f32.mxu0 0.0
        %7337 = vmatmul.mubr.f32.gmra.mrb[0].mxu0 %v6420
        %v7338 = vpop.f32.mrb[0].mxu0
        %v7339 = vadd.f32 0.0, %v7338
        %v7340 = vpop.f32.mrb[0].mxu0
        %7341 = vmatprep.mubr.f32.mxu0 0.0
        %7342 = vmatmul.mubr.f32.gmra.mrb[0].mxu0 %v6423
        %v7343 = vpop.f32.mrb[0].mxu0
        %v7344 = vadd.f32 0.0, %v7343
        %v7345 = vpop.f32.mrb[0].mxu0
        %7346 = vmatprep.mubr.f32.mxu0 0.0
        %7347 = vmatmul.mubr.f32.gmra.mrb[0].mxu0 %v6426
        %v7348 = vpop.f32.mrb[0].mxu0
        %v7349 = vadd.f32 0.0, %v7348
        %v7350 = vpop.f32.mrb[0].mxu0
        %7351 = vmatprep.mubr.f32.mxu0 0.0
        %7352 = vmatmul.mubr.f32.gmra.mrb[0].mxu0 %v6429
        %v7353 = vpop.f32.mrb[0].mxu0
        %v7354 = vadd.f32 0.0, %v7353
        %v7355 = vpop.f32.mrb[0].mxu0
        %7356 = vmatprep.mubr.f32.mxu0 0.0
        %7357 = vmatmul.mubr.f32.gmra.mrb[0].mxu0 %v6432
        %v7358 = vpop.f32.mrb[0].mxu0
        %v7359 = vadd.f32 0.0, %v7358
        %v7360 = vpop.f32.mrb[0].mxu0
        %7361 = vmatprep.mubr.f32.mxu0 0.0
        %7362 = vmatmul.mubr.f32.gmra.mrb[0].mxu0 %v6435
        %v7363 = vpop.f32.mrb[0].mxu0
        %v7364 = vadd.f32 0.0, %v7363
        %v7365 = vpop.f32.mrb[0].mxu0
        %7366 = vmatprep.mubr.f32.mxu0 0.0
        %7367 = vmatmul.mubr.f32.gmra.mrb[0].mxu0 %v6438
        %v7368 = vpop.f32.mrb[0].mxu0
        %v7369 = vadd.f32 0.0, %v7368
        %v7370 = vpop.f32.mrb[0].mxu0
        %7371 = vmatprep.mubr.f32.mxu0 0.0
        %7372 = vmatmul.mubr.f32.gmra.mrb[0].mxu0 %v6441
        %v7373 = vpop.f32.mrb[0].mxu0
        %v7374 = vadd.f32 0.0, %v7373
        %v7375 = vpop.f32.mrb[0].mxu0
        %7376 = vmatprep.mubr.f32.mxu0 0.0
        %7377 = vmatmul.mubr.f32.gmra.mrb[0].mxu0 %v6444
        %v7378 = vpop.f32.mrb[0].mxu0
        %v7379 = vadd.f32 0.0, %v7378
        %v7380 = vpop.f32.mrb[0].mxu0
        %7381 = vmatprep.mubr.f32.mxu0 0.0
        %7382 = vmatmul.mubr.f32.gmra.mrb[0].mxu0 %v6447
        %v7383 = vpop.f32.mrb[0].mxu0
        %v7384 = vadd.f32 0.0, %v7383
        %v7385 = vpop.f32.mrb[0].mxu0
        %7386 = vmatprep.mubr.f32.mxu0 0.0
        %7387 = vmatmul.mubr.f32.gmra.mrb[0].mxu0 %v6450
        %v7388 = vpop.f32.mrb[0].mxu0
        %v7389 = vadd.f32 0.0, %v7388
        %v7390 = vpop.f32.mrb[0].mxu0
        %7391 = vmatprep.mubr.f32.mxu0 0.0
        %7392 = vmatmul.mubr.f32.gmra.mrb[0].mxu0 %v6453
        %v7393 = vpop.f32.mrb[0].mxu0
        %v7394 = vadd.f32 0.0, %v7393
        %v7395 = vpop.f32.mrb[0].mxu0
        %7396 = vmatprep.mubr.f32.mxu0 0.0
        %7397 = vmatmul.mubr.f32.gmra.mrb[0].mxu0 %v6456
        %v7398 = vpop.f32.mrb[0].mxu0
        %v7399 = vadd.f32 0.0, %v7398
        %v7400 = vpop.f32.mrb[0].mxu0
        %7401 = vmatprep.mubr.f32.mxu0 0.0
        %7402 = vmatmul.mubr.f32.gmra.mrb[0].mxu0 %v6459
        %v7403 = vpop.f32.mrb[0].mxu0
        %v7404 = vadd.f32 0.0, %v7403
        %v7405 = vpop.f32.mrb[0].mxu0
        %7406 = vmatprep.mubr.f32.mxu0 0.0
        %7407 = vmatmul.mubr.f32.gmra.mrb[0].mxu0 %v6462
        %v7408 = vpop.f32.mrb[0].mxu0
        %v7409 = vadd.f32 0.0, %v7408
        %v7410 = vpop.f32.mrb[0].mxu0
        %7411 = vmatprep.mubr.f32.mxu0 0.0
        %7412 = vmatmul.mubr.f32.gmra.mrb[0].mxu0 %v6465
        %v7413 = vpop.f32.mrb[0].mxu0
        %v7414 = vadd.f32 0.0, %v7413
        %v7415 = vpop.f32.mrb[0].mxu0
        %7416 = vmatprep.mubr.f32.mxu0 0.0
        %7417 = vmatmul.mubr.f32.gmra.mrb[0].mxu0 %v6468
        %v7418 = vpop.f32.mrb[0].mxu0
        %v7419 = vadd.f32 0.0, %v7418
        %v7420 = vpop.f32.mrb[0].mxu0
        %7421 = vmatprep.mubr.f32.mxu0 0.0
        %7422 = vmatmul.mubr.f32.gmra.mrb[0].mxu0 %v6471
        %v7423 = vpop.f32.mrb[0].mxu0
        %v7424 = vadd.f32 0.0, %v7423
        %v7425 = vpop.f32.mrb[0].mxu0
        %7426 = vmatprep.mubr.f32.mxu0 0.0
        %7427 = vmatmul.mubr.f32.gmra.mrb[0].mxu0 %v6474
        %v7428 = vpop.f32.mrb[0].mxu0
        %v7429 = vadd.f32 0.0, %v7428
        %v7430 = vpop.f32.mrb[0].mxu0
        %7431 = vmatprep.mubr.f32.mxu0 0.0
        %7432 = vmatmul.mubr.f32.gmra.mrb[0].mxu0 %v6477
        %v7433 = vpop.f32.mrb[0].mxu0
        %v7434 = vadd.f32 0.0, %v7433
        %v7435 = vpop.f32.mrb[0].mxu0
        %7436 = vmatprep.mubr.f32.mxu0 0.0
        %7437 = vmatmul.mubr.f32.gmra.mrb[0].mxu0 %v6480
        %v7438 = vpop.f32.mrb[0].mxu0
        %v7439 = vadd.f32 0.0, %v7438
        %v7440 = vpop.f32.mrb[0].mxu0
        %7441 = vmatprep.mubr.f32.mxu0 0.0
        %7442 = vmatmul.mubr.f32.gmra.mrb[0].mxu0 %v6483
        %v7443 = vpop.f32.mrb[0].mxu0
        %v7444 = vadd.f32 0.0, %v7443
        %v7445 = vpop.f32.mrb[0].mxu0
        %7446 = vmatprep.mubr.f32.mxu0 0.0
        %7447 = vmatmul.mubr.f32.gmra.mrb[0].mxu0 %v6486
        %v7448 = vpop.f32.mrb[0].mxu0
        %v7449 = vadd.f32 0.0, %v7448
        %v7450 = vpop.f32.mrb[0].mxu0
        %7451 = vmatprep.mubr.f32.mxu0 0.0
        %7452 = vmatmul.mubr.f32.gmra.mrb[0].mxu0 %v6489
        %v7453 = vpop.f32.mrb[0].mxu0
        %v7454 = vadd.f32 0.0, %v7453
        %v7455 = vpop.f32.mrb[0].mxu0
        %7456 = vmatprep.mubr.f32.mxu0 0.0
        %7457 = vmatmul.mubr.f32.gmra.mrb[0].mxu0 %v6492
        %v7458 = vpop.f32.mrb[0].mxu0
        %v7459 = vadd.f32 0.0, %v7458
        %v7460 = vpop.f32.mrb[0].mxu0
        %7461 = vmatprep.mubr.f32.mxu0 0.0
        %7462 = vmatmul.mubr.f32.gmra.mrb[0].mxu0 %v6495
        %v7463 = vpop.f32.mrb[0].mxu0
        %v7464 = vadd.f32 0.0, %v7463
        %v7465 = vpop.f32.mrb[0].mxu0
        %7466 = vmatprep.mubr.f32.mxu0 0.0
        %7467 = vmatmul.mubr.f32.gmra.mrb[0].mxu0 %v6498
        %v7468 = vpop.f32.mrb[0].mxu0
        %v7469 = vadd.f32 0.0, %v7468
        %v7470 = vpop.f32.mrb[0].mxu0
        %7471 = vmatprep.mubr.f32.mxu0 0.0
        %7472 = vmatmul.mubr.f32.gmra.mrb[0].mxu0 %v6501
        %v7473 = vpop.f32.mrb[0].mxu0
        %v7474 = vadd.f32 0.0, %v7473
        %v7475 = vpop.f32.mrb[0].mxu0
        %7476 = vmatprep.mubr.f32.mxu0 0.0
        %7477 = vmatmul.mubr.f32.gmra.mrb[0].mxu0 %v6504
        %v7478 = vpop.f32.mrb[0].mxu0
        %v7479 = vadd.f32 0.0, %v7478
        %v7480 = vpop.f32.mrb[0].mxu0
        %7481 = vmatprep.mubr.f32.mxu0 0.0
        %7482 = vmatmul.mubr.f32.gmra.mrb[0].mxu0 %v6507
        %v7483 = vpop.f32.mrb[0].mxu0
        %v7484 = vadd.f32 0.0, %v7483
        %v7485 = vpop.f32.mrb[0].mxu0
        %7486 = vmatprep.mubr.f32.mxu0 0.0
        %7487 = vmatmul.mubr.f32.gmra.mrb[0].mxu0 %v6510
        %v7488 = vpop.f32.mrb[0].mxu0
        %v7489 = vadd.f32 0.0, %v7488
        %v7490 = vpop.f32.mrb[0].mxu0
        %7491 = vmatprep.mubr.f32.mxu0 0.0
        %7492 = vmatmul.mubr.f32.gmra.mrb[0].mxu0 %v6513
        %v7493 = vpop.f32.mrb[0].mxu0
        %v7494 = vadd.f32 0.0, %v7493
        %v7495 = vpop.f32.mrb[0].mxu0
        %7496 = vmatprep.mubr.f32.mxu0 0.0
        %7497 = vmatmul.mubr.f32.gmra.mrb[0].mxu0 %v6516
        %v7498 = vpop.f32.mrb[0].mxu0
        %v7499 = vadd.f32 0.0, %v7498
        %v7500 = vpop.f32.mrb[0].mxu0
        %7501 = vmatprep.mubr.f32.mxu0 0.0
        %7502 = vmatmul.mubr.f32.gmra.mrb[0].mxu0 %v6519
        %v7503 = vpop.f32.mrb[0].mxu0
        %v7504 = vadd.f32 0.0, %v7503
        %v7505 = vpop.f32.mrb[0].mxu0
        %7506 = vmatprep.mubr.f32.mxu0 0.0
        %7507 = vmatmul.mubr.f32.gmra.mrb[0].mxu0 %v6522
        %v7508 = vpop.f32.mrb[0].mxu0
        %v7509 = vadd.f32 0.0, %v7508
        %v7510 = vpop.f32.mrb[0].mxu0
        %7511 = vmatprep.mubr.f32.mxu0 0.0
        %7512 = vmatmul.mubr.f32.gmra.mrb[0].mxu0 %v6525
        %v7513 = vpop.f32.mrb[0].mxu0
        %v7514 = vadd.f32 0.0, %v7513
        %v7515 = vpop.f32.mrb[0].mxu0
        %7516 = vmatprep.mubr.f32.mxu0 0.0
        %7517 = vmatmul.mubr.f32.gmra.mrb[0].mxu0 %v4404
        %v7518 = vpop.f32.mrb[0].mxu0
        %v7519 = vadd.f32 0.0, %v7518
        %v7520 = vpop.f32.mrb[0].mxu0
        %7521 = vmatprep.mubr.f32.mxu0 0.0
        %7522 = vmatmul.mubr.f32.gmra.mrb[0].mxu0 %v4404
        %v7523 = vpop.f32.mrb[0].mxu0
        %v7524 = vadd.f32 0.0, %v7523
        %v7525 = vpop.f32.mrb[0].mxu0
        %7526 = vmatprep.mubr.f32.mxu0 0.0
        %7527 = vmatmul.mubr.f32.gmra.mrb[0].mxu0 %v4404
        %v7528 = vpop.f32.mrb[0].mxu0
        %v7529 = vadd.f32 0.0, %v7528
        %v7530 = vpop.f32.mrb[0].mxu0
        %7531 = vdwg.mxu0
        %v7532 = vadd.f32 %v6929, %v7264
        %v7533 = vadd.f32 %v6934, %v7269
        %v7534 = vadd.f32 %v6939, %v7274
        %v7535 = vadd.f32 %v6944, %v7279
        %v7536 = vadd.f32 %v6949, %v7284
        %v7537 = vadd.f32 %v6954, %v7289
        %v7538 = vadd.f32 %v6959, %v7294
        %v7539 = vadd.f32 %v6964, %v7299
        %v7540 = vadd.f32 %v6969, %v7304
        %v7541 = vadd.f32 %v6974, %v7309
        %v7542 = vadd.f32 %v6979, %v7314
        %v7543 = vadd.f32 %v6984, %v7319
        %v7544 = vadd.f32 %v6989, %v7324
        %v7545 = vadd.f32 %v6994, %v7329
        %v7546 = vadd.f32 %v6999, %v7334
        %v7547 = vadd.f32 %v7004, %v7339
        %v7548 = vadd.f32 %v7009, %v7344
        %v7549 = vadd.f32 %v7014, %v7349
        %v7550 = vadd.f32 %v7019, %v7354
        %v7551 = vadd.f32 %v7024, %v7359
        %v7552 = vadd.f32 %v7029, %v7364
        %v7553 = vadd.f32 %v7034, %v7369
        %v7554 = vadd.f32 %v7039, %v7374
        %v7555 = vadd.f32 %v7044, %v7379
        %v7556 = vadd.f32 %v7049, %v7384
        %v7557 = vadd.f32 %v7054, %v7389
        %v7558 = vadd.f32 %v7059, %v7394
        %v7559 = vadd.f32 %v7064, %v7399
        %v7560 = vadd.f32 %v7069, %v7404
        %v7561 = vadd.f32 %v7074, %v7409
        %v7562 = vadd.f32 %v7079, %v7414
        %v7563 = vadd.f32 %v7084, %v7419
        %v7564 = vadd.f32 %v7089, %v7424
        %v7565 = vadd.f32 %v7094, %v7429
        %v7566 = vadd.f32 %v7099, %v7434
        %v7567 = vadd.f32 %v7104, %v7439
        %v7568 = vadd.f32 %v7109, %v7444
        %v7569 = vadd.f32 %v7114, %v7449
        %v7570 = vadd.f32 %v7119, %v7454
        %v7571 = vadd.f32 %v7124, %v7459
        %v7572 = vadd.f32 %v7129, %v7464
        %v7573 = vadd.f32 %v7134, %v7469
        %v7574 = vadd.f32 %v7139, %v7474
        %v7575 = vadd.f32 %v7144, %v7479
        %v7576 = vadd.f32 %v7149, %v7484
        %v7577 = vadd.f32 %v7154, %v7489
        %v7578 = vadd.f32 %v7159, %v7494
        %v7579 = vadd.f32 %v7164, %v7499
        %v7580 = vadd.f32 %v7169, %v7504
        %v7581 = vadd.f32 %v7174, %v7509
        %v7582 = vadd.f32 %v7179, %v7514
        %v7583 = vadd.f32 %v7184, %v7519
        %v7584 = vadd.f32 %v7189, %v7524
        %v7585 = vadd.f32 %v7194, %v7529
        %s7586 = scalar_lea.vmem %s6, %s3043
        %v7587 = vld [vmem:[%s7586] sm:$0x1]
        %v7589 = vlaneseq
        %v7590 = vshrl.u32 %v7589, 7
        %v7591 = vsub.s32 0, %v7590
        %v7592 = vrot.slane %v7587, %v7591
        %v7594 = vadd.f32 %v7532, %v7592
        %v7595 = vadd.f32 %v7533, %v7592
        %v7596 = vadd.f32 %v7534, %v7592
        %v7597 = vadd.f32 %v7535, %v7592
        %v7598 = vadd.f32 %v7536, %v7592
        %v7599 = vadd.f32 %v7537, %v7592
        %v7600 = vadd.f32 %v7538, %v7592
        %v7601 = vadd.f32 %v7539, %v7592
        %v7602 = vadd.f32 %v7540, %v7592
        %v7603 = vadd.f32 %v7541, %v7592
        %v7604 = vadd.f32 %v7542, %v7592
        %v7605 = vadd.f32 %v7543, %v7592
        %v7606 = vadd.f32 %v7544, %v7592
        %v7607 = vadd.f32 %v7545, %v7592
        %v7608 = vadd.f32 %v7546, %v7592
        %v7609 = vadd.f32 %v7547, %v7592
        %v7610 = vadd.f32 %v7548, %v7592
        %v7611 = vadd.f32 %v7549, %v7592
        %v7612 = vadd.f32 %v7550, %v7592
        %v7613 = vadd.f32 %v7551, %v7592
        %v7614 = vadd.f32 %v7552, %v7592
        %v7615 = vadd.f32 %v7553, %v7592
        %v7616 = vadd.f32 %v7554, %v7592
        %v7617 = vadd.f32 %v7555, %v7592
        %v7618 = vadd.f32 %v7556, %v7592
        %v7619 = vadd.f32 %v7557, %v7592
        %v7620 = vadd.f32 %v7558, %v7592
        %v7621 = vadd.f32 %v7559, %v7592
        %v7622 = vadd.f32 %v7560, %v7592
        %v7623 = vadd.f32 %v7561, %v7592
        %v7624 = vadd.f32 %v7562, %v7592
        %v7625 = vadd.f32 %v7563, %v7592
        %v7626 = vadd.f32 %v7564, %v7592
        %v7627 = vadd.f32 %v7565, %v7592
        %v7628 = vadd.f32 %v7566, %v7592
        %v7629 = vadd.f32 %v7567, %v7592
        %v7630 = vadd.f32 %v7568, %v7592
        %v7631 = vadd.f32 %v7569, %v7592
        %v7632 = vadd.f32 %v7570, %v7592
        %v7633 = vadd.f32 %v7571, %v7592
        %v7634 = vadd.f32 %v7572, %v7592
        %v7635 = vadd.f32 %v7573, %v7592
        %v7636 = vadd.f32 %v7574, %v7592
        %v7637 = vadd.f32 %v7575, %v7592
        %v7638 = vadd.f32 %v7576, %v7592
        %v7639 = vadd.f32 %v7577, %v7592
        %v7640 = vadd.f32 %v7578, %v7592
        %v7641 = vadd.f32 %v7579, %v7592
        %v7642 = vadd.f32 %v7580, %v7592
        %v7643 = vadd.f32 %v7581, %v7592
        %v7644 = vadd.f32 %v7582, %v7592
        %v7645 = vadd.f32 %v7583, %v7592
        %v7646 = vadd.f32 %v7584, %v7592
        %v7647 = vadd.f32 %v7585, %v7592
        %v7648 = vadd.f32 %v7594, %v3044
        %v7649 = vadd.f32 %v7595, %v3045
        %v7650 = vadd.f32 %v7596, %v3046
        %v7651 = vadd.f32 %v7597, %v3047
        %v7652 = vadd.f32 %v7598, %v3048
        %v7653 = vadd.f32 %v7599, %v3049
        %v7654 = vadd.f32 %v7600, %v3050
        %v7655 = vadd.f32 %v7601, %v3051
        %v7656 = vadd.f32 %v7602, %v3052
        %v7657 = vadd.f32 %v7603, %v3053
        %v7658 = vadd.f32 %v7604, %v3054
        %v7659 = vadd.f32 %v7605, %v3055
        %v7660 = vadd.f32 %v7606, %v3056
        %v7661 = vadd.f32 %v7607, %v3057
        %v7662 = vadd.f32 %v7608, %v3058
        %v7663 = vadd.f32 %v7609, %v3059
        %v7664 = vadd.f32 %v7610, %v3060
        %v7665 = vadd.f32 %v7611, %v3061
        %v7666 = vadd.f32 %v7612, %v3062
        %v7667 = vadd.f32 %v7613, %v3063
        %v7668 = vadd.f32 %v7614, %v3064
        %v7669 = vadd.f32 %v7615, %v3065
        %v7670 = vadd.f32 %v7616, %v3066
        %v7671 = vadd.f32 %v7617, %v3067
        %v7672 = vadd.f32 %v7618, %v3068
        %v7673 = vadd.f32 %v7619, %v3069
        %v7674 = vadd.f32 %v7620, %v3070
        %v7675 = vadd.f32 %v7621, %v3071
        %v7676 = vadd.f32 %v7622, %v3072
        %v7677 = vadd.f32 %v7623, %v3073
        %v7678 = vadd.f32 %v7624, %v3074
        %v7679 = vadd.f32 %v7625, %v3075
        %v7680 = vadd.f32 %v7626, %v3076
        %v7681 = vadd.f32 %v7627, %v3077
        %v7682 = vadd.f32 %v7628, %v3078
        %v7683 = vadd.f32 %v7629, %v3079
        %v7684 = vadd.f32 %v7630, %v3080
        %v7685 = vadd.f32 %v7631, %v3081
        %v7686 = vadd.f32 %v7632, %v3082
        %v7687 = vadd.f32 %v7633, %v3083
        %v7688 = vadd.f32 %v7634, %v3084
        %v7689 = vadd.f32 %v7635, %v3085
        %v7690 = vadd.f32 %v7636, %v3086
        %v7691 = vadd.f32 %v7637, %v3087
        %v7692 = vadd.f32 %v7638, %v3088
        %v7693 = vadd.f32 %v7639, %v3089
        %v7694 = vadd.f32 %v7640, %v3090
        %v7695 = vadd.f32 %v7641, %v3091
        %v7696 = vadd.f32 %v7642, %v3092
        %v7697 = vadd.f32 %v7643, %v3093
        %v7698 = vadd.f32 %v7644, %v3094
        %v7699 = vadd.f32 %v7645, %v3095
        %v7700 = vadd.f32 %v7646, %v3096
        %v7701 = vadd.f32 %v7647, %v3097
        %v7702 = vmul.f32 %v7648, %v5249
        %v7703 = vmul.f32 %v7649, %v5254
        %v7704 = vmul.f32 %v7650, %v5259
        %v7705 = vmul.f32 %v7651, %v5264
        %v7706 = vmul.f32 %v7652, %v5269
        %v7707 = vmul.f32 %v7653, %v5274
        %v7708 = vmul.f32 %v7654, %v5279
        %v7709 = vmul.f32 %v7655, %v5284
        %v7710 = vmul.f32 %v7656, %v5289
        %v7711 = vmul.f32 %v7657, %v5294
        %v7712 = vmul.f32 %v7658, %v5299
        %v7713 = vmul.f32 %v7659, %v5304
        %v7714 = vmul.f32 %v7660, %v5309
        %v7715 = vmul.f32 %v7661, %v5314
        %v7716 = vmul.f32 %v7662, %v5319
        %v7717 = vmul.f32 %v7663, %v5324
        %v7718 = vmul.f32 %v7664, %v5329
        %v7719 = vmul.f32 %v7665, %v5334
        %v7720 = vmul.f32 %v7666, %v5339
        %v7721 = vmul.f32 %v7667, %v5344
        %v7722 = vmul.f32 %v7668, %v5349
        %v7723 = vmul.f32 %v7669, %v5354
        %v7724 = vmul.f32 %v7670, %v5359
        %v7725 = vmul.f32 %v7671, %v5364
        %v7726 = vmul.f32 %v7672, %v5369
        %v7727 = vmul.f32 %v7673, %v5374
        %v7728 = vmul.f32 %v7674, %v5379
        %v7729 = vmul.f32 %v7675, %v5384
        %v7730 = vmul.f32 %v7676, %v5389
        %v7731 = vmul.f32 %v7677, %v5394
        %v7732 = vmul.f32 %v7678, %v5399
        %v7733 = vmul.f32 %v7679, %v5404
        %v7734 = vmul.f32 %v7680, %v5409
        %v7735 = vmul.f32 %v7681, %v5414
        %v7736 = vmul.f32 %v7682, %v5419
        %v7737 = vmul.f32 %v7683, %v5424
        %v7738 = vmul.f32 %v7684, %v5429
        %v7739 = vmul.f32 %v7685, %v5434
        %v7740 = vmul.f32 %v7686, %v5439
        %v7741 = vmul.f32 %v7687, %v5444
        %v7742 = vmul.f32 %v7688, %v5449
        %v7743 = vmul.f32 %v7689, %v5454
        %v7744 = vmul.f32 %v7690, %v5459
        %v7745 = vmul.f32 %v7691, %v5464
        %v7746 = vmul.f32 %v7692, %v5469
        %v7747 = vmul.f32 %v7693, %v5474
        %v7748 = vmul.f32 %v7694, %v5479
        %v7749 = vmul.f32 %v7695, %v5484
        %v7750 = vmul.f32 %v7696, %v5489
        %v7751 = vmul.f32 %v7697, %v5494
        %v7752 = vmul.f32 %v7698, %v5499
        %v7753 = vmul.f32 %v7699, %v5504
        %v7754 = vmul.f32 %v7700, %v5509
        %v7755 = vmul.f32 %v7701, %v5514
        %7756 = vst.msk [vmem:[#allocation2] sm:$0xff] %vm3795, %v7702
        %7757 = vst.msk [vmem:[#allocation2 + $0x8] sm:$0xff] %vm3795, %v7703
        %7758 = vst.msk [vmem:[#allocation2 + $0x10] sm:$0xff] %vm3795, %v7704
        %7759 = vst.msk [vmem:[#allocation2 + $0x18] sm:$0xff] %vm3795, %v7705
        %7760 = vst.msk [vmem:[#allocation2 + $0x20] sm:$0xff] %vm3795, %v7706
        %7761 = vst.msk [vmem:[#allocation2 + $0x28] sm:$0xff] %vm3795, %v7707
        %7762 = vst.msk [vmem:[#allocation2 + $0x30] sm:$0xff] %vm3795, %v7708
        %7763 = vst.msk [vmem:[#allocation2 + $0x38] sm:$0xff] %vm3795, %v7709
        %7764 = vst.msk [vmem:[#allocation2 + $0x40] sm:$0xff] %vm3795, %v7710
        %7765 = vst.msk [vmem:[#allocation2 + $0x48] sm:$0xff] %vm3795, %v7711
        %7766 = vst.msk [vmem:[#allocation2 + $0x50] sm:$0xff] %vm3795, %v7712
        %7767 = vst.msk [vmem:[#allocation2 + $0x58] sm:$0xff] %vm3795, %v7713
        %7768 = vst.msk [vmem:[#allocation2 + $0x60] sm:$0xff] %vm3795, %v7714
        %7769 = vst.msk [vmem:[#allocation2 + $0x68] sm:$0xff] %vm3795, %v7715
        %7770 = vst.msk [vmem:[#allocation2 + $0x70] sm:$0xff] %vm3795, %v7716
        %7771 = vst.msk [vmem:[#allocation2 + $0x78] sm:$0xff] %vm3795, %v7717
        %7772 = vst.msk [vmem:[#allocation2 + $0x80] sm:$0xff] %vm3795, %v7718
        %7773 = vst.msk [vmem:[#allocation2 + $0x88] sm:$0xff] %vm3795, %v7719
        %7774 = vst.msk [vmem:[#allocation2 + $0x90] sm:$0xff] %vm3795, %v7720
        %7775 = vst.msk [vmem:[#allocation2 + $0x98] sm:$0xff] %vm3795, %v7721
        %7776 = vst.msk [vmem:[#allocation2 + $0xa0] sm:$0xff] %vm3795, %v7722
        %7777 = vst.msk [vmem:[#allocation2 + $0xa8] sm:$0xff] %vm3795, %v7723
        %7778 = vst.msk [vmem:[#allocation2 + $0xb0] sm:$0xff] %vm3795, %v7724
        %7779 = vst.msk [vmem:[#allocation2 + $0xb8] sm:$0xff] %vm3795, %v7725
        %7780 = vst.msk [vmem:[#allocation2 + $0xc0] sm:$0xff] %vm3795, %v7726
        %7781 = vst.msk [vmem:[#allocation2 + $0xc8] sm:$0xff] %vm3795, %v7727
        %7782 = vst.msk [vmem:[#allocation2 + $0xd0] sm:$0xff] %vm3795, %v7728
        %7783 = vst.msk [vmem:[#allocation2 + $0xd8] sm:$0xff] %vm3795, %v7729
        %7784 = vst.msk [vmem:[#allocation2 + $0xe0] sm:$0xff] %vm3795, %v7730
        %7785 = vst.msk [vmem:[#allocation2 + $0xe8] sm:$0xff] %vm3795, %v7731
        %7786 = vst.msk [vmem:[#allocation2 + $0xf0] sm:$0xff] %vm3795, %v7732
        %7787 = vst.msk [vmem:[#allocation2 + $0xf8] sm:$0xff] %vm3795, %v7733
        %7788 = vst.msk [vmem:[#allocation2 + $0x100] sm:$0xff] %vm3795, %v7734
        %7789 = vst.msk [vmem:[#allocation2 + $0x108] sm:$0xff] %vm3795, %v7735
        %7790 = vst.msk [vmem:[#allocation2 + $0x110] sm:$0xff] %vm3795, %v7736
        %7791 = vst.msk [vmem:[#allocation2 + $0x118] sm:$0xff] %vm3795, %v7737
        %7792 = vst.msk [vmem:[#allocation2 + $0x120] sm:$0xff] %vm3795, %v7738
        %7793 = vst.msk [vmem:[#allocation2 + $0x128] sm:$0xff] %vm3795, %v7739
        %7794 = vst.msk [vmem:[#allocation2 + $0x130] sm:$0xff] %vm3795, %v7740
        %7795 = vst.msk [vmem:[#allocation2 + $0x138] sm:$0xff] %vm3795, %v7741
        %7796 = vst.msk [vmem:[#allocation2 + $0x140] sm:$0xff] %vm3795, %v7742
        %7797 = vst.msk [vmem:[#allocation2 + $0x148] sm:$0xff] %vm3795, %v7743
        %7798 = vst.msk [vmem:[#allocation2 + $0x150] sm:$0xff] %vm3795, %v7744
        %7799 = vst.msk [vmem:[#allocation2 + $0x158] sm:$0xff] %vm3795, %v7745
        %7800 = vst.msk [vmem:[#allocation2 + $0x160] sm:$0xff] %vm3795, %v7746
        %7801 = vst.msk [vmem:[#allocation2 + $0x168] sm:$0xff] %vm3795, %v7747
        %7802 = vst.msk [vmem:[#allocation2 + $0x170] sm:$0xff] %vm3795, %v7748
        %7803 = vst.msk [vmem:[#allocation2 + $0x178] sm:$0xff] %vm3795, %v7749
        %7804 = vst.msk [vmem:[#allocation2 + $0x180] sm:$0xff] %vm3795, %v7750
        %7805 = vst.msk [vmem:[#allocation2 + $0x188] sm:$0xff] %vm3795, %v7751
        %7806 = vst.msk [vmem:[#allocation2 + $0x190] sm:$0xff] %vm3795, %v7752
        %7807 = vst.msk [vmem:[#allocation2 + $0x198] sm:$0xff] %vm3795, %v7753
        %7808 = vst.msk [vmem:[#allocation2 + $0x1a0] sm:$0xff] %vm3795, %v7754
        %7809 = vst.msk [vmem:[#allocation2 + $0x1a8] sm:$0xff] %vm3795, %v7755
      $region60: #{residual_blocks_with_input_conv.1} parent=51 // pred_fallthru
        _
      %p7810 = scmp.eq.s32.totalorder %s24, 2
      // Predicated region
      $region61: #{residual_blocks_with_input_conv.1} parent=51 // pred_check
        %p7811 = pneg %p7810
      $region62: #{residual_blocks_with_input_conv.1} parent=51 // pred_check_branch
        %7813 = sbr.rel (%p7811) target = $region64
      $region63: #{residual_blocks_with_input_conv.1} parent=51 // pred_region
        %v7814 = vld [vmem:[#allocation2] sm:$0xff]
        %v7815 = vld [vmem:[#allocation2 + $0x8] sm:$0xff]
        %v7816 = vld [vmem:[#allocation2 + $0x10] sm:$0xff]
        %v7817 = vld [vmem:[#allocation2 + $0x18] sm:$0xff]
        %v7818 = vld [vmem:[#allocation2 + $0x20] sm:$0xff]
        %v7819 = vld [vmem:[#allocation2 + $0x28] sm:$0xff]
        %v7820 = vld [vmem:[#allocation2 + $0x30] sm:$0xff]
        %v7821 = vld [vmem:[#allocation2 + $0x38] sm:$0xff]
        %v7822 = vld [vmem:[#allocation2 + $0x40] sm:$0xff]
        %v7823 = vld [vmem:[#allocation2 + $0x48] sm:$0xff]
        %v7824 = vld [vmem:[#allocation2 + $0x50] sm:$0xff]
        %v7825 = vld [vmem:[#allocation2 + $0x58] sm:$0xff]
        %v7826 = vld [vmem:[#allocation2 + $0x60] sm:$0xff]
        %v7827 = vld [vmem:[#allocation2 + $0x68] sm:$0xff]
        %v7828 = vld [vmem:[#allocation2 + $0x70] sm:$0xff]
        %v7829 = vld [vmem:[#allocation2 + $0x78] sm:$0xff]
        %v7830 = vld [vmem:[#allocation2 + $0x80] sm:$0xff]
        %v7831 = vld [vmem:[#allocation2 + $0x88] sm:$0xff]
        %v7832 = vld [vmem:[#allocation2 + $0x90] sm:$0xff]
        %v7833 = vld [vmem:[#allocation2 + $0x98] sm:$0xff]
        %v7834 = vld [vmem:[#allocation2 + $0xa0] sm:$0xff]
        %v7835 = vld [vmem:[#allocation2 + $0xa8] sm:$0xff]
        %v7836 = vld [vmem:[#allocation2 + $0xb0] sm:$0xff]
        %v7837 = vld [vmem:[#allocation2 + $0xb8] sm:$0xff]
        %v7838 = vld [vmem:[#allocation2 + $0xc0] sm:$0xff]
        %v7839 = vld [vmem:[#allocation2 + $0xc8] sm:$0xff]
        %v7840 = vld [vmem:[#allocation2 + $0xd0] sm:$0xff]
        %v7841 = vld [vmem:[#allocation2 + $0xd8] sm:$0xff]
        %v7842 = vld [vmem:[#allocation2 + $0xe0] sm:$0xff]
        %v7843 = vld [vmem:[#allocation2 + $0xe8] sm:$0xff]
        %v7844 = vld [vmem:[#allocation2 + $0xf0] sm:$0xff]
        %v7845 = vld [vmem:[#allocation2 + $0xf8] sm:$0xff]
        %v7846 = vld [vmem:[#allocation2 + $0x100] sm:$0xff]
        %v7847 = vld [vmem:[#allocation2 + $0x108] sm:$0xff]
        %v7848 = vld [vmem:[#allocation2 + $0x110] sm:$0xff]
        %v7849 = vld [vmem:[#allocation2 + $0x118] sm:$0xff]
        %v7850 = vld [vmem:[#allocation2 + $0x120] sm:$0xff]
        %v7851 = vld [vmem:[#allocation2 + $0x128] sm:$0xff]
        %v7852 = vld [vmem:[#allocation2 + $0x130] sm:$0xff]
        %v7853 = vld [vmem:[#allocation2 + $0x138] sm:$0xff]
        %v7854 = vld [vmem:[#allocation2 + $0x140] sm:$0xff]
        %v7855 = vld [vmem:[#allocation2 + $0x148] sm:$0xff]
        %v7856 = vld [vmem:[#allocation2 + $0x150] sm:$0xff]
        %v7857 = vld [vmem:[#allocation2 + $0x158] sm:$0xff]
        %v7858 = vld [vmem:[#allocation2 + $0x160] sm:$0xff]
        %v7859 = vld [vmem:[#allocation2 + $0x168] sm:$0xff]
        %v7860 = vld [vmem:[#allocation2 + $0x170] sm:$0xff]
        %v7861 = vld [vmem:[#allocation2 + $0x178] sm:$0xff]
        %v7862 = vld [vmem:[#allocation2 + $0x180] sm:$0xff]
        %v7863 = vld [vmem:[#allocation2 + $0x188] sm:$0xff]
        %v7864 = vld [vmem:[#allocation2 + $0x190] sm:$0xff]
        %v7865 = vld [vmem:[#allocation2 + $0x198] sm:$0xff]
        %v7866 = vld [vmem:[#allocation2 + $0x1a0] sm:$0xff]
        %v7867 = vld [vmem:[#allocation2 + $0x1a8] sm:$0xff]
        %vm7868 = vcmask 261120
        %7869 = vst.msk [vmem:[%s317] sm:$0xff] %vm7868, %v7814
        %7870 = vst.msk [vmem:[%s317 + $0x8] sm:$0xff] %vm7868, %v7815
        %7871 = vst.msk [vmem:[%s317 + $0x10] sm:$0xff] %vm7868, %v7816
        %7872 = vst.msk [vmem:[%s317 + $0x18] sm:$0xff] %vm7868, %v7817
        %7873 = vst.msk [vmem:[%s317 + $0x20] sm:$0xff] %vm7868, %v7818
        %7874 = vst.msk [vmem:[%s317 + $0x28] sm:$0xff] %vm7868, %v7819
        %7875 = vst.msk [vmem:[%s317 + $0x30] sm:$0xff] %vm7868, %v7820
        %7876 = vst.msk [vmem:[%s317 + $0x38] sm:$0xff] %vm7868, %v7821
        %7877 = vst.msk [vmem:[%s317 + $0x40] sm:$0xff] %vm7868, %v7822
        %7878 = vst.msk [vmem:[%s317 + $0x48] sm:$0xff] %vm7868, %v7823
        %7879 = vst.msk [vmem:[%s317 + $0x50] sm:$0xff] %vm7868, %v7824
        %7880 = vst.msk [vmem:[%s317 + $0x58] sm:$0xff] %vm7868, %v7825
        %7881 = vst.msk [vmem:[%s317 + $0x60] sm:$0xff] %vm7868, %v7826
        %7882 = vst.msk [vmem:[%s317 + $0x68] sm:$0xff] %vm7868, %v7827
        %7883 = vst.msk [vmem:[%s317 + $0x70] sm:$0xff] %vm7868, %v7828
        %7884 = vst.msk [vmem:[%s317 + $0x78] sm:$0xff] %vm7868, %v7829
        %7885 = vst.msk [vmem:[%s317 + $0x80] sm:$0xff] %vm7868, %v7830
        %7886 = vst.msk [vmem:[%s317 + $0x88] sm:$0xff] %vm7868, %v7831
        %7887 = vst.msk [vmem:[%s317 + $0x90] sm:$0xff] %vm7868, %v7832
        %7888 = vst.msk [vmem:[%s317 + $0x98] sm:$0xff] %vm7868, %v7833
        %7889 = vst.msk [vmem:[%s317 + $0xa0] sm:$0xff] %vm7868, %v7834
        %7890 = vst.msk [vmem:[%s317 + $0xa8] sm:$0xff] %vm7868, %v7835
        %7891 = vst.msk [vmem:[%s317 + $0xb0] sm:$0xff] %vm7868, %v7836
        %7892 = vst.msk [vmem:[%s317 + $0xb8] sm:$0xff] %vm7868, %v7837
        %7893 = vst.msk [vmem:[%s317 + $0xc0] sm:$0xff] %vm7868, %v7838
        %7894 = vst.msk [vmem:[%s317 + $0xc8] sm:$0xff] %vm7868, %v7839
        %7895 = vst.msk [vmem:[%s317 + $0xd0] sm:$0xff] %vm7868, %v7840
        %7896 = vst.msk [vmem:[%s317 + $0xd8] sm:$0xff] %vm7868, %v7841
        %7897 = vst.msk [vmem:[%s317 + $0xe0] sm:$0xff] %vm7868, %v7842
        %7898 = vst.msk [vmem:[%s317 + $0xe8] sm:$0xff] %vm7868, %v7843
        %7899 = vst.msk [vmem:[%s317 + $0xf0] sm:$0xff] %vm7868, %v7844
        %7900 = vst.msk [vmem:[%s317 + $0xf8] sm:$0xff] %vm7868, %v7845
        %7901 = vst.msk [vmem:[%s317 + $0x100] sm:$0xff] %vm7868, %v7846
        %7902 = vst.msk [vmem:[%s317 + $0x108] sm:$0xff] %vm7868, %v7847
        %7903 = vst.msk [vmem:[%s317 + $0x110] sm:$0xff] %vm7868, %v7848
        %7904 = vst.msk [vmem:[%s317 + $0x118] sm:$0xff] %vm7868, %v7849
        %7905 = vst.msk [vmem:[%s317 + $0x120] sm:$0xff] %vm7868, %v7850
        %7906 = vst.msk [vmem:[%s317 + $0x128] sm:$0xff] %vm7868, %v7851
        %7907 = vst.msk [vmem:[%s317 + $0x130] sm:$0xff] %vm7868, %v7852
        %7908 = vst.msk [vmem:[%s317 + $0x138] sm:$0xff] %vm7868, %v7853
        %7909 = vst.msk [vmem:[%s317 + $0x140] sm:$0xff] %vm7868, %v7854
        %7910 = vst.msk [vmem:[%s317 + $0x148] sm:$0xff] %vm7868, %v7855
        %7911 = vst.msk [vmem:[%s317 + $0x150] sm:$0xff] %vm7868, %v7856
        %7912 = vst.msk [vmem:[%s317 + $0x158] sm:$0xff] %vm7868, %v7857
        %7913 = vst.msk [vmem:[%s317 + $0x160] sm:$0xff] %vm7868, %v7858
        %7914 = vst.msk [vmem:[%s317 + $0x168] sm:$0xff] %vm7868, %v7859
        %7915 = vst.msk [vmem:[%s317 + $0x170] sm:$0xff] %vm7868, %v7860
        %7916 = vst.msk [vmem:[%s317 + $0x178] sm:$0xff] %vm7868, %v7861
        %7917 = vst.msk [vmem:[%s317 + $0x180] sm:$0xff] %vm7868, %v7862
        %7918 = vst.msk [vmem:[%s317 + $0x188] sm:$0xff] %vm7868, %v7863
        %7919 = vst.msk [vmem:[%s317 + $0x190] sm:$0xff] %vm7868, %v7864
        %7920 = vst.msk [vmem:[%s317 + $0x198] sm:$0xff] %vm7868, %v7865
        %7921 = vst.msk [vmem:[%s317 + $0x1a0] sm:$0xff] %vm7868, %v7866
        %7922 = vst.msk [vmem:[%s317 + $0x1a8] sm:$0xff] %vm7868, %v7867
      $region64: #{residual_blocks_with_input_conv.1} parent=51 // pred_fallthru
        _
      %p7923 = scmp.lt.s32.totalorder %s23, 1
      %s7924 = scalar_select %p7923, %s23, 1
      %s7925 = smul.addr %s7924, 54
      %s7926 = smul.addr %s7925, 8
      %s7927 = scalar_lea.vmem %s8, %s7926
      // Predicated region
      $region65: #{residual_blocks_with_input_conv.1} parent=51 // pred_check
        %p7928 = pneg %p222
      $region66: #{residual_blocks_with_input_conv.1} parent=51 // pred_check_branch
        %7930 = sbr.rel (%p7928) target = $region68
      $region67: #{residual_blocks_with_input_conv.1} parent=51 // pred_region
        _
      $region68: #{residual_blocks_with_input_conv.1} parent=51 // pred_fallthru
        _
    $region52: #{residual_blocks_with_input_conv.1} parent=5 // pred_fallthru
      _
    %p7931 = scmp.le.s32.totalorder 2, %s14
    // Predicated region
    $region69: #{residual_blocks_with_input_conv.1} parent=5 // pred_check
      %p7932 = pneg %p7931
    $region70: #{residual_blocks_with_input_conv.1} parent=5 // pred_check_branch
      %7934 = sbr.rel (%p7932) target = $region72
    $region71: #{residual_blocks_with_input_conv.1} parent=5 // pred_region
      %s7935 = ssub.s32 %s14, 2
      // Predicated region
      $region73: #{residual_blocks_with_input_conv.1} parent=71 // pred_check
        %p7936 = pneg %p228
      $region74: #{residual_blocks_with_input_conv.1} parent=71 // pred_check_branch
        %7938 = sbr.rel (%p7936) target = $region76
      $region75: #{residual_blocks_with_input_conv.1} parent=71 // pred_region
        %p7939 = scmp.lt.s32.totalorder %s25, 1
        %s7940 = scalar_select %p7939, %s25, 1
        %s7941 = smul.addr %s7940, 54
        %s7942 = smul.addr %s7941, 8
        %s7943 = scalar_lea.vmem %s8, %s7942
      $region76: #{residual_blocks_with_input_conv.1} parent=71 // pred_fallthru
        _
    $region72: #{residual_blocks_with_input_conv.1} parent=5 // pred_fallthru
      _
  $region6: #{residual_blocks_with_input_conv.1} parent=0 // loop_footer
    %s18 = sadd.s32 1, %s14
  $region7: #{residual_blocks_with_input_conv.1} parent=0 // loop_footer_branch
    %13 = sbr.rel target = $region3
  $region8: #{residual_blocks_with_input_conv.1} parent=0 // loop_exit
    _

</llo_original>
